<compile_context>
chip_gen: v5e
topology: v5e:2x2
jax: 0.10.0
libtpu: 0.0.40
codegen_flags: <defaults>
</compile_context>

<pallas_src>
import functools
import math

import jax
import jax.numpy as jnp
from jax import lax
from jax.experimental import pallas as pl
from jax.experimental.pallas import tpu as pltpu

D_MODEL = 400      # d_model of the encoder layer (flattened feature size)
D_FF = 2048        # default dim_feedforward of nn.TransformerEncoderLayer
LN_EPS = 1e-5      # default LayerNorm eps

# fused q/k/v weight: each projection sits in its own 512-lane-aligned segment
QKV_SEG = 512
Q_OFF, K_OFF, V_OFF = 0, QKV_SEG, 2 * QKV_SEG
QKV_COLS = 3 * QKV_SEG

# --- packed-slab row layout for the small parameters (one (16, 2048) f32) ---
ROW_BQ, ROW_BK, ROW_BV, ROW_BO = 0, 1, 2, 3
ROW_LN1W, ROW_LN1B, ROW_LN2W, ROW_LN2B = 4, 5, 6, 7
ROW_B2, ROW_FC1B, ROW_FC2W, ROW_FC2B = 8, 9, 10, 11
ROW_B1 = 12
SLAB_ROWS = 16


def _layer_norm(h, w, b):
    mu = jnp.mean(h, axis=-1, keepdims=True)
    var = jnp.mean((h - mu) ** 2, axis=-1, keepdims=True)
    return (h - mu) * lax.rsqrt(var + LN_EPS) * w + b


def ad_classifier_kernel(x_ref, mask_ref,
                         wqkv_ref, wo_ref, w1_ref, w2_ref, fc1w_ref,
                         slab_ref, out_ref):
    x = x_ref[...]                                  # (R, 400) f32
    mask = mask_ref[...]                            # (R, R) f32 additive mask
    slab = slab_ref[...]                            # (16, 2048) f32

    bq = slab[ROW_BQ:ROW_BQ + 1, :D_MODEL]
    bk = slab[ROW_BK:ROW_BK + 1, :D_MODEL]
    bv = slab[ROW_BV:ROW_BV + 1, :D_MODEL]
    bo = slab[ROW_BO:ROW_BO + 1, :D_MODEL]
    ln1w = slab[ROW_LN1W:ROW_LN1W + 1, :D_MODEL]
    ln1b = slab[ROW_LN1B:ROW_LN1B + 1, :D_MODEL]
    ln2w = slab[ROW_LN2W:ROW_LN2W + 1, :D_MODEL]
    ln2b = slab[ROW_LN2B:ROW_LN2B + 1, :D_MODEL]
    b2 = slab[ROW_B2:ROW_B2 + 1, :D_MODEL]
    fc1b = slab[ROW_FC1B:ROW_FC1B + 1, :D_MODEL]
    fc2w = slab[ROW_FC2W:ROW_FC2W + 1, :D_MODEL]    # fc2 weight as a row
    fc2b = slab[ROW_FC2B:ROW_FC2B + 1, 0:1]         # fc2 bias scalar
    b1 = slab[ROW_B1:ROW_B1 + 1, :]                 # (1, 2048)

    # ---- self-attention, nhead = 1 (post-norm encoder layer) ----
    xb = x.astype(jnp.bfloat16)                     # MXU inputs bf16, acc f32
    qkv = jnp.dot(xb, wqkv_ref[...],
                  preferred_element_type=jnp.float32)          # (R, 1536)
    q = qkv[:, Q_OFF:Q_OFF + D_MODEL] + bq
    k = qkv[:, K_OFF:K_OFF + D_MODEL] + bk
    v = qkv[:, V_OFF:V_OFF + D_MODEL] + bv

    scale = jnp.float32(1.0 / math.sqrt(D_MODEL))   # head_dim = 400
    s = lax.dot_general(q, k, (((1,), (1,)), ((), ())),
                        preferred_element_type=jnp.float32) * scale  # (R, R)
    # block-diagonal additive mask keeps attention within each original group
    s = s + mask
    s = s - jnp.max(s, axis=-1, keepdims=True)
    p = jnp.exp(s)
    p = p / jnp.sum(p, axis=-1, keepdims=True)      # exact division (parity)

    attn = jnp.dot(p, v, preferred_element_type=jnp.float32)    # (R, 400)
    attn = jnp.dot(attn.astype(jnp.bfloat16), wo_ref[...],
                   preferred_element_type=jnp.float32) + bo

    # ---- residual + LayerNorm 1 (f32 elementwise; v5e has no bf16 VPU) ----
    h = _layer_norm(x + attn, ln1w, ln1b)

    # ---- feed-forward: linear(400->2048) + relu + linear(2048->400) ----
    f = jnp.dot(h.astype(jnp.bfloat16), w1_ref[...],
                preferred_element_type=jnp.float32) + b1
    f = jnp.maximum(f, 0.0)
    f = jnp.dot(f.astype(jnp.bfloat16), w2_ref[...],
                preferred_element_type=jnp.float32) + b2

    # ---- residual + LayerNorm 2 ----
    h = _layer_norm(h + f, ln2w, ln2b)

    # ---- fc1 (400->400) + relu ----
    y = jnp.dot(h.astype(jnp.bfloat16), fc1w_ref[...],
                preferred_element_type=jnp.float32) + fc1b
    y = jnp.maximum(y, 0.0)

    # ---- fc2 (400->1) as a VPU reduction (avoid 1-lane-wide MXU result) ----
    z = jnp.sum(y * fc2w, axis=-1, keepdims=True) + fc2b         # (R, 1)
    # sigmoid(z) == 0.5 * (tanh(z/2) + 1): EUP tanh, no inf intermediates.
    out_ref[...] = 0.5 * (jnp.tanh(0.5 * z) + 1.0)


def init_params(key):
    """Deterministic synthetic parameters.

    Weight matrices are stored as (in_features, out_features), i.e. already
    transposed relative to PyTorch's nn.Linear (out, in), so the kernel
    computes x @ W + b.
    """
    ks = jax.random.split(key, 10)

    def w(k, shape, scale=0.02):
        return scale * jax.random.normal(k, shape, dtype=jnp.float32)

    return {
        # in-projection of MultiheadAttention, split into q/k/v
        "wq": w(ks[0], (D_MODEL, D_MODEL)),
        "wk": w(ks[1], (D_MODEL, D_MODEL)),
        "wv": w(ks[2], (D_MODEL, D_MODEL)),
        "wo": w(ks[3], (D_MODEL, D_MODEL)),
        "w1": w(ks[4], (D_MODEL, D_FF)),
        "w2": w(ks[5], (D_FF, D_MODEL)),
        "fc1w": w(ks[6], (D_MODEL, D_MODEL)),
        "bq": w(ks[7], (D_MODEL,), 0.01),
        "bk": w(ks[8], (D_MODEL,), 0.01),
        "bv": w(ks[9], (D_MODEL,), 0.01),
        "bo": jnp.zeros((D_MODEL,), jnp.float32),
        "ln1w": jnp.ones((D_MODEL,), jnp.float32),
        "ln1b": jnp.zeros((D_MODEL,), jnp.float32),
        "b1": jnp.zeros((D_FF,), jnp.float32),
        "b2": jnp.zeros((D_MODEL,), jnp.float32),
        "ln2w": jnp.ones((D_MODEL,), jnp.float32),
        "ln2b": jnp.zeros((D_MODEL,), jnp.float32),
        "fc1b": jnp.zeros((D_MODEL,), jnp.float32),
        "fc2w": w(jax.random.fold_in(key, 123), (D_MODEL,)),
        "fc2b": jnp.zeros((1,), jnp.float32),
    }


def prepare_params(params):
    """One-time conversion:

      * wq/wk/wv fused into one bf16 (400, 1536) weight, each projection at a
        512-lane-aligned offset (free after tiled-layout padding).
      * remaining big weights -> bf16.
      * 14 tiny bias / LayerNorm / fc2 params packed into one (16, 2048) f32
        slab (one DMA instead of 14 sub-2KB DMAs).
    """
    wqkv = jnp.zeros((D_MODEL, QKV_COLS), jnp.float32)
    wqkv = wqkv.at[:, Q_OFF:Q_OFF + D_MODEL].set(params["wq"])
    wqkv = wqkv.at[:, K_OFF:K_OFF + D_MODEL].set(params["wk"])
    wqkv = wqkv.at[:, V_OFF:V_OFF + D_MODEL].set(params["wv"])
    wqkv = wqkv.astype(jnp.bfloat16)

    wo = params["wo"].astype(jnp.bfloat16)
    w1 = params["w1"].astype(jnp.bfloat16)
    w2 = params["w2"].astype(jnp.bfloat16)
    fc1w = params["fc1w"].astype(jnp.bfloat16)

    slab = jnp.zeros((SLAB_ROWS, D_FF), jnp.float32)

    def put(s, row, vec):
        vec = jnp.asarray(vec, jnp.float32).reshape(-1)
        return s.at[row, :vec.shape[0]].set(vec)

    slab = put(slab, ROW_BQ, params["bq"])
    slab = put(slab, ROW_BK, params["bk"])
    slab = put(slab, ROW_BV, params["bv"])
    slab = put(slab, ROW_BO, params["bo"])
    slab = put(slab, ROW_LN1W, params["ln1w"])
    slab = put(slab, ROW_LN1B, params["ln1b"])
    slab = put(slab, ROW_LN2W, params["ln2w"])
    slab = put(slab, ROW_LN2B, params["ln2b"])
    slab = put(slab, ROW_B2, params["b2"])
    slab = put(slab, ROW_FC1B, params["fc1b"])
    slab = put(slab, ROW_FC2W, params["fc2w"])
    slab = put(slab, ROW_FC2B, params["fc2b"])
    slab = put(slab, ROW_B1, params["b1"])

    return (wqkv, wo, w1, w2, fc1w, slab)


def _pick_groups_per_step(g, n, target_rows=256):
    """Largest divisor of g such that the per-step row tile is legal and
    <= target_rows (amortizes the ~0.35us per-grid-step overhead)."""
    best = None
    for d in range(1, g + 1):
        if g % d:
            continue
        legal = (d == g) or ((d * n) % 8 == 0)   # (8,128) sublane rule
        if not legal:
            continue
        if d * n <= target_rows and (best is None or d > best):
            best = d
    return best if best is not None else g


def ad_classifier_forward_grouped(x, kernel_params, *, groups_per_step=None):
    """x: (G, N, C, H, W) -- G independent ADClassifier forwards, batch N each.

    Attention mixes rows only within each group of N rows, matching G
    separate calls of the PyTorch module. Returns (G, N, 1).
    """
    g_total, n = x.shape[0], x.shape[1]
    xf = x.reshape(g_total * n, -1).astype(jnp.float32)          # nn.Flatten()
    assert xf.shape[1] == D_MODEL, "flattened feature size must equal d_model=400"

    if groups_per_step is None:
        groups_per_step = _pick_groups_per_step(g_total, n)
    assert g_total % groups_per_step == 0
    rows_per_step = groups_per_step * n
    num_steps = g_total // groups_per_step
    if num_steps > 1:
        assert rows_per_step % 8 == 0, "row tile must be a multiple of 8"

    wqkv, wo, w1, w2, fc1w, slab = kernel_params

    # block-diagonal additive mask: 0 within a group, -1e30 across groups
    gid = jnp.arange(rows_per_step, dtype=jnp.int32) // n
    mask = jnp.where(gid[:, None] == gid[None, :], 0.0, -1e30).astype(jnp.float32)

    const = lambda g: (0, 0)   # constant block index -> no re-DMA across steps
    in_specs = [
        pl.BlockSpec((rows_per_step, D_MODEL), lambda g: (g, 0)),      # x
        pl.BlockSpec((rows_per_step, rows_per_step), const),           # mask
        pl.BlockSpec((D_MODEL, QKV_COLS), const),                      # wqkv
        pl.BlockSpec((D_MODEL, D_MODEL), const),                       # wo
        pl.BlockSpec((D_MODEL, D_FF), const),                          # w1
        pl.BlockSpec((D_FF, D_MODEL), const),                          # w2
        pl.BlockSpec((D_MODEL, D_MODEL), const),                       # fc1w
        pl.BlockSpec((SLAB_ROWS, D_FF), const),                        # slab
    ]
    out_specs = pl.BlockSpec((rows_per_step, 1), lambda g: (g, 0))

    # advisory cost estimate for XLA scheduling around the custom call
    total_rows = g_total * n
    weight_bytes = 2 * (D_MODEL * QKV_COLS + 2 * D_MODEL * D_MODEL
                        + 2 * D_MODEL * D_FF)
    bytes_accessed = (weight_bytes + SLAB_ROWS * D_FF * 4
                      + rows_per_step * rows_per_step * 4
                      + total_rows * D_MODEL * 4 + total_rows * 4)
    flops = 2 * total_rows * (D_MODEL * QKV_COLS + 2 * D_MODEL * D_MODEL
                              + 2 * D_MODEL * D_FF + D_MODEL)
    flops += 4 * total_rows * rows_per_step * D_MODEL
    transcendentals = total_rows * rows_per_step + 3 * total_rows

    out = pl.pallas_call(
        ad_classifier_kernel,
        out_shape=jax.ShapeDtypeStruct((total_rows, 1), jnp.float32),
        grid_spec=pltpu.PrefetchScalarGridSpec(
            num_scalar_prefetch=0,
            grid=(num_steps,),
            in_specs=in_specs,
            out_specs=out_specs),
        compiler_params=pltpu.CompilerParams(
            # "parallel": v7x megacore splits the grid across both TCs;
            # harmless no-op on single-core v5e/v6e.
            dimension_semantics=("parallel",),
            # double-buffered bf16 weights ~12 MiB + tiny tiles: safe on every
            # generation including v7x (64 MiB physical VMEM).
            vmem_limit_bytes=32 * 1024 * 1024),
        cost_estimate=pl.CostEstimate(
            flops=int(flops),
            transcendentals=int(transcendentals),
            bytes_accessed=int(bytes_accessed)),
    )(xf, mask, wqkv, wo, w1, w2, fc1w, slab)

    return out.reshape(g_total, n, 1)


def ad_classifier_forward(x_nchw, kernel_params):
    """Single PyTorch-module forward: attention mixes all N rows of the batch."""
    n = x_nchw.shape[0]
    out = ad_classifier_forward_grouped(x_nchw[None], kernel_params,
                                        groups_per_step=1)
    return out.reshape(n, 1)


def reference_forward_group(xg, params):
    """Pure-JAX f32 reference for one PyTorch forward on a flattened (N, 400)."""
    def lin(a, w, b):
        return a @ w + b

    q = lin(xg, params["wq"], params["bq"])
    k = lin(xg, params["wk"], params["bk"])
    v = lin(xg, params["wv"], params["bv"])
    s = (q @ k.T) * (1.0 / math.sqrt(D_MODEL))
    p = jax.nn.softmax(s, axis=-1)
    attn = lin(p @ v, params["wo"], params["bo"])
    h = _layer_norm(xg + attn, params["ln1w"], params["ln1b"])
    f = jnp.maximum(lin(h, params["w1"], params["b1"]), 0.0)
    f = lin(f, params["w2"], params["b2"])
    h = _layer_norm(h + f, params["ln2w"], params["ln2b"])
    y = jnp.maximum(lin(h, params["fc1w"], params["fc1b"]), 0.0)
    z = y @ params["fc2w"].reshape(-1, 1) + params["fc2b"]
    return jax.nn.sigmoid(z)


if __name__ == "__main__":
    key = jax.random.PRNGKey(0)
    kx, kp = jax.random.split(key)

    # 8 independent inferences; each is an (8, 4, 10, 10) NCHW batch that
    # flattens to (8, 400) = d_model. Attention mixes rows within each batch.
    G, N = 8, 8
    x = jax.random.normal(kx, (G, N, 4, 10, 10), dtype=jnp.float32)

    params = init_params(kp)
    kernel_params = prepare_params(params)   # one-time bf16 cast / packing

    # grid=(4,): 2 groups (16 rows) per step, weights VMEM-resident across steps
    fwd = jax.jit(functools.partial(ad_classifier_forward_grouped,
                                    groups_per_step=2))
    out = fwd(x, kernel_params)
    jax.block_until_ready(out)

    assert out.shape == (G, N, 1) and out.dtype == jnp.float32
    assert bool(jnp.all(jnp.isfinite(out)))
    assert bool(jnp.all((out >= 0.0) & (out <= 1.0)))

    # pure-JAX f32 reference, one group per PyTorch forward call
    xf = x.reshape(G, N, -1).astype(jnp.float32)
    ref = jax.vmap(lambda xg: reference_forward_group(xg, params))(xf)
    max_err = float(jnp.max(jnp.abs(out - ref)))
    assert max_err < 3e-2, f"kernel/reference mismatch: max|diff| = {max_err}"

    # single-module-forward entry point (grid=(1,), whole batch attends)
    out1 = jax.jit(ad_classifier_forward)(x[0], kernel_params)
    jax.block_until_ready(out1)
    assert out1.shape == (N, 1) and out1.dtype == jnp.float32
    max_err1 = float(jnp.max(jnp.abs(out1 - ref[0])))
    assert max_err1 < 3e-2, f"single-forward mismatch: max|diff| = {max_err1}"

    print("KERNEL_OK")
</pallas_src>

<mosaic_0001>
module attributes {stable_mosaic.version = 11 : i64} {
  func.func @ad_classifier_kernel(%arg0: i32, %arg1: memref<16x400xf32, #tpu.memory_space<vmem>>, %arg2: memref<16x16xf32, #tpu.memory_space<vmem>>, %arg3: memref<400x1536xbf16, #tpu.memory_space<vmem>>, %arg4: memref<400x400xbf16, #tpu.memory_space<vmem>>, %arg5: memref<400x2048xbf16, #tpu.memory_space<vmem>>, %arg6: memref<2048x400xbf16, #tpu.memory_space<vmem>>, %arg7: memref<400x400xbf16, #tpu.memory_space<vmem>>, %arg8: memref<16x2048xf32, #tpu.memory_space<vmem>>, %arg9: memref<16x1xf32, #tpu.memory_space<vmem>>) attributes {dimension_semantics = [#tpu.dimension_semantics<parallel>], iteration_bounds = array<i64: 4>, scalar_prefetch = 0 : i64, scratch_operands = 0 : i64, tpu.core_type = #tpu.core_type<tc>, window_params = [{transform_indices = @transform_0, window_bounds = array<i64: 16, 400>}, {pipeline_mode = #tpu.pipeline_mode<synchronous>, transform_indices = @transform_1, window_bounds = array<i64: 16, 16>}, {pipeline_mode = #tpu.pipeline_mode<synchronous>, transform_indices = @transform_2, window_bounds = array<i64: 400, 1536>}, {pipeline_mode = #tpu.pipeline_mode<synchronous>, transform_indices = @transform_3, window_bounds = array<i64: 400, 400>}, {pipeline_mode = #tpu.pipeline_mode<synchronous>, transform_indices = @transform_4, window_bounds = array<i64: 400, 2048>}, {pipeline_mode = #tpu.pipeline_mode<synchronous>, transform_indices = @transform_5, window_bounds = array<i64: 2048, 400>}, {pipeline_mode = #tpu.pipeline_mode<synchronous>, transform_indices = @transform_6, window_bounds = array<i64: 400, 400>}, {pipeline_mode = #tpu.pipeline_mode<synchronous>, transform_indices = @transform_7, window_bounds = array<i64: 16, 2048>}, {transform_indices = @transform_8, window_bounds = array<i64: 16, 1>}]} {
    %c0 = arith.constant 0 : index
    %c0_0 = arith.constant 0 : index
    %0 = vector.load %arg1[%c0, %c0_0] : memref<16x400xf32, #tpu.memory_space<vmem>>, vector<16x400xf32>
    %c0_1 = arith.constant 0 : index
    %c0_2 = arith.constant 0 : index
    %1 = vector.load %arg2[%c0_1, %c0_2] : memref<16x16xf32, #tpu.memory_space<vmem>>, vector<16x16xf32>
    %c0_3 = arith.constant 0 : index
    %c0_4 = arith.constant 0 : index
    %2 = vector.load %arg8[%c0_3, %c0_4] : memref<16x2048xf32, #tpu.memory_space<vmem>>, vector<16x2048xf32>
    %3 = vector.extract_strided_slice %2 {offsets = [0, 0], sizes = [1, 400], strides = [1, 1]} : vector<16x2048xf32> to vector<1x400xf32>
    %4 = vector.extract_strided_slice %2 {offsets = [1, 0], sizes = [1, 400], strides = [1, 1]} : vector<16x2048xf32> to vector<1x400xf32>
    %5 = vector.extract_strided_slice %2 {offsets = [2, 0], sizes = [1, 400], strides = [1, 1]} : vector<16x2048xf32> to vector<1x400xf32>
    %6 = vector.extract_strided_slice %2 {offsets = [3, 0], sizes = [1, 400], strides = [1, 1]} : vector<16x2048xf32> to vector<1x400xf32>
    %7 = vector.extract_strided_slice %2 {offsets = [4, 0], sizes = [1, 400], strides = [1, 1]} : vector<16x2048xf32> to vector<1x400xf32>
    %8 = vector.extract_strided_slice %2 {offsets = [5, 0], sizes = [1, 400], strides = [1, 1]} : vector<16x2048xf32> to vector<1x400xf32>
    %9 = vector.extract_strided_slice %2 {offsets = [6, 0], sizes = [1, 400], strides = [1, 1]} : vector<16x2048xf32> to vector<1x400xf32>
    %10 = vector.extract_strided_slice %2 {offsets = [7, 0], sizes = [1, 400], strides = [1, 1]} : vector<16x2048xf32> to vector<1x400xf32>
    %11 = vector.extract_strided_slice %2 {offsets = [8, 0], sizes = [1, 400], strides = [1, 1]} : vector<16x2048xf32> to vector<1x400xf32>
    %12 = vector.extract_strided_slice %2 {offsets = [9, 0], sizes = [1, 400], strides = [1, 1]} : vector<16x2048xf32> to vector<1x400xf32>
    %13 = vector.extract_strided_slice %2 {offsets = [10, 0], sizes = [1, 400], strides = [1, 1]} : vector<16x2048xf32> to vector<1x400xf32>
    %14 = vector.extract_strided_slice %2 {offsets = [11, 0], sizes = [1, 1], strides = [1, 1]} : vector<16x2048xf32> to vector<1x1xf32>
    %15 = vector.extract_strided_slice %2 {offsets = [12, 0], sizes = [1, 2048], strides = [1, 1]} : vector<16x2048xf32> to vector<1x2048xf32>
    %16 = arith.truncf %0 : vector<16x400xf32> to vector<16x400xbf16>
    %c0_5 = arith.constant 0 : index
    %c0_6 = arith.constant 0 : index
    %17 = vector.load %arg3[%c0_5, %c0_6] : memref<400x1536xbf16, #tpu.memory_space<vmem>>, vector<400x1536xbf16>
    %cst = arith.constant dense<0.000000e+00> : vector<16x1536xf32>
    %18 = tpu.matmul %16, %17, %cst {dimension_numbers = #tpu.dot_dimension_numbers<[1], [0], [0], [1], [0, 0, 1, 1], [], []>} : vector<16x400xbf16>, vector<400x1536xbf16>, vector<16x1536xf32> -> vector<16x1536xf32>
    %19 = vector.extract_strided_slice %18 {offsets = [0, 0], sizes = [16, 400], strides = [1, 1]} : vector<16x1536xf32> to vector<16x400xf32>
    %20 = vector.broadcast %3 : vector<1x400xf32> to vector<16x400xf32>
    %21 = arith.addf %19, %20 : vector<16x400xf32>
    %22 = vector.extract_strided_slice %18 {offsets = [0, 512], sizes = [16, 400], strides = [1, 1]} : vector<16x1536xf32> to vector<16x400xf32>
    %23 = vector.broadcast %4 : vector<1x400xf32> to vector<16x400xf32>
    %24 = arith.addf %22, %23 : vector<16x400xf32>
    %25 = vector.extract_strided_slice %18 {offsets = [0, 1024], sizes = [16, 400], strides = [1, 1]} : vector<16x1536xf32> to vector<16x400xf32>
    %26 = vector.broadcast %5 : vector<1x400xf32> to vector<16x400xf32>
    %27 = arith.addf %25, %26 : vector<16x400xf32>
    %cst_7 = arith.constant dense<0.000000e+00> : vector<16x16xf32>
    %28 = tpu.matmul %21, %24, %cst_7 {dimension_numbers = #tpu.dot_dimension_numbers<[1], [1], [0], [0], [0, 0, 1, 0], [], []>} : vector<16x400xf32>, vector<16x400xf32>, vector<16x16xf32> -> vector<16x16xf32>
    %cst_8 = arith.constant 5.000000e-02 : f32
    %29 = vector.broadcast %cst_8 : f32 to vector<16x16xf32>
    %30 = arith.mulf %28, %29 : vector<16x16xf32>
    %31 = arith.addf %30, %1 : vector<16x16xf32>
    %cst_9 = arith.constant dense<0xFF800000> : vector<16xf32>
    %32 = vector.multi_reduction <maximumf>, %31, %cst_9 [1] : vector<16x16xf32> to vector<16xf32>
    %33 = vector.shape_cast %32 : vector<16xf32> to vector<16x1xf32>
    %34 = vector.broadcast %33 : vector<16x1xf32> to vector<16x16xf32>
    %35 = arith.subf %31, %34 : vector<16x16xf32>
    %36 = math.exp %35 : vector<16x16xf32>
    %cst_10 = arith.constant dense<0.000000e+00> : vector<16xf32>
    %37 = vector.multi_reduction <add>, %36, %cst_10 [1] : vector<16x16xf32> to vector<16xf32>
    %38 = vector.shape_cast %37 : vector<16xf32> to vector<16x1xf32>
    %39 = vector.broadcast %38 : vector<16x1xf32> to vector<16x16xf32>
    %40 = arith.divf %36, %39 : vector<16x16xf32>
    %cst_11 = arith.constant dense<0.000000e+00> : vector<16x400xf32>
    %41 = tpu.matmul %40, %27, %cst_11 {dimension_numbers = #tpu.dot_dimension_numbers<[1], [0], [0], [1], [0, 0, 1, 1], [], []>} : vector<16x16xf32>, vector<16x400xf32>, vector<16x400xf32> -> vector<16x400xf32>
    %42 = arith.truncf %41 : vector<16x400xf32> to vector<16x400xbf16>
    %c0_12 = arith.constant 0 : index
    %c0_13 = arith.constant 0 : index
    %43 = vector.load %arg4[%c0_12, %c0_13] : memref<400x400xbf16, #tpu.memory_space<vmem>>, vector<400x400xbf16>
    %cst_14 = arith.constant dense<0.000000e+00> : vector<16x400xf32>
    %44 = tpu.matmul %42, %43, %cst_14 {dimension_numbers = #tpu.dot_dimension_numbers<[1], [0], [0], [1], [0, 0, 1, 1], [], []>} : vector<16x400xbf16>, vector<400x400xbf16>, vector<16x400xf32> -> vector<16x400xf32>
    %45 = vector.broadcast %6 : vector<1x400xf32> to vector<16x400xf32>
    %46 = arith.addf %44, %45 : vector<16x400xf32>
    %47 = arith.addf %0, %46 : vector<16x400xf32>
    %cst_15 = arith.constant dense<0.000000e+00> : vector<16xf32>
    %48 = vector.multi_reduction <add>, %47, %cst_15 [1] : vector<16x400xf32> to vector<16xf32>
    %49 = vector.shape_cast %48 : vector<16xf32> to vector<16x1xf32>
    %cst_16 = arith.constant 4.000000e+02 : f32
    %50 = vector.broadcast %cst_16 : f32 to vector<16x1xf32>
    %51 = arith.divf %49, %50 : vector<16x1xf32>
    %52 = vector.broadcast %51 : vector<16x1xf32> to vector<16x400xf32>
    %53 = arith.subf %47, %52 : vector<16x400xf32>
    %54 = arith.mulf %53, %53 : vector<16x400xf32>
    %cst_17 = arith.constant dense<0.000000e+00> : vector<16xf32>
    %55 = vector.multi_reduction <add>, %54, %cst_17 [1] : vector<16x400xf32> to vector<16xf32>
    %56 = vector.shape_cast %55 : vector<16xf32> to vector<16x1xf32>
    %cst_18 = arith.constant 4.000000e+02 : f32
    %57 = vector.broadcast %cst_18 : f32 to vector<16x1xf32>
    %58 = arith.divf %56, %57 : vector<16x1xf32>
    %59 = vector.broadcast %51 : vector<16x1xf32> to vector<16x400xf32>
    %60 = arith.subf %47, %59 : vector<16x400xf32>
    %cst_19 = arith.constant 9.99999974E-6 : f32
    %61 = vector.broadcast %cst_19 : f32 to vector<16x1xf32>
    %62 = arith.addf %58, %61 : vector<16x1xf32>
    %63 = math.rsqrt %62 : vector<16x1xf32>
    %64 = vector.broadcast %63 : vector<16x1xf32> to vector<16x400xf32>
    %65 = arith.mulf %60, %64 : vector<16x400xf32>
    %66 = vector.broadcast %7 : vector<1x400xf32> to vector<16x400xf32>
    %67 = arith.mulf %65, %66 : vector<16x400xf32>
    %68 = vector.broadcast %8 : vector<1x400xf32> to vector<16x400xf32>
    %69 = arith.addf %67, %68 : vector<16x400xf32>
    %70 = arith.truncf %69 : vector<16x400xf32> to vector<16x400xbf16>
    %c0_20 = arith.constant 0 : index
    %c0_21 = arith.constant 0 : index
    %71 = vector.load %arg5[%c0_20, %c0_21] : memref<400x2048xbf16, #tpu.memory_space<vmem>>, vector<400x2048xbf16>
    %cst_22 = arith.constant dense<0.000000e+00> : vector<16x2048xf32>
    %72 = tpu.matmul %70, %71, %cst_22 {dimension_numbers = #tpu.dot_dimension_numbers<[1], [0], [0], [1], [0, 0, 1, 1], [], []>} : vector<16x400xbf16>, vector<400x2048xbf16>, vector<16x2048xf32> -> vector<16x2048xf32>
    %73 = vector.broadcast %15 : vector<1x2048xf32> to vector<16x2048xf32>
    %74 = arith.addf %72, %73 : vector<16x2048xf32>
    %cst_23 = arith.constant 0.000000e+00 : f32
    %75 = vector.broadcast %cst_23 : f32 to vector<16x2048xf32>
    %76 = arith.maximumf %74, %75 : vector<16x2048xf32>
    %77 = arith.truncf %76 : vector<16x2048xf32> to vector<16x2048xbf16>
    %c0_24 = arith.constant 0 : index
    %c0_25 = arith.constant 0 : index
    %78 = vector.load %arg6[%c0_24, %c0_25] : memref<2048x400xbf16, #tpu.memory_space<vmem>>, vector<2048x400xbf16>
    %cst_26 = arith.constant dense<0.000000e+00> : vector<16x400xf32>
    %79 = tpu.matmul %77, %78, %cst_26 {dimension_numbers = #tpu.dot_dimension_numbers<[1], [0], [0], [1], [0, 0, 1, 1], [], []>} : vector<16x2048xbf16>, vector<2048x400xbf16>, vector<16x400xf32> -> vector<16x400xf32>
    %80 = vector.broadcast %11 : vector<1x400xf32> to vector<16x400xf32>
    %81 = arith.addf %79, %80 : vector<16x400xf32>
    %82 = arith.addf %69, %81 : vector<16x400xf32>
    %cst_27 = arith.constant dense<0.000000e+00> : vector<16xf32>
    %83 = vector.multi_reduction <add>, %82, %cst_27 [1] : vector<16x400xf32> to vector<16xf32>
    %84 = vector.shape_cast %83 : vector<16xf32> to vector<16x1xf32>
    %cst_28 = arith.constant 4.000000e+02 : f32
    %85 = vector.broadcast %cst_28 : f32 to vector<16x1xf32>
    %86 = arith.divf %84, %85 : vector<16x1xf32>
    %87 = vector.broadcast %86 : vector<16x1xf32> to vector<16x400xf32>
    %88 = arith.subf %82, %87 : vector<16x400xf32>
    %89 = arith.mulf %88, %88 : vector<16x400xf32>
    %cst_29 = arith.constant dense<0.000000e+00> : vector<16xf32>
    %90 = vector.multi_reduction <add>, %89, %cst_29 [1] : vector<16x400xf32> to vector<16xf32>
    %91 = vector.shape_cast %90 : vector<16xf32> to vector<16x1xf32>
    %cst_30 = arith.constant 4.000000e+02 : f32
    %92 = vector.broadcast %cst_30 : f32 to vector<16x1xf32>
    %93 = arith.divf %91, %92 : vector<16x1xf32>
    %94 = vector.broadcast %86 : vector<16x1xf32> to vector<16x400xf32>
    %95 = arith.subf %82, %94 : vector<16x400xf32>
    %cst_31 = arith.constant 9.99999974E-6 : f32
    %96 = vector.broadcast %cst_31 : f32 to vector<16x1xf32>
    %97 = arith.addf %93, %96 : vector<16x1xf32>
    %98 = math.rsqrt %97 : vector<16x1xf32>
    %99 = vector.broadcast %98 : vector<16x1xf32> to vector<16x400xf32>
    %100 = arith.mulf %95, %99 : vector<16x400xf32>
    %101 = vector.broadcast %9 : vector<1x400xf32> to vector<16x400xf32>
    %102 = arith.mulf %100, %101 : vector<16x400xf32>
    %103 = vector.broadcast %10 : vector<1x400xf32> to vector<16x400xf32>
    %104 = arith.addf %102, %103 : vector<16x400xf32>
    %105 = arith.truncf %104 : vector<16x400xf32> to vector<16x400xbf16>
    %c0_32 = arith.constant 0 : index
    %c0_33 = arith.constant 0 : index
    %106 = vector.load %arg7[%c0_32, %c0_33] : memref<400x400xbf16, #tpu.memory_space<vmem>>, vector<400x400xbf16>
    %cst_34 = arith.constant dense<0.000000e+00> : vector<16x400xf32>
    %107 = tpu.matmul %105, %106, %cst_34 {dimension_numbers = #tpu.dot_dimension_numbers<[1], [0], [0], [1], [0, 0, 1, 1], [], []>} : vector<16x400xbf16>, vector<400x400xbf16>, vector<16x400xf32> -> vector<16x400xf32>
    %108 = vector.broadcast %12 : vector<1x400xf32> to vector<16x400xf32>
    %109 = arith.addf %107, %108 : vector<16x400xf32>
    %cst_35 = arith.constant 0.000000e+00 : f32
    %110 = vector.broadcast %cst_35 : f32 to vector<16x400xf32>
    %111 = arith.maximumf %109, %110 : vector<16x400xf32>
    %112 = vector.broadcast %13 : vector<1x400xf32> to vector<16x400xf32>
    %113 = arith.mulf %111, %112 : vector<16x400xf32>
    %cst_36 = arith.constant dense<0.000000e+00> : vector<16xf32>
    %114 = vector.multi_reduction <add>, %113, %cst_36 [1] : vector<16x400xf32> to vector<16xf32>
    %115 = vector.shape_cast %114 : vector<16xf32> to vector<16x1xf32>
    %116 = vector.broadcast %14 : vector<1x1xf32> to vector<16x1xf32>
    %117 = arith.addf %115, %116 : vector<16x1xf32>
    %cst_37 = arith.constant 5.000000e-01 : f32
    %118 = vector.broadcast %cst_37 : f32 to vector<16x1xf32>
    %119 = arith.mulf %118, %117 : vector<16x1xf32>
    %120 = math.tanh %119 : vector<16x1xf32>
    %cst_38 = arith.constant 1.000000e+00 : f32
    %121 = vector.broadcast %cst_38 : f32 to vector<16x1xf32>
    %122 = arith.addf %120, %121 : vector<16x1xf32>
    %cst_39 = arith.constant 5.000000e-01 : f32
    %123 = vector.broadcast %cst_39 : f32 to vector<16x1xf32>
    %124 = arith.mulf %123, %122 : vector<16x1xf32>
    %c0_40 = arith.constant 0 : index
    %c0_41 = arith.constant 0 : index
    %125 = vector.load %arg9[%c0_40, %c0_41] : memref<16x1xf32, #tpu.memory_space<vmem>>, vector<16x1xf32>
    tpu.vector_store %arg9[%c0_40, %c0_41], %124 {strides = array<i32>} : memref<16x1xf32, #tpu.memory_space<vmem>>, vector<16x1xf32>,
    return
  }
  func.func @transform_0(%arg0: i32) -> (i32, i32) {
    %c0_i32 = arith.constant 0 : i32
    %c0_i32_0 = arith.constant 0 : i32
    return %arg0, %c0_i32 : i32, i32
  }
  func.func @transform_1(%arg0: i32) -> (i32, i32) {
    %c0_i32 = arith.constant 0 : i32
    %c0_i32_0 = arith.constant 0 : i32
    %c0_i32_1 = arith.constant 0 : i32
    return %c0_i32, %c0_i32_0 : i32, i32
  }
  func.func @transform_2(%arg0: i32) -> (i32, i32) {
    %c0_i32 = arith.constant 0 : i32
    %c0_i32_0 = arith.constant 0 : i32
    %c0_i32_1 = arith.constant 0 : i32
    return %c0_i32, %c0_i32_0 : i32, i32
  }
  func.func @transform_3(%arg0: i32) -> (i32, i32) {
    %c0_i32 = arith.constant 0 : i32
    %c0_i32_0 = arith.constant 0 : i32
    %c0_i32_1 = arith.constant 0 : i32
    return %c0_i32, %c0_i32_0 : i32, i32
  }
  func.func @transform_4(%arg0: i32) -> (i32, i32) {
    %c0_i32 = arith.constant 0 : i32
    %c0_i32_0 = arith.constant 0 : i32
    %c0_i32_1 = arith.constant 0 : i32
    return %c0_i32, %c0_i32_0 : i32, i32
  }
  func.func @transform_5(%arg0: i32) -> (i32, i32) {
    %c0_i32 = arith.constant 0 : i32
    %c0_i32_0 = arith.constant 0 : i32
    %c0_i32_1 = arith.constant 0 : i32
    return %c0_i32, %c0_i32_0 : i32, i32
  }
  func.func @transform_6(%arg0: i32) -> (i32, i32) {
    %c0_i32 = arith.constant 0 : i32
    %c0_i32_0 = arith.constant 0 : i32
    %c0_i32_1 = arith.constant 0 : i32
    return %c0_i32, %c0_i32_0 : i32, i32
  }
  func.func @transform_7(%arg0: i32) -> (i32, i32) {
    %c0_i32 = arith.constant 0 : i32
    %c0_i32_0 = arith.constant 0 : i32
    %c0_i32_1 = arith.constant 0 : i32
    return %c0_i32, %c0_i32_0 : i32, i32
  }
  func.func @transform_8(%arg0: i32) -> (i32, i32) {
    %c0_i32 = arith.constant 0 : i32
    %c0_i32_0 = arith.constant 0 : i32
    return %arg0, %c0_i32 : i32, i32
  }
}

</mosaic_0001>

<llo_original>
// kernel: ad_classifier_forward_grouped.1
$region0: #{ad_classifier_forward_grouped.1}
  #allocation0 [shape = 'u32[]', space=smem, size = 0x4, offset = 0x4, fixed_abs, tag = 'smem constant byte address 0x4 - core index']
  #allocation1 [shape = 'u32[72,128]{1,0:T(1,128)}', space=vmem, size = 0x9000, scoped, tag = 'internal scratch']
  %s0 = inlined_call_operand.vmem [shape: f32[64,400], index: 0, kind: input, shape index: {}]
  %s1 = inlined_call_operand.vmem [shape: f32[16,16], index: 1, kind: input, shape index: {}]
  %s2 = inlined_call_operand.vmem [shape: bf16[400,1536], index: 2, kind: input, shape index: {}]
  %s3 = inlined_call_operand.vmem [shape: bf16[400,400], index: 3, kind: input, shape index: {}]
  %s4 = inlined_call_operand.vmem [shape: bf16[400,2048], index: 4, kind: input, shape index: {}]
  %s5 = inlined_call_operand.vmem [shape: bf16[2048,400], index: 5, kind: input, shape index: {}]
  %s6 = inlined_call_operand.vmem [shape: bf16[400,400], index: 6, kind: input, shape index: {}]
  %s7 = inlined_call_operand.vmem [shape: f32[16,2048], index: 7, kind: input, shape index: {}]
  %s8 = inlined_call_operand.vmem [shape: f32[64,1], index: 8, kind: output, shape index: {}]
  %s9 = sld [smem:[#allocation0]]
  $region65: #{ad_classifier_forward_grouped.1} parent=0
    _
  %s11 = ssub.s32 1, %s9
  %s12 = scalar_select 0, %s11, %s9
  loop: start=0, step=1, limit=6
  $region2: #{ad_classifier_forward_grouped.1} parent=0 // loop_pre_header
    _
  $region3: #{ad_classifier_forward_grouped.1} parent=0 // loop_header
    %s14 = sphi 0, %s18
    %p15 = scmp.ge.s32.totalorder %s14, 6
    %s24 = sphi 0, %s26
    %s27 = sphi 0, %s24
    %s28 = sphi 0, %s27
    %s44 = sphi 0, %s28
    %s48 = sphi 0, %s48
    %s50 = sphi 0, %s48
    %s51 = sphi 0, %s50
    %s65 = sphi 0, %s51
    %s69 = sphi 0, %s69
    %s71 = sphi 0, %s69
    %s72 = sphi 0, %s71
    %s86 = sphi 0, %s72
    %s90 = sphi 0, %s90
    %s92 = sphi 0, %s90
    %s93 = sphi 0, %s92
    %s107 = sphi 0, %s93
    %s111 = sphi 0, %s111
    %s113 = sphi 0, %s111
    %s114 = sphi 0, %s113
    %s128 = sphi 0, %s114
    %s132 = sphi 0, %s132
    %s134 = sphi 0, %s132
    %s135 = sphi 0, %s134
    %s149 = sphi 0, %s135
    %s153 = sphi 0, %s153
    %s155 = sphi 0, %s153
    %s156 = sphi 0, %s155
    %s170 = sphi 0, %s156
    %s174 = sphi 0, %s174
    %s176 = sphi 0, %s174
    %s177 = sphi 0, %s176
    %s191 = sphi 0, %s177
    %s197 = sphi 0, %s199
    %s200 = sphi 0, %s197
    %s201 = sphi 0, %s200
    %s217 = sphi 0, %s201
  $region4: #{ad_classifier_forward_grouped.1} parent=0 // loop_header_branch
    %17 = sbr.rel (%p15) target = $region8
  $region5: #{ad_classifier_forward_grouped.1} parent=0 // loop_body
    %s19 = ssub.s32 %s14, 1
    %s20 = ssub.s32 %s14, 2
    %s21 = sadd.s32 %s14, 1
    %s22 = ssub.s32 %s14, %s21
    %p23 = scmp.eq.s32.totalorder %s22, 0
    %s25 = sadd.s32 %s24, 1
    %s26 = scalar_select %p23, %s24, %s25
    %p29 = pneg %p23
    %p30 = scmp.eq.s32.totalorder %s14, 3
    %p31 = por %p29, %p30
    %p32 = scmp.ne.s32.totalorder %s24, %s27
    %p33 = scmp.eq.s32.totalorder %s14, 0
    %p34 = por %p32, %p33
    %p35 = scmp.ne.s32.totalorder %s24, %s27
    %p36 = scmp.eq.s32.totalorder %s19, 3
    %p37 = por %p35, %p36
    %p38 = scmp.ne.s32.totalorder %s27, %s28
    %p39 = scmp.eq.s32.totalorder %s19, 0
    %p40 = por %p38, %p39
    %p41 = scmp.ne.s32.totalorder %s27, %s28
    %p42 = scmp.eq.s32.totalorder %s20, 3
    %p43 = por %p41, %p42
    %p45 = scmp.ne.s32.totalorder %s28, %s44
    %p46 = scmp.eq.s32.totalorder %s20, 0
    %p47 = por %p45, %p46
    %s49 = sadd.s32 %s48, 1
    %p52 = scmp.eq.s32.totalorder %s14, 3
    %p53 = scmp.ne.s32.totalorder %s48, %s50
    %p54 = scmp.eq.s32.totalorder %s14, 0
    %p55 = por %p53, %p54
    %p56 = scmp.ne.s32.totalorder %s48, %s50
    %p57 = scmp.eq.s32.totalorder %s19, 3
    %p58 = por %p56, %p57
    %p59 = scmp.ne.s32.totalorder %s50, %s51
    %p60 = scmp.eq.s32.totalorder %s19, 0
    %p61 = por %p59, %p60
    %p62 = scmp.ne.s32.totalorder %s50, %s51
    %p63 = scmp.eq.s32.totalorder %s20, 3
    %p64 = por %p62, %p63
    %p66 = scmp.ne.s32.totalorder %s51, %s65
    %p67 = scmp.eq.s32.totalorder %s20, 0
    %p68 = por %p66, %p67
    %s70 = sadd.s32 %s69, 1
    %p73 = scmp.eq.s32.totalorder %s14, 3
    %p74 = scmp.ne.s32.totalorder %s69, %s71
    %p75 = scmp.eq.s32.totalorder %s14, 0
    %p76 = por %p74, %p75
    %p77 = scmp.ne.s32.totalorder %s69, %s71
    %p78 = scmp.eq.s32.totalorder %s19, 3
    %p79 = por %p77, %p78
    %p80 = scmp.ne.s32.totalorder %s71, %s72
    %p81 = scmp.eq.s32.totalorder %s19, 0
    %p82 = por %p80, %p81
    %p83 = scmp.ne.s32.totalorder %s71, %s72
    %p84 = scmp.eq.s32.totalorder %s20, 3
    %p85 = por %p83, %p84
    %p87 = scmp.ne.s32.totalorder %s72, %s86
    %p88 = scmp.eq.s32.totalorder %s20, 0
    %p89 = por %p87, %p88
    %s91 = sadd.s32 %s90, 1
    %p94 = scmp.eq.s32.totalorder %s14, 3
    %p95 = scmp.ne.s32.totalorder %s90, %s92
    %p96 = scmp.eq.s32.totalorder %s14, 0
    %p97 = por %p95, %p96
    %p98 = scmp.ne.s32.totalorder %s90, %s92
    %p99 = scmp.eq.s32.totalorder %s19, 3
    %p100 = por %p98, %p99
    %p101 = scmp.ne.s32.totalorder %s92, %s93
    %p102 = scmp.eq.s32.totalorder %s19, 0
    %p103 = por %p101, %p102
    %p104 = scmp.ne.s32.totalorder %s92, %s93
    %p105 = scmp.eq.s32.totalorder %s20, 3
    %p106 = por %p104, %p105
    %p108 = scmp.ne.s32.totalorder %s93, %s107
    %p109 = scmp.eq.s32.totalorder %s20, 0
    %p110 = por %p108, %p109
    %s112 = sadd.s32 %s111, 1
    %p115 = scmp.eq.s32.totalorder %s14, 3
    %p116 = scmp.ne.s32.totalorder %s111, %s113
    %p117 = scmp.eq.s32.totalorder %s14, 0
    %p118 = por %p116, %p117
    %p119 = scmp.ne.s32.totalorder %s111, %s113
    %p120 = scmp.eq.s32.totalorder %s19, 3
    %p121 = por %p119, %p120
    %p122 = scmp.ne.s32.totalorder %s113, %s114
    %p123 = scmp.eq.s32.totalorder %s19, 0
    %p124 = por %p122, %p123
    %p125 = scmp.ne.s32.totalorder %s113, %s114
    %p126 = scmp.eq.s32.totalorder %s20, 3
    %p127 = por %p125, %p126
    %p129 = scmp.ne.s32.totalorder %s114, %s128
    %p130 = scmp.eq.s32.totalorder %s20, 0
    %p131 = por %p129, %p130
    %s133 = sadd.s32 %s132, 1
    %p136 = scmp.eq.s32.totalorder %s14, 3
    %p137 = scmp.ne.s32.totalorder %s132, %s134
    %p138 = scmp.eq.s32.totalorder %s14, 0
    %p139 = por %p137, %p138
    %p140 = scmp.ne.s32.totalorder %s132, %s134
    %p141 = scmp.eq.s32.totalorder %s19, 3
    %p142 = por %p140, %p141
    %p143 = scmp.ne.s32.totalorder %s134, %s135
    %p144 = scmp.eq.s32.totalorder %s19, 0
    %p145 = por %p143, %p144
    %p146 = scmp.ne.s32.totalorder %s134, %s135
    %p147 = scmp.eq.s32.totalorder %s20, 3
    %p148 = por %p146, %p147
    %p150 = scmp.ne.s32.totalorder %s135, %s149
    %p151 = scmp.eq.s32.totalorder %s20, 0
    %p152 = por %p150, %p151
    %s154 = sadd.s32 %s153, 1
    %p157 = scmp.eq.s32.totalorder %s14, 3
    %p158 = scmp.ne.s32.totalorder %s153, %s155
    %p159 = scmp.eq.s32.totalorder %s14, 0
    %p160 = por %p158, %p159
    %p161 = scmp.ne.s32.totalorder %s153, %s155
    %p162 = scmp.eq.s32.totalorder %s19, 3
    %p163 = por %p161, %p162
    %p164 = scmp.ne.s32.totalorder %s155, %s156
    %p165 = scmp.eq.s32.totalorder %s19, 0
    %p166 = por %p164, %p165
    %p167 = scmp.ne.s32.totalorder %s155, %s156
    %p168 = scmp.eq.s32.totalorder %s20, 3
    %p169 = por %p167, %p168
    %p171 = scmp.ne.s32.totalorder %s156, %s170
    %p172 = scmp.eq.s32.totalorder %s20, 0
    %p173 = por %p171, %p172
    %s175 = sadd.s32 %s174, 1
    %p178 = scmp.eq.s32.totalorder %s14, 3
    %p179 = scmp.ne.s32.totalorder %s174, %s176
    %p180 = scmp.eq.s32.totalorder %s14, 0
    %p181 = por %p179, %p180
    %p182 = scmp.ne.s32.totalorder %s174, %s176
    %p183 = scmp.eq.s32.totalorder %s19, 3
    %p184 = por %p182, %p183
    %p185 = scmp.ne.s32.totalorder %s176, %s177
    %p186 = scmp.eq.s32.totalorder %s19, 0
    %p187 = por %p185, %p186
    %p188 = scmp.ne.s32.totalorder %s176, %s177
    %p189 = scmp.eq.s32.totalorder %s20, 3
    %p190 = por %p188, %p189
    %p192 = scmp.ne.s32.totalorder %s177, %s191
    %p193 = scmp.eq.s32.totalorder %s20, 0
    %p194 = por %p192, %p193
    %s195 = ssub.s32 %s14, %s21
    %p196 = scmp.eq.s32.totalorder %s195, 0
    %s198 = sadd.s32 %s197, 1
    %s199 = scalar_select %p196, %s197, %s198
    %p202 = pneg %p196
    %p203 = scmp.eq.s32.totalorder %s14, 3
    %p204 = por %p202, %p203
    %p205 = scmp.ne.s32.totalorder %s197, %s200
    %p206 = scmp.eq.s32.totalorder %s14, 0
    %p207 = por %p205, %p206
    %p208 = scmp.ne.s32.totalorder %s197, %s200
    %p209 = scmp.eq.s32.totalorder %s19, 3
    %p210 = por %p208, %p209
    %p211 = scmp.ne.s32.totalorder %s200, %s201
    %p212 = scmp.eq.s32.totalorder %s19, 0
    %p213 = por %p211, %p212
    %p214 = scmp.ne.s32.totalorder %s200, %s201
    %p215 = scmp.eq.s32.totalorder %s20, 3
    %p216 = por %p214, %p215
    %p218 = scmp.ne.s32.totalorder %s201, %s217
    %p219 = scmp.eq.s32.totalorder %s20, 0
    %p220 = por %p218, %p219
    %p221 = scmp.le.s32.totalorder 1, %s14
    %p222 = scmp.lt.s32.totalorder %s14, 5
    %p223 = pnand %p221, %p222
    %p224 = pneg %p223
    // Predicated region
    $region9: #{ad_classifier_forward_grouped.1} parent=5 // pred_check
      _
    $region10: #{ad_classifier_forward_grouped.1} parent=5 // pred_check_branch
      %226 = sbr.rel (%p223) target = $region12
    $region11: #{ad_classifier_forward_grouped.1} parent=5 // pred_region
      %s227 = ssub.s32 %s14, 1
      // Predicated region
      $region13: #{ad_classifier_forward_grouped.1} parent=11 // pred_check
        %p228 = pneg %p61
      $region14: #{ad_classifier_forward_grouped.1} parent=11 // pred_check_branch
        %230 = sbr.rel (%p228) target = $region16
      $region15: #{ad_classifier_forward_grouped.1} parent=11 // pred_region
        _
      $region16: #{ad_classifier_forward_grouped.1} parent=11 // pred_fallthru
        _
      // Predicated region
      $region17: #{ad_classifier_forward_grouped.1} parent=11 // pred_check
        %p231 = pneg %p82
      $region18: #{ad_classifier_forward_grouped.1} parent=11 // pred_check_branch
        %233 = sbr.rel (%p231) target = $region20
      $region19: #{ad_classifier_forward_grouped.1} parent=11 // pred_region
        _
      $region20: #{ad_classifier_forward_grouped.1} parent=11 // pred_fallthru
        _
      // Predicated region
      $region21: #{ad_classifier_forward_grouped.1} parent=11 // pred_check
        %p234 = pneg %p103
      $region22: #{ad_classifier_forward_grouped.1} parent=11 // pred_check_branch
        %236 = sbr.rel (%p234) target = $region24
      $region23: #{ad_classifier_forward_grouped.1} parent=11 // pred_region
        _
      $region24: #{ad_classifier_forward_grouped.1} parent=11 // pred_fallthru
        _
      // Predicated region
      $region25: #{ad_classifier_forward_grouped.1} parent=11 // pred_check
        %p237 = pneg %p124
      $region26: #{ad_classifier_forward_grouped.1} parent=11 // pred_check_branch
        %239 = sbr.rel (%p237) target = $region28
      $region27: #{ad_classifier_forward_grouped.1} parent=11 // pred_region
        _
      $region28: #{ad_classifier_forward_grouped.1} parent=11 // pred_fallthru
        _
      // Predicated region
      $region29: #{ad_classifier_forward_grouped.1} parent=11 // pred_check
        %p240 = pneg %p145
      $region30: #{ad_classifier_forward_grouped.1} parent=11 // pred_check_branch
        %242 = sbr.rel (%p240) target = $region32
      $region31: #{ad_classifier_forward_grouped.1} parent=11 // pred_region
        _
      $region32: #{ad_classifier_forward_grouped.1} parent=11 // pred_fallthru
        _
      // Predicated region
      $region33: #{ad_classifier_forward_grouped.1} parent=11 // pred_check
        %p243 = pneg %p166
      $region34: #{ad_classifier_forward_grouped.1} parent=11 // pred_check_branch
        %245 = sbr.rel (%p243) target = $region36
      $region35: #{ad_classifier_forward_grouped.1} parent=11 // pred_region
        _
      $region36: #{ad_classifier_forward_grouped.1} parent=11 // pred_fallthru
        _
      // Predicated region
      $region37: #{ad_classifier_forward_grouped.1} parent=11 // pred_check
        %p246 = pneg %p187
      $region38: #{ad_classifier_forward_grouped.1} parent=11 // pred_check_branch
        %248 = sbr.rel (%p246) target = $region40
      $region39: #{ad_classifier_forward_grouped.1} parent=11 // pred_region
        _
      $region40: #{ad_classifier_forward_grouped.1} parent=11 // pred_fallthru
        _
    $region12: #{ad_classifier_forward_grouped.1} parent=5 // pred_fallthru
      _
    %p249 = scmp.lt.s32.totalorder %s14, 4
    // Predicated region
    $region41: #{ad_classifier_forward_grouped.1} parent=5 // pred_check
      %p250 = pneg %p249
    $region42: #{ad_classifier_forward_grouped.1} parent=5 // pred_check_branch
      %252 = sbr.rel (%p250) target = $region44
    $region43: #{ad_classifier_forward_grouped.1} parent=5 // pred_region
      // Predicated region
      $region45: #{ad_classifier_forward_grouped.1} parent=43 // pred_check
        %p253 = pneg %p34
      $region46: #{ad_classifier_forward_grouped.1} parent=43 // pred_check_branch
        %255 = sbr.rel (%p253) target = $region48
      $region47: #{ad_classifier_forward_grouped.1} parent=43 // pred_region
        %s256 = smul.u32 2, %s14
        %p257 = scmp.lt.s32.totalorder %s256, 7
        %s258 = scalar_select %p257, %s256, 7
        %s259 = smul.addr %s258, 4
        %s260 = smul.addr %s259, 8
        %s261 = scalar_lea.vmem %s0, %s260
        %s262 = smul.u32 2, %s14
      $region48: #{ad_classifier_forward_grouped.1} parent=43 // pred_fallthru
        _
    $region44: #{ad_classifier_forward_grouped.1} parent=5 // pred_fallthru
      _
    %p263 = scmp.le.s32.totalorder 1, %s14
    %p264 = scmp.lt.s32.totalorder %s14, 5
    %p265 = pnand %p263, %p264
    %p266 = pneg %p265
    // Predicated region
    $region49: #{ad_classifier_forward_grouped.1} parent=5 // pred_check
      _
    $region50: #{ad_classifier_forward_grouped.1} parent=5 // pred_check_branch
      %268 = sbr.rel (%p265) target = $region52
    $region51: #{ad_classifier_forward_grouped.1} parent=5 // pred_region
      %s269 = ssub.s32 %s14, 1
      %s270 = smul.u32 2, %s19
      %p271 = scmp.lt.s32.totalorder %s270, 7
      %s272 = scalar_select %p271, %s270, 7
      %s273 = smul.addr %s272, 4
      %s274 = smul.addr %s273, 8
      %s275 = scalar_lea.vmem %s0, %s274
      %p276 = pneg %p40
      %p277 = pneg %p37
      %p278 = pneg %p61
      %p279 = pneg %p58
      %p280 = pneg %p82
      %p281 = pneg %p79
      %p282 = pneg %p103
      %p283 = pneg %p100
      %p284 = pneg %p124
      %p285 = pneg %p121
      %p286 = pneg %p145
      %p287 = pneg %p142
      %p288 = pneg %p166
      %p289 = pneg %p163
      %p290 = pneg %p187
      %p291 = pneg %p184
      %p292 = pneg %p213
      %p293 = pneg %p210
      %s294 = smul.u32 2, %s19
      %p295 = scmp.lt.s32.totalorder %s294, 7
      %s296 = scalar_select %p295, %s294, 7
      %s297 = smul.addr %s296, 8
      %s298 = scalar_lea.vmem %s8, %s297
      %s299 = smul.u32 2, %s19
      %p300 = scmp.lt.s32.totalorder %s299, 7
      %s301 = scalar_select %p300, %s299, 7
      %s302 = smul.addr %s301, 4
      %s303 = smul.addr %s302, 8
      %s304 = scalar_lea.vmem %s0, %s303
      %s305 = smul.u32 2, %s19
      %s306 = smul.u32 2, %s19
      %p307 = scmp.lt.s32.totalorder %s306, 7
      %s308 = scalar_select %p307, %s306, 7
      %s309 = smul.addr %s308, 8
      %s310 = scalar_lea.vmem %s8, %s309
      %s311 = smul.u32 2, %s19
      %v313 = vld [vmem:[%s304] sm:$0xff]
      %v314 = vld [vmem:[%s304 + $0x8] sm:$0xff]
      %v315 = vld [vmem:[%s304 + $0x10] sm:$0xff]
      %v316 = vld [vmem:[%s304 + $0x18] sm:$0xff]
      %v317 = vld [vmem:[%s304 + $0x20] sm:$0xff]
      %v318 = vld [vmem:[%s304 + $0x28] sm:$0xff]
      %v319 = vld [vmem:[%s304 + $0x30] sm:$0xff]
      %v320 = vld [vmem:[%s304 + $0x38] sm:$0xff]
      %v321 = vld [vmem:[%s1] sm:$0xff]
      %v322 = vld [vmem:[%s1 + $0x8] sm:$0xff]
      %v323 = vld [vmem:[%s7] sm:$0xff]
      %v324 = vld [vmem:[%s7 + $0x8] sm:$0xff]
      %v325 = vld [vmem:[%s7 + $0x10] sm:$0xff]
      %v326 = vld [vmem:[%s7 + $0x18] sm:$0xff]
      %v327 = vld [vmem:[%s7 + $0x80] sm:$0xff]
      %v328 = vld [vmem:[%s7 + $0x88] sm:$0xff]
      %v329 = vld [vmem:[%s7 + $0x90] sm:$0xff]
      %v330 = vld [vmem:[%s7 + $0x98] sm:$0xff]
      %v331 = vld [vmem:[%s7 + $0xa0] sm:$0xff]
      %v332 = vld [vmem:[%s7 + $0xa8] sm:$0xff]
      %v333 = vld [vmem:[%s7 + $0xb0] sm:$0xff]
      %v334 = vld [vmem:[%s7 + $0xb8] sm:$0xff]
      %v335 = vld [vmem:[%s7 + $0xc0] sm:$0xff]
      %v336 = vld [vmem:[%s7 + $0xc8] sm:$0xff]
      %v337 = vld [vmem:[%s7 + $0xd0] sm:$0xff]
      %v338 = vld [vmem:[%s7 + $0xd8] sm:$0xff]
      %v339 = vld [vmem:[%s7 + $0xe0] sm:$0xff]
      %v340 = vld [vmem:[%s7 + $0xe8] sm:$0xff]
      %v341 = vld [vmem:[%s7 + $0xf0] sm:$0xff]
      %v342 = vld [vmem:[%s7 + $0xf8] sm:$0xff]
      %v343 = vpack.c.bf16 %v317, %v313
      %v344 = vpack.c.bf16 %v318, %v314
      %v345 = vpack.c.bf16 %v319, %v315
      %v346 = vpack.c.bf16 %v320, %v316
      %v347 = vld [vmem:[%s2] sm:$0xff]
      %v348 = vld [vmem:[%s2 + $0x8] sm:$0xff]
      %v349 = vld [vmem:[%s2 + $0x10] sm:$0xff]
      %v350 = vld [vmem:[%s2 + $0x18] sm:$0xff]
      %v351 = vld [vmem:[%s2 + $0x20] sm:$0xff]
      %v352 = vld [vmem:[%s2 + $0x28] sm:$0xff]
      %v353 = vld [vmem:[%s2 + $0x30] sm:$0xff]
      %v354 = vld [vmem:[%s2 + $0x38] sm:$0xff]
      %v355 = vld [vmem:[%s2 + $0x40] sm:$0xff]
      %v356 = vld [vmem:[%s2 + $0x48] sm:$0xff]
      %v357 = vld [vmem:[%s2 + $0x50] sm:$0xff]
      %v358 = vld [vmem:[%s2 + $0x58] sm:$0xff]
      %v359 = vld [vmem:[%s2 + $0x60] sm:$0xff]
      %v360 = vld [vmem:[%s2 + $0x68] sm:$0xff]
      %v361 = vld [vmem:[%s2 + $0x70] sm:$0xff]
      %v362 = vld [vmem:[%s2 + $0x78] sm:$0xff]
      %v363 = vld [vmem:[%s2 + $0x80] sm:$0xff]
      %v364 = vld [vmem:[%s2 + $0x88] sm:$0xff]
      %v365 = vld [vmem:[%s2 + $0x90] sm:$0xff]
      %v366 = vld [vmem:[%s2 + $0x98] sm:$0xff]
      %v367 = vld [vmem:[%s2 + $0xa0] sm:$0xff]
      %v368 = vld [vmem:[%s2 + $0xa8] sm:$0xff]
      %v369 = vld [vmem:[%s2 + $0xb0] sm:$0xff]
      %v370 = vld [vmem:[%s2 + $0xb8] sm:$0xff]
      %v371 = vld [vmem:[%s2 + $0xc0] sm:$0xff]
      %v372 = vld [vmem:[%s2 + $0xc8] sm:$0xff]
      %v373 = vld [vmem:[%s2 + $0xd0] sm:$0xff]
      %v374 = vld [vmem:[%s2 + $0xd8] sm:$0xff]
      %v375 = vld [vmem:[%s2 + $0xe0] sm:$0xff]
      %v376 = vld [vmem:[%s2 + $0xe8] sm:$0xff]
      %v377 = vld [vmem:[%s2 + $0xf0] sm:$0xff]
      %v378 = vld [vmem:[%s2 + $0xf8] sm:$0xff]
      %v379 = vld [vmem:[%s2 + $0x100] sm:$0xff]
      %v380 = vld [vmem:[%s2 + $0x108] sm:$0xff]
      %v381 = vld [vmem:[%s2 + $0x110] sm:$0xff]
      %v382 = vld [vmem:[%s2 + $0x118] sm:$0xff]
      %v383 = vld [vmem:[%s2 + $0x120] sm:$0xff]
      %v384 = vld [vmem:[%s2 + $0x128] sm:$0xff]
      %v385 = vld [vmem:[%s2 + $0x130] sm:$0xff]
      %v386 = vld [vmem:[%s2 + $0x138] sm:$0xff]
      %v387 = vld [vmem:[%s2 + $0x140] sm:$0xff]
      %v388 = vld [vmem:[%s2 + $0x148] sm:$0xff]
      %v389 = vld [vmem:[%s2 + $0x150] sm:$0xff]
      %v390 = vld [vmem:[%s2 + $0x158] sm:$0xff]
      %v391 = vld [vmem:[%s2 + $0x160] sm:$0xff]
      %v392 = vld [vmem:[%s2 + $0x168] sm:$0xff]
      %v393 = vld [vmem:[%s2 + $0x170] sm:$0xff]
      %v394 = vld [vmem:[%s2 + $0x178] sm:$0xff]
      %v395 = vld [vmem:[%s2 + $0x180] sm:$0xff]
      %v396 = vld [vmem:[%s2 + $0x188] sm:$0xff]
      %v397 = vld [vmem:[%s2 + $0x190] sm:$0xff]
      %v398 = vld [vmem:[%s2 + $0x198] sm:$0xff]
      %v399 = vld [vmem:[%s2 + $0x1a0] sm:$0xff]
      %v400 = vld [vmem:[%s2 + $0x1a8] sm:$0xff]
      %v401 = vld [vmem:[%s2 + $0x1b0] sm:$0xff]
      %v402 = vld [vmem:[%s2 + $0x1b8] sm:$0xff]
      %v403 = vld [vmem:[%s2 + $0x1c0] sm:$0xff]
      %v404 = vld [vmem:[%s2 + $0x1c8] sm:$0xff]
      %v405 = vld [vmem:[%s2 + $0x1d0] sm:$0xff]
      %v406 = vld [vmem:[%s2 + $0x1d8] sm:$0xff]
      %v407 = vld [vmem:[%s2 + $0x1e0] sm:$0xff]
      %v408 = vld [vmem:[%s2 + $0x1e8] sm:$0xff]
      %v409 = vld [vmem:[%s2 + $0x1f0] sm:$0xff]
      %v410 = vld [vmem:[%s2 + $0x1f8] sm:$0xff]
      %v411 = vld [vmem:[%s2 + $0x200] sm:$0xff]
      %v412 = vld [vmem:[%s2 + $0x208] sm:$0xff]
      %v413 = vld [vmem:[%s2 + $0x210] sm:$0xff]
      %v414 = vld [vmem:[%s2 + $0x218] sm:$0xff]
      %v415 = vld [vmem:[%s2 + $0x220] sm:$0xff]
      %v416 = vld [vmem:[%s2 + $0x228] sm:$0xff]
      %v417 = vld [vmem:[%s2 + $0x230] sm:$0xff]
      %v418 = vld [vmem:[%s2 + $0x238] sm:$0xff]
      %v419 = vld [vmem:[%s2 + $0x240] sm:$0xff]
      %v420 = vld [vmem:[%s2 + $0x248] sm:$0xff]
      %v421 = vld [vmem:[%s2 + $0x250] sm:$0xff]
      %v422 = vld [vmem:[%s2 + $0x258] sm:$0xff]
      %v423 = vld [vmem:[%s2 + $0x260] sm:$0xff]
      %v424 = vld [vmem:[%s2 + $0x268] sm:$0xff]
      %v425 = vld [vmem:[%s2 + $0x270] sm:$0xff]
      %v426 = vld [vmem:[%s2 + $0x278] sm:$0xff]
      %v427 = vld [vmem:[%s2 + $0x280] sm:$0xff]
      %v428 = vld [vmem:[%s2 + $0x288] sm:$0xff]
      %v429 = vld [vmem:[%s2 + $0x290] sm:$0xff]
      %v430 = vld [vmem:[%s2 + $0x298] sm:$0xff]
      %v431 = vld [vmem:[%s2 + $0x2a0] sm:$0xff]
      %v432 = vld [vmem:[%s2 + $0x2a8] sm:$0xff]
      %v433 = vld [vmem:[%s2 + $0x2b0] sm:$0xff]
      %v434 = vld [vmem:[%s2 + $0x2b8] sm:$0xff]
      %v435 = vld [vmem:[%s2 + $0x2c0] sm:$0xff]
      %v436 = vld [vmem:[%s2 + $0x2c8] sm:$0xff]
      %v437 = vld [vmem:[%s2 + $0x2d0] sm:$0xff]
      %v438 = vld [vmem:[%s2 + $0x2d8] sm:$0xff]
      %v439 = vld [vmem:[%s2 + $0x2e0] sm:$0xff]
      %v440 = vld [vmem:[%s2 + $0x2e8] sm:$0xff]
      %v441 = vld [vmem:[%s2 + $0x2f0] sm:$0xff]
      %v442 = vld [vmem:[%s2 + $0x2f8] sm:$0xff]
      %v443 = vld [vmem:[%s2 + $0x300] sm:$0xff]
      %v444 = vld [vmem:[%s2 + $0x308] sm:$0xff]
      %v445 = vld [vmem:[%s2 + $0x310] sm:$0xff]
      %v446 = vld [vmem:[%s2 + $0x318] sm:$0xff]
      %v447 = vld [vmem:[%s2 + $0x320] sm:$0xff]
      %v448 = vld [vmem:[%s2 + $0x328] sm:$0xff]
      %v449 = vld [vmem:[%s2 + $0x330] sm:$0xff]
      %v450 = vld [vmem:[%s2 + $0x338] sm:$0xff]
      %v451 = vld [vmem:[%s2 + $0x340] sm:$0xff]
      %v452 = vld [vmem:[%s2 + $0x348] sm:$0xff]
      %v453 = vld [vmem:[%s2 + $0x350] sm:$0xff]
      %v454 = vld [vmem:[%s2 + $0x358] sm:$0xff]
      %v455 = vld [vmem:[%s2 + $0x360] sm:$0xff]
      %v456 = vld [vmem:[%s2 + $0x368] sm:$0xff]
      %v457 = vld [vmem:[%s2 + $0x370] sm:$0xff]
      %v458 = vld [vmem:[%s2 + $0x378] sm:$0xff]
      %v459 = vld [vmem:[%s2 + $0x380] sm:$0xff]
      %v460 = vld [vmem:[%s2 + $0x388] sm:$0xff]
      %v461 = vld [vmem:[%s2 + $0x390] sm:$0xff]
      %v462 = vld [vmem:[%s2 + $0x398] sm:$0xff]
      %v463 = vld [vmem:[%s2 + $0x3a0] sm:$0xff]
      %v464 = vld [vmem:[%s2 + $0x3a8] sm:$0xff]
      %v465 = vld [vmem:[%s2 + $0x3b0] sm:$0xff]
      %v466 = vld [vmem:[%s2 + $0x3b8] sm:$0xff]
      %v467 = vld [vmem:[%s2 + $0x3c0] sm:$0xff]
      %v468 = vld [vmem:[%s2 + $0x3c8] sm:$0xff]
      %v469 = vld [vmem:[%s2 + $0x3d0] sm:$0xff]
      %v470 = vld [vmem:[%s2 + $0x3d8] sm:$0xff]
      %v471 = vld [vmem:[%s2 + $0x3e0] sm:$0xff]
      %v472 = vld [vmem:[%s2 + $0x3e8] sm:$0xff]
      %v473 = vld [vmem:[%s2 + $0x3f0] sm:$0xff]
      %v474 = vld [vmem:[%s2 + $0x3f8] sm:$0xff]
      %v475 = vld [vmem:[%s2 + $0x400] sm:$0xff]
      %v476 = vld [vmem:[%s2 + $0x408] sm:$0xff]
      %v477 = vld [vmem:[%s2 + $0x410] sm:$0xff]
      %v478 = vld [vmem:[%s2 + $0x418] sm:$0xff]
      %v479 = vld [vmem:[%s2 + $0x420] sm:$0xff]
      %v480 = vld [vmem:[%s2 + $0x428] sm:$0xff]
      %v481 = vld [vmem:[%s2 + $0x430] sm:$0xff]
      %v482 = vld [vmem:[%s2 + $0x438] sm:$0xff]
      %v483 = vld [vmem:[%s2 + $0x440] sm:$0xff]
      %v484 = vld [vmem:[%s2 + $0x448] sm:$0xff]
      %v485 = vld [vmem:[%s2 + $0x450] sm:$0xff]
      %v486 = vld [vmem:[%s2 + $0x458] sm:$0xff]
      %v487 = vld [vmem:[%s2 + $0x460] sm:$0xff]
      %v488 = vld [vmem:[%s2 + $0x468] sm:$0xff]
      %v489 = vld [vmem:[%s2 + $0x470] sm:$0xff]
      %v490 = vld [vmem:[%s2 + $0x478] sm:$0xff]
      %v491 = vld [vmem:[%s2 + $0x480] sm:$0xff]
      %v492 = vld [vmem:[%s2 + $0x488] sm:$0xff]
      %v493 = vld [vmem:[%s2 + $0x490] sm:$0xff]
      %v494 = vld [vmem:[%s2 + $0x498] sm:$0xff]
      %v495 = vld [vmem:[%s2 + $0x4a0] sm:$0xff]
      %v496 = vld [vmem:[%s2 + $0x4a8] sm:$0xff]
      %v497 = vld [vmem:[%s2 + $0x4b0] sm:$0xff]
      %v498 = vld [vmem:[%s2 + $0x4b8] sm:$0xff]
      %v499 = vld [vmem:[%s2 + $0x4c0] sm:$0xff]
      %v500 = vld [vmem:[%s2 + $0x4c8] sm:$0xff]
      %v501 = vld [vmem:[%s2 + $0x4d0] sm:$0xff]
      %v502 = vld [vmem:[%s2 + $0x4d8] sm:$0xff]
      %v503 = vld [vmem:[%s2 + $0x4e0] sm:$0xff]
      %v504 = vld [vmem:[%s2 + $0x4e8] sm:$0xff]
      %v505 = vld [vmem:[%s2 + $0x4f0] sm:$0xff]
      %v506 = vld [vmem:[%s2 + $0x4f8] sm:$0xff]
      %v507 = vld [vmem:[%s2 + $0x500] sm:$0xff]
      %v508 = vld [vmem:[%s2 + $0x508] sm:$0xff]
      %v509 = vld [vmem:[%s2 + $0x510] sm:$0xff]
      %v510 = vld [vmem:[%s2 + $0x518] sm:$0xff]
      %v511 = vld [vmem:[%s2 + $0x520] sm:$0xff]
      %v512 = vld [vmem:[%s2 + $0x528] sm:$0xff]
      %v513 = vld [vmem:[%s2 + $0x530] sm:$0xff]
      %v514 = vld [vmem:[%s2 + $0x538] sm:$0xff]
      %v515 = vld [vmem:[%s2 + $0x540] sm:$0xff]
      %v516 = vld [vmem:[%s2 + $0x548] sm:$0xff]
      %v517 = vld [vmem:[%s2 + $0x550] sm:$0xff]
      %v518 = vld [vmem:[%s2 + $0x558] sm:$0xff]
      %v519 = vld [vmem:[%s2 + $0x560] sm:$0xff]
      %v520 = vld [vmem:[%s2 + $0x568] sm:$0xff]
      %v521 = vld [vmem:[%s2 + $0x570] sm:$0xff]
      %v522 = vld [vmem:[%s2 + $0x578] sm:$0xff]
      %v523 = vld [vmem:[%s2 + $0x580] sm:$0xff]
      %v524 = vld [vmem:[%s2 + $0x588] sm:$0xff]
      %v525 = vld [vmem:[%s2 + $0x590] sm:$0xff]
      %v526 = vld [vmem:[%s2 + $0x598] sm:$0xff]
      %v527 = vld [vmem:[%s2 + $0x5a0] sm:$0xff]
      %v528 = vld [vmem:[%s2 + $0x5a8] sm:$0xff]
      %v529 = vld [vmem:[%s2 + $0x5b0] sm:$0xff]
      %v530 = vld [vmem:[%s2 + $0x5b8] sm:$0xff]
      %v531 = vld [vmem:[%s2 + $0x5c0] sm:$0xff]
      %v532 = vld [vmem:[%s2 + $0x5c8] sm:$0xff]
      %v533 = vld [vmem:[%s2 + $0x5d0] sm:$0xff]
      %v534 = vld [vmem:[%s2 + $0x5d8] sm:$0xff]
      %v535 = vld [vmem:[%s2 + $0x5e0] sm:$0xff]
      %v536 = vld [vmem:[%s2 + $0x5e8] sm:$0xff]
      %v537 = vld [vmem:[%s2 + $0x5f0] sm:$0xff]
      %v538 = vld [vmem:[%s2 + $0x5f8] sm:$0xff]
      %v539 = vld [vmem:[%s2 + $0x600] sm:$0xff]
      %v540 = vld [vmem:[%s2 + $0x608] sm:$0xff]
      %v541 = vld [vmem:[%s2 + $0x610] sm:$0xff]
      %v542 = vld [vmem:[%s2 + $0x618] sm:$0xff]
      %v543 = vld [vmem:[%s2 + $0x620] sm:$0xff]
      %v544 = vld [vmem:[%s2 + $0x628] sm:$0xff]
      %v545 = vld [vmem:[%s2 + $0x630] sm:$0xff]
      %v546 = vld [vmem:[%s2 + $0x638] sm:$0xff]
      %v547 = vld [vmem:[%s2 + $0x640] sm:$0xff]
      %v548 = vld [vmem:[%s2 + $0x648] sm:$0xff]
      %v549 = vld [vmem:[%s2 + $0x650] sm:$0xff]
      %v550 = vld [vmem:[%s2 + $0x658] sm:$0xff]
      %v551 = vld [vmem:[%s2 + $0x660] sm:$0xff]
      %v552 = vld [vmem:[%s2 + $0x668] sm:$0xff]
      %v553 = vld [vmem:[%s2 + $0x670] sm:$0xff]
      %v554 = vld [vmem:[%s2 + $0x678] sm:$0xff]
      %v555 = vld [vmem:[%s2 + $0x680] sm:$0xff]
      %v556 = vld [vmem:[%s2 + $0x688] sm:$0xff]
      %v557 = vld [vmem:[%s2 + $0x690] sm:$0xff]
      %v558 = vld [vmem:[%s2 + $0x698] sm:$0xff]
      %v559 = vld [vmem:[%s2 + $0x6a0] sm:$0xff]
      %v560 = vld [vmem:[%s2 + $0x6a8] sm:$0xff]
      %v561 = vld [vmem:[%s2 + $0x6b0] sm:$0xff]
      %v562 = vld [vmem:[%s2 + $0x6b8] sm:$0xff]
      %v563 = vld [vmem:[%s2 + $0x6c0] sm:$0xff]
      %v564 = vld [vmem:[%s2 + $0x6c8] sm:$0xff]
      %v565 = vld [vmem:[%s2 + $0x6d0] sm:$0xff]
      %v566 = vld [vmem:[%s2 + $0x6d8] sm:$0xff]
      %v567 = vld [vmem:[%s2 + $0x6e0] sm:$0xff]
      %v568 = vld [vmem:[%s2 + $0x6e8] sm:$0xff]
      %v569 = vld [vmem:[%s2 + $0x6f0] sm:$0xff]
      %v570 = vld [vmem:[%s2 + $0x6f8] sm:$0xff]
      %v571 = vld [vmem:[%s2 + $0x700] sm:$0xff]
      %v572 = vld [vmem:[%s2 + $0x708] sm:$0xff]
      %v573 = vld [vmem:[%s2 + $0x710] sm:$0xff]
      %v574 = vld [vmem:[%s2 + $0x718] sm:$0xff]
      %v575 = vld [vmem:[%s2 + $0x720] sm:$0xff]
      %v576 = vld [vmem:[%s2 + $0x728] sm:$0xff]
      %v577 = vld [vmem:[%s2 + $0x730] sm:$0xff]
      %v578 = vld [vmem:[%s2 + $0x738] sm:$0xff]
      %v579 = vld [vmem:[%s2 + $0x740] sm:$0xff]
      %v580 = vld [vmem:[%s2 + $0x748] sm:$0xff]
      %v581 = vld [vmem:[%s2 + $0x750] sm:$0xff]
      %v582 = vld [vmem:[%s2 + $0x758] sm:$0xff]
      %v583 = vld [vmem:[%s2 + $0x760] sm:$0xff]
      %v584 = vld [vmem:[%s2 + $0x768] sm:$0xff]
      %v585 = vld [vmem:[%s2 + $0x770] sm:$0xff]
      %v586 = vld [vmem:[%s2 + $0x778] sm:$0xff]
      %v587 = vld [vmem:[%s2 + $0x780] sm:$0xff]
      %v588 = vld [vmem:[%s2 + $0x788] sm:$0xff]
      %v589 = vld [vmem:[%s2 + $0x790] sm:$0xff]
      %v590 = vld [vmem:[%s2 + $0x798] sm:$0xff]
      %v591 = vld [vmem:[%s2 + $0x7a0] sm:$0xff]
      %v592 = vld [vmem:[%s2 + $0x7a8] sm:$0xff]
      %v593 = vld [vmem:[%s2 + $0x7b0] sm:$0xff]
      %v594 = vld [vmem:[%s2 + $0x7b8] sm:$0xff]
      %v595 = vld [vmem:[%s2 + $0x7c0] sm:$0xff]
      %v596 = vld [vmem:[%s2 + $0x7c8] sm:$0xff]
      %v597 = vld [vmem:[%s2 + $0x7d0] sm:$0xff]
      %v598 = vld [vmem:[%s2 + $0x7d8] sm:$0xff]
      %v599 = vld [vmem:[%s2 + $0x7e0] sm:$0xff]
      %v600 = vld [vmem:[%s2 + $0x7e8] sm:$0xff]
      %v601 = vld [vmem:[%s2 + $0x7f0] sm:$0xff]
      %v602 = vld [vmem:[%s2 + $0x7f8] sm:$0xff]
      %v603 = vld [vmem:[%s2 + $0x800] sm:$0xff]
      %v604 = vld [vmem:[%s2 + $0x808] sm:$0xff]
      %v605 = vld [vmem:[%s2 + $0x810] sm:$0xff]
      %v606 = vld [vmem:[%s2 + $0x818] sm:$0xff]
      %v607 = vld [vmem:[%s2 + $0x820] sm:$0xff]
      %v608 = vld [vmem:[%s2 + $0x828] sm:$0xff]
      %v609 = vld [vmem:[%s2 + $0x830] sm:$0xff]
      %v610 = vld [vmem:[%s2 + $0x838] sm:$0xff]
      %v611 = vld [vmem:[%s2 + $0x840] sm:$0xff]
      %v612 = vld [vmem:[%s2 + $0x848] sm:$0xff]
      %v613 = vld [vmem:[%s2 + $0x850] sm:$0xff]
      %v614 = vld [vmem:[%s2 + $0x858] sm:$0xff]
      %v615 = vld [vmem:[%s2 + $0x860] sm:$0xff]
      %v616 = vld [vmem:[%s2 + $0x868] sm:$0xff]
      %v617 = vld [vmem:[%s2 + $0x870] sm:$0xff]
      %v618 = vld [vmem:[%s2 + $0x878] sm:$0xff]
      %v619 = vld [vmem:[%s2 + $0x880] sm:$0xff]
      %v620 = vld [vmem:[%s2 + $0x888] sm:$0xff]
      %v621 = vld [vmem:[%s2 + $0x890] sm:$0xff]
      %v622 = vld [vmem:[%s2 + $0x898] sm:$0xff]
      %v623 = vld [vmem:[%s2 + $0x8a0] sm:$0xff]
      %v624 = vld [vmem:[%s2 + $0x8a8] sm:$0xff]
      %v625 = vld [vmem:[%s2 + $0x8b0] sm:$0xff]
      %v626 = vld [vmem:[%s2 + $0x8b8] sm:$0xff]
      %v627 = vld [vmem:[%s2 + $0x8c0] sm:$0xff]
      %v628 = vld [vmem:[%s2 + $0x8c8] sm:$0xff]
      %v629 = vld [vmem:[%s2 + $0x8d0] sm:$0xff]
      %v630 = vld [vmem:[%s2 + $0x8d8] sm:$0xff]
      %v631 = vld [vmem:[%s2 + $0x8e0] sm:$0xff]
      %v632 = vld [vmem:[%s2 + $0x8e8] sm:$0xff]
      %v633 = vld [vmem:[%s2 + $0x8f0] sm:$0xff]
      %v634 = vld [vmem:[%s2 + $0x8f8] sm:$0xff]
      %v635 = vld [vmem:[%s2 + $0x900] sm:$0xff]
      %v636 = vld [vmem:[%s2 + $0x908] sm:$0xff]
      %v637 = vld [vmem:[%s2 + $0x910] sm:$0xff]
      %v638 = vld [vmem:[%s2 + $0x918] sm:$0xff]
      %v639 = vld [vmem:[%s2 + $0x920] sm:$0xff]
      %v640 = vld [vmem:[%s2 + $0x928] sm:$0xff]
      %v641 = vld [vmem:[%s2 + $0x930] sm:$0xff]
      %v642 = vld [vmem:[%s2 + $0x938] sm:$0xff]
      %v643 = vld [vmem:[%s2 + $0x940] sm:$0xff]
      %v644 = vld [vmem:[%s2 + $0x948] sm:$0xff]
      %v645 = vld [vmem:[%s2 + $0x950] sm:$0xff]
      %v646 = vld [vmem:[%s2 + $0x958] sm:$0xff]
      %v947 = vunpack.c.l.b16 %v347
      %v948 = vunpack.c.h.b16 %v347
      %v949 = vunpack.c.l.b16 %v348
      %v950 = vunpack.c.h.b16 %v348
      %v951 = vunpack.c.l.b16 %v349
      %v952 = vunpack.c.h.b16 %v349
      %v953 = vunpack.c.l.b16 %v350
      %v954 = vunpack.c.h.b16 %v350
      %v955 = vunpack.c.l.b16 %v351
      %v956 = vunpack.c.h.b16 %v351
      %v957 = vunpack.c.l.b16 %v352
      %v958 = vunpack.c.h.b16 %v352
      %v959 = vunpack.c.l.b16 %v353
      %v960 = vunpack.c.h.b16 %v353
      %v961 = vunpack.c.l.b16 %v354
      %v962 = vunpack.c.h.b16 %v354
      %v963 = vunpack.c.l.b16 %v355
      %v964 = vunpack.c.h.b16 %v355
      %v965 = vunpack.c.l.b16 %v356
      %v966 = vunpack.c.h.b16 %v356
      %v967 = vunpack.c.l.b16 %v357
      %v968 = vunpack.c.h.b16 %v357
      %v969 = vunpack.c.l.b16 %v358
      %v970 = vunpack.c.h.b16 %v358
      %v971 = vunpack.c.l.b16 %v359
      %v972 = vunpack.c.h.b16 %v359
      %v973 = vunpack.c.l.b16 %v360
      %v974 = vunpack.c.h.b16 %v360
      %v975 = vunpack.c.l.b16 %v361
      %v976 = vunpack.c.h.b16 %v361
      %v977 = vunpack.c.l.b16 %v362
      %v978 = vunpack.c.h.b16 %v362
      %v979 = vunpack.c.l.b16 %v363
      %v980 = vunpack.c.h.b16 %v363
      %v981 = vunpack.c.l.b16 %v364
      %v982 = vunpack.c.h.b16 %v364
      %v983 = vunpack.c.l.b16 %v365
      %v984 = vunpack.c.h.b16 %v365
      %v985 = vunpack.c.l.b16 %v366
      %v986 = vunpack.c.h.b16 %v366
      %v987 = vunpack.c.l.b16 %v367
      %v988 = vunpack.c.h.b16 %v367
      %v989 = vunpack.c.l.b16 %v368
      %v990 = vunpack.c.h.b16 %v368
      %v991 = vunpack.c.l.b16 %v369
      %v992 = vunpack.c.h.b16 %v369
      %v993 = vunpack.c.l.b16 %v370
      %v994 = vunpack.c.h.b16 %v370
      %v995 = vunpack.c.l.b16 %v371
      %v996 = vunpack.c.h.b16 %v371
      %v997 = vunpack.c.l.b16 %v372
      %v998 = vunpack.c.h.b16 %v372
      %v999 = vunpack.c.l.b16 %v373
      %v1000 = vunpack.c.h.b16 %v373
      %v1001 = vunpack.c.l.b16 %v374
      %v1002 = vunpack.c.h.b16 %v374
      %v1003 = vunpack.c.l.b16 %v375
      %v1004 = vunpack.c.h.b16 %v375
      %v1005 = vunpack.c.l.b16 %v376
      %v1006 = vunpack.c.h.b16 %v376
      %v1007 = vunpack.c.l.b16 %v377
      %v1008 = vunpack.c.h.b16 %v377
      %v1009 = vunpack.c.l.b16 %v378
      %v1010 = vunpack.c.h.b16 %v378
      %v1011 = vunpack.c.l.b16 %v379
      %v1012 = vunpack.c.h.b16 %v379
      %v1013 = vunpack.c.l.b16 %v380
      %v1014 = vunpack.c.h.b16 %v380
      %v1015 = vunpack.c.l.b16 %v381
      %v1016 = vunpack.c.h.b16 %v381
      %v1017 = vunpack.c.l.b16 %v382
      %v1018 = vunpack.c.h.b16 %v382
      %v1019 = vunpack.c.l.b16 %v383
      %v1020 = vunpack.c.h.b16 %v383
      %v1021 = vunpack.c.l.b16 %v384
      %v1022 = vunpack.c.h.b16 %v384
      %v1023 = vunpack.c.l.b16 %v385
      %v1024 = vunpack.c.h.b16 %v385
      %v1025 = vunpack.c.l.b16 %v386
      %v1026 = vunpack.c.h.b16 %v386
      %v1027 = vunpack.c.l.b16 %v387
      %v1028 = vunpack.c.h.b16 %v387
      %v1029 = vunpack.c.l.b16 %v388
      %v1030 = vunpack.c.h.b16 %v388
      %v1031 = vunpack.c.l.b16 %v389
      %v1032 = vunpack.c.h.b16 %v389
      %v1033 = vunpack.c.l.b16 %v390
      %v1034 = vunpack.c.h.b16 %v390
      %v1035 = vunpack.c.l.b16 %v391
      %v1036 = vunpack.c.h.b16 %v391
      %v1037 = vunpack.c.l.b16 %v392
      %v1038 = vunpack.c.h.b16 %v392
      %v1039 = vunpack.c.l.b16 %v393
      %v1040 = vunpack.c.h.b16 %v393
      %v1041 = vunpack.c.l.b16 %v394
      %v1042 = vunpack.c.h.b16 %v394
      %v1043 = vunpack.c.l.b16 %v395
      %v1044 = vunpack.c.h.b16 %v395
      %v1045 = vunpack.c.l.b16 %v396
      %v1046 = vunpack.c.h.b16 %v396
      %v1047 = vunpack.c.l.b16 %v397
      %v1048 = vunpack.c.h.b16 %v397
      %v1049 = vunpack.c.l.b16 %v398
      %v1050 = vunpack.c.h.b16 %v398
      %v1051 = vunpack.c.l.b16 %v399
      %v1052 = vunpack.c.h.b16 %v399
      %v1053 = vunpack.c.l.b16 %v400
      %v1054 = vunpack.c.h.b16 %v400
      %v1055 = vunpack.c.l.b16 %v401
      %v1056 = vunpack.c.h.b16 %v401
      %v1057 = vunpack.c.l.b16 %v402
      %v1058 = vunpack.c.h.b16 %v402
      %v1059 = vunpack.c.l.b16 %v403
      %v1060 = vunpack.c.h.b16 %v403
      %v1061 = vunpack.c.l.b16 %v404
      %v1062 = vunpack.c.h.b16 %v404
      %v1063 = vunpack.c.l.b16 %v405
      %v1064 = vunpack.c.h.b16 %v405
      %v1065 = vunpack.c.l.b16 %v406
      %v1066 = vunpack.c.h.b16 %v406
      %v1067 = vunpack.c.l.b16 %v407
      %v1068 = vunpack.c.h.b16 %v407
      %v1069 = vunpack.c.l.b16 %v408
      %v1070 = vunpack.c.h.b16 %v408
      %v1071 = vunpack.c.l.b16 %v409
      %v1072 = vunpack.c.h.b16 %v409
      %v1073 = vunpack.c.l.b16 %v410
      %v1074 = vunpack.c.h.b16 %v410
      %v1075 = vunpack.c.l.b16 %v411
      %v1076 = vunpack.c.h.b16 %v411
      %v1077 = vunpack.c.l.b16 %v412
      %v1078 = vunpack.c.h.b16 %v412
      %v1079 = vunpack.c.l.b16 %v413
      %v1080 = vunpack.c.h.b16 %v413
      %v1081 = vunpack.c.l.b16 %v414
      %v1082 = vunpack.c.h.b16 %v414
      %v1083 = vunpack.c.l.b16 %v415
      %v1084 = vunpack.c.h.b16 %v415
      %v1085 = vunpack.c.l.b16 %v416
      %v1086 = vunpack.c.h.b16 %v416
      %v1087 = vunpack.c.l.b16 %v417
      %v1088 = vunpack.c.h.b16 %v417
      %v1089 = vunpack.c.l.b16 %v418
      %v1090 = vunpack.c.h.b16 %v418
      %v1091 = vunpack.c.l.b16 %v419
      %v1092 = vunpack.c.h.b16 %v419
      %v1093 = vunpack.c.l.b16 %v420
      %v1094 = vunpack.c.h.b16 %v420
      %v1095 = vunpack.c.l.b16 %v421
      %v1096 = vunpack.c.h.b16 %v421
      %v1097 = vunpack.c.l.b16 %v422
      %v1098 = vunpack.c.h.b16 %v422
      %v1099 = vunpack.c.l.b16 %v423
      %v1100 = vunpack.c.h.b16 %v423
      %v1101 = vunpack.c.l.b16 %v424
      %v1102 = vunpack.c.h.b16 %v424
      %v1103 = vunpack.c.l.b16 %v425
      %v1104 = vunpack.c.h.b16 %v425
      %v1105 = vunpack.c.l.b16 %v426
      %v1106 = vunpack.c.h.b16 %v426
      %v1107 = vunpack.c.l.b16 %v427
      %v1108 = vunpack.c.h.b16 %v427
      %v1109 = vunpack.c.l.b16 %v428
      %v1110 = vunpack.c.h.b16 %v428
      %v1111 = vunpack.c.l.b16 %v429
      %v1112 = vunpack.c.h.b16 %v429
      %v1113 = vunpack.c.l.b16 %v430
      %v1114 = vunpack.c.h.b16 %v430
      %v1115 = vunpack.c.l.b16 %v431
      %v1116 = vunpack.c.h.b16 %v431
      %v1117 = vunpack.c.l.b16 %v432
      %v1118 = vunpack.c.h.b16 %v432
      %v1119 = vunpack.c.l.b16 %v433
      %v1120 = vunpack.c.h.b16 %v433
      %v1121 = vunpack.c.l.b16 %v434
      %v1122 = vunpack.c.h.b16 %v434
      %v1123 = vunpack.c.l.b16 %v435
      %v1124 = vunpack.c.h.b16 %v435
      %v1125 = vunpack.c.l.b16 %v436
      %v1126 = vunpack.c.h.b16 %v436
      %v1127 = vunpack.c.l.b16 %v437
      %v1128 = vunpack.c.h.b16 %v437
      %v1129 = vunpack.c.l.b16 %v438
      %v1130 = vunpack.c.h.b16 %v438
      %v1131 = vunpack.c.l.b16 %v439
      %v1132 = vunpack.c.h.b16 %v439
      %v1133 = vunpack.c.l.b16 %v440
      %v1134 = vunpack.c.h.b16 %v440
      %v1135 = vunpack.c.l.b16 %v441
      %v1136 = vunpack.c.h.b16 %v441
      %v1137 = vunpack.c.l.b16 %v442
      %v1138 = vunpack.c.h.b16 %v442
      %v1139 = vunpack.c.l.b16 %v443
      %v1140 = vunpack.c.h.b16 %v443
      %v1141 = vunpack.c.l.b16 %v444
      %v1142 = vunpack.c.h.b16 %v444
      %v1143 = vunpack.c.l.b16 %v445
      %v1144 = vunpack.c.h.b16 %v445
      %v1145 = vunpack.c.l.b16 %v446
      %v1146 = vunpack.c.h.b16 %v446
      %v1147 = vunpack.c.l.b16 %v447
      %v1148 = vunpack.c.h.b16 %v447
      %v1149 = vunpack.c.l.b16 %v448
      %v1150 = vunpack.c.h.b16 %v448
      %v1151 = vunpack.c.l.b16 %v449
      %v1152 = vunpack.c.h.b16 %v449
      %v1153 = vunpack.c.l.b16 %v450
      %v1154 = vunpack.c.h.b16 %v450
      %v1155 = vunpack.c.l.b16 %v451
      %v1156 = vunpack.c.h.b16 %v451
      %v1157 = vunpack.c.l.b16 %v452
      %v1158 = vunpack.c.h.b16 %v452
      %v1159 = vunpack.c.l.b16 %v453
      %v1160 = vunpack.c.h.b16 %v453
      %v1161 = vunpack.c.l.b16 %v454
      %v1162 = vunpack.c.h.b16 %v454
      %v1163 = vunpack.c.l.b16 %v455
      %v1164 = vunpack.c.h.b16 %v455
      %v1165 = vunpack.c.l.b16 %v456
      %v1166 = vunpack.c.h.b16 %v456
      %v1167 = vunpack.c.l.b16 %v457
      %v1168 = vunpack.c.h.b16 %v457
      %v1169 = vunpack.c.l.b16 %v458
      %v1170 = vunpack.c.h.b16 %v458
      %v1171 = vunpack.c.l.b16 %v459
      %v1172 = vunpack.c.h.b16 %v459
      %v1173 = vunpack.c.l.b16 %v460
      %v1174 = vunpack.c.h.b16 %v460
      %v1175 = vunpack.c.l.b16 %v461
      %v1176 = vunpack.c.h.b16 %v461
      %v1177 = vunpack.c.l.b16 %v462
      %v1178 = vunpack.c.h.b16 %v462
      %v1179 = vunpack.c.l.b16 %v463
      %v1180 = vunpack.c.h.b16 %v463
      %v1181 = vunpack.c.l.b16 %v464
      %v1182 = vunpack.c.h.b16 %v464
      %v1183 = vunpack.c.l.b16 %v465
      %v1184 = vunpack.c.h.b16 %v465
      %v1185 = vunpack.c.l.b16 %v466
      %v1186 = vunpack.c.h.b16 %v466
      %v1187 = vunpack.c.l.b16 %v467
      %v1188 = vunpack.c.h.b16 %v467
      %v1189 = vunpack.c.l.b16 %v468
      %v1190 = vunpack.c.h.b16 %v468
      %v1191 = vunpack.c.l.b16 %v469
      %v1192 = vunpack.c.h.b16 %v469
      %v1193 = vunpack.c.l.b16 %v470
      %v1194 = vunpack.c.h.b16 %v470
      %v1195 = vunpack.c.l.b16 %v471
      %v1196 = vunpack.c.h.b16 %v471
      %v1197 = vunpack.c.l.b16 %v472
      %v1198 = vunpack.c.h.b16 %v472
      %v1199 = vunpack.c.l.b16 %v473
      %v1200 = vunpack.c.h.b16 %v473
      %v1201 = vunpack.c.l.b16 %v474
      %v1202 = vunpack.c.h.b16 %v474
      %v1203 = vunpack.c.l.b16 %v475
      %v1204 = vunpack.c.h.b16 %v475
      %v1205 = vunpack.c.l.b16 %v476
      %v1206 = vunpack.c.h.b16 %v476
      %v1207 = vunpack.c.l.b16 %v477
      %v1208 = vunpack.c.h.b16 %v477
      %v1209 = vunpack.c.l.b16 %v478
      %v1210 = vunpack.c.h.b16 %v478
      %v1211 = vunpack.c.l.b16 %v479
      %v1212 = vunpack.c.h.b16 %v479
      %v1213 = vunpack.c.l.b16 %v480
      %v1214 = vunpack.c.h.b16 %v480
      %v1215 = vunpack.c.l.b16 %v481
      %v1216 = vunpack.c.h.b16 %v481
      %v1217 = vunpack.c.l.b16 %v482
      %v1218 = vunpack.c.h.b16 %v482
      %v1219 = vunpack.c.l.b16 %v483
      %v1220 = vunpack.c.h.b16 %v483
      %v1221 = vunpack.c.l.b16 %v484
      %v1222 = vunpack.c.h.b16 %v484
      %v1223 = vunpack.c.l.b16 %v485
      %v1224 = vunpack.c.h.b16 %v485
      %v1225 = vunpack.c.l.b16 %v486
      %v1226 = vunpack.c.h.b16 %v486
      %v1227 = vunpack.c.l.b16 %v487
      %v1228 = vunpack.c.h.b16 %v487
      %v1229 = vunpack.c.l.b16 %v488
      %v1230 = vunpack.c.h.b16 %v488
      %v1231 = vunpack.c.l.b16 %v489
      %v1232 = vunpack.c.h.b16 %v489
      %v1233 = vunpack.c.l.b16 %v490
      %v1234 = vunpack.c.h.b16 %v490
      %v1235 = vunpack.c.l.b16 %v491
      %v1236 = vunpack.c.h.b16 %v491
      %v1237 = vunpack.c.l.b16 %v492
      %v1238 = vunpack.c.h.b16 %v492
      %v1239 = vunpack.c.l.b16 %v493
      %v1240 = vunpack.c.h.b16 %v493
      %v1241 = vunpack.c.l.b16 %v494
      %v1242 = vunpack.c.h.b16 %v494
      %v1243 = vunpack.c.l.b16 %v495
      %v1244 = vunpack.c.h.b16 %v495
      %v1245 = vunpack.c.l.b16 %v496
      %v1246 = vunpack.c.h.b16 %v496
      %v1247 = vunpack.c.l.b16 %v497
      %v1248 = vunpack.c.h.b16 %v497
      %v1249 = vunpack.c.l.b16 %v498
      %v1250 = vunpack.c.h.b16 %v498
      %v1251 = vunpack.c.l.b16 %v499
      %v1252 = vunpack.c.h.b16 %v499
      %v1253 = vunpack.c.l.b16 %v500
      %v1254 = vunpack.c.h.b16 %v500
      %v1255 = vunpack.c.l.b16 %v501
      %v1256 = vunpack.c.h.b16 %v501
      %v1257 = vunpack.c.l.b16 %v502
      %v1258 = vunpack.c.h.b16 %v502
      %v1259 = vunpack.c.l.b16 %v503
      %v1260 = vunpack.c.h.b16 %v503
      %v1261 = vunpack.c.l.b16 %v504
      %v1262 = vunpack.c.h.b16 %v504
      %v1263 = vunpack.c.l.b16 %v505
      %v1264 = vunpack.c.h.b16 %v505
      %v1265 = vunpack.c.l.b16 %v506
      %v1266 = vunpack.c.h.b16 %v506
      %v1267 = vunpack.c.l.b16 %v507
      %v1268 = vunpack.c.h.b16 %v507
      %v1269 = vunpack.c.l.b16 %v508
      %v1270 = vunpack.c.h.b16 %v508
      %v1271 = vunpack.c.l.b16 %v509
      %v1272 = vunpack.c.h.b16 %v509
      %v1273 = vunpack.c.l.b16 %v510
      %v1274 = vunpack.c.h.b16 %v510
      %v1275 = vunpack.c.l.b16 %v511
      %v1276 = vunpack.c.h.b16 %v511
      %v1277 = vunpack.c.l.b16 %v512
      %v1278 = vunpack.c.h.b16 %v512
      %v1279 = vunpack.c.l.b16 %v513
      %v1280 = vunpack.c.h.b16 %v513
      %v1281 = vunpack.c.l.b16 %v514
      %v1282 = vunpack.c.h.b16 %v514
      %v1283 = vunpack.c.l.b16 %v515
      %v1284 = vunpack.c.h.b16 %v515
      %v1285 = vunpack.c.l.b16 %v516
      %v1286 = vunpack.c.h.b16 %v516
      %v1287 = vunpack.c.l.b16 %v517
      %v1288 = vunpack.c.h.b16 %v517
      %v1289 = vunpack.c.l.b16 %v518
      %v1290 = vunpack.c.h.b16 %v518
      %v1291 = vunpack.c.l.b16 %v519
      %v1292 = vunpack.c.h.b16 %v519
      %v1293 = vunpack.c.l.b16 %v520
      %v1294 = vunpack.c.h.b16 %v520
      %v1295 = vunpack.c.l.b16 %v521
      %v1296 = vunpack.c.h.b16 %v521
      %v1297 = vunpack.c.l.b16 %v522
      %v1298 = vunpack.c.h.b16 %v522
      %v1299 = vunpack.c.l.b16 %v523
      %v1300 = vunpack.c.h.b16 %v523
      %v1301 = vunpack.c.l.b16 %v524
      %v1302 = vunpack.c.h.b16 %v524
      %v1303 = vunpack.c.l.b16 %v525
      %v1304 = vunpack.c.h.b16 %v525
      %v1305 = vunpack.c.l.b16 %v526
      %v1306 = vunpack.c.h.b16 %v526
      %v1307 = vunpack.c.l.b16 %v527
      %v1308 = vunpack.c.h.b16 %v527
      %v1309 = vunpack.c.l.b16 %v528
      %v1310 = vunpack.c.h.b16 %v528
      %v1311 = vunpack.c.l.b16 %v529
      %v1312 = vunpack.c.h.b16 %v529
      %v1313 = vunpack.c.l.b16 %v530
      %v1314 = vunpack.c.h.b16 %v530
      %v1315 = vunpack.c.l.b16 %v531
      %v1316 = vunpack.c.h.b16 %v531
      %v1317 = vunpack.c.l.b16 %v532
      %v1318 = vunpack.c.h.b16 %v532
      %v1319 = vunpack.c.l.b16 %v533
      %v1320 = vunpack.c.h.b16 %v533
      %v1321 = vunpack.c.l.b16 %v534
      %v1322 = vunpack.c.h.b16 %v534
      %v1323 = vunpack.c.l.b16 %v535
      %v1324 = vunpack.c.h.b16 %v535
      %v1325 = vunpack.c.l.b16 %v536
      %v1326 = vunpack.c.h.b16 %v536
      %v1327 = vunpack.c.l.b16 %v537
      %v1328 = vunpack.c.h.b16 %v537
      %v1329 = vunpack.c.l.b16 %v538
      %v1330 = vunpack.c.h.b16 %v538
      %v1331 = vunpack.c.l.b16 %v539
      %v1332 = vunpack.c.h.b16 %v539
      %v1333 = vunpack.c.l.b16 %v540
      %v1334 = vunpack.c.h.b16 %v540
      %v1335 = vunpack.c.l.b16 %v541
      %v1336 = vunpack.c.h.b16 %v541
      %v1337 = vunpack.c.l.b16 %v542
      %v1338 = vunpack.c.h.b16 %v542
      %v1339 = vunpack.c.l.b16 %v543
      %v1340 = vunpack.c.h.b16 %v543
      %v1341 = vunpack.c.l.b16 %v544
      %v1342 = vunpack.c.h.b16 %v544
      %v1343 = vunpack.c.l.b16 %v545
      %v1344 = vunpack.c.h.b16 %v545
      %v1345 = vunpack.c.l.b16 %v546
      %v1346 = vunpack.c.h.b16 %v546
      %v1347 = vunpack.c.l.b16 %v547
      %v1348 = vunpack.c.h.b16 %v547
      %v1349 = vunpack.c.l.b16 %v548
      %v1350 = vunpack.c.h.b16 %v548
      %v1351 = vunpack.c.l.b16 %v549
      %v1352 = vunpack.c.h.b16 %v549
      %v1353 = vunpack.c.l.b16 %v550
      %v1354 = vunpack.c.h.b16 %v550
      %v1355 = vunpack.c.l.b16 %v551
      %v1356 = vunpack.c.h.b16 %v551
      %v1357 = vunpack.c.l.b16 %v552
      %v1358 = vunpack.c.h.b16 %v552
      %v1359 = vunpack.c.l.b16 %v553
      %v1360 = vunpack.c.h.b16 %v553
      %v1361 = vunpack.c.l.b16 %v554
      %v1362 = vunpack.c.h.b16 %v554
      %v1363 = vunpack.c.l.b16 %v555
      %v1364 = vunpack.c.h.b16 %v555
      %v1365 = vunpack.c.l.b16 %v556
      %v1366 = vunpack.c.h.b16 %v556
      %v1367 = vunpack.c.l.b16 %v557
      %v1368 = vunpack.c.h.b16 %v557
      %v1369 = vunpack.c.l.b16 %v558
      %v1370 = vunpack.c.h.b16 %v558
      %v1371 = vunpack.c.l.b16 %v559
      %v1372 = vunpack.c.h.b16 %v559
      %v1373 = vunpack.c.l.b16 %v560
      %v1374 = vunpack.c.h.b16 %v560
      %v1375 = vunpack.c.l.b16 %v561
      %v1376 = vunpack.c.h.b16 %v561
      %v1377 = vunpack.c.l.b16 %v562
      %v1378 = vunpack.c.h.b16 %v562
      %v1379 = vunpack.c.l.b16 %v563
      %v1380 = vunpack.c.h.b16 %v563
      %v1381 = vunpack.c.l.b16 %v564
      %v1382 = vunpack.c.h.b16 %v564
      %v1383 = vunpack.c.l.b16 %v565
      %v1384 = vunpack.c.h.b16 %v565
      %v1385 = vunpack.c.l.b16 %v566
      %v1386 = vunpack.c.h.b16 %v566
      %v1387 = vunpack.c.l.b16 %v567
      %v1388 = vunpack.c.h.b16 %v567
      %v1389 = vunpack.c.l.b16 %v568
      %v1390 = vunpack.c.h.b16 %v568
      %v1391 = vunpack.c.l.b16 %v569
      %v1392 = vunpack.c.h.b16 %v569
      %v1393 = vunpack.c.l.b16 %v570
      %v1394 = vunpack.c.h.b16 %v570
      %v1395 = vunpack.c.l.b16 %v571
      %v1396 = vunpack.c.h.b16 %v571
      %v1397 = vunpack.c.l.b16 %v572
      %v1398 = vunpack.c.h.b16 %v572
      %v1399 = vunpack.c.l.b16 %v573
      %v1400 = vunpack.c.h.b16 %v573
      %v1401 = vunpack.c.l.b16 %v574
      %v1402 = vunpack.c.h.b16 %v574
      %v1403 = vunpack.c.l.b16 %v575
      %v1404 = vunpack.c.h.b16 %v575
      %v1405 = vunpack.c.l.b16 %v576
      %v1406 = vunpack.c.h.b16 %v576
      %v1407 = vunpack.c.l.b16 %v577
      %v1408 = vunpack.c.h.b16 %v577
      %v1409 = vunpack.c.l.b16 %v578
      %v1410 = vunpack.c.h.b16 %v578
      %v1411 = vunpack.c.l.b16 %v579
      %v1412 = vunpack.c.h.b16 %v579
      %v1413 = vunpack.c.l.b16 %v580
      %v1414 = vunpack.c.h.b16 %v580
      %v1415 = vunpack.c.l.b16 %v581
      %v1416 = vunpack.c.h.b16 %v581
      %v1417 = vunpack.c.l.b16 %v582
      %v1418 = vunpack.c.h.b16 %v582
      %v1419 = vunpack.c.l.b16 %v583
      %v1420 = vunpack.c.h.b16 %v583
      %v1421 = vunpack.c.l.b16 %v584
      %v1422 = vunpack.c.h.b16 %v584
      %v1423 = vunpack.c.l.b16 %v585
      %v1424 = vunpack.c.h.b16 %v585
      %v1425 = vunpack.c.l.b16 %v586
      %v1426 = vunpack.c.h.b16 %v586
      %v1427 = vunpack.c.l.b16 %v587
      %v1428 = vunpack.c.h.b16 %v587
      %v1429 = vunpack.c.l.b16 %v588
      %v1430 = vunpack.c.h.b16 %v588
      %v1431 = vunpack.c.l.b16 %v589
      %v1432 = vunpack.c.h.b16 %v589
      %v1433 = vunpack.c.l.b16 %v590
      %v1434 = vunpack.c.h.b16 %v590
      %v1435 = vunpack.c.l.b16 %v591
      %v1436 = vunpack.c.h.b16 %v591
      %v1437 = vunpack.c.l.b16 %v592
      %v1438 = vunpack.c.h.b16 %v592
      %v1439 = vunpack.c.l.b16 %v593
      %v1440 = vunpack.c.h.b16 %v593
      %v1441 = vunpack.c.l.b16 %v594
      %v1442 = vunpack.c.h.b16 %v594
      %v1443 = vunpack.c.l.b16 %v595
      %v1444 = vunpack.c.h.b16 %v595
      %v1445 = vunpack.c.l.b16 %v596
      %v1446 = vunpack.c.h.b16 %v596
      %v1447 = vunpack.c.l.b16 %v597
      %v1448 = vunpack.c.h.b16 %v597
      %v1449 = vunpack.c.l.b16 %v598
      %v1450 = vunpack.c.h.b16 %v598
      %v1451 = vunpack.c.l.b16 %v599
      %v1452 = vunpack.c.h.b16 %v599
      %v1453 = vunpack.c.l.b16 %v600
      %v1454 = vunpack.c.h.b16 %v600
      %v1455 = vunpack.c.l.b16 %v601
      %v1456 = vunpack.c.h.b16 %v601
      %v1457 = vunpack.c.l.b16 %v602
      %v1458 = vunpack.c.h.b16 %v602
      %v1459 = vunpack.c.l.b16 %v603
      %v1460 = vunpack.c.h.b16 %v603
      %v1461 = vunpack.c.l.b16 %v604
      %v1462 = vunpack.c.h.b16 %v604
      %v1463 = vunpack.c.l.b16 %v605
      %v1464 = vunpack.c.h.b16 %v605
      %v1465 = vunpack.c.l.b16 %v606
      %v1466 = vunpack.c.h.b16 %v606
      %v1467 = vunpack.c.l.b16 %v607
      %v1468 = vunpack.c.h.b16 %v607
      %v1469 = vunpack.c.l.b16 %v608
      %v1470 = vunpack.c.h.b16 %v608
      %v1471 = vunpack.c.l.b16 %v609
      %v1472 = vunpack.c.h.b16 %v609
      %v1473 = vunpack.c.l.b16 %v610
      %v1474 = vunpack.c.h.b16 %v610
      %v1475 = vunpack.c.l.b16 %v611
      %v1476 = vunpack.c.h.b16 %v611
      %v1477 = vunpack.c.l.b16 %v612
      %v1478 = vunpack.c.h.b16 %v612
      %v1479 = vunpack.c.l.b16 %v613
      %v1480 = vunpack.c.h.b16 %v613
      %v1481 = vunpack.c.l.b16 %v614
      %v1482 = vunpack.c.h.b16 %v614
      %v1483 = vunpack.c.l.b16 %v615
      %v1484 = vunpack.c.h.b16 %v615
      %v1485 = vunpack.c.l.b16 %v616
      %v1486 = vunpack.c.h.b16 %v616
      %v1487 = vunpack.c.l.b16 %v617
      %v1488 = vunpack.c.h.b16 %v617
      %v1489 = vunpack.c.l.b16 %v618
      %v1490 = vunpack.c.h.b16 %v618
      %v1491 = vunpack.c.l.b16 %v619
      %v1492 = vunpack.c.h.b16 %v619
      %v1493 = vunpack.c.l.b16 %v620
      %v1494 = vunpack.c.h.b16 %v620
      %v1495 = vunpack.c.l.b16 %v621
      %v1496 = vunpack.c.h.b16 %v621
      %v1497 = vunpack.c.l.b16 %v622
      %v1498 = vunpack.c.h.b16 %v622
      %v1499 = vunpack.c.l.b16 %v623
      %v1500 = vunpack.c.h.b16 %v623
      %v1501 = vunpack.c.l.b16 %v624
      %v1502 = vunpack.c.h.b16 %v624
      %v1503 = vunpack.c.l.b16 %v625
      %v1504 = vunpack.c.h.b16 %v625
      %v1505 = vunpack.c.l.b16 %v626
      %v1506 = vunpack.c.h.b16 %v626
      %v1507 = vunpack.c.l.b16 %v627
      %v1508 = vunpack.c.h.b16 %v627
      %v1509 = vunpack.c.l.b16 %v628
      %v1510 = vunpack.c.h.b16 %v628
      %v1511 = vunpack.c.l.b16 %v629
      %v1512 = vunpack.c.h.b16 %v629
      %v1513 = vunpack.c.l.b16 %v630
      %v1514 = vunpack.c.h.b16 %v630
      %v1515 = vunpack.c.l.b16 %v631
      %v1516 = vunpack.c.h.b16 %v631
      %v1517 = vunpack.c.l.b16 %v632
      %v1518 = vunpack.c.h.b16 %v632
      %v1519 = vunpack.c.l.b16 %v633
      %v1520 = vunpack.c.h.b16 %v633
      %v1521 = vunpack.c.l.b16 %v634
      %v1522 = vunpack.c.h.b16 %v634
      %v1523 = vunpack.c.l.b16 %v635
      %v1524 = vunpack.c.h.b16 %v635
      %v1525 = vunpack.c.l.b16 %v636
      %v1526 = vunpack.c.h.b16 %v636
      %v1527 = vunpack.c.l.b16 %v637
      %v1528 = vunpack.c.h.b16 %v637
      %v1529 = vunpack.c.l.b16 %v638
      %v1530 = vunpack.c.h.b16 %v638
      %v1531 = vunpack.c.l.b16 %v639
      %v1532 = vunpack.c.h.b16 %v639
      %v1533 = vunpack.c.l.b16 %v640
      %v1534 = vunpack.c.h.b16 %v640
      %v1535 = vunpack.c.l.b16 %v641
      %v1536 = vunpack.c.h.b16 %v641
      %v1537 = vunpack.c.l.b16 %v642
      %v1538 = vunpack.c.h.b16 %v642
      %v1539 = vunpack.c.l.b16 %v643
      %v1540 = vunpack.c.h.b16 %v643
      %v1541 = vunpack.c.l.b16 %v644
      %v1542 = vunpack.c.h.b16 %v644
      %v1543 = vunpack.c.l.b16 %v645
      %v1544 = vunpack.c.h.b16 %v645
      %v1545 = vunpack.c.l.b16 %v646
      %v1546 = vunpack.c.h.b16 %v646
      %v1547 = vpack.c.b16 %v959, %v947
      %v1548 = vpack.c.b16 %v960, %v948
      %v1549 = vpack.c.b16 %v961, %v949
      %v1550 = vpack.c.b16 %v962, %v950
      %v1551 = vpack.c.b16 %v963, %v951
      %v1552 = vpack.c.b16 %v964, %v952
      %v1553 = vpack.c.b16 %v965, %v953
      %v1554 = vpack.c.b16 %v966, %v954
      %v1555 = vpack.c.b16 %v967, %v955
      %v1556 = vpack.c.b16 %v968, %v956
      %v1557 = vpack.c.b16 %v969, %v957
      %v1558 = vpack.c.b16 %v970, %v958
      %v1559 = vpack.c.b16 %v983, %v971
      %v1560 = vpack.c.b16 %v984, %v972
      %v1561 = vpack.c.b16 %v985, %v973
      %v1562 = vpack.c.b16 %v986, %v974
      %v1563 = vpack.c.b16 %v987, %v975
      %v1564 = vpack.c.b16 %v988, %v976
      %v1565 = vpack.c.b16 %v989, %v977
      %v1566 = vpack.c.b16 %v990, %v978
      %v1567 = vpack.c.b16 %v991, %v979
      %v1568 = vpack.c.b16 %v992, %v980
      %v1569 = vpack.c.b16 %v993, %v981
      %v1570 = vpack.c.b16 %v994, %v982
      %v1571 = vpack.c.b16 %v1007, %v995
      %v1572 = vpack.c.b16 %v1008, %v996
      %v1573 = vpack.c.b16 %v1009, %v997
      %v1574 = vpack.c.b16 %v1010, %v998
      %v1575 = vpack.c.b16 %v1011, %v999
      %v1576 = vpack.c.b16 %v1012, %v1000
      %v1577 = vpack.c.b16 %v1013, %v1001
      %v1578 = vpack.c.b16 %v1014, %v1002
      %v1579 = vpack.c.b16 %v1015, %v1003
      %v1580 = vpack.c.b16 %v1016, %v1004
      %v1581 = vpack.c.b16 %v1017, %v1005
      %v1582 = vpack.c.b16 %v1018, %v1006
      %v1583 = vpack.c.b16 %v1031, %v1019
      %v1584 = vpack.c.b16 %v1032, %v1020
      %v1585 = vpack.c.b16 %v1033, %v1021
      %v1586 = vpack.c.b16 %v1034, %v1022
      %v1587 = vpack.c.b16 %v1035, %v1023
      %v1588 = vpack.c.b16 %v1036, %v1024
      %v1589 = vpack.c.b16 %v1037, %v1025
      %v1590 = vpack.c.b16 %v1038, %v1026
      %v1591 = vpack.c.b16 %v1039, %v1027
      %v1592 = vpack.c.b16 %v1040, %v1028
      %v1593 = vpack.c.b16 %v1041, %v1029
      %v1594 = vpack.c.b16 %v1042, %v1030
      %v1595 = vpack.c.b16 %v1055, %v1043
      %v1596 = vpack.c.b16 %v1056, %v1044
      %v1597 = vpack.c.b16 %v1057, %v1045
      %v1598 = vpack.c.b16 %v1058, %v1046
      %v1599 = vpack.c.b16 %v1059, %v1047
      %v1600 = vpack.c.b16 %v1060, %v1048
      %v1601 = vpack.c.b16 %v1061, %v1049
      %v1602 = vpack.c.b16 %v1062, %v1050
      %v1603 = vpack.c.b16 %v1063, %v1051
      %v1604 = vpack.c.b16 %v1064, %v1052
      %v1605 = vpack.c.b16 %v1065, %v1053
      %v1606 = vpack.c.b16 %v1066, %v1054
      %v1607 = vpack.c.b16 %v1079, %v1067
      %v1608 = vpack.c.b16 %v1080, %v1068
      %v1609 = vpack.c.b16 %v1081, %v1069
      %v1610 = vpack.c.b16 %v1082, %v1070
      %v1611 = vpack.c.b16 %v1083, %v1071
      %v1612 = vpack.c.b16 %v1084, %v1072
      %v1613 = vpack.c.b16 %v1085, %v1073
      %v1614 = vpack.c.b16 %v1086, %v1074
      %v1615 = vpack.c.b16 %v1087, %v1075
      %v1616 = vpack.c.b16 %v1088, %v1076
      %v1617 = vpack.c.b16 %v1089, %v1077
      %v1618 = vpack.c.b16 %v1090, %v1078
      %v1619 = vpack.c.b16 %v1103, %v1091
      %v1620 = vpack.c.b16 %v1104, %v1092
      %v1621 = vpack.c.b16 %v1105, %v1093
      %v1622 = vpack.c.b16 %v1106, %v1094
      %v1623 = vpack.c.b16 %v1107, %v1095
      %v1624 = vpack.c.b16 %v1108, %v1096
      %v1625 = vpack.c.b16 %v1109, %v1097
      %v1626 = vpack.c.b16 %v1110, %v1098
      %v1627 = vpack.c.b16 %v1111, %v1099
      %v1628 = vpack.c.b16 %v1112, %v1100
      %v1629 = vpack.c.b16 %v1113, %v1101
      %v1630 = vpack.c.b16 %v1114, %v1102
      %v1631 = vpack.c.b16 %v1127, %v1115
      %v1632 = vpack.c.b16 %v1128, %v1116
      %v1633 = vpack.c.b16 %v1129, %v1117
      %v1634 = vpack.c.b16 %v1130, %v1118
      %v1635 = vpack.c.b16 %v1131, %v1119
      %v1636 = vpack.c.b16 %v1132, %v1120
      %v1637 = vpack.c.b16 %v1133, %v1121
      %v1638 = vpack.c.b16 %v1134, %v1122
      %v1639 = vpack.c.b16 %v1135, %v1123
      %v1640 = vpack.c.b16 %v1136, %v1124
      %v1641 = vpack.c.b16 %v1137, %v1125
      %v1642 = vpack.c.b16 %v1138, %v1126
      %v1643 = vpack.c.b16 %v1151, %v1139
      %v1644 = vpack.c.b16 %v1152, %v1140
      %v1645 = vpack.c.b16 %v1153, %v1141
      %v1646 = vpack.c.b16 %v1154, %v1142
      %v1647 = vpack.c.b16 %v1155, %v1143
      %v1648 = vpack.c.b16 %v1156, %v1144
      %v1649 = vpack.c.b16 %v1157, %v1145
      %v1650 = vpack.c.b16 %v1158, %v1146
      %v1651 = vpack.c.b16 %v1159, %v1147
      %v1652 = vpack.c.b16 %v1160, %v1148
      %v1653 = vpack.c.b16 %v1161, %v1149
      %v1654 = vpack.c.b16 %v1162, %v1150
      %v1655 = vpack.c.b16 %v1175, %v1163
      %v1656 = vpack.c.b16 %v1176, %v1164
      %v1657 = vpack.c.b16 %v1177, %v1165
      %v1658 = vpack.c.b16 %v1178, %v1166
      %v1659 = vpack.c.b16 %v1179, %v1167
      %v1660 = vpack.c.b16 %v1180, %v1168
      %v1661 = vpack.c.b16 %v1181, %v1169
      %v1662 = vpack.c.b16 %v1182, %v1170
      %v1663 = vpack.c.b16 %v1183, %v1171
      %v1664 = vpack.c.b16 %v1184, %v1172
      %v1665 = vpack.c.b16 %v1185, %v1173
      %v1666 = vpack.c.b16 %v1186, %v1174
      %v1667 = vpack.c.b16 %v1199, %v1187
      %v1668 = vpack.c.b16 %v1200, %v1188
      %v1669 = vpack.c.b16 %v1201, %v1189
      %v1670 = vpack.c.b16 %v1202, %v1190
      %v1671 = vpack.c.b16 %v1203, %v1191
      %v1672 = vpack.c.b16 %v1204, %v1192
      %v1673 = vpack.c.b16 %v1205, %v1193
      %v1674 = vpack.c.b16 %v1206, %v1194
      %v1675 = vpack.c.b16 %v1207, %v1195
      %v1676 = vpack.c.b16 %v1208, %v1196
      %v1677 = vpack.c.b16 %v1209, %v1197
      %v1678 = vpack.c.b16 %v1210, %v1198
      %v1679 = vpack.c.b16 %v1223, %v1211
      %v1680 = vpack.c.b16 %v1224, %v1212
      %v1681 = vpack.c.b16 %v1225, %v1213
      %v1682 = vpack.c.b16 %v1226, %v1214
      %v1683 = vpack.c.b16 %v1227, %v1215
      %v1684 = vpack.c.b16 %v1228, %v1216
      %v1685 = vpack.c.b16 %v1229, %v1217
      %v1686 = vpack.c.b16 %v1230, %v1218
      %v1687 = vpack.c.b16 %v1231, %v1219
      %v1688 = vpack.c.b16 %v1232, %v1220
      %v1689 = vpack.c.b16 %v1233, %v1221
      %v1690 = vpack.c.b16 %v1234, %v1222
      %v1691 = vpack.c.b16 %v1247, %v1235
      %v1692 = vpack.c.b16 %v1248, %v1236
      %v1693 = vpack.c.b16 %v1249, %v1237
      %v1694 = vpack.c.b16 %v1250, %v1238
      %v1695 = vpack.c.b16 %v1251, %v1239
      %v1696 = vpack.c.b16 %v1252, %v1240
      %v1697 = vpack.c.b16 %v1253, %v1241
      %v1698 = vpack.c.b16 %v1254, %v1242
      %v1699 = vpack.c.b16 %v1255, %v1243
      %v1700 = vpack.c.b16 %v1256, %v1244
      %v1701 = vpack.c.b16 %v1257, %v1245
      %v1702 = vpack.c.b16 %v1258, %v1246
      %v1703 = vpack.c.b16 %v1271, %v1259
      %v1704 = vpack.c.b16 %v1272, %v1260
      %v1705 = vpack.c.b16 %v1273, %v1261
      %v1706 = vpack.c.b16 %v1274, %v1262
      %v1707 = vpack.c.b16 %v1275, %v1263
      %v1708 = vpack.c.b16 %v1276, %v1264
      %v1709 = vpack.c.b16 %v1277, %v1265
      %v1710 = vpack.c.b16 %v1278, %v1266
      %v1711 = vpack.c.b16 %v1279, %v1267
      %v1712 = vpack.c.b16 %v1280, %v1268
      %v1713 = vpack.c.b16 %v1281, %v1269
      %v1714 = vpack.c.b16 %v1282, %v1270
      %v1715 = vpack.c.b16 %v1295, %v1283
      %v1716 = vpack.c.b16 %v1296, %v1284
      %v1717 = vpack.c.b16 %v1297, %v1285
      %v1718 = vpack.c.b16 %v1298, %v1286
      %v1719 = vpack.c.b16 %v1299, %v1287
      %v1720 = vpack.c.b16 %v1300, %v1288
      %v1721 = vpack.c.b16 %v1301, %v1289
      %v1722 = vpack.c.b16 %v1302, %v1290
      %v1723 = vpack.c.b16 %v1303, %v1291
      %v1724 = vpack.c.b16 %v1304, %v1292
      %v1725 = vpack.c.b16 %v1305, %v1293
      %v1726 = vpack.c.b16 %v1306, %v1294
      %v1727 = vpack.c.b16 %v1319, %v1307
      %v1728 = vpack.c.b16 %v1320, %v1308
      %v1729 = vpack.c.b16 %v1321, %v1309
      %v1730 = vpack.c.b16 %v1322, %v1310
      %v1731 = vpack.c.b16 %v1323, %v1311
      %v1732 = vpack.c.b16 %v1324, %v1312
      %v1733 = vpack.c.b16 %v1325, %v1313
      %v1734 = vpack.c.b16 %v1326, %v1314
      %v1735 = vpack.c.b16 %v1327, %v1315
      %v1736 = vpack.c.b16 %v1328, %v1316
      %v1737 = vpack.c.b16 %v1329, %v1317
      %v1738 = vpack.c.b16 %v1330, %v1318
      %v1739 = vpack.c.b16 %v1343, %v1331
      %v1740 = vpack.c.b16 %v1344, %v1332
      %v1741 = vpack.c.b16 %v1345, %v1333
      %v1742 = vpack.c.b16 %v1346, %v1334
      %v1743 = vpack.c.b16 %v1347, %v1335
      %v1744 = vpack.c.b16 %v1348, %v1336
      %v1745 = vpack.c.b16 %v1349, %v1337
      %v1746 = vpack.c.b16 %v1350, %v1338
      %v1747 = vpack.c.b16 %v1351, %v1339
      %v1748 = vpack.c.b16 %v1352, %v1340
      %v1749 = vpack.c.b16 %v1353, %v1341
      %v1750 = vpack.c.b16 %v1354, %v1342
      %v1751 = vpack.c.b16 %v1367, %v1355
      %v1752 = vpack.c.b16 %v1368, %v1356
      %v1753 = vpack.c.b16 %v1369, %v1357
      %v1754 = vpack.c.b16 %v1370, %v1358
      %v1755 = vpack.c.b16 %v1371, %v1359
      %v1756 = vpack.c.b16 %v1372, %v1360
      %v1757 = vpack.c.b16 %v1373, %v1361
      %v1758 = vpack.c.b16 %v1374, %v1362
      %v1759 = vpack.c.b16 %v1375, %v1363
      %v1760 = vpack.c.b16 %v1376, %v1364
      %v1761 = vpack.c.b16 %v1377, %v1365
      %v1762 = vpack.c.b16 %v1378, %v1366
      %v1763 = vpack.c.b16 %v1391, %v1379
      %v1764 = vpack.c.b16 %v1392, %v1380
      %v1765 = vpack.c.b16 %v1393, %v1381
      %v1766 = vpack.c.b16 %v1394, %v1382
      %v1767 = vpack.c.b16 %v1395, %v1383
      %v1768 = vpack.c.b16 %v1396, %v1384
      %v1769 = vpack.c.b16 %v1397, %v1385
      %v1770 = vpack.c.b16 %v1398, %v1386
      %v1771 = vpack.c.b16 %v1399, %v1387
      %v1772 = vpack.c.b16 %v1400, %v1388
      %v1773 = vpack.c.b16 %v1401, %v1389
      %v1774 = vpack.c.b16 %v1402, %v1390
      %v1775 = vpack.c.b16 %v1415, %v1403
      %v1776 = vpack.c.b16 %v1416, %v1404
      %v1777 = vpack.c.b16 %v1417, %v1405
      %v1778 = vpack.c.b16 %v1418, %v1406
      %v1779 = vpack.c.b16 %v1419, %v1407
      %v1780 = vpack.c.b16 %v1420, %v1408
      %v1781 = vpack.c.b16 %v1421, %v1409
      %v1782 = vpack.c.b16 %v1422, %v1410
      %v1783 = vpack.c.b16 %v1423, %v1411
      %v1784 = vpack.c.b16 %v1424, %v1412
      %v1785 = vpack.c.b16 %v1425, %v1413
      %v1786 = vpack.c.b16 %v1426, %v1414
      %v1787 = vpack.c.b16 %v1439, %v1427
      %v1788 = vpack.c.b16 %v1440, %v1428
      %v1789 = vpack.c.b16 %v1441, %v1429
      %v1790 = vpack.c.b16 %v1442, %v1430
      %v1791 = vpack.c.b16 %v1443, %v1431
      %v1792 = vpack.c.b16 %v1444, %v1432
      %v1793 = vpack.c.b16 %v1445, %v1433
      %v1794 = vpack.c.b16 %v1446, %v1434
      %v1795 = vpack.c.b16 %v1447, %v1435
      %v1796 = vpack.c.b16 %v1448, %v1436
      %v1797 = vpack.c.b16 %v1449, %v1437
      %v1798 = vpack.c.b16 %v1450, %v1438
      %v1799 = vpack.c.b16 %v1463, %v1451
      %v1800 = vpack.c.b16 %v1464, %v1452
      %v1801 = vpack.c.b16 %v1465, %v1453
      %v1802 = vpack.c.b16 %v1466, %v1454
      %v1803 = vpack.c.b16 %v1467, %v1455
      %v1804 = vpack.c.b16 %v1468, %v1456
      %v1805 = vpack.c.b16 %v1469, %v1457
      %v1806 = vpack.c.b16 %v1470, %v1458
      %v1807 = vpack.c.b16 %v1471, %v1459
      %v1808 = vpack.c.b16 %v1472, %v1460
      %v1809 = vpack.c.b16 %v1473, %v1461
      %v1810 = vpack.c.b16 %v1474, %v1462
      %v1811 = vpack.c.b16 %v1487, %v1475
      %v1812 = vpack.c.b16 %v1488, %v1476
      %v1813 = vpack.c.b16 %v1489, %v1477
      %v1814 = vpack.c.b16 %v1490, %v1478
      %v1815 = vpack.c.b16 %v1491, %v1479
      %v1816 = vpack.c.b16 %v1492, %v1480
      %v1817 = vpack.c.b16 %v1493, %v1481
      %v1818 = vpack.c.b16 %v1494, %v1482
      %v1819 = vpack.c.b16 %v1495, %v1483
      %v1820 = vpack.c.b16 %v1496, %v1484
      %v1821 = vpack.c.b16 %v1497, %v1485
      %v1822 = vpack.c.b16 %v1498, %v1486
      %v1823 = vpack.c.b16 %v1511, %v1499
      %v1824 = vpack.c.b16 %v1512, %v1500
      %v1825 = vpack.c.b16 %v1513, %v1501
      %v1826 = vpack.c.b16 %v1514, %v1502
      %v1827 = vpack.c.b16 %v1515, %v1503
      %v1828 = vpack.c.b16 %v1516, %v1504
      %v1829 = vpack.c.b16 %v1517, %v1505
      %v1830 = vpack.c.b16 %v1518, %v1506
      %v1831 = vpack.c.b16 %v1519, %v1507
      %v1832 = vpack.c.b16 %v1520, %v1508
      %v1833 = vpack.c.b16 %v1521, %v1509
      %v1834 = vpack.c.b16 %v1522, %v1510
      %v1835 = vpack.c.b16 %v1535, %v1523
      %v1836 = vpack.c.b16 %v1536, %v1524
      %v1837 = vpack.c.b16 %v1537, %v1525
      %v1838 = vpack.c.b16 %v1538, %v1526
      %v1839 = vpack.c.b16 %v1539, %v1527
      %v1840 = vpack.c.b16 %v1540, %v1528
      %v1841 = vpack.c.b16 %v1541, %v1529
      %v1842 = vpack.c.b16 %v1542, %v1530
      %v1843 = vpack.c.b16 %v1543, %v1531
      %v1844 = vpack.c.b16 %v1544, %v1532
      %v1845 = vpack.c.b16 %v1545, %v1533
      %v1846 = vpack.c.b16 %v1546, %v1534
      %vm2147 = vcmask 130048
      %v2149 = vsel %vm2147, %v346, 0
      %2151 = vmatpush.bf16.msra.mxu0 %v1631
      %2152 = vmatpush.bf16.msra.mxu0 %v1619
      %2153 = vmatpush.bf16.msra.mxu0 %v1607
      %2154 = vmatpush.bf16.msra.mxu0 %v1595
      %2155 = vmatpush.bf16.msra.mxu0 %v1583
      %2156 = vmatpush.bf16.msra.mxu0 %v1571
      %2157 = vmatpush.bf16.msra.mxu0 %v1559
      %2158 = vmatpush.bf16.msra.mxu0 %v1547
      %2159 = vmatmul.bf16.gmra.mxu0 %v343
      %v2160 = vpop.f32.mrf.mxu0
      %v2161 = vadd.f32 0.0, %v2160
      %v2162 = vpop.f32.mrf.mxu0
      %v2163 = vadd.f32 0.0, %v2162
      %2164 = vdwg.mxu0
      %2165 = vmatpush.bf16.msra.mxu0 %v1727
      %2166 = vmatpush.bf16.msra.mxu0 %v1715
      %2167 = vmatpush.bf16.msra.mxu0 %v1703
      %2168 = vmatpush.bf16.msra.mxu0 %v1691
      %2169 = vmatpush.bf16.msra.mxu0 %v1679
      %2170 = vmatpush.bf16.msra.mxu0 %v1667
      %2171 = vmatpush.bf16.msra.mxu0 %v1655
      %2172 = vmatpush.bf16.msra.mxu0 %v1643
      %2173 = vmatmul.bf16.gmra.mxu0 %v344
      %v2174 = vpop.f32.mrf.mxu0
      %v2175 = vadd.f32 %v2161, %v2174
      %v2176 = vpop.f32.mrf.mxu0
      %v2177 = vadd.f32 %v2163, %v2176
      %2178 = vdwg.mxu0
      %2179 = vmatpush.bf16.msra.mxu0 %v1823
      %2180 = vmatpush.bf16.msra.mxu0 %v1811
      %2181 = vmatpush.bf16.msra.mxu0 %v1799
      %2182 = vmatpush.bf16.msra.mxu0 %v1787
      %2183 = vmatpush.bf16.msra.mxu0 %v1775
      %2184 = vmatpush.bf16.msra.mxu0 %v1763
      %2185 = vmatpush.bf16.msra.mxu0 %v1751
      %2186 = vmatpush.bf16.msra.mxu0 %v1739
      %2187 = vmatmul.bf16.gmra.mxu0 %v345
      %v2188 = vpop.f32.mrf.mxu0
      %v2189 = vadd.f32 %v2175, %v2188
      %v2190 = vpop.f32.mrf.mxu0
      %v2191 = vadd.f32 %v2177, %v2190
      %2192 = vdwg.mxu0
      %2193 = vmatpush.bf16.msra.mxu0 0
      %2194 = vmatpush.bf16.msra.mxu0 0
      %2195 = vmatpush.bf16.msra.mxu0 0
      %2196 = vmatpush.bf16.msra.mxu0 0
      %2197 = vmatpush.bf16.msra.mxu0 0
      %2198 = vmatpush.bf16.msra.mxu0 0
      %2199 = vmatpush.bf16.msra.mxu0 0
      %2200 = vmatpush.bf16.msra.mxu0 %v1835
      %2201 = vmatmul.bf16.gmra.mxu0 %v2149
      %v2202 = vpop.f32.mrf.mxu0
      %v2203 = vadd.f32 %v2189, %v2202
      %v2204 = vpop.f32.mrf.mxu0
      %v2205 = vadd.f32 %v2191, %v2204
      %2206 = vdwg.mxu0
      %2207 = vmatpush.bf16.msra.mxu0 %v1632
      %2208 = vmatpush.bf16.msra.mxu0 %v1620
      %2209 = vmatpush.bf16.msra.mxu0 %v1608
      %2210 = vmatpush.bf16.msra.mxu0 %v1596
      %2211 = vmatpush.bf16.msra.mxu0 %v1584
      %2212 = vmatpush.bf16.msra.mxu0 %v1572
      %2213 = vmatpush.bf16.msra.mxu0 %v1560
      %2214 = vmatpush.bf16.msra.mxu0 %v1548
      %2215 = vmatmul.bf16.gmra.mxu0 %v343
      %v2216 = vpop.f32.mrf.mxu0
      %v2217 = vadd.f32 0.0, %v2216
      %v2218 = vpop.f32.mrf.mxu0
      %v2219 = vadd.f32 0.0, %v2218
      %2220 = vdwg.mxu0
      %2221 = vmatpush.bf16.msra.mxu0 %v1728
      %2222 = vmatpush.bf16.msra.mxu0 %v1716
      %2223 = vmatpush.bf16.msra.mxu0 %v1704
      %2224 = vmatpush.bf16.msra.mxu0 %v1692
      %2225 = vmatpush.bf16.msra.mxu0 %v1680
      %2226 = vmatpush.bf16.msra.mxu0 %v1668
      %2227 = vmatpush.bf16.msra.mxu0 %v1656
      %2228 = vmatpush.bf16.msra.mxu0 %v1644
      %2229 = vmatmul.bf16.gmra.mxu0 %v344
      %v2230 = vpop.f32.mrf.mxu0
      %v2231 = vadd.f32 %v2217, %v2230
      %v2232 = vpop.f32.mrf.mxu0
      %v2233 = vadd.f32 %v2219, %v2232
      %2234 = vdwg.mxu0
      %2235 = vmatpush.bf16.msra.mxu0 %v1824
      %2236 = vmatpush.bf16.msra.mxu0 %v1812
      %2237 = vmatpush.bf16.msra.mxu0 %v1800
      %2238 = vmatpush.bf16.msra.mxu0 %v1788
      %2239 = vmatpush.bf16.msra.mxu0 %v1776
      %2240 = vmatpush.bf16.msra.mxu0 %v1764
      %2241 = vmatpush.bf16.msra.mxu0 %v1752
      %2242 = vmatpush.bf16.msra.mxu0 %v1740
      %2243 = vmatmul.bf16.gmra.mxu0 %v345
      %v2244 = vpop.f32.mrf.mxu0
      %v2245 = vadd.f32 %v2231, %v2244
      %v2246 = vpop.f32.mrf.mxu0
      %v2247 = vadd.f32 %v2233, %v2246
      %2248 = vdwg.mxu0
      %2249 = vmatpush.bf16.msra.mxu0 0
      %2250 = vmatpush.bf16.msra.mxu0 0
      %2251 = vmatpush.bf16.msra.mxu0 0
      %2252 = vmatpush.bf16.msra.mxu0 0
      %2253 = vmatpush.bf16.msra.mxu0 0
      %2254 = vmatpush.bf16.msra.mxu0 0
      %2255 = vmatpush.bf16.msra.mxu0 0
      %2256 = vmatpush.bf16.msra.mxu0 %v1836
      %2257 = vmatmul.bf16.gmra.mxu0 %v2149
      %v2258 = vpop.f32.mrf.mxu0
      %v2259 = vadd.f32 %v2245, %v2258
      %v2260 = vpop.f32.mrf.mxu0
      %v2261 = vadd.f32 %v2247, %v2260
      %2262 = vdwg.mxu0
      %2263 = vmatpush.bf16.msra.mxu0 %v1633
      %2264 = vmatpush.bf16.msra.mxu0 %v1621
      %2265 = vmatpush.bf16.msra.mxu0 %v1609
      %2266 = vmatpush.bf16.msra.mxu0 %v1597
      %2267 = vmatpush.bf16.msra.mxu0 %v1585
      %2268 = vmatpush.bf16.msra.mxu0 %v1573
      %2269 = vmatpush.bf16.msra.mxu0 %v1561
      %2270 = vmatpush.bf16.msra.mxu0 %v1549
      %2271 = vmatmul.bf16.gmra.mxu0 %v343
      %v2272 = vpop.f32.mrf.mxu0
      %v2273 = vadd.f32 0.0, %v2272
      %v2274 = vpop.f32.mrf.mxu0
      %v2275 = vadd.f32 0.0, %v2274
      %2276 = vdwg.mxu0
      %2277 = vmatpush.bf16.msra.mxu0 %v1729
      %2278 = vmatpush.bf16.msra.mxu0 %v1717
      %2279 = vmatpush.bf16.msra.mxu0 %v1705
      %2280 = vmatpush.bf16.msra.mxu0 %v1693
      %2281 = vmatpush.bf16.msra.mxu0 %v1681
      %2282 = vmatpush.bf16.msra.mxu0 %v1669
      %2283 = vmatpush.bf16.msra.mxu0 %v1657
      %2284 = vmatpush.bf16.msra.mxu0 %v1645
      %2285 = vmatmul.bf16.gmra.mxu0 %v344
      %v2286 = vpop.f32.mrf.mxu0
      %v2287 = vadd.f32 %v2273, %v2286
      %v2288 = vpop.f32.mrf.mxu0
      %v2289 = vadd.f32 %v2275, %v2288
      %2290 = vdwg.mxu0
      %2291 = vmatpush.bf16.msra.mxu0 %v1825
      %2292 = vmatpush.bf16.msra.mxu0 %v1813
      %2293 = vmatpush.bf16.msra.mxu0 %v1801
      %2294 = vmatpush.bf16.msra.mxu0 %v1789
      %2295 = vmatpush.bf16.msra.mxu0 %v1777
      %2296 = vmatpush.bf16.msra.mxu0 %v1765
      %2297 = vmatpush.bf16.msra.mxu0 %v1753
      %2298 = vmatpush.bf16.msra.mxu0 %v1741
      %2299 = vmatmul.bf16.gmra.mxu0 %v345
      %v2300 = vpop.f32.mrf.mxu0
      %v2301 = vadd.f32 %v2287, %v2300
      %v2302 = vpop.f32.mrf.mxu0
      %v2303 = vadd.f32 %v2289, %v2302
      %2304 = vdwg.mxu0
      %2305 = vmatpush.bf16.msra.mxu0 0
      %2306 = vmatpush.bf16.msra.mxu0 0
      %2307 = vmatpush.bf16.msra.mxu0 0
      %2308 = vmatpush.bf16.msra.mxu0 0
      %2309 = vmatpush.bf16.msra.mxu0 0
      %2310 = vmatpush.bf16.msra.mxu0 0
      %2311 = vmatpush.bf16.msra.mxu0 0
      %2312 = vmatpush.bf16.msra.mxu0 %v1837
      %2313 = vmatmul.bf16.gmra.mxu0 %v2149
      %v2314 = vpop.f32.mrf.mxu0
      %v2315 = vadd.f32 %v2301, %v2314
      %v2316 = vpop.f32.mrf.mxu0
      %v2317 = vadd.f32 %v2303, %v2316
      %2318 = vdwg.mxu0
      %2319 = vmatpush.bf16.msra.mxu0 %v1634
      %2320 = vmatpush.bf16.msra.mxu0 %v1622
      %2321 = vmatpush.bf16.msra.mxu0 %v1610
      %2322 = vmatpush.bf16.msra.mxu0 %v1598
      %2323 = vmatpush.bf16.msra.mxu0 %v1586
      %2324 = vmatpush.bf16.msra.mxu0 %v1574
      %2325 = vmatpush.bf16.msra.mxu0 %v1562
      %2326 = vmatpush.bf16.msra.mxu0 %v1550
      %2327 = vmatmul.bf16.gmra.mxu0 %v343
      %v2328 = vpop.f32.mrf.mxu0
      %v2329 = vadd.f32 0.0, %v2328
      %v2330 = vpop.f32.mrf.mxu0
      %v2331 = vadd.f32 0.0, %v2330
      %2332 = vdwg.mxu0
      %2333 = vmatpush.bf16.msra.mxu0 %v1730
      %2334 = vmatpush.bf16.msra.mxu0 %v1718
      %2335 = vmatpush.bf16.msra.mxu0 %v1706
      %2336 = vmatpush.bf16.msra.mxu0 %v1694
      %2337 = vmatpush.bf16.msra.mxu0 %v1682
      %2338 = vmatpush.bf16.msra.mxu0 %v1670
      %2339 = vmatpush.bf16.msra.mxu0 %v1658
      %2340 = vmatpush.bf16.msra.mxu0 %v1646
      %2341 = vmatmul.bf16.gmra.mxu0 %v344
      %v2342 = vpop.f32.mrf.mxu0
      %v2343 = vadd.f32 %v2329, %v2342
      %v2344 = vpop.f32.mrf.mxu0
      %v2345 = vadd.f32 %v2331, %v2344
      %2346 = vdwg.mxu0
      %2347 = vmatpush.bf16.msra.mxu0 %v1826
      %2348 = vmatpush.bf16.msra.mxu0 %v1814
      %2349 = vmatpush.bf16.msra.mxu0 %v1802
      %2350 = vmatpush.bf16.msra.mxu0 %v1790
      %2351 = vmatpush.bf16.msra.mxu0 %v1778
      %2352 = vmatpush.bf16.msra.mxu0 %v1766
      %2353 = vmatpush.bf16.msra.mxu0 %v1754
      %2354 = vmatpush.bf16.msra.mxu0 %v1742
      %2355 = vmatmul.bf16.gmra.mxu0 %v345
      %v2356 = vpop.f32.mrf.mxu0
      %v2357 = vadd.f32 %v2343, %v2356
      %v2358 = vpop.f32.mrf.mxu0
      %v2359 = vadd.f32 %v2345, %v2358
      %2360 = vdwg.mxu0
      %2361 = vmatpush.bf16.msra.mxu0 0
      %2362 = vmatpush.bf16.msra.mxu0 0
      %2363 = vmatpush.bf16.msra.mxu0 0
      %2364 = vmatpush.bf16.msra.mxu0 0
      %2365 = vmatpush.bf16.msra.mxu0 0
      %2366 = vmatpush.bf16.msra.mxu0 0
      %2367 = vmatpush.bf16.msra.mxu0 0
      %2368 = vmatpush.bf16.msra.mxu0 %v1838
      %2369 = vmatmul.bf16.gmra.mxu0 %v2149
      %v2370 = vpop.f32.mrf.mxu0
      %v2371 = vadd.f32 %v2357, %v2370
      %v2372 = vpop.f32.mrf.mxu0
      %v2373 = vadd.f32 %v2359, %v2372
      %2374 = vdwg.mxu0
      %2375 = vmatpush.bf16.msra.mxu0 %v1635
      %2376 = vmatpush.bf16.msra.mxu0 %v1623
      %2377 = vmatpush.bf16.msra.mxu0 %v1611
      %2378 = vmatpush.bf16.msra.mxu0 %v1599
      %2379 = vmatpush.bf16.msra.mxu0 %v1587
      %2380 = vmatpush.bf16.msra.mxu0 %v1575
      %2381 = vmatpush.bf16.msra.mxu0 %v1563
      %2382 = vmatpush.bf16.msra.mxu0 %v1551
      %2383 = vmatmul.bf16.gmra.mxu0 %v343
      %v2384 = vpop.f32.mrf.mxu0
      %v2385 = vadd.f32 0.0, %v2384
      %v2386 = vpop.f32.mrf.mxu0
      %v2387 = vadd.f32 0.0, %v2386
      %2388 = vdwg.mxu0
      %2389 = vmatpush.bf16.msra.mxu0 %v1731
      %2390 = vmatpush.bf16.msra.mxu0 %v1719
      %2391 = vmatpush.bf16.msra.mxu0 %v1707
      %2392 = vmatpush.bf16.msra.mxu0 %v1695
      %2393 = vmatpush.bf16.msra.mxu0 %v1683
      %2394 = vmatpush.bf16.msra.mxu0 %v1671
      %2395 = vmatpush.bf16.msra.mxu0 %v1659
      %2396 = vmatpush.bf16.msra.mxu0 %v1647
      %2397 = vmatmul.bf16.gmra.mxu0 %v344
      %v2398 = vpop.f32.mrf.mxu0
      %v2399 = vadd.f32 %v2385, %v2398
      %v2400 = vpop.f32.mrf.mxu0
      %v2401 = vadd.f32 %v2387, %v2400
      %2402 = vdwg.mxu0
      %2403 = vmatpush.bf16.msra.mxu0 %v1827
      %2404 = vmatpush.bf16.msra.mxu0 %v1815
      %2405 = vmatpush.bf16.msra.mxu0 %v1803
      %2406 = vmatpush.bf16.msra.mxu0 %v1791
      %2407 = vmatpush.bf16.msra.mxu0 %v1779
      %2408 = vmatpush.bf16.msra.mxu0 %v1767
      %2409 = vmatpush.bf16.msra.mxu0 %v1755
      %2410 = vmatpush.bf16.msra.mxu0 %v1743
      %2411 = vmatmul.bf16.gmra.mxu0 %v345
      %v2412 = vpop.f32.mrf.mxu0
      %v2413 = vadd.f32 %v2399, %v2412
      %v2414 = vpop.f32.mrf.mxu0
      %v2415 = vadd.f32 %v2401, %v2414
      %2416 = vdwg.mxu0
      %2417 = vmatpush.bf16.msra.mxu0 0
      %2418 = vmatpush.bf16.msra.mxu0 0
      %2419 = vmatpush.bf16.msra.mxu0 0
      %2420 = vmatpush.bf16.msra.mxu0 0
      %2421 = vmatpush.bf16.msra.mxu0 0
      %2422 = vmatpush.bf16.msra.mxu0 0
      %2423 = vmatpush.bf16.msra.mxu0 0
      %2424 = vmatpush.bf16.msra.mxu0 %v1839
      %2425 = vmatmul.bf16.gmra.mxu0 %v2149
      %v2426 = vpop.f32.mrf.mxu0
      %v2427 = vadd.f32 %v2413, %v2426
      %v2428 = vpop.f32.mrf.mxu0
      %v2429 = vadd.f32 %v2415, %v2428
      %2430 = vdwg.mxu0
      %2431 = vmatpush.bf16.msra.mxu0 %v1636
      %2432 = vmatpush.bf16.msra.mxu0 %v1624
      %2433 = vmatpush.bf16.msra.mxu0 %v1612
      %2434 = vmatpush.bf16.msra.mxu0 %v1600
      %2435 = vmatpush.bf16.msra.mxu0 %v1588
      %2436 = vmatpush.bf16.msra.mxu0 %v1576
      %2437 = vmatpush.bf16.msra.mxu0 %v1564
      %2438 = vmatpush.bf16.msra.mxu0 %v1552
      %2439 = vmatmul.bf16.gmra.mxu0 %v343
      %v2440 = vpop.f32.mrf.mxu0
      %v2441 = vadd.f32 0.0, %v2440
      %v2442 = vpop.f32.mrf.mxu0
      %v2443 = vadd.f32 0.0, %v2442
      %2444 = vdwg.mxu0
      %2445 = vmatpush.bf16.msra.mxu0 %v1732
      %2446 = vmatpush.bf16.msra.mxu0 %v1720
      %2447 = vmatpush.bf16.msra.mxu0 %v1708
      %2448 = vmatpush.bf16.msra.mxu0 %v1696
      %2449 = vmatpush.bf16.msra.mxu0 %v1684
      %2450 = vmatpush.bf16.msra.mxu0 %v1672
      %2451 = vmatpush.bf16.msra.mxu0 %v1660
      %2452 = vmatpush.bf16.msra.mxu0 %v1648
      %2453 = vmatmul.bf16.gmra.mxu0 %v344
      %v2454 = vpop.f32.mrf.mxu0
      %v2455 = vadd.f32 %v2441, %v2454
      %v2456 = vpop.f32.mrf.mxu0
      %v2457 = vadd.f32 %v2443, %v2456
      %2458 = vdwg.mxu0
      %2459 = vmatpush.bf16.msra.mxu0 %v1828
      %2460 = vmatpush.bf16.msra.mxu0 %v1816
      %2461 = vmatpush.bf16.msra.mxu0 %v1804
      %2462 = vmatpush.bf16.msra.mxu0 %v1792
      %2463 = vmatpush.bf16.msra.mxu0 %v1780
      %2464 = vmatpush.bf16.msra.mxu0 %v1768
      %2465 = vmatpush.bf16.msra.mxu0 %v1756
      %2466 = vmatpush.bf16.msra.mxu0 %v1744
      %2467 = vmatmul.bf16.gmra.mxu0 %v345
      %v2468 = vpop.f32.mrf.mxu0
      %v2469 = vadd.f32 %v2455, %v2468
      %v2470 = vpop.f32.mrf.mxu0
      %v2471 = vadd.f32 %v2457, %v2470
      %2472 = vdwg.mxu0
      %2473 = vmatpush.bf16.msra.mxu0 0
      %2474 = vmatpush.bf16.msra.mxu0 0
      %2475 = vmatpush.bf16.msra.mxu0 0
      %2476 = vmatpush.bf16.msra.mxu0 0
      %2477 = vmatpush.bf16.msra.mxu0 0
      %2478 = vmatpush.bf16.msra.mxu0 0
      %2479 = vmatpush.bf16.msra.mxu0 0
      %2480 = vmatpush.bf16.msra.mxu0 %v1840
      %2481 = vmatmul.bf16.gmra.mxu0 %v2149
      %v2482 = vpop.f32.mrf.mxu0
      %v2483 = vadd.f32 %v2469, %v2482
      %v2484 = vpop.f32.mrf.mxu0
      %v2485 = vadd.f32 %v2471, %v2484
      %2486 = vdwg.mxu0
      %2487 = vmatpush.bf16.msra.mxu0 %v1637
      %2488 = vmatpush.bf16.msra.mxu0 %v1625
      %2489 = vmatpush.bf16.msra.mxu0 %v1613
      %2490 = vmatpush.bf16.msra.mxu0 %v1601
      %2491 = vmatpush.bf16.msra.mxu0 %v1589
      %2492 = vmatpush.bf16.msra.mxu0 %v1577
      %2493 = vmatpush.bf16.msra.mxu0 %v1565
      %2494 = vmatpush.bf16.msra.mxu0 %v1553
      %2495 = vmatmul.bf16.gmra.mxu0 %v343
      %v2496 = vpop.f32.mrf.mxu0
      %v2497 = vadd.f32 0.0, %v2496
      %v2498 = vpop.f32.mrf.mxu0
      %v2499 = vadd.f32 0.0, %v2498
      %2500 = vdwg.mxu0
      %2501 = vmatpush.bf16.msra.mxu0 %v1733
      %2502 = vmatpush.bf16.msra.mxu0 %v1721
      %2503 = vmatpush.bf16.msra.mxu0 %v1709
      %2504 = vmatpush.bf16.msra.mxu0 %v1697
      %2505 = vmatpush.bf16.msra.mxu0 %v1685
      %2506 = vmatpush.bf16.msra.mxu0 %v1673
      %2507 = vmatpush.bf16.msra.mxu0 %v1661
      %2508 = vmatpush.bf16.msra.mxu0 %v1649
      %2509 = vmatmul.bf16.gmra.mxu0 %v344
      %v2510 = vpop.f32.mrf.mxu0
      %v2511 = vadd.f32 %v2497, %v2510
      %v2512 = vpop.f32.mrf.mxu0
      %v2513 = vadd.f32 %v2499, %v2512
      %2514 = vdwg.mxu0
      %2515 = vmatpush.bf16.msra.mxu0 %v1829
      %2516 = vmatpush.bf16.msra.mxu0 %v1817
      %2517 = vmatpush.bf16.msra.mxu0 %v1805
      %2518 = vmatpush.bf16.msra.mxu0 %v1793
      %2519 = vmatpush.bf16.msra.mxu0 %v1781
      %2520 = vmatpush.bf16.msra.mxu0 %v1769
      %2521 = vmatpush.bf16.msra.mxu0 %v1757
      %2522 = vmatpush.bf16.msra.mxu0 %v1745
      %2523 = vmatmul.bf16.gmra.mxu0 %v345
      %v2524 = vpop.f32.mrf.mxu0
      %v2525 = vadd.f32 %v2511, %v2524
      %v2526 = vpop.f32.mrf.mxu0
      %v2527 = vadd.f32 %v2513, %v2526
      %2528 = vdwg.mxu0
      %2529 = vmatpush.bf16.msra.mxu0 0
      %2530 = vmatpush.bf16.msra.mxu0 0
      %2531 = vmatpush.bf16.msra.mxu0 0
      %2532 = vmatpush.bf16.msra.mxu0 0
      %2533 = vmatpush.bf16.msra.mxu0 0
      %2534 = vmatpush.bf16.msra.mxu0 0
      %2535 = vmatpush.bf16.msra.mxu0 0
      %2536 = vmatpush.bf16.msra.mxu0 %v1841
      %2537 = vmatmul.bf16.gmra.mxu0 %v2149
      %v2538 = vpop.f32.mrf.mxu0
      %v2539 = vadd.f32 %v2525, %v2538
      %v2540 = vpop.f32.mrf.mxu0
      %v2541 = vadd.f32 %v2527, %v2540
      %2542 = vdwg.mxu0
      %2543 = vmatpush.bf16.msra.mxu0 %v1638
      %2544 = vmatpush.bf16.msra.mxu0 %v1626
      %2545 = vmatpush.bf16.msra.mxu0 %v1614
      %2546 = vmatpush.bf16.msra.mxu0 %v1602
      %2547 = vmatpush.bf16.msra.mxu0 %v1590
      %2548 = vmatpush.bf16.msra.mxu0 %v1578
      %2549 = vmatpush.bf16.msra.mxu0 %v1566
      %2550 = vmatpush.bf16.msra.mxu0 %v1554
      %2551 = vmatmul.bf16.gmra.mxu0 %v343
      %v2552 = vpop.f32.mrf.mxu0
      %v2553 = vadd.f32 0.0, %v2552
      %v2554 = vpop.f32.mrf.mxu0
      %v2555 = vadd.f32 0.0, %v2554
      %2556 = vdwg.mxu0
      %2557 = vmatpush.bf16.msra.mxu0 %v1734
      %2558 = vmatpush.bf16.msra.mxu0 %v1722
      %2559 = vmatpush.bf16.msra.mxu0 %v1710
      %2560 = vmatpush.bf16.msra.mxu0 %v1698
      %2561 = vmatpush.bf16.msra.mxu0 %v1686
      %2562 = vmatpush.bf16.msra.mxu0 %v1674
      %2563 = vmatpush.bf16.msra.mxu0 %v1662
      %2564 = vmatpush.bf16.msra.mxu0 %v1650
      %2565 = vmatmul.bf16.gmra.mxu0 %v344
      %v2566 = vpop.f32.mrf.mxu0
      %v2567 = vadd.f32 %v2553, %v2566
      %v2568 = vpop.f32.mrf.mxu0
      %v2569 = vadd.f32 %v2555, %v2568
      %2570 = vdwg.mxu0
      %2571 = vmatpush.bf16.msra.mxu0 %v1830
      %2572 = vmatpush.bf16.msra.mxu0 %v1818
      %2573 = vmatpush.bf16.msra.mxu0 %v1806
      %2574 = vmatpush.bf16.msra.mxu0 %v1794
      %2575 = vmatpush.bf16.msra.mxu0 %v1782
      %2576 = vmatpush.bf16.msra.mxu0 %v1770
      %2577 = vmatpush.bf16.msra.mxu0 %v1758
      %2578 = vmatpush.bf16.msra.mxu0 %v1746
      %2579 = vmatmul.bf16.gmra.mxu0 %v345
      %v2580 = vpop.f32.mrf.mxu0
      %v2581 = vadd.f32 %v2567, %v2580
      %v2582 = vpop.f32.mrf.mxu0
      %v2583 = vadd.f32 %v2569, %v2582
      %2584 = vdwg.mxu0
      %2585 = vmatpush.bf16.msra.mxu0 0
      %2586 = vmatpush.bf16.msra.mxu0 0
      %2587 = vmatpush.bf16.msra.mxu0 0
      %2588 = vmatpush.bf16.msra.mxu0 0
      %2589 = vmatpush.bf16.msra.mxu0 0
      %2590 = vmatpush.bf16.msra.mxu0 0
      %2591 = vmatpush.bf16.msra.mxu0 0
      %2592 = vmatpush.bf16.msra.mxu0 %v1842
      %2593 = vmatmul.bf16.gmra.mxu0 %v2149
      %v2594 = vpop.f32.mrf.mxu0
      %v2595 = vadd.f32 %v2581, %v2594
      %v2596 = vpop.f32.mrf.mxu0
      %v2597 = vadd.f32 %v2583, %v2596
      %2598 = vdwg.mxu0
      %2599 = vmatpush.bf16.msra.mxu0 %v1639
      %2600 = vmatpush.bf16.msra.mxu0 %v1627
      %2601 = vmatpush.bf16.msra.mxu0 %v1615
      %2602 = vmatpush.bf16.msra.mxu0 %v1603
      %2603 = vmatpush.bf16.msra.mxu0 %v1591
      %2604 = vmatpush.bf16.msra.mxu0 %v1579
      %2605 = vmatpush.bf16.msra.mxu0 %v1567
      %2606 = vmatpush.bf16.msra.mxu0 %v1555
      %2607 = vmatmul.bf16.gmra.mxu0 %v343
      %v2608 = vpop.f32.mrf.mxu0
      %v2609 = vadd.f32 0.0, %v2608
      %v2610 = vpop.f32.mrf.mxu0
      %v2611 = vadd.f32 0.0, %v2610
      %2612 = vdwg.mxu0
      %2613 = vmatpush.bf16.msra.mxu0 %v1735
      %2614 = vmatpush.bf16.msra.mxu0 %v1723
      %2615 = vmatpush.bf16.msra.mxu0 %v1711
      %2616 = vmatpush.bf16.msra.mxu0 %v1699
      %2617 = vmatpush.bf16.msra.mxu0 %v1687
      %2618 = vmatpush.bf16.msra.mxu0 %v1675
      %2619 = vmatpush.bf16.msra.mxu0 %v1663
      %2620 = vmatpush.bf16.msra.mxu0 %v1651
      %2621 = vmatmul.bf16.gmra.mxu0 %v344
      %v2622 = vpop.f32.mrf.mxu0
      %v2623 = vadd.f32 %v2609, %v2622
      %v2624 = vpop.f32.mrf.mxu0
      %v2625 = vadd.f32 %v2611, %v2624
      %2626 = vdwg.mxu0
      %2627 = vmatpush.bf16.msra.mxu0 %v1831
      %2628 = vmatpush.bf16.msra.mxu0 %v1819
      %2629 = vmatpush.bf16.msra.mxu0 %v1807
      %2630 = vmatpush.bf16.msra.mxu0 %v1795
      %2631 = vmatpush.bf16.msra.mxu0 %v1783
      %2632 = vmatpush.bf16.msra.mxu0 %v1771
      %2633 = vmatpush.bf16.msra.mxu0 %v1759
      %2634 = vmatpush.bf16.msra.mxu0 %v1747
      %2635 = vmatmul.bf16.gmra.mxu0 %v345
      %v2636 = vpop.f32.mrf.mxu0
      %v2637 = vadd.f32 %v2623, %v2636
      %v2638 = vpop.f32.mrf.mxu0
      %v2639 = vadd.f32 %v2625, %v2638
      %2640 = vdwg.mxu0
      %2641 = vmatpush.bf16.msra.mxu0 0
      %2642 = vmatpush.bf16.msra.mxu0 0
      %2643 = vmatpush.bf16.msra.mxu0 0
      %2644 = vmatpush.bf16.msra.mxu0 0
      %2645 = vmatpush.bf16.msra.mxu0 0
      %2646 = vmatpush.bf16.msra.mxu0 0
      %2647 = vmatpush.bf16.msra.mxu0 0
      %2648 = vmatpush.bf16.msra.mxu0 %v1843
      %2649 = vmatmul.bf16.gmra.mxu0 %v2149
      %v2650 = vpop.f32.mrf.mxu0
      %v2651 = vadd.f32 %v2637, %v2650
      %v2652 = vpop.f32.mrf.mxu0
      %v2653 = vadd.f32 %v2639, %v2652
      %2654 = vdwg.mxu0
      %2655 = vmatpush.bf16.msra.mxu0 %v1640
      %2656 = vmatpush.bf16.msra.mxu0 %v1628
      %2657 = vmatpush.bf16.msra.mxu0 %v1616
      %2658 = vmatpush.bf16.msra.mxu0 %v1604
      %2659 = vmatpush.bf16.msra.mxu0 %v1592
      %2660 = vmatpush.bf16.msra.mxu0 %v1580
      %2661 = vmatpush.bf16.msra.mxu0 %v1568
      %2662 = vmatpush.bf16.msra.mxu0 %v1556
      %2663 = vmatmul.bf16.gmra.mxu0 %v343
      %v2664 = vpop.f32.mrf.mxu0
      %v2665 = vadd.f32 0.0, %v2664
      %v2666 = vpop.f32.mrf.mxu0
      %v2667 = vadd.f32 0.0, %v2666
      %2668 = vdwg.mxu0
      %2669 = vmatpush.bf16.msra.mxu0 %v1736
      %2670 = vmatpush.bf16.msra.mxu0 %v1724
      %2671 = vmatpush.bf16.msra.mxu0 %v1712
      %2672 = vmatpush.bf16.msra.mxu0 %v1700
      %2673 = vmatpush.bf16.msra.mxu0 %v1688
      %2674 = vmatpush.bf16.msra.mxu0 %v1676
      %2675 = vmatpush.bf16.msra.mxu0 %v1664
      %2676 = vmatpush.bf16.msra.mxu0 %v1652
      %2677 = vmatmul.bf16.gmra.mxu0 %v344
      %v2678 = vpop.f32.mrf.mxu0
      %v2679 = vadd.f32 %v2665, %v2678
      %v2680 = vpop.f32.mrf.mxu0
      %v2681 = vadd.f32 %v2667, %v2680
      %2682 = vdwg.mxu0
      %2683 = vmatpush.bf16.msra.mxu0 %v1832
      %2684 = vmatpush.bf16.msra.mxu0 %v1820
      %2685 = vmatpush.bf16.msra.mxu0 %v1808
      %2686 = vmatpush.bf16.msra.mxu0 %v1796
      %2687 = vmatpush.bf16.msra.mxu0 %v1784
      %2688 = vmatpush.bf16.msra.mxu0 %v1772
      %2689 = vmatpush.bf16.msra.mxu0 %v1760
      %2690 = vmatpush.bf16.msra.mxu0 %v1748
      %2691 = vmatmul.bf16.gmra.mxu0 %v345
      %v2692 = vpop.f32.mrf.mxu0
      %v2693 = vadd.f32 %v2679, %v2692
      %v2694 = vpop.f32.mrf.mxu0
      %v2695 = vadd.f32 %v2681, %v2694
      %2696 = vdwg.mxu0
      %2697 = vmatpush.bf16.msra.mxu0 0
      %2698 = vmatpush.bf16.msra.mxu0 0
      %2699 = vmatpush.bf16.msra.mxu0 0
      %2700 = vmatpush.bf16.msra.mxu0 0
      %2701 = vmatpush.bf16.msra.mxu0 0
      %2702 = vmatpush.bf16.msra.mxu0 0
      %2703 = vmatpush.bf16.msra.mxu0 0
      %2704 = vmatpush.bf16.msra.mxu0 %v1844
      %2705 = vmatmul.bf16.gmra.mxu0 %v2149
      %v2706 = vpop.f32.mrf.mxu0
      %v2707 = vadd.f32 %v2693, %v2706
      %v2708 = vpop.f32.mrf.mxu0
      %v2709 = vadd.f32 %v2695, %v2708
      %2710 = vdwg.mxu0
      %2711 = vmatpush.bf16.msra.mxu0 %v1641
      %2712 = vmatpush.bf16.msra.mxu0 %v1629
      %2713 = vmatpush.bf16.msra.mxu0 %v1617
      %2714 = vmatpush.bf16.msra.mxu0 %v1605
      %2715 = vmatpush.bf16.msra.mxu0 %v1593
      %2716 = vmatpush.bf16.msra.mxu0 %v1581
      %2717 = vmatpush.bf16.msra.mxu0 %v1569
      %2718 = vmatpush.bf16.msra.mxu0 %v1557
      %2719 = vmatmul.bf16.gmra.mxu0 %v343
      %v2720 = vpop.f32.mrf.mxu0
      %v2721 = vadd.f32 0.0, %v2720
      %v2722 = vpop.f32.mrf.mxu0
      %v2723 = vadd.f32 0.0, %v2722
      %2724 = vdwg.mxu0
      %2725 = vmatpush.bf16.msra.mxu0 %v1737
      %2726 = vmatpush.bf16.msra.mxu0 %v1725
      %2727 = vmatpush.bf16.msra.mxu0 %v1713
      %2728 = vmatpush.bf16.msra.mxu0 %v1701
      %2729 = vmatpush.bf16.msra.mxu0 %v1689
      %2730 = vmatpush.bf16.msra.mxu0 %v1677
      %2731 = vmatpush.bf16.msra.mxu0 %v1665
      %2732 = vmatpush.bf16.msra.mxu0 %v1653
      %2733 = vmatmul.bf16.gmra.mxu0 %v344
      %v2734 = vpop.f32.mrf.mxu0
      %v2735 = vadd.f32 %v2721, %v2734
      %v2736 = vpop.f32.mrf.mxu0
      %v2737 = vadd.f32 %v2723, %v2736
      %2738 = vdwg.mxu0
      %2739 = vmatpush.bf16.msra.mxu0 %v1833
      %2740 = vmatpush.bf16.msra.mxu0 %v1821
      %2741 = vmatpush.bf16.msra.mxu0 %v1809
      %2742 = vmatpush.bf16.msra.mxu0 %v1797
      %2743 = vmatpush.bf16.msra.mxu0 %v1785
      %2744 = vmatpush.bf16.msra.mxu0 %v1773
      %2745 = vmatpush.bf16.msra.mxu0 %v1761
      %2746 = vmatpush.bf16.msra.mxu0 %v1749
      %2747 = vmatmul.bf16.gmra.mxu0 %v345
      %v2748 = vpop.f32.mrf.mxu0
      %v2749 = vadd.f32 %v2735, %v2748
      %v2750 = vpop.f32.mrf.mxu0
      %v2751 = vadd.f32 %v2737, %v2750
      %2752 = vdwg.mxu0
      %2753 = vmatpush.bf16.msra.mxu0 0
      %2754 = vmatpush.bf16.msra.mxu0 0
      %2755 = vmatpush.bf16.msra.mxu0 0
      %2756 = vmatpush.bf16.msra.mxu0 0
      %2757 = vmatpush.bf16.msra.mxu0 0
      %2758 = vmatpush.bf16.msra.mxu0 0
      %2759 = vmatpush.bf16.msra.mxu0 0
      %2760 = vmatpush.bf16.msra.mxu0 %v1845
      %2761 = vmatmul.bf16.gmra.mxu0 %v2149
      %v2762 = vpop.f32.mrf.mxu0
      %v2763 = vadd.f32 %v2749, %v2762
      %v2764 = vpop.f32.mrf.mxu0
      %v2765 = vadd.f32 %v2751, %v2764
      %2766 = vdwg.mxu0
      %2767 = vmatpush.bf16.msra.mxu0 %v1642
      %2768 = vmatpush.bf16.msra.mxu0 %v1630
      %2769 = vmatpush.bf16.msra.mxu0 %v1618
      %2770 = vmatpush.bf16.msra.mxu0 %v1606
      %2771 = vmatpush.bf16.msra.mxu0 %v1594
      %2772 = vmatpush.bf16.msra.mxu0 %v1582
      %2773 = vmatpush.bf16.msra.mxu0 %v1570
      %2774 = vmatpush.bf16.msra.mxu0 %v1558
      %2775 = vmatmul.bf16.gmra.mxu0 %v343
      %v2776 = vpop.f32.mrf.mxu0
      %v2777 = vadd.f32 0.0, %v2776
      %v2778 = vpop.f32.mrf.mxu0
      %v2779 = vadd.f32 0.0, %v2778
      %2780 = vdwg.mxu0
      %2781 = vmatpush.bf16.msra.mxu0 %v1738
      %2782 = vmatpush.bf16.msra.mxu0 %v1726
      %2783 = vmatpush.bf16.msra.mxu0 %v1714
      %2784 = vmatpush.bf16.msra.mxu0 %v1702
      %2785 = vmatpush.bf16.msra.mxu0 %v1690
      %2786 = vmatpush.bf16.msra.mxu0 %v1678
      %2787 = vmatpush.bf16.msra.mxu0 %v1666
      %2788 = vmatpush.bf16.msra.mxu0 %v1654
      %2789 = vmatmul.bf16.gmra.mxu0 %v344
      %v2790 = vpop.f32.mrf.mxu0
      %v2791 = vadd.f32 %v2777, %v2790
      %v2792 = vpop.f32.mrf.mxu0
      %v2793 = vadd.f32 %v2779, %v2792
      %2794 = vdwg.mxu0
      %2795 = vmatpush.bf16.msra.mxu0 %v1834
      %2796 = vmatpush.bf16.msra.mxu0 %v1822
      %2797 = vmatpush.bf16.msra.mxu0 %v1810
      %2798 = vmatpush.bf16.msra.mxu0 %v1798
      %2799 = vmatpush.bf16.msra.mxu0 %v1786
      %2800 = vmatpush.bf16.msra.mxu0 %v1774
      %2801 = vmatpush.bf16.msra.mxu0 %v1762
      %2802 = vmatpush.bf16.msra.mxu0 %v1750
      %2803 = vmatmul.bf16.gmra.mxu0 %v345
      %v2804 = vpop.f32.mrf.mxu0
      %v2805 = vadd.f32 %v2791, %v2804
      %v2806 = vpop.f32.mrf.mxu0
      %v2807 = vadd.f32 %v2793, %v2806
      %2808 = vdwg.mxu0
      %2809 = vmatpush.bf16.msra.mxu0 0
      %2810 = vmatpush.bf16.msra.mxu0 0
      %2811 = vmatpush.bf16.msra.mxu0 0
      %2812 = vmatpush.bf16.msra.mxu0 0
      %2813 = vmatpush.bf16.msra.mxu0 0
      %2814 = vmatpush.bf16.msra.mxu0 0
      %2815 = vmatpush.bf16.msra.mxu0 0
      %2816 = vmatpush.bf16.msra.mxu0 %v1846
      %2817 = vmatmul.bf16.gmra.mxu0 %v2149
      %v2818 = vpop.f32.mrf.mxu0
      %v2819 = vadd.f32 %v2805, %v2818
      %v2820 = vpop.f32.mrf.mxu0
      %v2821 = vadd.f32 %v2807, %v2820
      %2822 = vdwg.mxu0
      %v2823 = vperm.slane %v323, 0
      %v2824 = vperm.slane %v324, 0
      %v2825 = vperm.slane %v325, 0
      %v2826 = vperm.slane %v326, 0
      %v2827 = vadd.f32 %v2203, %v2823
      %v2828 = vadd.f32 %v2259, %v2824
      %v2829 = vadd.f32 %v2315, %v2825
      %v2830 = vadd.f32 %v2371, %v2826
      %v2831 = vadd.f32 %v2205, %v2823
      %v2832 = vadd.f32 %v2261, %v2824
      %v2833 = vadd.f32 %v2317, %v2825
      %v2834 = vadd.f32 %v2373, %v2826
      %v2835 = vperm.slane %v323, 1
      %v2836 = vperm.slane %v324, 1
      %v2837 = vperm.slane %v325, 1
      %v2838 = vperm.slane %v326, 1
      %v2839 = vadd.f32 %v2427, %v2835
      %v2840 = vadd.f32 %v2483, %v2836
      %v2841 = vadd.f32 %v2539, %v2837
      %v2842 = vadd.f32 %v2595, %v2838
      %v2843 = vadd.f32 %v2429, %v2835
      %v2844 = vadd.f32 %v2485, %v2836
      %v2845 = vadd.f32 %v2541, %v2837
      %v2846 = vadd.f32 %v2597, %v2838
      %v2847 = vperm.slane %v323, 2
      %v2848 = vperm.slane %v324, 2
      %v2849 = vperm.slane %v325, 2
      %v2850 = vperm.slane %v326, 2
      %v2851 = vadd.f32 %v2651, %v2847
      %v2852 = vadd.f32 %v2707, %v2848
      %v2853 = vadd.f32 %v2763, %v2849
      %v2854 = vadd.f32 %v2819, %v2850
      %v2855 = vadd.f32 %v2653, %v2847
      %v2856 = vadd.f32 %v2709, %v2848
      %v2857 = vadd.f32 %v2765, %v2849
      %v2858 = vadd.f32 %v2821, %v2850
      %v2860 = vsel %vm2147, %v2830, 0
      %v2863 = vsel %vm2147, %v2834, 0
      %v2866 = vsel %vm2147, %v2842, 0
      %v2869 = vsel %vm2147, %v2846, 0
      %2871 = vmatpush.xpose.msra.mxu0 0.0
      %2872 = vmatpush.xpose.msra.mxu0 0.0
      %2873 = vmatpush.xpose.msra.mxu0 0.0
      %2874 = vmatpush.xpose.msra.mxu0 0.0
      %2875 = vmatpush.xpose.msra.mxu0 0.0
      %2876 = vmatpush.xpose.msra.mxu0 0.0
      %2877 = vmatpush.xpose.msra.mxu0 0.0
      %2878 = vmatpush.xpose.msra.mxu0 0.0
      %2879 = vmatpush.xpose.msra.mxu0 0.0
      %2880 = vmatpush.xpose.msra.mxu0 0.0
      %2881 = vmatpush.xpose.msra.mxu0 0.0
      %2882 = vmatpush.xpose.msra.mxu0 0.0
      %2883 = vmatpush.xpose.msra.mxu0 0.0
      %2884 = vmatpush.xpose.msra.mxu0 0.0
      %2885 = vmatpush.xpose.msra.mxu0 %v2843
      %2886 = vmatpush.xpose.msra.mxu0 %v2839
      %2887 = vmatmul.f32.gmra.mxu0 %v2827
      %v2888 = vpop.f32.mrf.mxu0
      %v2889 = vadd.f32 0.0, %v2888
      %2890 = vmatmul.f32.gmra.mxu0 %v2831
      %v2891 = vpop.f32.mrf.mxu0
      %v2892 = vadd.f32 0.0, %v2891
      %2893 = vdwg.mxu0
      %2894 = vmatpush.xpose.msra.mxu0 0.0
      %2895 = vmatpush.xpose.msra.mxu0 0.0
      %2896 = vmatpush.xpose.msra.mxu0 0.0
      %2897 = vmatpush.xpose.msra.mxu0 0.0
      %2898 = vmatpush.xpose.msra.mxu0 0.0
      %2899 = vmatpush.xpose.msra.mxu0 0.0
      %2900 = vmatpush.xpose.msra.mxu0 0.0
      %2901 = vmatpush.xpose.msra.mxu0 0.0
      %2902 = vmatpush.xpose.msra.mxu0 0.0
      %2903 = vmatpush.xpose.msra.mxu0 0.0
      %2904 = vmatpush.xpose.msra.mxu0 0.0
      %2905 = vmatpush.xpose.msra.mxu0 0.0
      %2906 = vmatpush.xpose.msra.mxu0 0.0
      %2907 = vmatpush.xpose.msra.mxu0 0.0
      %2908 = vmatpush.xpose.msra.mxu0 %v2844
      %2909 = vmatpush.xpose.msra.mxu0 %v2840
      %2910 = vmatmul.f32.gmra.mxu0 %v2828
      %v2911 = vpop.f32.mrf.mxu0
      %v2912 = vadd.f32 %v2889, %v2911
      %2913 = vmatmul.f32.gmra.mxu0 %v2832
      %v2914 = vpop.f32.mrf.mxu0
      %v2915 = vadd.f32 %v2892, %v2914
      %2916 = vdwg.mxu0
      %2917 = vmatpush.xpose.msra.mxu0 0.0
      %2918 = vmatpush.xpose.msra.mxu0 0.0
      %2919 = vmatpush.xpose.msra.mxu0 0.0
      %2920 = vmatpush.xpose.msra.mxu0 0.0
      %2921 = vmatpush.xpose.msra.mxu0 0.0
      %2922 = vmatpush.xpose.msra.mxu0 0.0
      %2923 = vmatpush.xpose.msra.mxu0 0.0
      %2924 = vmatpush.xpose.msra.mxu0 0.0
      %2925 = vmatpush.xpose.msra.mxu0 0.0
      %2926 = vmatpush.xpose.msra.mxu0 0.0
      %2927 = vmatpush.xpose.msra.mxu0 0.0
      %2928 = vmatpush.xpose.msra.mxu0 0.0
      %2929 = vmatpush.xpose.msra.mxu0 0.0
      %2930 = vmatpush.xpose.msra.mxu0 0.0
      %2931 = vmatpush.xpose.msra.mxu0 %v2845
      %2932 = vmatpush.xpose.msra.mxu0 %v2841
      %2933 = vmatmul.f32.gmra.mxu0 %v2829
      %v2934 = vpop.f32.mrf.mxu0
      %v2935 = vadd.f32 %v2912, %v2934
      %2936 = vmatmul.f32.gmra.mxu0 %v2833
      %v2937 = vpop.f32.mrf.mxu0
      %v2938 = vadd.f32 %v2915, %v2937
      %2939 = vdwg.mxu0
      %2940 = vmatpush.xpose.msra.mxu0 0.0
      %2941 = vmatpush.xpose.msra.mxu0 0.0
      %2942 = vmatpush.xpose.msra.mxu0 0.0
      %2943 = vmatpush.xpose.msra.mxu0 0.0
      %2944 = vmatpush.xpose.msra.mxu0 0.0
      %2945 = vmatpush.xpose.msra.mxu0 0.0
      %2946 = vmatpush.xpose.msra.mxu0 0.0
      %2947 = vmatpush.xpose.msra.mxu0 0.0
      %2948 = vmatpush.xpose.msra.mxu0 0.0
      %2949 = vmatpush.xpose.msra.mxu0 0.0
      %2950 = vmatpush.xpose.msra.mxu0 0.0
      %2951 = vmatpush.xpose.msra.mxu0 0.0
      %2952 = vmatpush.xpose.msra.mxu0 0.0
      %2953 = vmatpush.xpose.msra.mxu0 0.0
      %2954 = vmatpush.xpose.msra.mxu0 %v2869
      %2955 = vmatpush.xpose.msra.mxu0 %v2866
      %2956 = vmatmul.f32.gmra.mxu0 %v2860
      %v2957 = vpop.f32.mrf.mxu0
      %v2958 = vadd.f32 %v2935, %v2957
      %2959 = vmatmul.f32.gmra.mxu0 %v2863
      %v2960 = vpop.f32.mrf.mxu0
      %v2961 = vadd.f32 %v2938, %v2960
      %2962 = vdwg.mxu0
      %v2963 = vmul.f32 %v2958, 0.05
      %v2964 = vmul.f32 %v2961, 0.05
      %v2965 = vadd.f32 %v2963, %v321
      %v2966 = vadd.f32 %v2964, %v322
      %v2967 = vsel %vm2147, %v2965, -inf
      %2968 = vmax.xlane.f32.xlu0 %v2967
      %v2969 = vpop.xlane.xlu0 %2968
      %v2970 = vsel %vm2147, %v2966, -inf
      %2971 = vmax.xlane.f32.xlu0 %v2970
      %v2972 = vpop.xlane.xlu0 %2971
      %v2973 = vsub.f32 %v2965, %v2969
      %v2974 = vsub.f32 %v2966, %v2972
      %v2975 = vmul.f32 %v2973, 1.442695
      %v2976 = vpow.pop %v2975
      %v2977 = vmul.f32 %v2974, 1.442695
      %v2978 = vpow.pop %v2977
      %v2979 = vsel %vm2147, %v2976, 0.0
      %2980 = vadd.xlane.f32.xlu0 %v2979
      %v2981 = vpop.xlane.xlu0 %2980
      %v2982 = vsel %vm2147, %v2978, 0.0
      %2983 = vadd.xlane.f32.xlu0 %v2982
      %v2984 = vpop.xlane.xlu0 %2983
      %v2985 = vrcp.pop %v2981
      %v2986 = vmul.f32 %v2981, %v2985
      %v2987 = vsub.f32 1.0, %v2986
      %v2988 = vmul.f32 %v2985, %v2987
      %v2989 = vadd.f32 %v2985, %v2988
      %vm2990 = vweird.f32 %v2981
      %vm2991 = vweird.f32 %v2985
      %vm2992 = vmor %vm2990, %vm2991
      %v2993 = vsel %vm2992, %v2985, %v2989
      %v2994 = vand.u32 2147483647, %v2981
      %vm2995 = vcmp.eq.f32.partialorder %v2994, 8.507059e+37
      %v2996 = vand.u32 %v2981, 2147483648
      %v2997 = vor.u32 1.1754944e-38, %v2996
      %v2998 = vsel %vm2995, %v2997, %v2993
      %v2999 = vmul.f32 %v2976, %v2998
      %v3000 = vrcp.pop %v2984
      %v3001 = vmul.f32 %v2984, %v3000
      %v3002 = vsub.f32 1.0, %v3001
      %v3003 = vmul.f32 %v3000, %v3002
      %v3004 = vadd.f32 %v3000, %v3003
      %vm3005 = vweird.f32 %v2984
      %vm3006 = vweird.f32 %v3000
      %vm3007 = vmor %vm3005, %vm3006
      %v3008 = vsel %vm3007, %v3000, %v3004
      %v3009 = vand.u32 2147483647, %v2984
      %vm3010 = vcmp.eq.f32.partialorder %v3009, 8.507059e+37
      %v3011 = vand.u32 %v2984, 2147483648
      %v3012 = vor.u32 1.1754944e-38, %v3011
      %v3013 = vsel %vm3010, %v3012, %v3008
      %v3014 = vmul.f32 %v2978, %v3013
      %v3016 = vsel %vm2147, %v2999, 0
      %v3019 = vsel %vm2147, %v3014, 0
      %3021 = vmatpush.msra.mxu0 0.0
      %3022 = vmatpush.msra.mxu0 0.0
      %3023 = vmatpush.msra.mxu0 0.0
      %3024 = vmatpush.msra.mxu0 0.0
      %3025 = vmatpush.msra.mxu0 0.0
      %3026 = vmatpush.msra.mxu0 0.0
      %3027 = vmatpush.msra.mxu0 0.0
      %3028 = vmatpush.msra.mxu0 0.0
      %3029 = vmatpush.msra.mxu0 0.0
      %3030 = vmatpush.msra.mxu0 0.0
      %3031 = vmatpush.msra.mxu0 0.0
      %3032 = vmatpush.msra.mxu0 0.0
      %3033 = vmatpush.msra.mxu0 0.0
      %3034 = vmatpush.msra.mxu0 0.0
      %3035 = vmatpush.msra.mxu0 %v2855
      %3036 = vmatpush.msra.mxu0 %v2851
      %3037 = vmatmul.f32.gmra.mxu0 %v3016
      %v3038 = vpop.f32.mrf.mxu0
      %v3039 = vadd.f32 0.0, %v3038
      %3040 = vmatmul.f32.gmra.mxu0 %v3019
      %v3041 = vpop.f32.mrf.mxu0
      %v3042 = vadd.f32 0.0, %v3041
      %3043 = vdwg.mxu0
      %3044 = vmatpush.msra.mxu0 0.0
      %3045 = vmatpush.msra.mxu0 0.0
      %3046 = vmatpush.msra.mxu0 0.0
      %3047 = vmatpush.msra.mxu0 0.0
      %3048 = vmatpush.msra.mxu0 0.0
      %3049 = vmatpush.msra.mxu0 0.0
      %3050 = vmatpush.msra.mxu0 0.0
      %3051 = vmatpush.msra.mxu0 0.0
      %3052 = vmatpush.msra.mxu0 0.0
      %3053 = vmatpush.msra.mxu0 0.0
      %3054 = vmatpush.msra.mxu0 0.0
      %3055 = vmatpush.msra.mxu0 0.0
      %3056 = vmatpush.msra.mxu0 0.0
      %3057 = vmatpush.msra.mxu0 0.0
      %3058 = vmatpush.msra.mxu0 %v2856
      %3059 = vmatpush.msra.mxu0 %v2852
      %3060 = vmatmul.f32.gmra.mxu0 %v3016
      %v3061 = vpop.f32.mrf.mxu0
      %v3062 = vadd.f32 0.0, %v3061
      %3063 = vmatmul.f32.gmra.mxu0 %v3019
      %v3064 = vpop.f32.mrf.mxu0
      %v3065 = vadd.f32 0.0, %v3064
      %3066 = vdwg.mxu0
      %3067 = vmatpush.msra.mxu0 0.0
      %3068 = vmatpush.msra.mxu0 0.0
      %3069 = vmatpush.msra.mxu0 0.0
      %3070 = vmatpush.msra.mxu0 0.0
      %3071 = vmatpush.msra.mxu0 0.0
      %3072 = vmatpush.msra.mxu0 0.0
      %3073 = vmatpush.msra.mxu0 0.0
      %3074 = vmatpush.msra.mxu0 0.0
      %3075 = vmatpush.msra.mxu0 0.0
      %3076 = vmatpush.msra.mxu0 0.0
      %3077 = vmatpush.msra.mxu0 0.0
      %3078 = vmatpush.msra.mxu0 0.0
      %3079 = vmatpush.msra.mxu0 0.0
      %3080 = vmatpush.msra.mxu0 0.0
      %3081 = vmatpush.msra.mxu0 %v2857
      %3082 = vmatpush.msra.mxu0 %v2853
      %3083 = vmatmul.f32.gmra.mxu0 %v3016
      %v3084 = vpop.f32.mrf.mxu0
      %v3085 = vadd.f32 0.0, %v3084
      %3086 = vmatmul.f32.gmra.mxu0 %v3019
      %v3087 = vpop.f32.mrf.mxu0
      %v3088 = vadd.f32 0.0, %v3087
      %3089 = vdwg.mxu0
      %3090 = vmatpush.msra.mxu0 0.0
      %3091 = vmatpush.msra.mxu0 0.0
      %3092 = vmatpush.msra.mxu0 0.0
      %3093 = vmatpush.msra.mxu0 0.0
      %3094 = vmatpush.msra.mxu0 0.0
      %3095 = vmatpush.msra.mxu0 0.0
      %3096 = vmatpush.msra.mxu0 0.0
      %3097 = vmatpush.msra.mxu0 0.0
      %3098 = vmatpush.msra.mxu0 0.0
      %3099 = vmatpush.msra.mxu0 0.0
      %3100 = vmatpush.msra.mxu0 0.0
      %3101 = vmatpush.msra.mxu0 0.0
      %3102 = vmatpush.msra.mxu0 0.0
      %3103 = vmatpush.msra.mxu0 0.0
      %3104 = vmatpush.msra.mxu0 %v2858
      %3105 = vmatpush.msra.mxu0 %v2854
      %3106 = vmatmul.f32.gmra.mxu0 %v3016
      %v3107 = vpop.f32.mrf.mxu0
      %v3108 = vadd.f32 0.0, %v3107
      %3109 = vmatmul.f32.gmra.mxu0 %v3019
      %v3110 = vpop.f32.mrf.mxu0
      %v3111 = vadd.f32 0.0, %v3110
      %3112 = vdwg.mxu0
      %v3113 = vpack.c.bf16 %v3042, %v3039
      %v3114 = vpack.c.bf16 %v3065, %v3062
      %v3115 = vpack.c.bf16 %v3088, %v3085
      %v3116 = vpack.c.bf16 %v3111, %v3108
      %v3117 = vld [vmem:[%s3] sm:$0xff]
      %v3118 = vld [vmem:[%s3 + $0x8] sm:$0xff]
      %v3119 = vld [vmem:[%s3 + $0x10] sm:$0xff]
      %v3120 = vld [vmem:[%s3 + $0x18] sm:$0xff]
      %v3121 = vld [vmem:[%s3 + $0x20] sm:$0xff]
      %v3122 = vld [vmem:[%s3 + $0x28] sm:$0xff]
      %v3123 = vld [vmem:[%s3 + $0x30] sm:$0xff]
      %v3124 = vld [vmem:[%s3 + $0x38] sm:$0xff]
      %v3125 = vld [vmem:[%s3 + $0x40] sm:$0xff]
      %v3126 = vld [vmem:[%s3 + $0x48] sm:$0xff]
      %v3127 = vld [vmem:[%s3 + $0x50] sm:$0xff]
      %v3128 = vld [vmem:[%s3 + $0x58] sm:$0xff]
      %v3129 = vld [vmem:[%s3 + $0x60] sm:$0xff]
      %v3130 = vld [vmem:[%s3 + $0x68] sm:$0xff]
      %v3131 = vld [vmem:[%s3 + $0x70] sm:$0xff]
      %v3132 = vld [vmem:[%s3 + $0x78] sm:$0xff]
      %v3133 = vld [vmem:[%s3 + $0x80] sm:$0xff]
      %v3134 = vld [vmem:[%s3 + $0x88] sm:$0xff]
      %v3135 = vld [vmem:[%s3 + $0x90] sm:$0xff]
      %v3136 = vld [vmem:[%s3 + $0x98] sm:$0xff]
      %v3137 = vld [vmem:[%s3 + $0xa0] sm:$0xff]
      %v3138 = vld [vmem:[%s3 + $0xa8] sm:$0xff]
      %v3139 = vld [vmem:[%s3 + $0xb0] sm:$0xff]
      %v3140 = vld [vmem:[%s3 + $0xb8] sm:$0xff]
      %v3141 = vld [vmem:[%s3 + $0xc0] sm:$0xff]
      %v3142 = vld [vmem:[%s3 + $0xc8] sm:$0xff]
      %v3143 = vld [vmem:[%s3 + $0xd0] sm:$0xff]
      %v3144 = vld [vmem:[%s3 + $0xd8] sm:$0xff]
      %v3145 = vld [vmem:[%s3 + $0xe0] sm:$0xff]
      %v3146 = vld [vmem:[%s3 + $0xe8] sm:$0xff]
      %v3147 = vld [vmem:[%s3 + $0xf0] sm:$0xff]
      %v3148 = vld [vmem:[%s3 + $0xf8] sm:$0xff]
      %v3149 = vld [vmem:[%s3 + $0x100] sm:$0xff]
      %v3150 = vld [vmem:[%s3 + $0x108] sm:$0xff]
      %v3151 = vld [vmem:[%s3 + $0x110] sm:$0xff]
      %v3152 = vld [vmem:[%s3 + $0x118] sm:$0xff]
      %v3153 = vld [vmem:[%s3 + $0x120] sm:$0xff]
      %v3154 = vld [vmem:[%s3 + $0x128] sm:$0xff]
      %v3155 = vld [vmem:[%s3 + $0x130] sm:$0xff]
      %v3156 = vld [vmem:[%s3 + $0x138] sm:$0xff]
      %v3157 = vld [vmem:[%s3 + $0x140] sm:$0xff]
      %v3158 = vld [vmem:[%s3 + $0x148] sm:$0xff]
      %v3159 = vld [vmem:[%s3 + $0x150] sm:$0xff]
      %v3160 = vld [vmem:[%s3 + $0x158] sm:$0xff]
      %v3161 = vld [vmem:[%s3 + $0x160] sm:$0xff]
      %v3162 = vld [vmem:[%s3 + $0x168] sm:$0xff]
      %v3163 = vld [vmem:[%s3 + $0x170] sm:$0xff]
      %v3164 = vld [vmem:[%s3 + $0x178] sm:$0xff]
      %v3165 = vld [vmem:[%s3 + $0x180] sm:$0xff]
      %v3166 = vld [vmem:[%s3 + $0x188] sm:$0xff]
      %v3167 = vld [vmem:[%s3 + $0x190] sm:$0xff]
      %v3168 = vld [vmem:[%s3 + $0x198] sm:$0xff]
      %v3169 = vld [vmem:[%s3 + $0x1a0] sm:$0xff]
      %v3170 = vld [vmem:[%s3 + $0x1a8] sm:$0xff]
      %v3171 = vld [vmem:[%s3 + $0x1b0] sm:$0xff]
      %v3172 = vld [vmem:[%s3 + $0x1b8] sm:$0xff]
      %v3173 = vld [vmem:[%s3 + $0x1c0] sm:$0xff]
      %v3174 = vld [vmem:[%s3 + $0x1c8] sm:$0xff]
      %v3175 = vld [vmem:[%s3 + $0x1d0] sm:$0xff]
      %v3176 = vld [vmem:[%s3 + $0x1d8] sm:$0xff]
      %v3177 = vld [vmem:[%s3 + $0x1e0] sm:$0xff]
      %v3178 = vld [vmem:[%s3 + $0x1e8] sm:$0xff]
      %v3179 = vld [vmem:[%s3 + $0x1f0] sm:$0xff]
      %v3180 = vld [vmem:[%s3 + $0x1f8] sm:$0xff]
      %v3181 = vld [vmem:[%s3 + $0x200] sm:$0xff]
      %v3182 = vld [vmem:[%s3 + $0x208] sm:$0xff]
      %v3183 = vld [vmem:[%s3 + $0x210] sm:$0xff]
      %v3184 = vld [vmem:[%s3 + $0x218] sm:$0xff]
      %v3185 = vld [vmem:[%s3 + $0x220] sm:$0xff]
      %v3186 = vld [vmem:[%s3 + $0x228] sm:$0xff]
      %v3187 = vld [vmem:[%s3 + $0x230] sm:$0xff]
      %v3188 = vld [vmem:[%s3 + $0x238] sm:$0xff]
      %v3189 = vld [vmem:[%s3 + $0x240] sm:$0xff]
      %v3190 = vld [vmem:[%s3 + $0x248] sm:$0xff]
      %v3191 = vld [vmem:[%s3 + $0x250] sm:$0xff]
      %v3192 = vld [vmem:[%s3 + $0x258] sm:$0xff]
      %v3193 = vld [vmem:[%s3 + $0x260] sm:$0xff]
      %v3194 = vld [vmem:[%s3 + $0x268] sm:$0xff]
      %v3195 = vld [vmem:[%s3 + $0x270] sm:$0xff]
      %v3196 = vld [vmem:[%s3 + $0x278] sm:$0xff]
      %v3197 = vld [vmem:[%s3 + $0x280] sm:$0xff]
      %v3198 = vld [vmem:[%s3 + $0x288] sm:$0xff]
      %v3199 = vld [vmem:[%s3 + $0x290] sm:$0xff]
      %v3200 = vld [vmem:[%s3 + $0x298] sm:$0xff]
      %v3201 = vld [vmem:[%s3 + $0x2a0] sm:$0xff]
      %v3202 = vld [vmem:[%s3 + $0x2a8] sm:$0xff]
      %v3203 = vld [vmem:[%s3 + $0x2b0] sm:$0xff]
      %v3204 = vld [vmem:[%s3 + $0x2b8] sm:$0xff]
      %v3205 = vld [vmem:[%s3 + $0x2c0] sm:$0xff]
      %v3206 = vld [vmem:[%s3 + $0x2c8] sm:$0xff]
      %v3207 = vld [vmem:[%s3 + $0x2d0] sm:$0xff]
      %v3208 = vld [vmem:[%s3 + $0x2d8] sm:$0xff]
      %v3209 = vld [vmem:[%s3 + $0x2e0] sm:$0xff]
      %v3210 = vld [vmem:[%s3 + $0x2e8] sm:$0xff]
      %v3211 = vld [vmem:[%s3 + $0x2f0] sm:$0xff]
      %v3212 = vld [vmem:[%s3 + $0x2f8] sm:$0xff]
      %v3213 = vld [vmem:[%s3 + $0x300] sm:$0xff]
      %v3214 = vld [vmem:[%s3 + $0x308] sm:$0xff]
      %v3215 = vld [vmem:[%s3 + $0x310] sm:$0xff]
      %v3216 = vld [vmem:[%s3 + $0x318] sm:$0xff]
      %v3217 = vperm.slane %v323, 3
      %v3218 = vperm.slane %v324, 3
      %v3219 = vperm.slane %v325, 3
      %v3220 = vperm.slane %v326, 3
      %v3321 = vunpack.c.l.b16 %v3117
      %v3322 = vunpack.c.h.b16 %v3117
      %v3323 = vunpack.c.l.b16 %v3118
      %v3324 = vunpack.c.h.b16 %v3118
      %v3325 = vunpack.c.l.b16 %v3119
      %v3326 = vunpack.c.h.b16 %v3119
      %v3327 = vunpack.c.l.b16 %v3120
      %v3328 = vunpack.c.h.b16 %v3120
      %v3329 = vunpack.c.l.b16 %v3121
      %v3330 = vunpack.c.h.b16 %v3121
      %v3331 = vunpack.c.l.b16 %v3122
      %v3332 = vunpack.c.h.b16 %v3122
      %v3333 = vunpack.c.l.b16 %v3123
      %v3334 = vunpack.c.h.b16 %v3123
      %v3335 = vunpack.c.l.b16 %v3124
      %v3336 = vunpack.c.h.b16 %v3124
      %v3337 = vunpack.c.l.b16 %v3125
      %v3338 = vunpack.c.h.b16 %v3125
      %v3339 = vunpack.c.l.b16 %v3126
      %v3340 = vunpack.c.h.b16 %v3126
      %v3341 = vunpack.c.l.b16 %v3127
      %v3342 = vunpack.c.h.b16 %v3127
      %v3343 = vunpack.c.l.b16 %v3128
      %v3344 = vunpack.c.h.b16 %v3128
      %v3345 = vunpack.c.l.b16 %v3129
      %v3346 = vunpack.c.h.b16 %v3129
      %v3347 = vunpack.c.l.b16 %v3130
      %v3348 = vunpack.c.h.b16 %v3130
      %v3349 = vunpack.c.l.b16 %v3131
      %v3350 = vunpack.c.h.b16 %v3131
      %v3351 = vunpack.c.l.b16 %v3132
      %v3352 = vunpack.c.h.b16 %v3132
      %v3353 = vunpack.c.l.b16 %v3133
      %v3354 = vunpack.c.h.b16 %v3133
      %v3355 = vunpack.c.l.b16 %v3134
      %v3356 = vunpack.c.h.b16 %v3134
      %v3357 = vunpack.c.l.b16 %v3135
      %v3358 = vunpack.c.h.b16 %v3135
      %v3359 = vunpack.c.l.b16 %v3136
      %v3360 = vunpack.c.h.b16 %v3136
      %v3361 = vunpack.c.l.b16 %v3137
      %v3362 = vunpack.c.h.b16 %v3137
      %v3363 = vunpack.c.l.b16 %v3138
      %v3364 = vunpack.c.h.b16 %v3138
      %v3365 = vunpack.c.l.b16 %v3139
      %v3366 = vunpack.c.h.b16 %v3139
      %v3367 = vunpack.c.l.b16 %v3140
      %v3368 = vunpack.c.h.b16 %v3140
      %v3369 = vunpack.c.l.b16 %v3141
      %v3370 = vunpack.c.h.b16 %v3141
      %v3371 = vunpack.c.l.b16 %v3142
      %v3372 = vunpack.c.h.b16 %v3142
      %v3373 = vunpack.c.l.b16 %v3143
      %v3374 = vunpack.c.h.b16 %v3143
      %v3375 = vunpack.c.l.b16 %v3144
      %v3376 = vunpack.c.h.b16 %v3144
      %v3377 = vunpack.c.l.b16 %v3145
      %v3378 = vunpack.c.h.b16 %v3145
      %v3379 = vunpack.c.l.b16 %v3146
      %v3380 = vunpack.c.h.b16 %v3146
      %v3381 = vunpack.c.l.b16 %v3147
      %v3382 = vunpack.c.h.b16 %v3147
      %v3383 = vunpack.c.l.b16 %v3148
      %v3384 = vunpack.c.h.b16 %v3148
      %v3385 = vunpack.c.l.b16 %v3149
      %v3386 = vunpack.c.h.b16 %v3149
      %v3387 = vunpack.c.l.b16 %v3150
      %v3388 = vunpack.c.h.b16 %v3150
      %v3389 = vunpack.c.l.b16 %v3151
      %v3390 = vunpack.c.h.b16 %v3151
      %v3391 = vunpack.c.l.b16 %v3152
      %v3392 = vunpack.c.h.b16 %v3152
      %v3393 = vunpack.c.l.b16 %v3153
      %v3394 = vunpack.c.h.b16 %v3153
      %v3395 = vunpack.c.l.b16 %v3154
      %v3396 = vunpack.c.h.b16 %v3154
      %v3397 = vunpack.c.l.b16 %v3155
      %v3398 = vunpack.c.h.b16 %v3155
      %v3399 = vunpack.c.l.b16 %v3156
      %v3400 = vunpack.c.h.b16 %v3156
      %v3401 = vunpack.c.l.b16 %v3157
      %v3402 = vunpack.c.h.b16 %v3157
      %v3403 = vunpack.c.l.b16 %v3158
      %v3404 = vunpack.c.h.b16 %v3158
      %v3405 = vunpack.c.l.b16 %v3159
      %v3406 = vunpack.c.h.b16 %v3159
      %v3407 = vunpack.c.l.b16 %v3160
      %v3408 = vunpack.c.h.b16 %v3160
      %v3409 = vunpack.c.l.b16 %v3161
      %v3410 = vunpack.c.h.b16 %v3161
      %v3411 = vunpack.c.l.b16 %v3162
      %v3412 = vunpack.c.h.b16 %v3162
      %v3413 = vunpack.c.l.b16 %v3163
      %v3414 = vunpack.c.h.b16 %v3163
      %v3415 = vunpack.c.l.b16 %v3164
      %v3416 = vunpack.c.h.b16 %v3164
      %v3417 = vunpack.c.l.b16 %v3165
      %v3418 = vunpack.c.h.b16 %v3165
      %v3419 = vunpack.c.l.b16 %v3166
      %v3420 = vunpack.c.h.b16 %v3166
      %v3421 = vunpack.c.l.b16 %v3167
      %v3422 = vunpack.c.h.b16 %v3167
      %v3423 = vunpack.c.l.b16 %v3168
      %v3424 = vunpack.c.h.b16 %v3168
      %v3425 = vunpack.c.l.b16 %v3169
      %v3426 = vunpack.c.h.b16 %v3169
      %v3427 = vunpack.c.l.b16 %v3170
      %v3428 = vunpack.c.h.b16 %v3170
      %v3429 = vunpack.c.l.b16 %v3171
      %v3430 = vunpack.c.h.b16 %v3171
      %v3431 = vunpack.c.l.b16 %v3172
      %v3432 = vunpack.c.h.b16 %v3172
      %v3433 = vunpack.c.l.b16 %v3173
      %v3434 = vunpack.c.h.b16 %v3173
      %v3435 = vunpack.c.l.b16 %v3174
      %v3436 = vunpack.c.h.b16 %v3174
      %v3437 = vunpack.c.l.b16 %v3175
      %v3438 = vunpack.c.h.b16 %v3175
      %v3439 = vunpack.c.l.b16 %v3176
      %v3440 = vunpack.c.h.b16 %v3176
      %v3441 = vunpack.c.l.b16 %v3177
      %v3442 = vunpack.c.h.b16 %v3177
      %v3443 = vunpack.c.l.b16 %v3178
      %v3444 = vunpack.c.h.b16 %v3178
      %v3445 = vunpack.c.l.b16 %v3179
      %v3446 = vunpack.c.h.b16 %v3179
      %v3447 = vunpack.c.l.b16 %v3180
      %v3448 = vunpack.c.h.b16 %v3180
      %v3449 = vunpack.c.l.b16 %v3181
      %v3450 = vunpack.c.h.b16 %v3181
      %v3451 = vunpack.c.l.b16 %v3182
      %v3452 = vunpack.c.h.b16 %v3182
      %v3453 = vunpack.c.l.b16 %v3183
      %v3454 = vunpack.c.h.b16 %v3183
      %v3455 = vunpack.c.l.b16 %v3184
      %v3456 = vunpack.c.h.b16 %v3184
      %v3457 = vunpack.c.l.b16 %v3185
      %v3458 = vunpack.c.h.b16 %v3185
      %v3459 = vunpack.c.l.b16 %v3186
      %v3460 = vunpack.c.h.b16 %v3186
      %v3461 = vunpack.c.l.b16 %v3187
      %v3462 = vunpack.c.h.b16 %v3187
      %v3463 = vunpack.c.l.b16 %v3188
      %v3464 = vunpack.c.h.b16 %v3188
      %v3465 = vunpack.c.l.b16 %v3189
      %v3466 = vunpack.c.h.b16 %v3189
      %v3467 = vunpack.c.l.b16 %v3190
      %v3468 = vunpack.c.h.b16 %v3190
      %v3469 = vunpack.c.l.b16 %v3191
      %v3470 = vunpack.c.h.b16 %v3191
      %v3471 = vunpack.c.l.b16 %v3192
      %v3472 = vunpack.c.h.b16 %v3192
      %v3473 = vunpack.c.l.b16 %v3193
      %v3474 = vunpack.c.h.b16 %v3193
      %v3475 = vunpack.c.l.b16 %v3194
      %v3476 = vunpack.c.h.b16 %v3194
      %v3477 = vunpack.c.l.b16 %v3195
      %v3478 = vunpack.c.h.b16 %v3195
      %v3479 = vunpack.c.l.b16 %v3196
      %v3480 = vunpack.c.h.b16 %v3196
      %v3481 = vunpack.c.l.b16 %v3197
      %v3482 = vunpack.c.h.b16 %v3197
      %v3483 = vunpack.c.l.b16 %v3198
      %v3484 = vunpack.c.h.b16 %v3198
      %v3485 = vunpack.c.l.b16 %v3199
      %v3486 = vunpack.c.h.b16 %v3199
      %v3487 = vunpack.c.l.b16 %v3200
      %v3488 = vunpack.c.h.b16 %v3200
      %v3489 = vunpack.c.l.b16 %v3201
      %v3490 = vunpack.c.h.b16 %v3201
      %v3491 = vunpack.c.l.b16 %v3202
      %v3492 = vunpack.c.h.b16 %v3202
      %v3493 = vunpack.c.l.b16 %v3203
      %v3494 = vunpack.c.h.b16 %v3203
      %v3495 = vunpack.c.l.b16 %v3204
      %v3496 = vunpack.c.h.b16 %v3204
      %v3497 = vunpack.c.l.b16 %v3205
      %v3498 = vunpack.c.h.b16 %v3205
      %v3499 = vunpack.c.l.b16 %v3206
      %v3500 = vunpack.c.h.b16 %v3206
      %v3501 = vunpack.c.l.b16 %v3207
      %v3502 = vunpack.c.h.b16 %v3207
      %v3503 = vunpack.c.l.b16 %v3208
      %v3504 = vunpack.c.h.b16 %v3208
      %v3505 = vunpack.c.l.b16 %v3209
      %v3506 = vunpack.c.h.b16 %v3209
      %v3507 = vunpack.c.l.b16 %v3210
      %v3508 = vunpack.c.h.b16 %v3210
      %v3509 = vunpack.c.l.b16 %v3211
      %v3510 = vunpack.c.h.b16 %v3211
      %v3511 = vunpack.c.l.b16 %v3212
      %v3512 = vunpack.c.h.b16 %v3212
      %v3513 = vunpack.c.l.b16 %v3213
      %v3514 = vunpack.c.h.b16 %v3213
      %v3515 = vunpack.c.l.b16 %v3214
      %v3516 = vunpack.c.h.b16 %v3214
      %v3517 = vunpack.c.l.b16 %v3215
      %v3518 = vunpack.c.h.b16 %v3215
      %v3519 = vunpack.c.l.b16 %v3216
      %v3520 = vunpack.c.h.b16 %v3216
      %v3521 = vpack.c.b16 %v3325, %v3321
      %v3522 = vpack.c.b16 %v3326, %v3322
      %v3523 = vpack.c.b16 %v3327, %v3323
      %v3524 = vpack.c.b16 %v3328, %v3324
      %v3525 = vpack.c.b16 %v3333, %v3329
      %v3526 = vpack.c.b16 %v3334, %v3330
      %v3527 = vpack.c.b16 %v3335, %v3331
      %v3528 = vpack.c.b16 %v3336, %v3332
      %v3529 = vpack.c.b16 %v3341, %v3337
      %v3530 = vpack.c.b16 %v3342, %v3338
      %v3531 = vpack.c.b16 %v3343, %v3339
      %v3532 = vpack.c.b16 %v3344, %v3340
      %v3533 = vpack.c.b16 %v3349, %v3345
      %v3534 = vpack.c.b16 %v3350, %v3346
      %v3535 = vpack.c.b16 %v3351, %v3347
      %v3536 = vpack.c.b16 %v3352, %v3348
      %v3537 = vpack.c.b16 %v3357, %v3353
      %v3538 = vpack.c.b16 %v3358, %v3354
      %v3539 = vpack.c.b16 %v3359, %v3355
      %v3540 = vpack.c.b16 %v3360, %v3356
      %v3541 = vpack.c.b16 %v3365, %v3361
      %v3542 = vpack.c.b16 %v3366, %v3362
      %v3543 = vpack.c.b16 %v3367, %v3363
      %v3544 = vpack.c.b16 %v3368, %v3364
      %v3545 = vpack.c.b16 %v3373, %v3369
      %v3546 = vpack.c.b16 %v3374, %v3370
      %v3547 = vpack.c.b16 %v3375, %v3371
      %v3548 = vpack.c.b16 %v3376, %v3372
      %v3549 = vpack.c.b16 %v3381, %v3377
      %v3550 = vpack.c.b16 %v3382, %v3378
      %v3551 = vpack.c.b16 %v3383, %v3379
      %v3552 = vpack.c.b16 %v3384, %v3380
      %v3553 = vpack.c.b16 %v3389, %v3385
      %v3554 = vpack.c.b16 %v3390, %v3386
      %v3555 = vpack.c.b16 %v3391, %v3387
      %v3556 = vpack.c.b16 %v3392, %v3388
      %v3557 = vpack.c.b16 %v3397, %v3393
      %v3558 = vpack.c.b16 %v3398, %v3394
      %v3559 = vpack.c.b16 %v3399, %v3395
      %v3560 = vpack.c.b16 %v3400, %v3396
      %v3561 = vpack.c.b16 %v3405, %v3401
      %v3562 = vpack.c.b16 %v3406, %v3402
      %v3563 = vpack.c.b16 %v3407, %v3403
      %v3564 = vpack.c.b16 %v3408, %v3404
      %v3565 = vpack.c.b16 %v3413, %v3409
      %v3566 = vpack.c.b16 %v3414, %v3410
      %v3567 = vpack.c.b16 %v3415, %v3411
      %v3568 = vpack.c.b16 %v3416, %v3412
      %v3569 = vpack.c.b16 %v3421, %v3417
      %v3570 = vpack.c.b16 %v3422, %v3418
      %v3571 = vpack.c.b16 %v3423, %v3419
      %v3572 = vpack.c.b16 %v3424, %v3420
      %v3573 = vpack.c.b16 %v3429, %v3425
      %v3574 = vpack.c.b16 %v3430, %v3426
      %v3575 = vpack.c.b16 %v3431, %v3427
      %v3576 = vpack.c.b16 %v3432, %v3428
      %v3577 = vpack.c.b16 %v3437, %v3433
      %v3578 = vpack.c.b16 %v3438, %v3434
      %v3579 = vpack.c.b16 %v3439, %v3435
      %v3580 = vpack.c.b16 %v3440, %v3436
      %v3581 = vpack.c.b16 %v3445, %v3441
      %v3582 = vpack.c.b16 %v3446, %v3442
      %v3583 = vpack.c.b16 %v3447, %v3443
      %v3584 = vpack.c.b16 %v3448, %v3444
      %v3585 = vpack.c.b16 %v3453, %v3449
      %v3586 = vpack.c.b16 %v3454, %v3450
      %v3587 = vpack.c.b16 %v3455, %v3451
      %v3588 = vpack.c.b16 %v3456, %v3452
      %v3589 = vpack.c.b16 %v3461, %v3457
      %v3590 = vpack.c.b16 %v3462, %v3458
      %v3591 = vpack.c.b16 %v3463, %v3459
      %v3592 = vpack.c.b16 %v3464, %v3460
      %v3593 = vpack.c.b16 %v3469, %v3465
      %v3594 = vpack.c.b16 %v3470, %v3466
      %v3595 = vpack.c.b16 %v3471, %v3467
      %v3596 = vpack.c.b16 %v3472, %v3468
      %v3597 = vpack.c.b16 %v3477, %v3473
      %v3598 = vpack.c.b16 %v3478, %v3474
      %v3599 = vpack.c.b16 %v3479, %v3475
      %v3600 = vpack.c.b16 %v3480, %v3476
      %v3601 = vpack.c.b16 %v3485, %v3481
      %v3602 = vpack.c.b16 %v3486, %v3482
      %v3603 = vpack.c.b16 %v3487, %v3483
      %v3604 = vpack.c.b16 %v3488, %v3484
      %v3605 = vpack.c.b16 %v3493, %v3489
      %v3606 = vpack.c.b16 %v3494, %v3490
      %v3607 = vpack.c.b16 %v3495, %v3491
      %v3608 = vpack.c.b16 %v3496, %v3492
      %v3609 = vpack.c.b16 %v3501, %v3497
      %v3610 = vpack.c.b16 %v3502, %v3498
      %v3611 = vpack.c.b16 %v3503, %v3499
      %v3612 = vpack.c.b16 %v3504, %v3500
      %v3613 = vpack.c.b16 %v3509, %v3505
      %v3614 = vpack.c.b16 %v3510, %v3506
      %v3615 = vpack.c.b16 %v3511, %v3507
      %v3616 = vpack.c.b16 %v3512, %v3508
      %v3617 = vpack.c.b16 %v3517, %v3513
      %v3618 = vpack.c.b16 %v3518, %v3514
      %v3619 = vpack.c.b16 %v3519, %v3515
      %v3620 = vpack.c.b16 %v3520, %v3516
      %v3722 = vsel %vm2147, %v3116, 0
      %3724 = vmatpush.bf16.msra.mxu0 %v3549
      %3725 = vmatpush.bf16.msra.mxu0 %v3545
      %3726 = vmatpush.bf16.msra.mxu0 %v3541
      %3727 = vmatpush.bf16.msra.mxu0 %v3537
      %3728 = vmatpush.bf16.msra.mxu0 %v3533
      %3729 = vmatpush.bf16.msra.mxu0 %v3529
      %3730 = vmatpush.bf16.msra.mxu0 %v3525
      %3731 = vmatpush.bf16.msra.mxu0 %v3521
      %3732 = vmatmul.bf16.gmra.mxu0 %v3113
      %v3733 = vpop.f32.mrf.mxu0
      %v3734 = vadd.f32 %v3217, %v3733
      %v3735 = vpop.f32.mrf.mxu0
      %v3736 = vadd.f32 %v3217, %v3735
      %3737 = vdwg.mxu0
      %3738 = vmatpush.bf16.msra.mxu0 %v3581
      %3739 = vmatpush.bf16.msra.mxu0 %v3577
      %3740 = vmatpush.bf16.msra.mxu0 %v3573
      %3741 = vmatpush.bf16.msra.mxu0 %v3569
      %3742 = vmatpush.bf16.msra.mxu0 %v3565
      %3743 = vmatpush.bf16.msra.mxu0 %v3561
      %3744 = vmatpush.bf16.msra.mxu0 %v3557
      %3745 = vmatpush.bf16.msra.mxu0 %v3553
      %3746 = vmatmul.bf16.gmra.mxu0 %v3114
      %v3747 = vpop.f32.mrf.mxu0
      %v3748 = vadd.f32 %v3734, %v3747
      %v3749 = vpop.f32.mrf.mxu0
      %v3750 = vadd.f32 %v3736, %v3749
      %3751 = vdwg.mxu0
      %3752 = vmatpush.bf16.msra.mxu0 %v3613
      %3753 = vmatpush.bf16.msra.mxu0 %v3609
      %3754 = vmatpush.bf16.msra.mxu0 %v3605
      %3755 = vmatpush.bf16.msra.mxu0 %v3601
      %3756 = vmatpush.bf16.msra.mxu0 %v3597
      %3757 = vmatpush.bf16.msra.mxu0 %v3593
      %3758 = vmatpush.bf16.msra.mxu0 %v3589
      %3759 = vmatpush.bf16.msra.mxu0 %v3585
      %3760 = vmatmul.bf16.gmra.mxu0 %v3115
      %v3761 = vpop.f32.mrf.mxu0
      %v3762 = vadd.f32 %v3748, %v3761
      %v3763 = vpop.f32.mrf.mxu0
      %v3764 = vadd.f32 %v3750, %v3763
      %3765 = vdwg.mxu0
      %3766 = vmatpush.bf16.msra.mxu0 0
      %3767 = vmatpush.bf16.msra.mxu0 0
      %3768 = vmatpush.bf16.msra.mxu0 0
      %3769 = vmatpush.bf16.msra.mxu0 0
      %3770 = vmatpush.bf16.msra.mxu0 0
      %3771 = vmatpush.bf16.msra.mxu0 0
      %3772 = vmatpush.bf16.msra.mxu0 0
      %3773 = vmatpush.bf16.msra.mxu0 %v3617
      %3774 = vmatmul.bf16.gmra.mxu0 %v3722
      %v3775 = vpop.f32.mrf.mxu0
      %v3776 = vadd.f32 %v3762, %v3775
      %v3777 = vpop.f32.mrf.mxu0
      %v3778 = vadd.f32 %v3764, %v3777
      %3779 = vdwg.mxu0
      %3780 = vmatpush.bf16.msra.mxu0 %v3550
      %3781 = vmatpush.bf16.msra.mxu0 %v3546
      %3782 = vmatpush.bf16.msra.mxu0 %v3542
      %3783 = vmatpush.bf16.msra.mxu0 %v3538
      %3784 = vmatpush.bf16.msra.mxu0 %v3534
      %3785 = vmatpush.bf16.msra.mxu0 %v3530
      %3786 = vmatpush.bf16.msra.mxu0 %v3526
      %3787 = vmatpush.bf16.msra.mxu0 %v3522
      %3788 = vmatmul.bf16.gmra.mxu0 %v3113
      %v3789 = vpop.f32.mrf.mxu0
      %v3790 = vadd.f32 %v3218, %v3789
      %v3791 = vpop.f32.mrf.mxu0
      %v3792 = vadd.f32 %v3218, %v3791
      %3793 = vdwg.mxu0
      %3794 = vmatpush.bf16.msra.mxu0 %v3582
      %3795 = vmatpush.bf16.msra.mxu0 %v3578
      %3796 = vmatpush.bf16.msra.mxu0 %v3574
      %3797 = vmatpush.bf16.msra.mxu0 %v3570
      %3798 = vmatpush.bf16.msra.mxu0 %v3566
      %3799 = vmatpush.bf16.msra.mxu0 %v3562
      %3800 = vmatpush.bf16.msra.mxu0 %v3558
      %3801 = vmatpush.bf16.msra.mxu0 %v3554
      %3802 = vmatmul.bf16.gmra.mxu0 %v3114
      %v3803 = vpop.f32.mrf.mxu0
      %v3804 = vadd.f32 %v3790, %v3803
      %v3805 = vpop.f32.mrf.mxu0
      %v3806 = vadd.f32 %v3792, %v3805
      %3807 = vdwg.mxu0
      %3808 = vmatpush.bf16.msra.mxu0 %v3614
      %3809 = vmatpush.bf16.msra.mxu0 %v3610
      %3810 = vmatpush.bf16.msra.mxu0 %v3606
      %3811 = vmatpush.bf16.msra.mxu0 %v3602
      %3812 = vmatpush.bf16.msra.mxu0 %v3598
      %3813 = vmatpush.bf16.msra.mxu0 %v3594
      %3814 = vmatpush.bf16.msra.mxu0 %v3590
      %3815 = vmatpush.bf16.msra.mxu0 %v3586
      %3816 = vmatmul.bf16.gmra.mxu0 %v3115
      %v3817 = vpop.f32.mrf.mxu0
      %v3818 = vadd.f32 %v3804, %v3817
      %v3819 = vpop.f32.mrf.mxu0
      %v3820 = vadd.f32 %v3806, %v3819
      %3821 = vdwg.mxu0
      %3822 = vmatpush.bf16.msra.mxu0 0
      %3823 = vmatpush.bf16.msra.mxu0 0
      %3824 = vmatpush.bf16.msra.mxu0 0
      %3825 = vmatpush.bf16.msra.mxu0 0
      %3826 = vmatpush.bf16.msra.mxu0 0
      %3827 = vmatpush.bf16.msra.mxu0 0
      %3828 = vmatpush.bf16.msra.mxu0 0
      %3829 = vmatpush.bf16.msra.mxu0 %v3618
      %3830 = vmatmul.bf16.gmra.mxu0 %v3722
      %v3831 = vpop.f32.mrf.mxu0
      %v3832 = vadd.f32 %v3818, %v3831
      %v3833 = vpop.f32.mrf.mxu0
      %v3834 = vadd.f32 %v3820, %v3833
      %3835 = vdwg.mxu0
      %3836 = vmatpush.bf16.msra.mxu0 %v3551
      %3837 = vmatpush.bf16.msra.mxu0 %v3547
      %3838 = vmatpush.bf16.msra.mxu0 %v3543
      %3839 = vmatpush.bf16.msra.mxu0 %v3539
      %3840 = vmatpush.bf16.msra.mxu0 %v3535
      %3841 = vmatpush.bf16.msra.mxu0 %v3531
      %3842 = vmatpush.bf16.msra.mxu0 %v3527
      %3843 = vmatpush.bf16.msra.mxu0 %v3523
      %3844 = vmatmul.bf16.gmra.mxu0 %v3113
      %v3845 = vpop.f32.mrf.mxu0
      %v3846 = vadd.f32 %v3219, %v3845
      %v3847 = vpop.f32.mrf.mxu0
      %v3848 = vadd.f32 %v3219, %v3847
      %3849 = vdwg.mxu0
      %3850 = vmatpush.bf16.msra.mxu0 %v3583
      %3851 = vmatpush.bf16.msra.mxu0 %v3579
      %3852 = vmatpush.bf16.msra.mxu0 %v3575
      %3853 = vmatpush.bf16.msra.mxu0 %v3571
      %3854 = vmatpush.bf16.msra.mxu0 %v3567
      %3855 = vmatpush.bf16.msra.mxu0 %v3563
      %3856 = vmatpush.bf16.msra.mxu0 %v3559
      %3857 = vmatpush.bf16.msra.mxu0 %v3555
      %3858 = vmatmul.bf16.gmra.mxu0 %v3114
      %v3859 = vpop.f32.mrf.mxu0
      %v3860 = vadd.f32 %v3846, %v3859
      %v3861 = vpop.f32.mrf.mxu0
      %v3862 = vadd.f32 %v3848, %v3861
      %3863 = vdwg.mxu0
      %3864 = vmatpush.bf16.msra.mxu0 %v3615
      %3865 = vmatpush.bf16.msra.mxu0 %v3611
      %3866 = vmatpush.bf16.msra.mxu0 %v3607
      %3867 = vmatpush.bf16.msra.mxu0 %v3603
      %3868 = vmatpush.bf16.msra.mxu0 %v3599
      %3869 = vmatpush.bf16.msra.mxu0 %v3595
      %3870 = vmatpush.bf16.msra.mxu0 %v3591
      %3871 = vmatpush.bf16.msra.mxu0 %v3587
      %3872 = vmatmul.bf16.gmra.mxu0 %v3115
      %v3873 = vpop.f32.mrf.mxu0
      %v3874 = vadd.f32 %v3860, %v3873
      %v3875 = vpop.f32.mrf.mxu0
      %v3876 = vadd.f32 %v3862, %v3875
      %3877 = vdwg.mxu0
      %3878 = vmatpush.bf16.msra.mxu0 0
      %3879 = vmatpush.bf16.msra.mxu0 0
      %3880 = vmatpush.bf16.msra.mxu0 0
      %3881 = vmatpush.bf16.msra.mxu0 0
      %3882 = vmatpush.bf16.msra.mxu0 0
      %3883 = vmatpush.bf16.msra.mxu0 0
      %3884 = vmatpush.bf16.msra.mxu0 0
      %3885 = vmatpush.bf16.msra.mxu0 %v3619
      %3886 = vmatmul.bf16.gmra.mxu0 %v3722
      %v3887 = vpop.f32.mrf.mxu0
      %v3888 = vadd.f32 %v3874, %v3887
      %v3889 = vpop.f32.mrf.mxu0
      %v3890 = vadd.f32 %v3876, %v3889
      %3891 = vdwg.mxu0
      %3892 = vmatpush.bf16.msra.mxu0 %v3552
      %3893 = vmatpush.bf16.msra.mxu0 %v3548
      %3894 = vmatpush.bf16.msra.mxu0 %v3544
      %3895 = vmatpush.bf16.msra.mxu0 %v3540
      %3896 = vmatpush.bf16.msra.mxu0 %v3536
      %3897 = vmatpush.bf16.msra.mxu0 %v3532
      %3898 = vmatpush.bf16.msra.mxu0 %v3528
      %3899 = vmatpush.bf16.msra.mxu0 %v3524
      %3900 = vmatmul.bf16.gmra.mxu0 %v3113
      %v3901 = vpop.f32.mrf.mxu0
      %v3902 = vadd.f32 %v3220, %v3901
      %v3903 = vpop.f32.mrf.mxu0
      %v3904 = vadd.f32 %v3220, %v3903
      %3905 = vdwg.mxu0
      %3906 = vmatpush.bf16.msra.mxu0 %v3584
      %3907 = vmatpush.bf16.msra.mxu0 %v3580
      %3908 = vmatpush.bf16.msra.mxu0 %v3576
      %3909 = vmatpush.bf16.msra.mxu0 %v3572
      %3910 = vmatpush.bf16.msra.mxu0 %v3568
      %3911 = vmatpush.bf16.msra.mxu0 %v3564
      %3912 = vmatpush.bf16.msra.mxu0 %v3560
      %3913 = vmatpush.bf16.msra.mxu0 %v3556
      %3914 = vmatmul.bf16.gmra.mxu0 %v3114
      %v3915 = vpop.f32.mrf.mxu0
      %v3916 = vadd.f32 %v3902, %v3915
      %v3917 = vpop.f32.mrf.mxu0
      %v3918 = vadd.f32 %v3904, %v3917
      %3919 = vdwg.mxu0
      %3920 = vmatpush.bf16.msra.mxu0 %v3616
      %3921 = vmatpush.bf16.msra.mxu0 %v3612
      %3922 = vmatpush.bf16.msra.mxu0 %v3608
      %3923 = vmatpush.bf16.msra.mxu0 %v3604
      %3924 = vmatpush.bf16.msra.mxu0 %v3600
      %3925 = vmatpush.bf16.msra.mxu0 %v3596
      %3926 = vmatpush.bf16.msra.mxu0 %v3592
      %3927 = vmatpush.bf16.msra.mxu0 %v3588
      %3928 = vmatmul.bf16.gmra.mxu0 %v3115
      %v3929 = vpop.f32.mrf.mxu0
      %v3930 = vadd.f32 %v3916, %v3929
      %v3931 = vpop.f32.mrf.mxu0
      %v3932 = vadd.f32 %v3918, %v3931
      %3933 = vdwg.mxu0
      %3934 = vmatpush.bf16.msra.mxu0 0
      %3935 = vmatpush.bf16.msra.mxu0 0
      %3936 = vmatpush.bf16.msra.mxu0 0
      %3937 = vmatpush.bf16.msra.mxu0 0
      %3938 = vmatpush.bf16.msra.mxu0 0
      %3939 = vmatpush.bf16.msra.mxu0 0
      %3940 = vmatpush.bf16.msra.mxu0 0
      %3941 = vmatpush.bf16.msra.mxu0 %v3620
      %3942 = vmatmul.bf16.gmra.mxu0 %v3722
      %v3943 = vpop.f32.mrf.mxu0
      %v3944 = vadd.f32 %v3930, %v3943
      %v3945 = vpop.f32.mrf.mxu0
      %v3946 = vadd.f32 %v3932, %v3945
      %3947 = vdwg.mxu0
      %v3948 = vadd.f32 %v313, %v3776
      %v3949 = vadd.f32 %v314, %v3832
      %v3950 = vadd.f32 %v315, %v3888
      %v3951 = vadd.f32 %v316, %v3944
      %v3952 = vadd.f32 %v317, %v3778
      %v3953 = vadd.f32 %v318, %v3834
      %v3954 = vadd.f32 %v319, %v3890
      %v3955 = vadd.f32 %v320, %v3946
      %v3956 = vadd.f32 %v3948, %v3949
      %v3957 = vadd.f32 %v3956, %v3950
      %v3958 = vsel %vm2147, %v3951, 0.0
      %v3959 = vadd.f32 %v3957, %v3958
      %3960 = vadd.xlane.f32.xlu0 %v3959
      %v3961 = vpop.xlane.xlu0 %3960
      %v3962 = vadd.f32 %v3952, %v3953
      %v3963 = vadd.f32 %v3962, %v3954
      %v3964 = vsel %vm2147, %v3955, 0.0
      %v3965 = vadd.f32 %v3963, %v3964
      %3966 = vadd.xlane.f32.xlu0 %v3965
      %v3967 = vpop.xlane.xlu0 %3966
      %v3968 = vrcp.pop 400.0
      %v3969 = vmul.f32 400.0, %v3968
      %v3970 = vsub.f32 1.0, %v3969
      %v3971 = vmul.f32 %v3968, %v3970
      %v3972 = vadd.f32 %v3968, %v3971
      %vm3973 = vweird.f32 %v3968
      %v3974 = vsel %vm3973, %v3968, %v3972
      %v3975 = vmul.f32 %v3961, %v3974
      %v3976 = vmul.f32 %v3967, %v3974
      %v3977 = vsub.f32 %v3948, %v3975
      %v3978 = vsub.f32 %v3949, %v3975
      %v3979 = vsub.f32 %v3950, %v3975
      %v3980 = vsub.f32 %v3951, %v3975
      %v3981 = vsub.f32 %v3952, %v3976
      %v3982 = vsub.f32 %v3953, %v3976
      %v3983 = vsub.f32 %v3954, %v3976
      %v3984 = vsub.f32 %v3955, %v3976
      %v3985 = vmul.f32 %v3977, %v3977
      %v3986 = vmul.f32 %v3978, %v3978
      %v3987 = vmul.f32 %v3979, %v3979
      %v3988 = vmul.f32 %v3980, %v3980
      %v3989 = vmul.f32 %v3981, %v3981
      %v3990 = vmul.f32 %v3982, %v3982
      %v3991 = vmul.f32 %v3983, %v3983
      %v3992 = vmul.f32 %v3984, %v3984
      %v3993 = vadd.f32 %v3985, %v3986
      %v3994 = vadd.f32 %v3993, %v3987
      %v3995 = vsel %vm2147, %v3988, 0.0
      %v3996 = vadd.f32 %v3994, %v3995
      %3997 = vadd.xlane.f32.xlu0 %v3996
      %v3998 = vpop.xlane.xlu0 %3997
      %v3999 = vadd.f32 %v3989, %v3990
      %v4000 = vadd.f32 %v3999, %v3991
      %v4001 = vsel %vm2147, %v3992, 0.0
      %v4002 = vadd.f32 %v4000, %v4001
      %4003 = vadd.xlane.f32.xlu0 %v4002
      %v4004 = vpop.xlane.xlu0 %4003
      %v4005 = vmul.f32 %v3998, %v3974
      %v4006 = vmul.f32 %v4004, %v3974
      %v4007 = vadd.f32 %v4005, 1e-05
      %v4008 = vadd.f32 %v4006, 1e-05
      %v4009 = vrsqrt.pop %v4007
      %v4010 = vmul.f32 %v4009, %v4007
      %v4011 = vmul.f32 %v4010, %v4009
      %v4012 = vmul.f32 0.5, %v4011
      %v4013 = vsub.f32 1.5, %v4012
      %v4014 = vmul.f32 %v4009, %v4013
      %vm4015 = vweird.f32 %v4007
      %vm4016 = vweird.f32 %v4009
      %vm4017 = vmor %vm4015, %vm4016
      %v4018 = vsel %vm4017, %v4009, %v4014
      %v4019 = vrsqrt.pop %v4008
      %v4020 = vmul.f32 %v4019, %v4008
      %v4021 = vmul.f32 %v4020, %v4019
      %v4022 = vmul.f32 0.5, %v4021
      %v4023 = vsub.f32 1.5, %v4022
      %v4024 = vmul.f32 %v4019, %v4023
      %vm4025 = vweird.f32 %v4008
      %vm4026 = vweird.f32 %v4019
      %vm4027 = vmor %vm4025, %vm4026
      %v4028 = vsel %vm4027, %v4019, %v4024
      %v4029 = vmul.f32 %v3977, %v4018
      %v4030 = vmul.f32 %v3978, %v4018
      %v4031 = vmul.f32 %v3979, %v4018
      %v4032 = vmul.f32 %v3980, %v4018
      %v4033 = vmul.f32 %v3981, %v4028
      %v4034 = vmul.f32 %v3982, %v4028
      %v4035 = vmul.f32 %v3983, %v4028
      %v4036 = vmul.f32 %v3984, %v4028
      %v4037 = vperm.slane %v323, 4
      %v4038 = vperm.slane %v324, 4
      %v4039 = vperm.slane %v325, 4
      %v4040 = vperm.slane %v326, 4
      %v4041 = vmul.f32 %v4029, %v4037
      %v4042 = vmul.f32 %v4030, %v4038
      %v4043 = vmul.f32 %v4031, %v4039
      %v4044 = vmul.f32 %v4032, %v4040
      %v4045 = vmul.f32 %v4033, %v4037
      %v4046 = vmul.f32 %v4034, %v4038
      %v4047 = vmul.f32 %v4035, %v4039
      %v4048 = vmul.f32 %v4036, %v4040
      %v4049 = vperm.slane %v323, 5
      %v4050 = vperm.slane %v324, 5
      %v4051 = vperm.slane %v325, 5
      %v4052 = vperm.slane %v326, 5
      %v4053 = vadd.f32 %v4041, %v4049
      %v4054 = vadd.f32 %v4042, %v4050
      %v4055 = vadd.f32 %v4043, %v4051
      %v4056 = vadd.f32 %v4044, %v4052
      %v4057 = vadd.f32 %v4045, %v4049
      %v4058 = vadd.f32 %v4046, %v4050
      %v4059 = vadd.f32 %v4047, %v4051
      %v4060 = vadd.f32 %v4048, %v4052
      %v4061 = vpack.c.bf16 %v4057, %v4053
      %v4062 = vpack.c.bf16 %v4058, %v4054
      %v4063 = vpack.c.bf16 %v4059, %v4055
      %v4064 = vpack.c.bf16 %v4060, %v4056
      %v4065 = vld [vmem:[%s4] sm:$0xff]
      %v4066 = vld [vmem:[%s4 + $0x8] sm:$0xff]
      %v4067 = vld [vmem:[%s4 + $0x10] sm:$0xff]
      %v4068 = vld [vmem:[%s4 + $0x18] sm:$0xff]
      %v4069 = vld [vmem:[%s4 + $0x20] sm:$0xff]
      %v4070 = vld [vmem:[%s4 + $0x28] sm:$0xff]
      %v4071 = vld [vmem:[%s4 + $0x30] sm:$0xff]
      %v4072 = vld [vmem:[%s4 + $0x38] sm:$0xff]
      %v4073 = vld [vmem:[%s4 + $0x40] sm:$0xff]
      %v4074 = vld [vmem:[%s4 + $0x48] sm:$0xff]
      %v4075 = vld [vmem:[%s4 + $0x50] sm:$0xff]
      %v4076 = vld [vmem:[%s4 + $0x58] sm:$0xff]
      %v4077 = vld [vmem:[%s4 + $0x60] sm:$0xff]
      %v4078 = vld [vmem:[%s4 + $0x68] sm:$0xff]
      %v4079 = vld [vmem:[%s4 + $0x70] sm:$0xff]
      %v4080 = vld [vmem:[%s4 + $0x78] sm:$0xff]
      %v4081 = vld [vmem:[%s4 + $0x80] sm:$0xff]
      %v4082 = vld [vmem:[%s4 + $0x88] sm:$0xff]
      %v4083 = vld [vmem:[%s4 + $0x90] sm:$0xff]
      %v4084 = vld [vmem:[%s4 + $0x98] sm:$0xff]
      %v4085 = vld [vmem:[%s4 + $0xa0] sm:$0xff]
      %v4086 = vld [vmem:[%s4 + $0xa8] sm:$0xff]
      %v4087 = vld [vmem:[%s4 + $0xb0] sm:$0xff]
      %v4088 = vld [vmem:[%s4 + $0xb8] sm:$0xff]
      %v4089 = vld [vmem:[%s4 + $0xc0] sm:$0xff]
      %v4090 = vld [vmem:[%s4 + $0xc8] sm:$0xff]
      %v4091 = vld [vmem:[%s4 + $0xd0] sm:$0xff]
      %v4092 = vld [vmem:[%s4 + $0xd8] sm:$0xff]
      %v4093 = vld [vmem:[%s4 + $0xe0] sm:$0xff]
      %v4094 = vld [vmem:[%s4 + $0xe8] sm:$0xff]
      %v4095 = vld [vmem:[%s4 + $0xf0] sm:$0xff]
      %v4096 = vld [vmem:[%s4 + $0xf8] sm:$0xff]
      %v4097 = vld [vmem:[%s4 + $0x100] sm:$0xff]
      %v4098 = vld [vmem:[%s4 + $0x108] sm:$0xff]
      %v4099 = vld [vmem:[%s4 + $0x110] sm:$0xff]
      %v4100 = vld [vmem:[%s4 + $0x118] sm:$0xff]
      %v4101 = vld [vmem:[%s4 + $0x120] sm:$0xff]
      %v4102 = vld [vmem:[%s4 + $0x128] sm:$0xff]
      %v4103 = vld [vmem:[%s4 + $0x130] sm:$0xff]
      %v4104 = vld [vmem:[%s4 + $0x138] sm:$0xff]
      %v4105 = vld [vmem:[%s4 + $0x140] sm:$0xff]
      %v4106 = vld [vmem:[%s4 + $0x148] sm:$0xff]
      %v4107 = vld [vmem:[%s4 + $0x150] sm:$0xff]
      %v4108 = vld [vmem:[%s4 + $0x158] sm:$0xff]
      %v4109 = vld [vmem:[%s4 + $0x160] sm:$0xff]
      %v4110 = vld [vmem:[%s4 + $0x168] sm:$0xff]
      %v4111 = vld [vmem:[%s4 + $0x170] sm:$0xff]
      %v4112 = vld [vmem:[%s4 + $0x178] sm:$0xff]
      %v4113 = vld [vmem:[%s4 + $0x180] sm:$0xff]
      %v4114 = vld [vmem:[%s4 + $0x188] sm:$0xff]
      %v4115 = vld [vmem:[%s4 + $0x190] sm:$0xff]
      %v4116 = vld [vmem:[%s4 + $0x198] sm:$0xff]
      %v4117 = vld [vmem:[%s4 + $0x1a0] sm:$0xff]
      %v4118 = vld [vmem:[%s4 + $0x1a8] sm:$0xff]
      %v4119 = vld [vmem:[%s4 + $0x1b0] sm:$0xff]
      %v4120 = vld [vmem:[%s4 + $0x1b8] sm:$0xff]
      %v4121 = vld [vmem:[%s4 + $0x1c0] sm:$0xff]
      %v4122 = vld [vmem:[%s4 + $0x1c8] sm:$0xff]
      %v4123 = vld [vmem:[%s4 + $0x1d0] sm:$0xff]
      %v4124 = vld [vmem:[%s4 + $0x1d8] sm:$0xff]
      %v4125 = vld [vmem:[%s4 + $0x1e0] sm:$0xff]
      %v4126 = vld [vmem:[%s4 + $0x1e8] sm:$0xff]
      %v4127 = vld [vmem:[%s4 + $0x1f0] sm:$0xff]
      %v4128 = vld [vmem:[%s4 + $0x1f8] sm:$0xff]
      %v4129 = vld [vmem:[%s4 + $0x200] sm:$0xff]
      %v4130 = vld [vmem:[%s4 + $0x208] sm:$0xff]
      %v4131 = vld [vmem:[%s4 + $0x210] sm:$0xff]
      %v4132 = vld [vmem:[%s4 + $0x218] sm:$0xff]
      %v4133 = vld [vmem:[%s4 + $0x220] sm:$0xff]
      %v4134 = vld [vmem:[%s4 + $0x228] sm:$0xff]
      %v4135 = vld [vmem:[%s4 + $0x230] sm:$0xff]
      %v4136 = vld [vmem:[%s4 + $0x238] sm:$0xff]
      %v4137 = vld [vmem:[%s4 + $0x240] sm:$0xff]
      %v4138 = vld [vmem:[%s4 + $0x248] sm:$0xff]
      %v4139 = vld [vmem:[%s4 + $0x250] sm:$0xff]
      %v4140 = vld [vmem:[%s4 + $0x258] sm:$0xff]
      %v4141 = vld [vmem:[%s4 + $0x260] sm:$0xff]
      %v4142 = vld [vmem:[%s4 + $0x268] sm:$0xff]
      %v4143 = vld [vmem:[%s4 + $0x270] sm:$0xff]
      %v4144 = vld [vmem:[%s4 + $0x278] sm:$0xff]
      %v4145 = vld [vmem:[%s4 + $0x280] sm:$0xff]
      %v4146 = vld [vmem:[%s4 + $0x288] sm:$0xff]
      %v4147 = vld [vmem:[%s4 + $0x290] sm:$0xff]
      %v4148 = vld [vmem:[%s4 + $0x298] sm:$0xff]
      %v4149 = vld [vmem:[%s4 + $0x2a0] sm:$0xff]
      %v4150 = vld [vmem:[%s4 + $0x2a8] sm:$0xff]
      %v4151 = vld [vmem:[%s4 + $0x2b0] sm:$0xff]
      %v4152 = vld [vmem:[%s4 + $0x2b8] sm:$0xff]
      %v4153 = vld [vmem:[%s4 + $0x2c0] sm:$0xff]
      %v4154 = vld [vmem:[%s4 + $0x2c8] sm:$0xff]
      %v4155 = vld [vmem:[%s4 + $0x2d0] sm:$0xff]
      %v4156 = vld [vmem:[%s4 + $0x2d8] sm:$0xff]
      %v4157 = vld [vmem:[%s4 + $0x2e0] sm:$0xff]
      %v4158 = vld [vmem:[%s4 + $0x2e8] sm:$0xff]
      %v4159 = vld [vmem:[%s4 + $0x2f0] sm:$0xff]
      %v4160 = vld [vmem:[%s4 + $0x2f8] sm:$0xff]
      %v4161 = vld [vmem:[%s4 + $0x300] sm:$0xff]
      %v4162 = vld [vmem:[%s4 + $0x308] sm:$0xff]
      %v4163 = vld [vmem:[%s4 + $0x310] sm:$0xff]
      %v4164 = vld [vmem:[%s4 + $0x318] sm:$0xff]
      %v4165 = vld [vmem:[%s4 + $0x320] sm:$0xff]
      %v4166 = vld [vmem:[%s4 + $0x328] sm:$0xff]
      %v4167 = vld [vmem:[%s4 + $0x330] sm:$0xff]
      %v4168 = vld [vmem:[%s4 + $0x338] sm:$0xff]
      %v4169 = vld [vmem:[%s4 + $0x340] sm:$0xff]
      %v4170 = vld [vmem:[%s4 + $0x348] sm:$0xff]
      %v4171 = vld [vmem:[%s4 + $0x350] sm:$0xff]
      %v4172 = vld [vmem:[%s4 + $0x358] sm:$0xff]
      %v4173 = vld [vmem:[%s4 + $0x360] sm:$0xff]
      %v4174 = vld [vmem:[%s4 + $0x368] sm:$0xff]
      %v4175 = vld [vmem:[%s4 + $0x370] sm:$0xff]
      %v4176 = vld [vmem:[%s4 + $0x378] sm:$0xff]
      %v4177 = vld [vmem:[%s4 + $0x380] sm:$0xff]
      %v4178 = vld [vmem:[%s4 + $0x388] sm:$0xff]
      %v4179 = vld [vmem:[%s4 + $0x390] sm:$0xff]
      %v4180 = vld [vmem:[%s4 + $0x398] sm:$0xff]
      %v4181 = vld [vmem:[%s4 + $0x3a0] sm:$0xff]
      %v4182 = vld [vmem:[%s4 + $0x3a8] sm:$0xff]
      %v4183 = vld [vmem:[%s4 + $0x3b0] sm:$0xff]
      %v4184 = vld [vmem:[%s4 + $0x3b8] sm:$0xff]
      %v4185 = vld [vmem:[%s4 + $0x3c0] sm:$0xff]
      %v4186 = vld [vmem:[%s4 + $0x3c8] sm:$0xff]
      %v4187 = vld [vmem:[%s4 + $0x3d0] sm:$0xff]
      %v4188 = vld [vmem:[%s4 + $0x3d8] sm:$0xff]
      %v4189 = vld [vmem:[%s4 + $0x3e0] sm:$0xff]
      %v4190 = vld [vmem:[%s4 + $0x3e8] sm:$0xff]
      %v4191 = vld [vmem:[%s4 + $0x3f0] sm:$0xff]
      %v4192 = vld [vmem:[%s4 + $0x3f8] sm:$0xff]
      %v4193 = vld [vmem:[%s4 + $0x400] sm:$0xff]
      %v4194 = vld [vmem:[%s4 + $0x408] sm:$0xff]
      %v4195 = vld [vmem:[%s4 + $0x410] sm:$0xff]
      %v4196 = vld [vmem:[%s4 + $0x418] sm:$0xff]
      %v4197 = vld [vmem:[%s4 + $0x420] sm:$0xff]
      %v4198 = vld [vmem:[%s4 + $0x428] sm:$0xff]
      %v4199 = vld [vmem:[%s4 + $0x430] sm:$0xff]
      %v4200 = vld [vmem:[%s4 + $0x438] sm:$0xff]
      %v4201 = vld [vmem:[%s4 + $0x440] sm:$0xff]
      %v4202 = vld [vmem:[%s4 + $0x448] sm:$0xff]
      %v4203 = vld [vmem:[%s4 + $0x450] sm:$0xff]
      %v4204 = vld [vmem:[%s4 + $0x458] sm:$0xff]
      %v4205 = vld [vmem:[%s4 + $0x460] sm:$0xff]
      %v4206 = vld [vmem:[%s4 + $0x468] sm:$0xff]
      %v4207 = vld [vmem:[%s4 + $0x470] sm:$0xff]
      %v4208 = vld [vmem:[%s4 + $0x478] sm:$0xff]
      %v4209 = vld [vmem:[%s4 + $0x480] sm:$0xff]
      %v4210 = vld [vmem:[%s4 + $0x488] sm:$0xff]
      %v4211 = vld [vmem:[%s4 + $0x490] sm:$0xff]
      %v4212 = vld [vmem:[%s4 + $0x498] sm:$0xff]
      %v4213 = vld [vmem:[%s4 + $0x4a0] sm:$0xff]
      %v4214 = vld [vmem:[%s4 + $0x4a8] sm:$0xff]
      %v4215 = vld [vmem:[%s4 + $0x4b0] sm:$0xff]
      %v4216 = vld [vmem:[%s4 + $0x4b8] sm:$0xff]
      %v4217 = vld [vmem:[%s4 + $0x4c0] sm:$0xff]
      %v4218 = vld [vmem:[%s4 + $0x4c8] sm:$0xff]
      %v4219 = vld [vmem:[%s4 + $0x4d0] sm:$0xff]
      %v4220 = vld [vmem:[%s4 + $0x4d8] sm:$0xff]
      %v4221 = vld [vmem:[%s4 + $0x4e0] sm:$0xff]
      %v4222 = vld [vmem:[%s4 + $0x4e8] sm:$0xff]
      %v4223 = vld [vmem:[%s4 + $0x4f0] sm:$0xff]
      %v4224 = vld [vmem:[%s4 + $0x4f8] sm:$0xff]
      %v4225 = vld [vmem:[%s4 + $0x500] sm:$0xff]
      %v4226 = vld [vmem:[%s4 + $0x508] sm:$0xff]
      %v4227 = vld [vmem:[%s4 + $0x510] sm:$0xff]
      %v4228 = vld [vmem:[%s4 + $0x518] sm:$0xff]
      %v4229 = vld [vmem:[%s4 + $0x520] sm:$0xff]
      %v4230 = vld [vmem:[%s4 + $0x528] sm:$0xff]
      %v4231 = vld [vmem:[%s4 + $0x530] sm:$0xff]
      %v4232 = vld [vmem:[%s4 + $0x538] sm:$0xff]
      %v4233 = vld [vmem:[%s4 + $0x540] sm:$0xff]
      %v4234 = vld [vmem:[%s4 + $0x548] sm:$0xff]
      %v4235 = vld [vmem:[%s4 + $0x550] sm:$0xff]
      %v4236 = vld [vmem:[%s4 + $0x558] sm:$0xff]
      %v4237 = vld [vmem:[%s4 + $0x560] sm:$0xff]
      %v4238 = vld [vmem:[%s4 + $0x568] sm:$0xff]
      %v4239 = vld [vmem:[%s4 + $0x570] sm:$0xff]
      %v4240 = vld [vmem:[%s4 + $0x578] sm:$0xff]
      %v4241 = vld [vmem:[%s4 + $0x580] sm:$0xff]
      %v4242 = vld [vmem:[%s4 + $0x588] sm:$0xff]
      %v4243 = vld [vmem:[%s4 + $0x590] sm:$0xff]
      %v4244 = vld [vmem:[%s4 + $0x598] sm:$0xff]
      %v4245 = vld [vmem:[%s4 + $0x5a0] sm:$0xff]
      %v4246 = vld [vmem:[%s4 + $0x5a8] sm:$0xff]
      %v4247 = vld [vmem:[%s4 + $0x5b0] sm:$0xff]
      %v4248 = vld [vmem:[%s4 + $0x5b8] sm:$0xff]
      %v4249 = vld [vmem:[%s4 + $0x5c0] sm:$0xff]
      %v4250 = vld [vmem:[%s4 + $0x5c8] sm:$0xff]
      %v4251 = vld [vmem:[%s4 + $0x5d0] sm:$0xff]
      %v4252 = vld [vmem:[%s4 + $0x5d8] sm:$0xff]
      %v4253 = vld [vmem:[%s4 + $0x5e0] sm:$0xff]
      %v4254 = vld [vmem:[%s4 + $0x5e8] sm:$0xff]
      %v4255 = vld [vmem:[%s4 + $0x5f0] sm:$0xff]
      %v4256 = vld [vmem:[%s4 + $0x5f8] sm:$0xff]
      %v4257 = vld [vmem:[%s4 + $0x600] sm:$0xff]
      %v4258 = vld [vmem:[%s4 + $0x608] sm:$0xff]
      %v4259 = vld [vmem:[%s4 + $0x610] sm:$0xff]
      %v4260 = vld [vmem:[%s4 + $0x618] sm:$0xff]
      %v4261 = vld [vmem:[%s4 + $0x620] sm:$0xff]
      %v4262 = vld [vmem:[%s4 + $0x628] sm:$0xff]
      %v4263 = vld [vmem:[%s4 + $0x630] sm:$0xff]
      %v4264 = vld [vmem:[%s4 + $0x638] sm:$0xff]
      %v4265 = vld [vmem:[%s4 + $0x640] sm:$0xff]
      %v4266 = vld [vmem:[%s4 + $0x648] sm:$0xff]
      %v4267 = vld [vmem:[%s4 + $0x650] sm:$0xff]
      %v4268 = vld [vmem:[%s4 + $0x658] sm:$0xff]
      %v4269 = vld [vmem:[%s4 + $0x660] sm:$0xff]
      %v4270 = vld [vmem:[%s4 + $0x668] sm:$0xff]
      %v4271 = vld [vmem:[%s4 + $0x670] sm:$0xff]
      %v4272 = vld [vmem:[%s4 + $0x678] sm:$0xff]
      %v4273 = vld [vmem:[%s4 + $0x680] sm:$0xff]
      %v4274 = vld [vmem:[%s4 + $0x688] sm:$0xff]
      %v4275 = vld [vmem:[%s4 + $0x690] sm:$0xff]
      %v4276 = vld [vmem:[%s4 + $0x698] sm:$0xff]
      %v4277 = vld [vmem:[%s4 + $0x6a0] sm:$0xff]
      %v4278 = vld [vmem:[%s4 + $0x6a8] sm:$0xff]
      %v4279 = vld [vmem:[%s4 + $0x6b0] sm:$0xff]
      %v4280 = vld [vmem:[%s4 + $0x6b8] sm:$0xff]
      %v4281 = vld [vmem:[%s4 + $0x6c0] sm:$0xff]
      %v4282 = vld [vmem:[%s4 + $0x6c8] sm:$0xff]
      %v4283 = vld [vmem:[%s4 + $0x6d0] sm:$0xff]
      %v4284 = vld [vmem:[%s4 + $0x6d8] sm:$0xff]
      %v4285 = vld [vmem:[%s4 + $0x6e0] sm:$0xff]
      %v4286 = vld [vmem:[%s4 + $0x6e8] sm:$0xff]
      %v4287 = vld [vmem:[%s4 + $0x6f0] sm:$0xff]
      %v4288 = vld [vmem:[%s4 + $0x6f8] sm:$0xff]
      %v4289 = vld [vmem:[%s4 + $0x700] sm:$0xff]
      %v4290 = vld [vmem:[%s4 + $0x708] sm:$0xff]
      %v4291 = vld [vmem:[%s4 + $0x710] sm:$0xff]
      %v4292 = vld [vmem:[%s4 + $0x718] sm:$0xff]
      %v4293 = vld [vmem:[%s4 + $0x720] sm:$0xff]
      %v4294 = vld [vmem:[%s4 + $0x728] sm:$0xff]
      %v4295 = vld [vmem:[%s4 + $0x730] sm:$0xff]
      %v4296 = vld [vmem:[%s4 + $0x738] sm:$0xff]
      %v4297 = vld [vmem:[%s4 + $0x740] sm:$0xff]
      %v4298 = vld [vmem:[%s4 + $0x748] sm:$0xff]
      %v4299 = vld [vmem:[%s4 + $0x750] sm:$0xff]
      %v4300 = vld [vmem:[%s4 + $0x758] sm:$0xff]
      %v4301 = vld [vmem:[%s4 + $0x760] sm:$0xff]
      %v4302 = vld [vmem:[%s4 + $0x768] sm:$0xff]
      %v4303 = vld [vmem:[%s4 + $0x770] sm:$0xff]
      %v4304 = vld [vmem:[%s4 + $0x778] sm:$0xff]
      %v4305 = vld [vmem:[%s4 + $0x780] sm:$0xff]
      %v4306 = vld [vmem:[%s4 + $0x788] sm:$0xff]
      %v4307 = vld [vmem:[%s4 + $0x790] sm:$0xff]
      %v4308 = vld [vmem:[%s4 + $0x798] sm:$0xff]
      %v4309 = vld [vmem:[%s4 + $0x7a0] sm:$0xff]
      %v4310 = vld [vmem:[%s4 + $0x7a8] sm:$0xff]
      %v4311 = vld [vmem:[%s4 + $0x7b0] sm:$0xff]
      %v4312 = vld [vmem:[%s4 + $0x7b8] sm:$0xff]
      %v4313 = vld [vmem:[%s4 + $0x7c0] sm:$0xff]
      %v4314 = vld [vmem:[%s4 + $0x7c8] sm:$0xff]
      %v4315 = vld [vmem:[%s4 + $0x7d0] sm:$0xff]
      %v4316 = vld [vmem:[%s4 + $0x7d8] sm:$0xff]
      %v4317 = vld [vmem:[%s4 + $0x7e0] sm:$0xff]
      %v4318 = vld [vmem:[%s4 + $0x7e8] sm:$0xff]
      %v4319 = vld [vmem:[%s4 + $0x7f0] sm:$0xff]
      %v4320 = vld [vmem:[%s4 + $0x7f8] sm:$0xff]
      %v4321 = vld [vmem:[%s4 + $0x800] sm:$0xff]
      %v4322 = vld [vmem:[%s4 + $0x808] sm:$0xff]
      %v4323 = vld [vmem:[%s4 + $0x810] sm:$0xff]
      %v4324 = vld [vmem:[%s4 + $0x818] sm:$0xff]
      %v4325 = vld [vmem:[%s4 + $0x820] sm:$0xff]
      %v4326 = vld [vmem:[%s4 + $0x828] sm:$0xff]
      %v4327 = vld [vmem:[%s4 + $0x830] sm:$0xff]
      %v4328 = vld [vmem:[%s4 + $0x838] sm:$0xff]
      %v4329 = vld [vmem:[%s4 + $0x840] sm:$0xff]
      %v4330 = vld [vmem:[%s4 + $0x848] sm:$0xff]
      %v4331 = vld [vmem:[%s4 + $0x850] sm:$0xff]
      %v4332 = vld [vmem:[%s4 + $0x858] sm:$0xff]
      %v4333 = vld [vmem:[%s4 + $0x860] sm:$0xff]
      %v4334 = vld [vmem:[%s4 + $0x868] sm:$0xff]
      %v4335 = vld [vmem:[%s4 + $0x870] sm:$0xff]
      %v4336 = vld [vmem:[%s4 + $0x878] sm:$0xff]
      %v4337 = vld [vmem:[%s4 + $0x880] sm:$0xff]
      %v4338 = vld [vmem:[%s4 + $0x888] sm:$0xff]
      %v4339 = vld [vmem:[%s4 + $0x890] sm:$0xff]
      %v4340 = vld [vmem:[%s4 + $0x898] sm:$0xff]
      %v4341 = vld [vmem:[%s4 + $0x8a0] sm:$0xff]
      %v4342 = vld [vmem:[%s4 + $0x8a8] sm:$0xff]
      %v4343 = vld [vmem:[%s4 + $0x8b0] sm:$0xff]
      %v4344 = vld [vmem:[%s4 + $0x8b8] sm:$0xff]
      %v4345 = vld [vmem:[%s4 + $0x8c0] sm:$0xff]
      %v4346 = vld [vmem:[%s4 + $0x8c8] sm:$0xff]
      %v4347 = vld [vmem:[%s4 + $0x8d0] sm:$0xff]
      %v4348 = vld [vmem:[%s4 + $0x8d8] sm:$0xff]
      %v4349 = vld [vmem:[%s4 + $0x8e0] sm:$0xff]
      %v4350 = vld [vmem:[%s4 + $0x8e8] sm:$0xff]
      %v4351 = vld [vmem:[%s4 + $0x8f0] sm:$0xff]
      %v4352 = vld [vmem:[%s4 + $0x8f8] sm:$0xff]
      %v4353 = vld [vmem:[%s4 + $0x900] sm:$0xff]
      %v4354 = vld [vmem:[%s4 + $0x908] sm:$0xff]
      %v4355 = vld [vmem:[%s4 + $0x910] sm:$0xff]
      %v4356 = vld [vmem:[%s4 + $0x918] sm:$0xff]
      %v4357 = vld [vmem:[%s4 + $0x920] sm:$0xff]
      %v4358 = vld [vmem:[%s4 + $0x928] sm:$0xff]
      %v4359 = vld [vmem:[%s4 + $0x930] sm:$0xff]
      %v4360 = vld [vmem:[%s4 + $0x938] sm:$0xff]
      %v4361 = vld [vmem:[%s4 + $0x940] sm:$0xff]
      %v4362 = vld [vmem:[%s4 + $0x948] sm:$0xff]
      %v4363 = vld [vmem:[%s4 + $0x950] sm:$0xff]
      %v4364 = vld [vmem:[%s4 + $0x958] sm:$0xff]
      %v4365 = vld [vmem:[%s4 + $0x960] sm:$0xff]
      %v4366 = vld [vmem:[%s4 + $0x968] sm:$0xff]
      %v4367 = vld [vmem:[%s4 + $0x970] sm:$0xff]
      %v4368 = vld [vmem:[%s4 + $0x978] sm:$0xff]
      %v4369 = vld [vmem:[%s4 + $0x980] sm:$0xff]
      %v4370 = vld [vmem:[%s4 + $0x988] sm:$0xff]
      %v4371 = vld [vmem:[%s4 + $0x990] sm:$0xff]
      %v4372 = vld [vmem:[%s4 + $0x998] sm:$0xff]
      %v4373 = vld [vmem:[%s4 + $0x9a0] sm:$0xff]
      %v4374 = vld [vmem:[%s4 + $0x9a8] sm:$0xff]
      %v4375 = vld [vmem:[%s4 + $0x9b0] sm:$0xff]
      %v4376 = vld [vmem:[%s4 + $0x9b8] sm:$0xff]
      %v4377 = vld [vmem:[%s4 + $0x9c0] sm:$0xff]
      %v4378 = vld [vmem:[%s4 + $0x9c8] sm:$0xff]
      %v4379 = vld [vmem:[%s4 + $0x9d0] sm:$0xff]
      %v4380 = vld [vmem:[%s4 + $0x9d8] sm:$0xff]
      %v4381 = vld [vmem:[%s4 + $0x9e0] sm:$0xff]
      %v4382 = vld [vmem:[%s4 + $0x9e8] sm:$0xff]
      %v4383 = vld [vmem:[%s4 + $0x9f0] sm:$0xff]
      %v4384 = vld [vmem:[%s4 + $0x9f8] sm:$0xff]
      %v4385 = vld [vmem:[%s4 + $0xa00] sm:$0xff]
      %v4386 = vld [vmem:[%s4 + $0xa08] sm:$0xff]
      %v4387 = vld [vmem:[%s4 + $0xa10] sm:$0xff]
      %v4388 = vld [vmem:[%s4 + $0xa18] sm:$0xff]
      %v4389 = vld [vmem:[%s4 + $0xa20] sm:$0xff]
      %v4390 = vld [vmem:[%s4 + $0xa28] sm:$0xff]
      %v4391 = vld [vmem:[%s4 + $0xa30] sm:$0xff]
      %v4392 = vld [vmem:[%s4 + $0xa38] sm:$0xff]
      %v4393 = vld [vmem:[%s4 + $0xa40] sm:$0xff]
      %v4394 = vld [vmem:[%s4 + $0xa48] sm:$0xff]
      %v4395 = vld [vmem:[%s4 + $0xa50] sm:$0xff]
      %v4396 = vld [vmem:[%s4 + $0xa58] sm:$0xff]
      %v4397 = vld [vmem:[%s4 + $0xa60] sm:$0xff]
      %v4398 = vld [vmem:[%s4 + $0xa68] sm:$0xff]
      %v4399 = vld [vmem:[%s4 + $0xa70] sm:$0xff]
      %v4400 = vld [vmem:[%s4 + $0xa78] sm:$0xff]
      %v4401 = vld [vmem:[%s4 + $0xa80] sm:$0xff]
      %v4402 = vld [vmem:[%s4 + $0xa88] sm:$0xff]
      %v4403 = vld [vmem:[%s4 + $0xa90] sm:$0xff]
      %v4404 = vld [vmem:[%s4 + $0xa98] sm:$0xff]
      %v4405 = vld [vmem:[%s4 + $0xaa0] sm:$0xff]
      %v4406 = vld [vmem:[%s4 + $0xaa8] sm:$0xff]
      %v4407 = vld [vmem:[%s4 + $0xab0] sm:$0xff]
      %v4408 = vld [vmem:[%s4 + $0xab8] sm:$0xff]
      %v4409 = vld [vmem:[%s4 + $0xac0] sm:$0xff]
      %v4410 = vld [vmem:[%s4 + $0xac8] sm:$0xff]
      %v4411 = vld [vmem:[%s4 + $0xad0] sm:$0xff]
      %v4412 = vld [vmem:[%s4 + $0xad8] sm:$0xff]
      %v4413 = vld [vmem:[%s4 + $0xae0] sm:$0xff]
      %v4414 = vld [vmem:[%s4 + $0xae8] sm:$0xff]
      %v4415 = vld [vmem:[%s4 + $0xaf0] sm:$0xff]
      %v4416 = vld [vmem:[%s4 + $0xaf8] sm:$0xff]
      %v4417 = vld [vmem:[%s4 + $0xb00] sm:$0xff]
      %v4418 = vld [vmem:[%s4 + $0xb08] sm:$0xff]
      %v4419 = vld [vmem:[%s4 + $0xb10] sm:$0xff]
      %v4420 = vld [vmem:[%s4 + $0xb18] sm:$0xff]
      %v4421 = vld [vmem:[%s4 + $0xb20] sm:$0xff]
      %v4422 = vld [vmem:[%s4 + $0xb28] sm:$0xff]
      %v4423 = vld [vmem:[%s4 + $0xb30] sm:$0xff]
      %v4424 = vld [vmem:[%s4 + $0xb38] sm:$0xff]
      %v4425 = vld [vmem:[%s4 + $0xb40] sm:$0xff]
      %v4426 = vld [vmem:[%s4 + $0xb48] sm:$0xff]
      %v4427 = vld [vmem:[%s4 + $0xb50] sm:$0xff]
      %v4428 = vld [vmem:[%s4 + $0xb58] sm:$0xff]
      %v4429 = vld [vmem:[%s4 + $0xb60] sm:$0xff]
      %v4430 = vld [vmem:[%s4 + $0xb68] sm:$0xff]
      %v4431 = vld [vmem:[%s4 + $0xb70] sm:$0xff]
      %v4432 = vld [vmem:[%s4 + $0xb78] sm:$0xff]
      %v4433 = vld [vmem:[%s4 + $0xb80] sm:$0xff]
      %v4434 = vld [vmem:[%s4 + $0xb88] sm:$0xff]
      %v4435 = vld [vmem:[%s4 + $0xb90] sm:$0xff]
      %v4436 = vld [vmem:[%s4 + $0xb98] sm:$0xff]
      %v4437 = vld [vmem:[%s4 + $0xba0] sm:$0xff]
      %v4438 = vld [vmem:[%s4 + $0xba8] sm:$0xff]
      %v4439 = vld [vmem:[%s4 + $0xbb0] sm:$0xff]
      %v4440 = vld [vmem:[%s4 + $0xbb8] sm:$0xff]
      %v4441 = vld [vmem:[%s4 + $0xbc0] sm:$0xff]
      %v4442 = vld [vmem:[%s4 + $0xbc8] sm:$0xff]
      %v4443 = vld [vmem:[%s4 + $0xbd0] sm:$0xff]
      %v4444 = vld [vmem:[%s4 + $0xbd8] sm:$0xff]
      %v4445 = vld [vmem:[%s4 + $0xbe0] sm:$0xff]
      %v4446 = vld [vmem:[%s4 + $0xbe8] sm:$0xff]
      %v4447 = vld [vmem:[%s4 + $0xbf0] sm:$0xff]
      %v4448 = vld [vmem:[%s4 + $0xbf8] sm:$0xff]
      %v4449 = vld [vmem:[%s4 + $0xc00] sm:$0xff]
      %v4450 = vld [vmem:[%s4 + $0xc08] sm:$0xff]
      %v4451 = vld [vmem:[%s4 + $0xc10] sm:$0xff]
      %v4452 = vld [vmem:[%s4 + $0xc18] sm:$0xff]
      %v4453 = vld [vmem:[%s4 + $0xc20] sm:$0xff]
      %v4454 = vld [vmem:[%s4 + $0xc28] sm:$0xff]
      %v4455 = vld [vmem:[%s4 + $0xc30] sm:$0xff]
      %v4456 = vld [vmem:[%s4 + $0xc38] sm:$0xff]
      %v4457 = vld [vmem:[%s4 + $0xc40] sm:$0xff]
      %v4458 = vld [vmem:[%s4 + $0xc48] sm:$0xff]
      %v4459 = vld [vmem:[%s4 + $0xc50] sm:$0xff]
      %v4460 = vld [vmem:[%s4 + $0xc58] sm:$0xff]
      %v4461 = vld [vmem:[%s4 + $0xc60] sm:$0xff]
      %v4462 = vld [vmem:[%s4 + $0xc68] sm:$0xff]
      %v4463 = vld [vmem:[%s4 + $0xc70] sm:$0xff]
      %v4464 = vld [vmem:[%s4 + $0xc78] sm:$0xff]
      %v4465 = vperm.slane %v327, 4
      %v4466 = vperm.slane %v328, 4
      %v4467 = vperm.slane %v329, 4
      %v4468 = vperm.slane %v330, 4
      %v4469 = vperm.slane %v331, 4
      %v4470 = vperm.slane %v332, 4
      %v4471 = vperm.slane %v333, 4
      %v4472 = vperm.slane %v334, 4
      %v4473 = vperm.slane %v335, 4
      %v4474 = vperm.slane %v336, 4
      %v4475 = vperm.slane %v337, 4
      %v4476 = vperm.slane %v338, 4
      %v4477 = vperm.slane %v339, 4
      %v4478 = vperm.slane %v340, 4
      %v4479 = vperm.slane %v341, 4
      %v4480 = vperm.slane %v342, 4
      %v4881 = vunpack.c.l.b16 %v4065
      %v4882 = vunpack.c.h.b16 %v4065
      %v4883 = vunpack.c.l.b16 %v4066
      %v4884 = vunpack.c.h.b16 %v4066
      %v4885 = vunpack.c.l.b16 %v4067
      %v4886 = vunpack.c.h.b16 %v4067
      %v4887 = vunpack.c.l.b16 %v4068
      %v4888 = vunpack.c.h.b16 %v4068
      %v4889 = vunpack.c.l.b16 %v4069
      %v4890 = vunpack.c.h.b16 %v4069
      %v4891 = vunpack.c.l.b16 %v4070
      %v4892 = vunpack.c.h.b16 %v4070
      %v4893 = vunpack.c.l.b16 %v4071
      %v4894 = vunpack.c.h.b16 %v4071
      %v4895 = vunpack.c.l.b16 %v4072
      %v4896 = vunpack.c.h.b16 %v4072
      %v4897 = vunpack.c.l.b16 %v4073
      %v4898 = vunpack.c.h.b16 %v4073
      %v4899 = vunpack.c.l.b16 %v4074
      %v4900 = vunpack.c.h.b16 %v4074
      %v4901 = vunpack.c.l.b16 %v4075
      %v4902 = vunpack.c.h.b16 %v4075
      %v4903 = vunpack.c.l.b16 %v4076
      %v4904 = vunpack.c.h.b16 %v4076
      %v4905 = vunpack.c.l.b16 %v4077
      %v4906 = vunpack.c.h.b16 %v4077
      %v4907 = vunpack.c.l.b16 %v4078
      %v4908 = vunpack.c.h.b16 %v4078
      %v4909 = vunpack.c.l.b16 %v4079
      %v4910 = vunpack.c.h.b16 %v4079
      %v4911 = vunpack.c.l.b16 %v4080
      %v4912 = vunpack.c.h.b16 %v4080
      %v4913 = vunpack.c.l.b16 %v4081
      %v4914 = vunpack.c.h.b16 %v4081
      %v4915 = vunpack.c.l.b16 %v4082
      %v4916 = vunpack.c.h.b16 %v4082
      %v4917 = vunpack.c.l.b16 %v4083
      %v4918 = vunpack.c.h.b16 %v4083
      %v4919 = vunpack.c.l.b16 %v4084
      %v4920 = vunpack.c.h.b16 %v4084
      %v4921 = vunpack.c.l.b16 %v4085
      %v4922 = vunpack.c.h.b16 %v4085
      %v4923 = vunpack.c.l.b16 %v4086
      %v4924 = vunpack.c.h.b16 %v4086
      %v4925 = vunpack.c.l.b16 %v4087
      %v4926 = vunpack.c.h.b16 %v4087
      %v4927 = vunpack.c.l.b16 %v4088
      %v4928 = vunpack.c.h.b16 %v4088
      %v4929 = vunpack.c.l.b16 %v4089
      %v4930 = vunpack.c.h.b16 %v4089
      %v4931 = vunpack.c.l.b16 %v4090
      %v4932 = vunpack.c.h.b16 %v4090
      %v4933 = vunpack.c.l.b16 %v4091
      %v4934 = vunpack.c.h.b16 %v4091
      %v4935 = vunpack.c.l.b16 %v4092
      %v4936 = vunpack.c.h.b16 %v4092
      %v4937 = vunpack.c.l.b16 %v4093
      %v4938 = vunpack.c.h.b16 %v4093
      %v4939 = vunpack.c.l.b16 %v4094
      %v4940 = vunpack.c.h.b16 %v4094
      %v4941 = vunpack.c.l.b16 %v4095
      %v4942 = vunpack.c.h.b16 %v4095
      %v4943 = vunpack.c.l.b16 %v4096
      %v4944 = vunpack.c.h.b16 %v4096
      %v4945 = vunpack.c.l.b16 %v4097
      %v4946 = vunpack.c.h.b16 %v4097
      %v4947 = vunpack.c.l.b16 %v4098
      %v4948 = vunpack.c.h.b16 %v4098
      %v4949 = vunpack.c.l.b16 %v4099
      %v4950 = vunpack.c.h.b16 %v4099
      %v4951 = vunpack.c.l.b16 %v4100
      %v4952 = vunpack.c.h.b16 %v4100
      %v4953 = vunpack.c.l.b16 %v4101
      %v4954 = vunpack.c.h.b16 %v4101
      %v4955 = vunpack.c.l.b16 %v4102
      %v4956 = vunpack.c.h.b16 %v4102
      %v4957 = vunpack.c.l.b16 %v4103
      %v4958 = vunpack.c.h.b16 %v4103
      %v4959 = vunpack.c.l.b16 %v4104
      %v4960 = vunpack.c.h.b16 %v4104
      %v4961 = vunpack.c.l.b16 %v4105
      %v4962 = vunpack.c.h.b16 %v4105
      %v4963 = vunpack.c.l.b16 %v4106
      %v4964 = vunpack.c.h.b16 %v4106
      %v4965 = vunpack.c.l.b16 %v4107
      %v4966 = vunpack.c.h.b16 %v4107
      %v4967 = vunpack.c.l.b16 %v4108
      %v4968 = vunpack.c.h.b16 %v4108
      %v4969 = vunpack.c.l.b16 %v4109
      %v4970 = vunpack.c.h.b16 %v4109
      %v4971 = vunpack.c.l.b16 %v4110
      %v4972 = vunpack.c.h.b16 %v4110
      %v4973 = vunpack.c.l.b16 %v4111
      %v4974 = vunpack.c.h.b16 %v4111
      %v4975 = vunpack.c.l.b16 %v4112
      %v4976 = vunpack.c.h.b16 %v4112
      %v4977 = vunpack.c.l.b16 %v4113
      %v4978 = vunpack.c.h.b16 %v4113
      %v4979 = vunpack.c.l.b16 %v4114
      %v4980 = vunpack.c.h.b16 %v4114
      %v4981 = vunpack.c.l.b16 %v4115
      %v4982 = vunpack.c.h.b16 %v4115
      %v4983 = vunpack.c.l.b16 %v4116
      %v4984 = vunpack.c.h.b16 %v4116
      %v4985 = vunpack.c.l.b16 %v4117
      %v4986 = vunpack.c.h.b16 %v4117
      %v4987 = vunpack.c.l.b16 %v4118
      %v4988 = vunpack.c.h.b16 %v4118
      %v4989 = vunpack.c.l.b16 %v4119
      %v4990 = vunpack.c.h.b16 %v4119
      %v4991 = vunpack.c.l.b16 %v4120
      %v4992 = vunpack.c.h.b16 %v4120
      %v4993 = vunpack.c.l.b16 %v4121
      %v4994 = vunpack.c.h.b16 %v4121
      %v4995 = vunpack.c.l.b16 %v4122
      %v4996 = vunpack.c.h.b16 %v4122
      %v4997 = vunpack.c.l.b16 %v4123
      %v4998 = vunpack.c.h.b16 %v4123
      %v4999 = vunpack.c.l.b16 %v4124
      %v5000 = vunpack.c.h.b16 %v4124
      %v5001 = vunpack.c.l.b16 %v4125
      %v5002 = vunpack.c.h.b16 %v4125
      %v5003 = vunpack.c.l.b16 %v4126
      %v5004 = vunpack.c.h.b16 %v4126
      %v5005 = vunpack.c.l.b16 %v4127
      %v5006 = vunpack.c.h.b16 %v4127
      %v5007 = vunpack.c.l.b16 %v4128
      %v5008 = vunpack.c.h.b16 %v4128
      %v5009 = vunpack.c.l.b16 %v4129
      %v5010 = vunpack.c.h.b16 %v4129
      %v5011 = vunpack.c.l.b16 %v4130
      %v5012 = vunpack.c.h.b16 %v4130
      %v5013 = vunpack.c.l.b16 %v4131
      %v5014 = vunpack.c.h.b16 %v4131
      %v5015 = vunpack.c.l.b16 %v4132
      %v5016 = vunpack.c.h.b16 %v4132
      %v5017 = vunpack.c.l.b16 %v4133
      %v5018 = vunpack.c.h.b16 %v4133
      %v5019 = vunpack.c.l.b16 %v4134
      %v5020 = vunpack.c.h.b16 %v4134
      %v5021 = vunpack.c.l.b16 %v4135
      %v5022 = vunpack.c.h.b16 %v4135
      %v5023 = vunpack.c.l.b16 %v4136
      %v5024 = vunpack.c.h.b16 %v4136
      %v5025 = vunpack.c.l.b16 %v4137
      %v5026 = vunpack.c.h.b16 %v4137
      %v5027 = vunpack.c.l.b16 %v4138
      %v5028 = vunpack.c.h.b16 %v4138
      %v5029 = vunpack.c.l.b16 %v4139
      %v5030 = vunpack.c.h.b16 %v4139
      %v5031 = vunpack.c.l.b16 %v4140
      %v5032 = vunpack.c.h.b16 %v4140
      %v5033 = vunpack.c.l.b16 %v4141
      %v5034 = vunpack.c.h.b16 %v4141
      %v5035 = vunpack.c.l.b16 %v4142
      %v5036 = vunpack.c.h.b16 %v4142
      %v5037 = vunpack.c.l.b16 %v4143
      %v5038 = vunpack.c.h.b16 %v4143
      %v5039 = vunpack.c.l.b16 %v4144
      %v5040 = vunpack.c.h.b16 %v4144
      %v5041 = vunpack.c.l.b16 %v4145
      %v5042 = vunpack.c.h.b16 %v4145
      %v5043 = vunpack.c.l.b16 %v4146
      %v5044 = vunpack.c.h.b16 %v4146
      %v5045 = vunpack.c.l.b16 %v4147
      %v5046 = vunpack.c.h.b16 %v4147
      %v5047 = vunpack.c.l.b16 %v4148
      %v5048 = vunpack.c.h.b16 %v4148
      %v5049 = vunpack.c.l.b16 %v4149
      %v5050 = vunpack.c.h.b16 %v4149
      %v5051 = vunpack.c.l.b16 %v4150
      %v5052 = vunpack.c.h.b16 %v4150
      %v5053 = vunpack.c.l.b16 %v4151
      %v5054 = vunpack.c.h.b16 %v4151
      %v5055 = vunpack.c.l.b16 %v4152
      %v5056 = vunpack.c.h.b16 %v4152
      %v5057 = vunpack.c.l.b16 %v4153
      %v5058 = vunpack.c.h.b16 %v4153
      %v5059 = vunpack.c.l.b16 %v4154
      %v5060 = vunpack.c.h.b16 %v4154
      %v5061 = vunpack.c.l.b16 %v4155
      %v5062 = vunpack.c.h.b16 %v4155
      %v5063 = vunpack.c.l.b16 %v4156
      %v5064 = vunpack.c.h.b16 %v4156
      %v5065 = vunpack.c.l.b16 %v4157
      %v5066 = vunpack.c.h.b16 %v4157
      %v5067 = vunpack.c.l.b16 %v4158
      %v5068 = vunpack.c.h.b16 %v4158
      %v5069 = vunpack.c.l.b16 %v4159
      %v5070 = vunpack.c.h.b16 %v4159
      %v5071 = vunpack.c.l.b16 %v4160
      %v5072 = vunpack.c.h.b16 %v4160
      %v5073 = vunpack.c.l.b16 %v4161
      %v5074 = vunpack.c.h.b16 %v4161
      %v5075 = vunpack.c.l.b16 %v4162
      %v5076 = vunpack.c.h.b16 %v4162
      %v5077 = vunpack.c.l.b16 %v4163
      %v5078 = vunpack.c.h.b16 %v4163
      %v5079 = vunpack.c.l.b16 %v4164
      %v5080 = vunpack.c.h.b16 %v4164
      %v5081 = vunpack.c.l.b16 %v4165
      %v5082 = vunpack.c.h.b16 %v4165
      %v5083 = vunpack.c.l.b16 %v4166
      %v5084 = vunpack.c.h.b16 %v4166
      %v5085 = vunpack.c.l.b16 %v4167
      %v5086 = vunpack.c.h.b16 %v4167
      %v5087 = vunpack.c.l.b16 %v4168
      %v5088 = vunpack.c.h.b16 %v4168
      %v5089 = vunpack.c.l.b16 %v4169
      %v5090 = vunpack.c.h.b16 %v4169
      %v5091 = vunpack.c.l.b16 %v4170
      %v5092 = vunpack.c.h.b16 %v4170
      %v5093 = vunpack.c.l.b16 %v4171
      %v5094 = vunpack.c.h.b16 %v4171
      %v5095 = vunpack.c.l.b16 %v4172
      %v5096 = vunpack.c.h.b16 %v4172
      %v5097 = vunpack.c.l.b16 %v4173
      %v5098 = vunpack.c.h.b16 %v4173
      %v5099 = vunpack.c.l.b16 %v4174
      %v5100 = vunpack.c.h.b16 %v4174
      %v5101 = vunpack.c.l.b16 %v4175
      %v5102 = vunpack.c.h.b16 %v4175
      %v5103 = vunpack.c.l.b16 %v4176
      %v5104 = vunpack.c.h.b16 %v4176
      %v5105 = vunpack.c.l.b16 %v4177
      %v5106 = vunpack.c.h.b16 %v4177
      %v5107 = vunpack.c.l.b16 %v4178
      %v5108 = vunpack.c.h.b16 %v4178
      %v5109 = vunpack.c.l.b16 %v4179
      %v5110 = vunpack.c.h.b16 %v4179
      %v5111 = vunpack.c.l.b16 %v4180
      %v5112 = vunpack.c.h.b16 %v4180
      %v5113 = vunpack.c.l.b16 %v4181
      %v5114 = vunpack.c.h.b16 %v4181
      %v5115 = vunpack.c.l.b16 %v4182
      %v5116 = vunpack.c.h.b16 %v4182
      %v5117 = vunpack.c.l.b16 %v4183
      %v5118 = vunpack.c.h.b16 %v4183
      %v5119 = vunpack.c.l.b16 %v4184
      %v5120 = vunpack.c.h.b16 %v4184
      %v5121 = vunpack.c.l.b16 %v4185
      %v5122 = vunpack.c.h.b16 %v4185
      %v5123 = vunpack.c.l.b16 %v4186
      %v5124 = vunpack.c.h.b16 %v4186
      %v5125 = vunpack.c.l.b16 %v4187
      %v5126 = vunpack.c.h.b16 %v4187
      %v5127 = vunpack.c.l.b16 %v4188
      %v5128 = vunpack.c.h.b16 %v4188
      %v5129 = vunpack.c.l.b16 %v4189
      %v5130 = vunpack.c.h.b16 %v4189
      %v5131 = vunpack.c.l.b16 %v4190
      %v5132 = vunpack.c.h.b16 %v4190
      %v5133 = vunpack.c.l.b16 %v4191
      %v5134 = vunpack.c.h.b16 %v4191
      %v5135 = vunpack.c.l.b16 %v4192
      %v5136 = vunpack.c.h.b16 %v4192
      %v5137 = vunpack.c.l.b16 %v4193
      %v5138 = vunpack.c.h.b16 %v4193
      %v5139 = vunpack.c.l.b16 %v4194
      %v5140 = vunpack.c.h.b16 %v4194
      %v5141 = vunpack.c.l.b16 %v4195
      %v5142 = vunpack.c.h.b16 %v4195
      %v5143 = vunpack.c.l.b16 %v4196
      %v5144 = vunpack.c.h.b16 %v4196
      %v5145 = vunpack.c.l.b16 %v4197
      %v5146 = vunpack.c.h.b16 %v4197
      %v5147 = vunpack.c.l.b16 %v4198
      %v5148 = vunpack.c.h.b16 %v4198
      %v5149 = vunpack.c.l.b16 %v4199
      %v5150 = vunpack.c.h.b16 %v4199
      %v5151 = vunpack.c.l.b16 %v4200
      %v5152 = vunpack.c.h.b16 %v4200
      %v5153 = vunpack.c.l.b16 %v4201
      %v5154 = vunpack.c.h.b16 %v4201
      %v5155 = vunpack.c.l.b16 %v4202
      %v5156 = vunpack.c.h.b16 %v4202
      %v5157 = vunpack.c.l.b16 %v4203
      %v5158 = vunpack.c.h.b16 %v4203
      %v5159 = vunpack.c.l.b16 %v4204
      %v5160 = vunpack.c.h.b16 %v4204
      %v5161 = vunpack.c.l.b16 %v4205
      %v5162 = vunpack.c.h.b16 %v4205
      %v5163 = vunpack.c.l.b16 %v4206
      %v5164 = vunpack.c.h.b16 %v4206
      %v5165 = vunpack.c.l.b16 %v4207
      %v5166 = vunpack.c.h.b16 %v4207
      %v5167 = vunpack.c.l.b16 %v4208
      %v5168 = vunpack.c.h.b16 %v4208
      %v5169 = vunpack.c.l.b16 %v4209
      %v5170 = vunpack.c.h.b16 %v4209
      %v5171 = vunpack.c.l.b16 %v4210
      %v5172 = vunpack.c.h.b16 %v4210
      %v5173 = vunpack.c.l.b16 %v4211
      %v5174 = vunpack.c.h.b16 %v4211
      %v5175 = vunpack.c.l.b16 %v4212
      %v5176 = vunpack.c.h.b16 %v4212
      %v5177 = vunpack.c.l.b16 %v4213
      %v5178 = vunpack.c.h.b16 %v4213
      %v5179 = vunpack.c.l.b16 %v4214
      %v5180 = vunpack.c.h.b16 %v4214
      %v5181 = vunpack.c.l.b16 %v4215
      %v5182 = vunpack.c.h.b16 %v4215
      %v5183 = vunpack.c.l.b16 %v4216
      %v5184 = vunpack.c.h.b16 %v4216
      %v5185 = vunpack.c.l.b16 %v4217
      %v5186 = vunpack.c.h.b16 %v4217
      %v5187 = vunpack.c.l.b16 %v4218
      %v5188 = vunpack.c.h.b16 %v4218
      %v5189 = vunpack.c.l.b16 %v4219
      %v5190 = vunpack.c.h.b16 %v4219
      %v5191 = vunpack.c.l.b16 %v4220
      %v5192 = vunpack.c.h.b16 %v4220
      %v5193 = vunpack.c.l.b16 %v4221
      %v5194 = vunpack.c.h.b16 %v4221
      %v5195 = vunpack.c.l.b16 %v4222
      %v5196 = vunpack.c.h.b16 %v4222
      %v5197 = vunpack.c.l.b16 %v4223
      %v5198 = vunpack.c.h.b16 %v4223
      %v5199 = vunpack.c.l.b16 %v4224
      %v5200 = vunpack.c.h.b16 %v4224
      %v5201 = vunpack.c.l.b16 %v4225
      %v5202 = vunpack.c.h.b16 %v4225
      %v5203 = vunpack.c.l.b16 %v4226
      %v5204 = vunpack.c.h.b16 %v4226
      %v5205 = vunpack.c.l.b16 %v4227
      %v5206 = vunpack.c.h.b16 %v4227
      %v5207 = vunpack.c.l.b16 %v4228
      %v5208 = vunpack.c.h.b16 %v4228
      %v5209 = vunpack.c.l.b16 %v4229
      %v5210 = vunpack.c.h.b16 %v4229
      %v5211 = vunpack.c.l.b16 %v4230
      %v5212 = vunpack.c.h.b16 %v4230
      %v5213 = vunpack.c.l.b16 %v4231
      %v5214 = vunpack.c.h.b16 %v4231
      %v5215 = vunpack.c.l.b16 %v4232
      %v5216 = vunpack.c.h.b16 %v4232
      %v5217 = vunpack.c.l.b16 %v4233
      %v5218 = vunpack.c.h.b16 %v4233
      %v5219 = vunpack.c.l.b16 %v4234
      %v5220 = vunpack.c.h.b16 %v4234
      %v5221 = vunpack.c.l.b16 %v4235
      %v5222 = vunpack.c.h.b16 %v4235
      %v5223 = vunpack.c.l.b16 %v4236
      %v5224 = vunpack.c.h.b16 %v4236
      %v5225 = vunpack.c.l.b16 %v4237
      %v5226 = vunpack.c.h.b16 %v4237
      %v5227 = vunpack.c.l.b16 %v4238
      %v5228 = vunpack.c.h.b16 %v4238
      %v5229 = vunpack.c.l.b16 %v4239
      %v5230 = vunpack.c.h.b16 %v4239
      %v5231 = vunpack.c.l.b16 %v4240
      %v5232 = vunpack.c.h.b16 %v4240
      %v5233 = vunpack.c.l.b16 %v4241
      %v5234 = vunpack.c.h.b16 %v4241
      %v5235 = vunpack.c.l.b16 %v4242
      %v5236 = vunpack.c.h.b16 %v4242
      %v5237 = vunpack.c.l.b16 %v4243
      %v5238 = vunpack.c.h.b16 %v4243
      %v5239 = vunpack.c.l.b16 %v4244
      %v5240 = vunpack.c.h.b16 %v4244
      %v5241 = vunpack.c.l.b16 %v4245
      %v5242 = vunpack.c.h.b16 %v4245
      %v5243 = vunpack.c.l.b16 %v4246
      %v5244 = vunpack.c.h.b16 %v4246
      %v5245 = vunpack.c.l.b16 %v4247
      %v5246 = vunpack.c.h.b16 %v4247
      %v5247 = vunpack.c.l.b16 %v4248
      %v5248 = vunpack.c.h.b16 %v4248
      %v5249 = vunpack.c.l.b16 %v4249
      %v5250 = vunpack.c.h.b16 %v4249
      %v5251 = vunpack.c.l.b16 %v4250
      %v5252 = vunpack.c.h.b16 %v4250
      %v5253 = vunpack.c.l.b16 %v4251
      %v5254 = vunpack.c.h.b16 %v4251
      %v5255 = vunpack.c.l.b16 %v4252
      %v5256 = vunpack.c.h.b16 %v4252
      %v5257 = vunpack.c.l.b16 %v4253
      %v5258 = vunpack.c.h.b16 %v4253
      %v5259 = vunpack.c.l.b16 %v4254
      %v5260 = vunpack.c.h.b16 %v4254
      %v5261 = vunpack.c.l.b16 %v4255
      %v5262 = vunpack.c.h.b16 %v4255
      %v5263 = vunpack.c.l.b16 %v4256
      %v5264 = vunpack.c.h.b16 %v4256
      %v5265 = vunpack.c.l.b16 %v4257
      %v5266 = vunpack.c.h.b16 %v4257
      %v5267 = vunpack.c.l.b16 %v4258
      %v5268 = vunpack.c.h.b16 %v4258
      %v5269 = vunpack.c.l.b16 %v4259
      %v5270 = vunpack.c.h.b16 %v4259
      %v5271 = vunpack.c.l.b16 %v4260
      %v5272 = vunpack.c.h.b16 %v4260
      %v5273 = vunpack.c.l.b16 %v4261
      %v5274 = vunpack.c.h.b16 %v4261
      %v5275 = vunpack.c.l.b16 %v4262
      %v5276 = vunpack.c.h.b16 %v4262
      %v5277 = vunpack.c.l.b16 %v4263
      %v5278 = vunpack.c.h.b16 %v4263
      %v5279 = vunpack.c.l.b16 %v4264
      %v5280 = vunpack.c.h.b16 %v4264
      %v5281 = vunpack.c.l.b16 %v4265
      %v5282 = vunpack.c.h.b16 %v4265
      %v5283 = vunpack.c.l.b16 %v4266
      %v5284 = vunpack.c.h.b16 %v4266
      %v5285 = vunpack.c.l.b16 %v4267
      %v5286 = vunpack.c.h.b16 %v4267
      %v5287 = vunpack.c.l.b16 %v4268
      %v5288 = vunpack.c.h.b16 %v4268
      %v5289 = vunpack.c.l.b16 %v4269
      %v5290 = vunpack.c.h.b16 %v4269
      %v5291 = vunpack.c.l.b16 %v4270
      %v5292 = vunpack.c.h.b16 %v4270
      %v5293 = vunpack.c.l.b16 %v4271
      %v5294 = vunpack.c.h.b16 %v4271
      %v5295 = vunpack.c.l.b16 %v4272
      %v5296 = vunpack.c.h.b16 %v4272
      %v5297 = vunpack.c.l.b16 %v4273
      %v5298 = vunpack.c.h.b16 %v4273
      %v5299 = vunpack.c.l.b16 %v4274
      %v5300 = vunpack.c.h.b16 %v4274
      %v5301 = vunpack.c.l.b16 %v4275
      %v5302 = vunpack.c.h.b16 %v4275
      %v5303 = vunpack.c.l.b16 %v4276
      %v5304 = vunpack.c.h.b16 %v4276
      %v5305 = vunpack.c.l.b16 %v4277
      %v5306 = vunpack.c.h.b16 %v4277
      %v5307 = vunpack.c.l.b16 %v4278
      %v5308 = vunpack.c.h.b16 %v4278
      %v5309 = vunpack.c.l.b16 %v4279
      %v5310 = vunpack.c.h.b16 %v4279
      %v5311 = vunpack.c.l.b16 %v4280
      %v5312 = vunpack.c.h.b16 %v4280
      %v5313 = vunpack.c.l.b16 %v4281
      %v5314 = vunpack.c.h.b16 %v4281
      %v5315 = vunpack.c.l.b16 %v4282
      %v5316 = vunpack.c.h.b16 %v4282
      %v5317 = vunpack.c.l.b16 %v4283
      %v5318 = vunpack.c.h.b16 %v4283
      %v5319 = vunpack.c.l.b16 %v4284
      %v5320 = vunpack.c.h.b16 %v4284
      %v5321 = vunpack.c.l.b16 %v4285
      %v5322 = vunpack.c.h.b16 %v4285
      %v5323 = vunpack.c.l.b16 %v4286
      %v5324 = vunpack.c.h.b16 %v4286
      %v5325 = vunpack.c.l.b16 %v4287
      %v5326 = vunpack.c.h.b16 %v4287
      %v5327 = vunpack.c.l.b16 %v4288
      %v5328 = vunpack.c.h.b16 %v4288
      %v5329 = vunpack.c.l.b16 %v4289
      %v5330 = vunpack.c.h.b16 %v4289
      %v5331 = vunpack.c.l.b16 %v4290
      %v5332 = vunpack.c.h.b16 %v4290
      %v5333 = vunpack.c.l.b16 %v4291
      %v5334 = vunpack.c.h.b16 %v4291
      %v5335 = vunpack.c.l.b16 %v4292
      %v5336 = vunpack.c.h.b16 %v4292
      %v5337 = vunpack.c.l.b16 %v4293
      %v5338 = vunpack.c.h.b16 %v4293
      %v5339 = vunpack.c.l.b16 %v4294
      %v5340 = vunpack.c.h.b16 %v4294
      %v5341 = vunpack.c.l.b16 %v4295
      %v5342 = vunpack.c.h.b16 %v4295
      %v5343 = vunpack.c.l.b16 %v4296
      %v5344 = vunpack.c.h.b16 %v4296
      %v5345 = vunpack.c.l.b16 %v4297
      %v5346 = vunpack.c.h.b16 %v4297
      %v5347 = vunpack.c.l.b16 %v4298
      %v5348 = vunpack.c.h.b16 %v4298
      %v5349 = vunpack.c.l.b16 %v4299
      %v5350 = vunpack.c.h.b16 %v4299
      %v5351 = vunpack.c.l.b16 %v4300
      %v5352 = vunpack.c.h.b16 %v4300
      %v5353 = vunpack.c.l.b16 %v4301
      %v5354 = vunpack.c.h.b16 %v4301
      %v5355 = vunpack.c.l.b16 %v4302
      %v5356 = vunpack.c.h.b16 %v4302
      %v5357 = vunpack.c.l.b16 %v4303
      %v5358 = vunpack.c.h.b16 %v4303
      %v5359 = vunpack.c.l.b16 %v4304
      %v5360 = vunpack.c.h.b16 %v4304
      %v5361 = vunpack.c.l.b16 %v4305
      %v5362 = vunpack.c.h.b16 %v4305
      %v5363 = vunpack.c.l.b16 %v4306
      %v5364 = vunpack.c.h.b16 %v4306
      %v5365 = vunpack.c.l.b16 %v4307
      %v5366 = vunpack.c.h.b16 %v4307
      %v5367 = vunpack.c.l.b16 %v4308
      %v5368 = vunpack.c.h.b16 %v4308
      %v5369 = vunpack.c.l.b16 %v4309
      %v5370 = vunpack.c.h.b16 %v4309
      %v5371 = vunpack.c.l.b16 %v4310
      %v5372 = vunpack.c.h.b16 %v4310
      %v5373 = vunpack.c.l.b16 %v4311
      %v5374 = vunpack.c.h.b16 %v4311
      %v5375 = vunpack.c.l.b16 %v4312
      %v5376 = vunpack.c.h.b16 %v4312
      %v5377 = vunpack.c.l.b16 %v4313
      %v5378 = vunpack.c.h.b16 %v4313
      %v5379 = vunpack.c.l.b16 %v4314
      %v5380 = vunpack.c.h.b16 %v4314
      %v5381 = vunpack.c.l.b16 %v4315
      %v5382 = vunpack.c.h.b16 %v4315
      %v5383 = vunpack.c.l.b16 %v4316
      %v5384 = vunpack.c.h.b16 %v4316
      %v5385 = vunpack.c.l.b16 %v4317
      %v5386 = vunpack.c.h.b16 %v4317
      %v5387 = vunpack.c.l.b16 %v4318
      %v5388 = vunpack.c.h.b16 %v4318
      %v5389 = vunpack.c.l.b16 %v4319
      %v5390 = vunpack.c.h.b16 %v4319
      %v5391 = vunpack.c.l.b16 %v4320
      %v5392 = vunpack.c.h.b16 %v4320
      %v5393 = vunpack.c.l.b16 %v4321
      %v5394 = vunpack.c.h.b16 %v4321
      %v5395 = vunpack.c.l.b16 %v4322
      %v5396 = vunpack.c.h.b16 %v4322
      %v5397 = vunpack.c.l.b16 %v4323
      %v5398 = vunpack.c.h.b16 %v4323
      %v5399 = vunpack.c.l.b16 %v4324
      %v5400 = vunpack.c.h.b16 %v4324
      %v5401 = vunpack.c.l.b16 %v4325
      %v5402 = vunpack.c.h.b16 %v4325
      %v5403 = vunpack.c.l.b16 %v4326
      %v5404 = vunpack.c.h.b16 %v4326
      %v5405 = vunpack.c.l.b16 %v4327
      %v5406 = vunpack.c.h.b16 %v4327
      %v5407 = vunpack.c.l.b16 %v4328
      %v5408 = vunpack.c.h.b16 %v4328
      %v5409 = vunpack.c.l.b16 %v4329
      %v5410 = vunpack.c.h.b16 %v4329
      %v5411 = vunpack.c.l.b16 %v4330
      %v5412 = vunpack.c.h.b16 %v4330
      %v5413 = vunpack.c.l.b16 %v4331
      %v5414 = vunpack.c.h.b16 %v4331
      %v5415 = vunpack.c.l.b16 %v4332
      %v5416 = vunpack.c.h.b16 %v4332
      %v5417 = vunpack.c.l.b16 %v4333
      %v5418 = vunpack.c.h.b16 %v4333
      %v5419 = vunpack.c.l.b16 %v4334
      %v5420 = vunpack.c.h.b16 %v4334
      %v5421 = vunpack.c.l.b16 %v4335
      %v5422 = vunpack.c.h.b16 %v4335
      %v5423 = vunpack.c.l.b16 %v4336
      %v5424 = vunpack.c.h.b16 %v4336
      %v5425 = vunpack.c.l.b16 %v4337
      %v5426 = vunpack.c.h.b16 %v4337
      %v5427 = vunpack.c.l.b16 %v4338
      %v5428 = vunpack.c.h.b16 %v4338
      %v5429 = vunpack.c.l.b16 %v4339
      %v5430 = vunpack.c.h.b16 %v4339
      %v5431 = vunpack.c.l.b16 %v4340
      %v5432 = vunpack.c.h.b16 %v4340
      %v5433 = vunpack.c.l.b16 %v4341
      %v5434 = vunpack.c.h.b16 %v4341
      %v5435 = vunpack.c.l.b16 %v4342
      %v5436 = vunpack.c.h.b16 %v4342
      %v5437 = vunpack.c.l.b16 %v4343
      %v5438 = vunpack.c.h.b16 %v4343
      %v5439 = vunpack.c.l.b16 %v4344
      %v5440 = vunpack.c.h.b16 %v4344
      %v5441 = vunpack.c.l.b16 %v4345
      %v5442 = vunpack.c.h.b16 %v4345
      %v5443 = vunpack.c.l.b16 %v4346
      %v5444 = vunpack.c.h.b16 %v4346
      %v5445 = vunpack.c.l.b16 %v4347
      %v5446 = vunpack.c.h.b16 %v4347
      %v5447 = vunpack.c.l.b16 %v4348
      %v5448 = vunpack.c.h.b16 %v4348
      %v5449 = vunpack.c.l.b16 %v4349
      %v5450 = vunpack.c.h.b16 %v4349
      %v5451 = vunpack.c.l.b16 %v4350
      %v5452 = vunpack.c.h.b16 %v4350
      %v5453 = vunpack.c.l.b16 %v4351
      %v5454 = vunpack.c.h.b16 %v4351
      %v5455 = vunpack.c.l.b16 %v4352
      %v5456 = vunpack.c.h.b16 %v4352
      %v5457 = vunpack.c.l.b16 %v4353
      %v5458 = vunpack.c.h.b16 %v4353
      %v5459 = vunpack.c.l.b16 %v4354
      %v5460 = vunpack.c.h.b16 %v4354
      %v5461 = vunpack.c.l.b16 %v4355
      %v5462 = vunpack.c.h.b16 %v4355
      %v5463 = vunpack.c.l.b16 %v4356
      %v5464 = vunpack.c.h.b16 %v4356
      %v5465 = vunpack.c.l.b16 %v4357
      %v5466 = vunpack.c.h.b16 %v4357
      %v5467 = vunpack.c.l.b16 %v4358
      %v5468 = vunpack.c.h.b16 %v4358
      %v5469 = vunpack.c.l.b16 %v4359
      %v5470 = vunpack.c.h.b16 %v4359
      %v5471 = vunpack.c.l.b16 %v4360
      %v5472 = vunpack.c.h.b16 %v4360
      %v5473 = vunpack.c.l.b16 %v4361
      %v5474 = vunpack.c.h.b16 %v4361
      %v5475 = vunpack.c.l.b16 %v4362
      %v5476 = vunpack.c.h.b16 %v4362
      %v5477 = vunpack.c.l.b16 %v4363
      %v5478 = vunpack.c.h.b16 %v4363
      %v5479 = vunpack.c.l.b16 %v4364
      %v5480 = vunpack.c.h.b16 %v4364
      %v5481 = vunpack.c.l.b16 %v4365
      %v5482 = vunpack.c.h.b16 %v4365
      %v5483 = vunpack.c.l.b16 %v4366
      %v5484 = vunpack.c.h.b16 %v4366
      %v5485 = vunpack.c.l.b16 %v4367
      %v5486 = vunpack.c.h.b16 %v4367
      %v5487 = vunpack.c.l.b16 %v4368
      %v5488 = vunpack.c.h.b16 %v4368
      %v5489 = vunpack.c.l.b16 %v4369
      %v5490 = vunpack.c.h.b16 %v4369
      %v5491 = vunpack.c.l.b16 %v4370
      %v5492 = vunpack.c.h.b16 %v4370
      %v5493 = vunpack.c.l.b16 %v4371
      %v5494 = vunpack.c.h.b16 %v4371
      %v5495 = vunpack.c.l.b16 %v4372
      %v5496 = vunpack.c.h.b16 %v4372
      %v5497 = vunpack.c.l.b16 %v4373
      %v5498 = vunpack.c.h.b16 %v4373
      %v5499 = vunpack.c.l.b16 %v4374
      %v5500 = vunpack.c.h.b16 %v4374
      %v5501 = vunpack.c.l.b16 %v4375
      %v5502 = vunpack.c.h.b16 %v4375
      %v5503 = vunpack.c.l.b16 %v4376
      %v5504 = vunpack.c.h.b16 %v4376
      %v5505 = vunpack.c.l.b16 %v4377
      %v5506 = vunpack.c.h.b16 %v4377
      %v5507 = vunpack.c.l.b16 %v4378
      %v5508 = vunpack.c.h.b16 %v4378
      %v5509 = vunpack.c.l.b16 %v4379
      %v5510 = vunpack.c.h.b16 %v4379
      %v5511 = vunpack.c.l.b16 %v4380
      %v5512 = vunpack.c.h.b16 %v4380
      %v5513 = vunpack.c.l.b16 %v4381
      %v5514 = vunpack.c.h.b16 %v4381
      %v5515 = vunpack.c.l.b16 %v4382
      %v5516 = vunpack.c.h.b16 %v4382
      %v5517 = vunpack.c.l.b16 %v4383
      %v5518 = vunpack.c.h.b16 %v4383
      %v5519 = vunpack.c.l.b16 %v4384
      %v5520 = vunpack.c.h.b16 %v4384
      %v5521 = vunpack.c.l.b16 %v4385
      %v5522 = vunpack.c.h.b16 %v4385
      %v5523 = vunpack.c.l.b16 %v4386
      %v5524 = vunpack.c.h.b16 %v4386
      %v5525 = vunpack.c.l.b16 %v4387
      %v5526 = vunpack.c.h.b16 %v4387
      %v5527 = vunpack.c.l.b16 %v4388
      %v5528 = vunpack.c.h.b16 %v4388
      %v5529 = vunpack.c.l.b16 %v4389
      %v5530 = vunpack.c.h.b16 %v4389
      %v5531 = vunpack.c.l.b16 %v4390
      %v5532 = vunpack.c.h.b16 %v4390
      %v5533 = vunpack.c.l.b16 %v4391
      %v5534 = vunpack.c.h.b16 %v4391
      %v5535 = vunpack.c.l.b16 %v4392
      %v5536 = vunpack.c.h.b16 %v4392
      %v5537 = vunpack.c.l.b16 %v4393
      %v5538 = vunpack.c.h.b16 %v4393
      %v5539 = vunpack.c.l.b16 %v4394
      %v5540 = vunpack.c.h.b16 %v4394
      %v5541 = vunpack.c.l.b16 %v4395
      %v5542 = vunpack.c.h.b16 %v4395
      %v5543 = vunpack.c.l.b16 %v4396
      %v5544 = vunpack.c.h.b16 %v4396
      %v5545 = vunpack.c.l.b16 %v4397
      %v5546 = vunpack.c.h.b16 %v4397
      %v5547 = vunpack.c.l.b16 %v4398
      %v5548 = vunpack.c.h.b16 %v4398
      %v5549 = vunpack.c.l.b16 %v4399
      %v5550 = vunpack.c.h.b16 %v4399
      %v5551 = vunpack.c.l.b16 %v4400
      %v5552 = vunpack.c.h.b16 %v4400
      %v5553 = vunpack.c.l.b16 %v4401
      %v5554 = vunpack.c.h.b16 %v4401
      %v5555 = vunpack.c.l.b16 %v4402
      %v5556 = vunpack.c.h.b16 %v4402
      %v5557 = vunpack.c.l.b16 %v4403
      %v5558 = vunpack.c.h.b16 %v4403
      %v5559 = vunpack.c.l.b16 %v4404
      %v5560 = vunpack.c.h.b16 %v4404
      %v5561 = vunpack.c.l.b16 %v4405
      %v5562 = vunpack.c.h.b16 %v4405
      %v5563 = vunpack.c.l.b16 %v4406
      %v5564 = vunpack.c.h.b16 %v4406
      %v5565 = vunpack.c.l.b16 %v4407
      %v5566 = vunpack.c.h.b16 %v4407
      %v5567 = vunpack.c.l.b16 %v4408
      %v5568 = vunpack.c.h.b16 %v4408
      %v5569 = vunpack.c.l.b16 %v4409
      %v5570 = vunpack.c.h.b16 %v4409
      %v5571 = vunpack.c.l.b16 %v4410
      %v5572 = vunpack.c.h.b16 %v4410
      %v5573 = vunpack.c.l.b16 %v4411
      %v5574 = vunpack.c.h.b16 %v4411
      %v5575 = vunpack.c.l.b16 %v4412
      %v5576 = vunpack.c.h.b16 %v4412
      %v5577 = vunpack.c.l.b16 %v4413
      %v5578 = vunpack.c.h.b16 %v4413
      %v5579 = vunpack.c.l.b16 %v4414
      %v5580 = vunpack.c.h.b16 %v4414
      %v5581 = vunpack.c.l.b16 %v4415
      %v5582 = vunpack.c.h.b16 %v4415
      %v5583 = vunpack.c.l.b16 %v4416
      %v5584 = vunpack.c.h.b16 %v4416
      %v5585 = vunpack.c.l.b16 %v4417
      %v5586 = vunpack.c.h.b16 %v4417
      %v5587 = vunpack.c.l.b16 %v4418
      %v5588 = vunpack.c.h.b16 %v4418
      %v5589 = vunpack.c.l.b16 %v4419
      %v5590 = vunpack.c.h.b16 %v4419
      %v5591 = vunpack.c.l.b16 %v4420
      %v5592 = vunpack.c.h.b16 %v4420
      %v5593 = vunpack.c.l.b16 %v4421
      %v5594 = vunpack.c.h.b16 %v4421
      %v5595 = vunpack.c.l.b16 %v4422
      %v5596 = vunpack.c.h.b16 %v4422
      %v5597 = vunpack.c.l.b16 %v4423
      %v5598 = vunpack.c.h.b16 %v4423
      %v5599 = vunpack.c.l.b16 %v4424
      %v5600 = vunpack.c.h.b16 %v4424
      %v5601 = vunpack.c.l.b16 %v4425
      %v5602 = vunpack.c.h.b16 %v4425
      %v5603 = vunpack.c.l.b16 %v4426
      %v5604 = vunpack.c.h.b16 %v4426
      %v5605 = vunpack.c.l.b16 %v4427
      %v5606 = vunpack.c.h.b16 %v4427
      %v5607 = vunpack.c.l.b16 %v4428
      %v5608 = vunpack.c.h.b16 %v4428
      %v5609 = vunpack.c.l.b16 %v4429
      %v5610 = vunpack.c.h.b16 %v4429
      %v5611 = vunpack.c.l.b16 %v4430
      %v5612 = vunpack.c.h.b16 %v4430
      %v5613 = vunpack.c.l.b16 %v4431
      %v5614 = vunpack.c.h.b16 %v4431
      %v5615 = vunpack.c.l.b16 %v4432
      %v5616 = vunpack.c.h.b16 %v4432
      %v5617 = vunpack.c.l.b16 %v4433
      %v5618 = vunpack.c.h.b16 %v4433
      %v5619 = vunpack.c.l.b16 %v4434
      %v5620 = vunpack.c.h.b16 %v4434
      %v5621 = vunpack.c.l.b16 %v4435
      %v5622 = vunpack.c.h.b16 %v4435
      %v5623 = vunpack.c.l.b16 %v4436
      %v5624 = vunpack.c.h.b16 %v4436
      %v5625 = vunpack.c.l.b16 %v4437
      %v5626 = vunpack.c.h.b16 %v4437
      %v5627 = vunpack.c.l.b16 %v4438
      %v5628 = vunpack.c.h.b16 %v4438
      %v5629 = vunpack.c.l.b16 %v4439
      %v5630 = vunpack.c.h.b16 %v4439
      %v5631 = vunpack.c.l.b16 %v4440
      %v5632 = vunpack.c.h.b16 %v4440
      %v5633 = vunpack.c.l.b16 %v4441
      %v5634 = vunpack.c.h.b16 %v4441
      %v5635 = vunpack.c.l.b16 %v4442
      %v5636 = vunpack.c.h.b16 %v4442
      %v5637 = vunpack.c.l.b16 %v4443
      %v5638 = vunpack.c.h.b16 %v4443
      %v5639 = vunpack.c.l.b16 %v4444
      %v5640 = vunpack.c.h.b16 %v4444
      %v5641 = vunpack.c.l.b16 %v4445
      %v5642 = vunpack.c.h.b16 %v4445
      %v5643 = vunpack.c.l.b16 %v4446
      %v5644 = vunpack.c.h.b16 %v4446
      %v5645 = vunpack.c.l.b16 %v4447
      %v5646 = vunpack.c.h.b16 %v4447
      %v5647 = vunpack.c.l.b16 %v4448
      %v5648 = vunpack.c.h.b16 %v4448
      %v5649 = vunpack.c.l.b16 %v4449
      %v5650 = vunpack.c.h.b16 %v4449
      %v5651 = vunpack.c.l.b16 %v4450
      %v5652 = vunpack.c.h.b16 %v4450
      %v5653 = vunpack.c.l.b16 %v4451
      %v5654 = vunpack.c.h.b16 %v4451
      %v5655 = vunpack.c.l.b16 %v4452
      %v5656 = vunpack.c.h.b16 %v4452
      %v5657 = vunpack.c.l.b16 %v4453
      %v5658 = vunpack.c.h.b16 %v4453
      %v5659 = vunpack.c.l.b16 %v4454
      %v5660 = vunpack.c.h.b16 %v4454
      %v5661 = vunpack.c.l.b16 %v4455
      %v5662 = vunpack.c.h.b16 %v4455
      %v5663 = vunpack.c.l.b16 %v4456
      %v5664 = vunpack.c.h.b16 %v4456
      %v5665 = vunpack.c.l.b16 %v4457
      %v5666 = vunpack.c.h.b16 %v4457
      %v5667 = vunpack.c.l.b16 %v4458
      %v5668 = vunpack.c.h.b16 %v4458
      %v5669 = vunpack.c.l.b16 %v4459
      %v5670 = vunpack.c.h.b16 %v4459
      %v5671 = vunpack.c.l.b16 %v4460
      %v5672 = vunpack.c.h.b16 %v4460
      %v5673 = vunpack.c.l.b16 %v4461
      %v5674 = vunpack.c.h.b16 %v4461
      %v5675 = vunpack.c.l.b16 %v4462
      %v5676 = vunpack.c.h.b16 %v4462
      %v5677 = vunpack.c.l.b16 %v4463
      %v5678 = vunpack.c.h.b16 %v4463
      %v5679 = vunpack.c.l.b16 %v4464
      %v5680 = vunpack.c.h.b16 %v4464
      %v5681 = vpack.c.b16 %v4897, %v4881
      %v5682 = vpack.c.b16 %v4898, %v4882
      %v5683 = vpack.c.b16 %v4899, %v4883
      %v5684 = vpack.c.b16 %v4900, %v4884
      %v5685 = vpack.c.b16 %v4901, %v4885
      %v5686 = vpack.c.b16 %v4902, %v4886
      %v5687 = vpack.c.b16 %v4903, %v4887
      %v5688 = vpack.c.b16 %v4904, %v4888
      %v5689 = vpack.c.b16 %v4905, %v4889
      %v5690 = vpack.c.b16 %v4906, %v4890
      %v5691 = vpack.c.b16 %v4907, %v4891
      %v5692 = vpack.c.b16 %v4908, %v4892
      %v5693 = vpack.c.b16 %v4909, %v4893
      %v5694 = vpack.c.b16 %v4910, %v4894
      %v5695 = vpack.c.b16 %v4911, %v4895
      %v5696 = vpack.c.b16 %v4912, %v4896
      %v5697 = vpack.c.b16 %v4929, %v4913
      %v5698 = vpack.c.b16 %v4930, %v4914
      %v5699 = vpack.c.b16 %v4931, %v4915
      %v5700 = vpack.c.b16 %v4932, %v4916
      %v5701 = vpack.c.b16 %v4933, %v4917
      %v5702 = vpack.c.b16 %v4934, %v4918
      %v5703 = vpack.c.b16 %v4935, %v4919
      %v5704 = vpack.c.b16 %v4936, %v4920
      %v5705 = vpack.c.b16 %v4937, %v4921
      %v5706 = vpack.c.b16 %v4938, %v4922
      %v5707 = vpack.c.b16 %v4939, %v4923
      %v5708 = vpack.c.b16 %v4940, %v4924
      %v5709 = vpack.c.b16 %v4941, %v4925
      %v5710 = vpack.c.b16 %v4942, %v4926
      %v5711 = vpack.c.b16 %v4943, %v4927
      %v5712 = vpack.c.b16 %v4944, %v4928
      %v5713 = vpack.c.b16 %v4961, %v4945
      %v5714 = vpack.c.b16 %v4962, %v4946
      %v5715 = vpack.c.b16 %v4963, %v4947
      %v5716 = vpack.c.b16 %v4964, %v4948
      %v5717 = vpack.c.b16 %v4965, %v4949
      %v5718 = vpack.c.b16 %v4966, %v4950
      %v5719 = vpack.c.b16 %v4967, %v4951
      %v5720 = vpack.c.b16 %v4968, %v4952
      %v5721 = vpack.c.b16 %v4969, %v4953
      %v5722 = vpack.c.b16 %v4970, %v4954
      %v5723 = vpack.c.b16 %v4971, %v4955
      %v5724 = vpack.c.b16 %v4972, %v4956
      %v5725 = vpack.c.b16 %v4973, %v4957
      %v5726 = vpack.c.b16 %v4974, %v4958
      %v5727 = vpack.c.b16 %v4975, %v4959
      %v5728 = vpack.c.b16 %v4976, %v4960
      %v5729 = vpack.c.b16 %v4993, %v4977
      %v5730 = vpack.c.b16 %v4994, %v4978
      %v5731 = vpack.c.b16 %v4995, %v4979
      %v5732 = vpack.c.b16 %v4996, %v4980
      %v5733 = vpack.c.b16 %v4997, %v4981
      %v5734 = vpack.c.b16 %v4998, %v4982
      %v5735 = vpack.c.b16 %v4999, %v4983
      %v5736 = vpack.c.b16 %v5000, %v4984
      %v5737 = vpack.c.b16 %v5001, %v4985
      %v5738 = vpack.c.b16 %v5002, %v4986
      %v5739 = vpack.c.b16 %v5003, %v4987
      %v5740 = vpack.c.b16 %v5004, %v4988
      %v5741 = vpack.c.b16 %v5005, %v4989
      %v5742 = vpack.c.b16 %v5006, %v4990
      %v5743 = vpack.c.b16 %v5007, %v4991
      %v5744 = vpack.c.b16 %v5008, %v4992
      %v5745 = vpack.c.b16 %v5025, %v5009
      %v5746 = vpack.c.b16 %v5026, %v5010
      %v5747 = vpack.c.b16 %v5027, %v5011
      %v5748 = vpack.c.b16 %v5028, %v5012
      %v5749 = vpack.c.b16 %v5029, %v5013
      %v5750 = vpack.c.b16 %v5030, %v5014
      %v5751 = vpack.c.b16 %v5031, %v5015
      %v5752 = vpack.c.b16 %v5032, %v5016
      %v5753 = vpack.c.b16 %v5033, %v5017
      %v5754 = vpack.c.b16 %v5034, %v5018
      %v5755 = vpack.c.b16 %v5035, %v5019
      %v5756 = vpack.c.b16 %v5036, %v5020
      %v5757 = vpack.c.b16 %v5037, %v5021
      %v5758 = vpack.c.b16 %v5038, %v5022
      %v5759 = vpack.c.b16 %v5039, %v5023
      %v5760 = vpack.c.b16 %v5040, %v5024
      %v5761 = vpack.c.b16 %v5057, %v5041
      %v5762 = vpack.c.b16 %v5058, %v5042
      %v5763 = vpack.c.b16 %v5059, %v5043
      %v5764 = vpack.c.b16 %v5060, %v5044
      %v5765 = vpack.c.b16 %v5061, %v5045
      %v5766 = vpack.c.b16 %v5062, %v5046
      %v5767 = vpack.c.b16 %v5063, %v5047
      %v5768 = vpack.c.b16 %v5064, %v5048
      %v5769 = vpack.c.b16 %v5065, %v5049
      %v5770 = vpack.c.b16 %v5066, %v5050
      %v5771 = vpack.c.b16 %v5067, %v5051
      %v5772 = vpack.c.b16 %v5068, %v5052
      %v5773 = vpack.c.b16 %v5069, %v5053
      %v5774 = vpack.c.b16 %v5070, %v5054
      %v5775 = vpack.c.b16 %v5071, %v5055
      %v5776 = vpack.c.b16 %v5072, %v5056
      %v5777 = vpack.c.b16 %v5089, %v5073
      %v5778 = vpack.c.b16 %v5090, %v5074
      %v5779 = vpack.c.b16 %v5091, %v5075
      %v5780 = vpack.c.b16 %v5092, %v5076
      %v5781 = vpack.c.b16 %v5093, %v5077
      %v5782 = vpack.c.b16 %v5094, %v5078
      %v5783 = vpack.c.b16 %v5095, %v5079
      %v5784 = vpack.c.b16 %v5096, %v5080
      %v5785 = vpack.c.b16 %v5097, %v5081
      %v5786 = vpack.c.b16 %v5098, %v5082
      %v5787 = vpack.c.b16 %v5099, %v5083
      %v5788 = vpack.c.b16 %v5100, %v5084
      %v5789 = vpack.c.b16 %v5101, %v5085
      %v5790 = vpack.c.b16 %v5102, %v5086
      %v5791 = vpack.c.b16 %v5103, %v5087
      %v5792 = vpack.c.b16 %v5104, %v5088
      %v5793 = vpack.c.b16 %v5121, %v5105
      %v5794 = vpack.c.b16 %v5122, %v5106
      %v5795 = vpack.c.b16 %v5123, %v5107
      %v5796 = vpack.c.b16 %v5124, %v5108
      %v5797 = vpack.c.b16 %v5125, %v5109
      %v5798 = vpack.c.b16 %v5126, %v5110
      %v5799 = vpack.c.b16 %v5127, %v5111
      %v5800 = vpack.c.b16 %v5128, %v5112
      %v5801 = vpack.c.b16 %v5129, %v5113
      %v5802 = vpack.c.b16 %v5130, %v5114
      %v5803 = vpack.c.b16 %v5131, %v5115
      %v5804 = vpack.c.b16 %v5132, %v5116
      %v5805 = vpack.c.b16 %v5133, %v5117
      %v5806 = vpack.c.b16 %v5134, %v5118
      %v5807 = vpack.c.b16 %v5135, %v5119
      %v5808 = vpack.c.b16 %v5136, %v5120
      %v5809 = vpack.c.b16 %v5153, %v5137
      %v5810 = vpack.c.b16 %v5154, %v5138
      %v5811 = vpack.c.b16 %v5155, %v5139
      %v5812 = vpack.c.b16 %v5156, %v5140
      %v5813 = vpack.c.b16 %v5157, %v5141
      %v5814 = vpack.c.b16 %v5158, %v5142
      %v5815 = vpack.c.b16 %v5159, %v5143
      %v5816 = vpack.c.b16 %v5160, %v5144
      %v5817 = vpack.c.b16 %v5161, %v5145
      %v5818 = vpack.c.b16 %v5162, %v5146
      %v5819 = vpack.c.b16 %v5163, %v5147
      %v5820 = vpack.c.b16 %v5164, %v5148
      %v5821 = vpack.c.b16 %v5165, %v5149
      %v5822 = vpack.c.b16 %v5166, %v5150
      %v5823 = vpack.c.b16 %v5167, %v5151
      %v5824 = vpack.c.b16 %v5168, %v5152
      %v5825 = vpack.c.b16 %v5185, %v5169
      %v5826 = vpack.c.b16 %v5186, %v5170
      %v5827 = vpack.c.b16 %v5187, %v5171
      %v5828 = vpack.c.b16 %v5188, %v5172
      %v5829 = vpack.c.b16 %v5189, %v5173
      %v5830 = vpack.c.b16 %v5190, %v5174
      %v5831 = vpack.c.b16 %v5191, %v5175
      %v5832 = vpack.c.b16 %v5192, %v5176
      %v5833 = vpack.c.b16 %v5193, %v5177
      %v5834 = vpack.c.b16 %v5194, %v5178
      %v5835 = vpack.c.b16 %v5195, %v5179
      %v5836 = vpack.c.b16 %v5196, %v5180
      %v5837 = vpack.c.b16 %v5197, %v5181
      %v5838 = vpack.c.b16 %v5198, %v5182
      %v5839 = vpack.c.b16 %v5199, %v5183
      %v5840 = vpack.c.b16 %v5200, %v5184
      %v5841 = vpack.c.b16 %v5217, %v5201
      %v5842 = vpack.c.b16 %v5218, %v5202
      %v5843 = vpack.c.b16 %v5219, %v5203
      %v5844 = vpack.c.b16 %v5220, %v5204
      %v5845 = vpack.c.b16 %v5221, %v5205
      %v5846 = vpack.c.b16 %v5222, %v5206
      %v5847 = vpack.c.b16 %v5223, %v5207
      %v5848 = vpack.c.b16 %v5224, %v5208
      %v5849 = vpack.c.b16 %v5225, %v5209
      %v5850 = vpack.c.b16 %v5226, %v5210
      %v5851 = vpack.c.b16 %v5227, %v5211
      %v5852 = vpack.c.b16 %v5228, %v5212
      %v5853 = vpack.c.b16 %v5229, %v5213
      %v5854 = vpack.c.b16 %v5230, %v5214
      %v5855 = vpack.c.b16 %v5231, %v5215
      %v5856 = vpack.c.b16 %v5232, %v5216
      %v5857 = vpack.c.b16 %v5249, %v5233
      %v5858 = vpack.c.b16 %v5250, %v5234
      %v5859 = vpack.c.b16 %v5251, %v5235
      %v5860 = vpack.c.b16 %v5252, %v5236
      %v5861 = vpack.c.b16 %v5253, %v5237
      %v5862 = vpack.c.b16 %v5254, %v5238
      %v5863 = vpack.c.b16 %v5255, %v5239
      %v5864 = vpack.c.b16 %v5256, %v5240
      %v5865 = vpack.c.b16 %v5257, %v5241
      %v5866 = vpack.c.b16 %v5258, %v5242
      %v5867 = vpack.c.b16 %v5259, %v5243
      %v5868 = vpack.c.b16 %v5260, %v5244
      %v5869 = vpack.c.b16 %v5261, %v5245
      %v5870 = vpack.c.b16 %v5262, %v5246
      %v5871 = vpack.c.b16 %v5263, %v5247
      %v5872 = vpack.c.b16 %v5264, %v5248
      %v5873 = vpack.c.b16 %v5281, %v5265
      %v5874 = vpack.c.b16 %v5282, %v5266
      %v5875 = vpack.c.b16 %v5283, %v5267
      %v5876 = vpack.c.b16 %v5284, %v5268
      %v5877 = vpack.c.b16 %v5285, %v5269
      %v5878 = vpack.c.b16 %v5286, %v5270
      %v5879 = vpack.c.b16 %v5287, %v5271
      %v5880 = vpack.c.b16 %v5288, %v5272
      %v5881 = vpack.c.b16 %v5289, %v5273
      %v5882 = vpack.c.b16 %v5290, %v5274
      %v5883 = vpack.c.b16 %v5291, %v5275
      %v5884 = vpack.c.b16 %v5292, %v5276
      %v5885 = vpack.c.b16 %v5293, %v5277
      %v5886 = vpack.c.b16 %v5294, %v5278
      %v5887 = vpack.c.b16 %v5295, %v5279
      %v5888 = vpack.c.b16 %v5296, %v5280
      %v5889 = vpack.c.b16 %v5313, %v5297
      %v5890 = vpack.c.b16 %v5314, %v5298
      %v5891 = vpack.c.b16 %v5315, %v5299
      %v5892 = vpack.c.b16 %v5316, %v5300
      %v5893 = vpack.c.b16 %v5317, %v5301
      %v5894 = vpack.c.b16 %v5318, %v5302
      %v5895 = vpack.c.b16 %v5319, %v5303
      %v5896 = vpack.c.b16 %v5320, %v5304
      %v5897 = vpack.c.b16 %v5321, %v5305
      %v5898 = vpack.c.b16 %v5322, %v5306
      %v5899 = vpack.c.b16 %v5323, %v5307
      %v5900 = vpack.c.b16 %v5324, %v5308
      %v5901 = vpack.c.b16 %v5325, %v5309
      %v5902 = vpack.c.b16 %v5326, %v5310
      %v5903 = vpack.c.b16 %v5327, %v5311
      %v5904 = vpack.c.b16 %v5328, %v5312
      %v5905 = vpack.c.b16 %v5345, %v5329
      %v5906 = vpack.c.b16 %v5346, %v5330
      %v5907 = vpack.c.b16 %v5347, %v5331
      %v5908 = vpack.c.b16 %v5348, %v5332
      %v5909 = vpack.c.b16 %v5349, %v5333
      %v5910 = vpack.c.b16 %v5350, %v5334
      %v5911 = vpack.c.b16 %v5351, %v5335
      %v5912 = vpack.c.b16 %v5352, %v5336
      %v5913 = vpack.c.b16 %v5353, %v5337
      %v5914 = vpack.c.b16 %v5354, %v5338
      %v5915 = vpack.c.b16 %v5355, %v5339
      %v5916 = vpack.c.b16 %v5356, %v5340
      %v5917 = vpack.c.b16 %v5357, %v5341
      %v5918 = vpack.c.b16 %v5358, %v5342
      %v5919 = vpack.c.b16 %v5359, %v5343
      %v5920 = vpack.c.b16 %v5360, %v5344
      %v5921 = vpack.c.b16 %v5377, %v5361
      %v5922 = vpack.c.b16 %v5378, %v5362
      %v5923 = vpack.c.b16 %v5379, %v5363
      %v5924 = vpack.c.b16 %v5380, %v5364
      %v5925 = vpack.c.b16 %v5381, %v5365
      %v5926 = vpack.c.b16 %v5382, %v5366
      %v5927 = vpack.c.b16 %v5383, %v5367
      %v5928 = vpack.c.b16 %v5384, %v5368
      %v5929 = vpack.c.b16 %v5385, %v5369
      %v5930 = vpack.c.b16 %v5386, %v5370
      %v5931 = vpack.c.b16 %v5387, %v5371
      %v5932 = vpack.c.b16 %v5388, %v5372
      %v5933 = vpack.c.b16 %v5389, %v5373
      %v5934 = vpack.c.b16 %v5390, %v5374
      %v5935 = vpack.c.b16 %v5391, %v5375
      %v5936 = vpack.c.b16 %v5392, %v5376
      %v5937 = vpack.c.b16 %v5409, %v5393
      %v5938 = vpack.c.b16 %v5410, %v5394
      %v5939 = vpack.c.b16 %v5411, %v5395
      %v5940 = vpack.c.b16 %v5412, %v5396
      %v5941 = vpack.c.b16 %v5413, %v5397
      %v5942 = vpack.c.b16 %v5414, %v5398
      %v5943 = vpack.c.b16 %v5415, %v5399
      %v5944 = vpack.c.b16 %v5416, %v5400
      %v5945 = vpack.c.b16 %v5417, %v5401
      %v5946 = vpack.c.b16 %v5418, %v5402
      %v5947 = vpack.c.b16 %v5419, %v5403
      %v5948 = vpack.c.b16 %v5420, %v5404
      %v5949 = vpack.c.b16 %v5421, %v5405
      %v5950 = vpack.c.b16 %v5422, %v5406
      %v5951 = vpack.c.b16 %v5423, %v5407
      %v5952 = vpack.c.b16 %v5424, %v5408
      %v5953 = vpack.c.b16 %v5441, %v5425
      %v5954 = vpack.c.b16 %v5442, %v5426
      %v5955 = vpack.c.b16 %v5443, %v5427
      %v5956 = vpack.c.b16 %v5444, %v5428
      %v5957 = vpack.c.b16 %v5445, %v5429
      %v5958 = vpack.c.b16 %v5446, %v5430
      %v5959 = vpack.c.b16 %v5447, %v5431
      %v5960 = vpack.c.b16 %v5448, %v5432
      %v5961 = vpack.c.b16 %v5449, %v5433
      %v5962 = vpack.c.b16 %v5450, %v5434
      %v5963 = vpack.c.b16 %v5451, %v5435
      %v5964 = vpack.c.b16 %v5452, %v5436
      %v5965 = vpack.c.b16 %v5453, %v5437
      %v5966 = vpack.c.b16 %v5454, %v5438
      %v5967 = vpack.c.b16 %v5455, %v5439
      %v5968 = vpack.c.b16 %v5456, %v5440
      %v5969 = vpack.c.b16 %v5473, %v5457
      %v5970 = vpack.c.b16 %v5474, %v5458
      %v5971 = vpack.c.b16 %v5475, %v5459
      %v5972 = vpack.c.b16 %v5476, %v5460
      %v5973 = vpack.c.b16 %v5477, %v5461
      %v5974 = vpack.c.b16 %v5478, %v5462
      %v5975 = vpack.c.b16 %v5479, %v5463
      %v5976 = vpack.c.b16 %v5480, %v5464
      %v5977 = vpack.c.b16 %v5481, %v5465
      %v5978 = vpack.c.b16 %v5482, %v5466
      %v5979 = vpack.c.b16 %v5483, %v5467
      %v5980 = vpack.c.b16 %v5484, %v5468
      %v5981 = vpack.c.b16 %v5485, %v5469
      %v5982 = vpack.c.b16 %v5486, %v5470
      %v5983 = vpack.c.b16 %v5487, %v5471
      %v5984 = vpack.c.b16 %v5488, %v5472
      %v5985 = vpack.c.b16 %v5505, %v5489
      %v5986 = vpack.c.b16 %v5506, %v5490
      %v5987 = vpack.c.b16 %v5507, %v5491
      %v5988 = vpack.c.b16 %v5508, %v5492
      %v5989 = vpack.c.b16 %v5509, %v5493
      %v5990 = vpack.c.b16 %v5510, %v5494
      %v5991 = vpack.c.b16 %v5511, %v5495
      %v5992 = vpack.c.b16 %v5512, %v5496
      %v5993 = vpack.c.b16 %v5513, %v5497
      %v5994 = vpack.c.b16 %v5514, %v5498
      %v5995 = vpack.c.b16 %v5515, %v5499
      %v5996 = vpack.c.b16 %v5516, %v5500
      %v5997 = vpack.c.b16 %v5517, %v5501
      %v5998 = vpack.c.b16 %v5518, %v5502
      %v5999 = vpack.c.b16 %v5519, %v5503
      %v6000 = vpack.c.b16 %v5520, %v5504
      %v6001 = vpack.c.b16 %v5537, %v5521
      %v6002 = vpack.c.b16 %v5538, %v5522
      %v6003 = vpack.c.b16 %v5539, %v5523
      %v6004 = vpack.c.b16 %v5540, %v5524
      %v6005 = vpack.c.b16 %v5541, %v5525
      %v6006 = vpack.c.b16 %v5542, %v5526
      %v6007 = vpack.c.b16 %v5543, %v5527
      %v6008 = vpack.c.b16 %v5544, %v5528
      %v6009 = vpack.c.b16 %v5545, %v5529
      %v6010 = vpack.c.b16 %v5546, %v5530
      %v6011 = vpack.c.b16 %v5547, %v5531
      %v6012 = vpack.c.b16 %v5548, %v5532
      %v6013 = vpack.c.b16 %v5549, %v5533
      %v6014 = vpack.c.b16 %v5550, %v5534
      %v6015 = vpack.c.b16 %v5551, %v5535
      %v6016 = vpack.c.b16 %v5552, %v5536
      %v6017 = vpack.c.b16 %v5569, %v5553
      %v6018 = vpack.c.b16 %v5570, %v5554
      %v6019 = vpack.c.b16 %v5571, %v5555
      %v6020 = vpack.c.b16 %v5572, %v5556
      %v6021 = vpack.c.b16 %v5573, %v5557
      %v6022 = vpack.c.b16 %v5574, %v5558
      %v6023 = vpack.c.b16 %v5575, %v5559
      %v6024 = vpack.c.b16 %v5576, %v5560
      %v6025 = vpack.c.b16 %v5577, %v5561
      %v6026 = vpack.c.b16 %v5578, %v5562
      %v6027 = vpack.c.b16 %v5579, %v5563
      %v6028 = vpack.c.b16 %v5580, %v5564
      %v6029 = vpack.c.b16 %v5581, %v5565
      %v6030 = vpack.c.b16 %v5582, %v5566
      %v6031 = vpack.c.b16 %v5583, %v5567
      %v6032 = vpack.c.b16 %v5584, %v5568
      %v6033 = vpack.c.b16 %v5601, %v5585
      %v6034 = vpack.c.b16 %v5602, %v5586
      %v6035 = vpack.c.b16 %v5603, %v5587
      %v6036 = vpack.c.b16 %v5604, %v5588
      %v6037 = vpack.c.b16 %v5605, %v5589
      %v6038 = vpack.c.b16 %v5606, %v5590
      %v6039 = vpack.c.b16 %v5607, %v5591
      %v6040 = vpack.c.b16 %v5608, %v5592
      %v6041 = vpack.c.b16 %v5609, %v5593
      %v6042 = vpack.c.b16 %v5610, %v5594
      %v6043 = vpack.c.b16 %v5611, %v5595
      %v6044 = vpack.c.b16 %v5612, %v5596
      %v6045 = vpack.c.b16 %v5613, %v5597
      %v6046 = vpack.c.b16 %v5614, %v5598
      %v6047 = vpack.c.b16 %v5615, %v5599
      %v6048 = vpack.c.b16 %v5616, %v5600
      %v6049 = vpack.c.b16 %v5633, %v5617
      %v6050 = vpack.c.b16 %v5634, %v5618
      %v6051 = vpack.c.b16 %v5635, %v5619
      %v6052 = vpack.c.b16 %v5636, %v5620
      %v6053 = vpack.c.b16 %v5637, %v5621
      %v6054 = vpack.c.b16 %v5638, %v5622
      %v6055 = vpack.c.b16 %v5639, %v5623
      %v6056 = vpack.c.b16 %v5640, %v5624
      %v6057 = vpack.c.b16 %v5641, %v5625
      %v6058 = vpack.c.b16 %v5642, %v5626
      %v6059 = vpack.c.b16 %v5643, %v5627
      %v6060 = vpack.c.b16 %v5644, %v5628
      %v6061 = vpack.c.b16 %v5645, %v5629
      %v6062 = vpack.c.b16 %v5646, %v5630
      %v6063 = vpack.c.b16 %v5647, %v5631
      %v6064 = vpack.c.b16 %v5648, %v5632
      %v6065 = vpack.c.b16 %v5665, %v5649
      %v6066 = vpack.c.b16 %v5666, %v5650
      %v6067 = vpack.c.b16 %v5667, %v5651
      %v6068 = vpack.c.b16 %v5668, %v5652
      %v6069 = vpack.c.b16 %v5669, %v5653
      %v6070 = vpack.c.b16 %v5670, %v5654
      %v6071 = vpack.c.b16 %v5671, %v5655
      %v6072 = vpack.c.b16 %v5672, %v5656
      %v6073 = vpack.c.b16 %v5673, %v5657
      %v6074 = vpack.c.b16 %v5674, %v5658
      %v6075 = vpack.c.b16 %v5675, %v5659
      %v6076 = vpack.c.b16 %v5676, %v5660
      %v6077 = vpack.c.b16 %v5677, %v5661
      %v6078 = vpack.c.b16 %v5678, %v5662
      %v6079 = vpack.c.b16 %v5679, %v5663
      %v6080 = vpack.c.b16 %v5680, %v5664
      %v6482 = vsel %vm2147, %v4064, 0
      %6484 = vmatpush.bf16.msra.mxu0 %v5793
      %6485 = vmatpush.bf16.msra.mxu0 %v5777
      %6486 = vmatpush.bf16.msra.mxu0 %v5761
      %6487 = vmatpush.bf16.msra.mxu0 %v5745
      %6488 = vmatpush.bf16.msra.mxu0 %v5729
      %6489 = vmatpush.bf16.msra.mxu0 %v5713
      %6490 = vmatpush.bf16.msra.mxu0 %v5697
      %6491 = vmatpush.bf16.msra.mxu0 %v5681
      %6492 = vmatmul.bf16.gmra.mxu0 %v4061
      %v6493 = vpop.f32.mrf.mxu0
      %v6494 = vadd.f32 %v4465, %v6493
      %v6495 = vpop.f32.mrf.mxu0
      %v6496 = vadd.f32 %v4465, %v6495
      %6497 = vdwg.mxu0
      %6498 = vmatpush.bf16.msra.mxu0 %v5921
      %6499 = vmatpush.bf16.msra.mxu0 %v5905
      %6500 = vmatpush.bf16.msra.mxu0 %v5889
      %6501 = vmatpush.bf16.msra.mxu0 %v5873
      %6502 = vmatpush.bf16.msra.mxu0 %v5857
      %6503 = vmatpush.bf16.msra.mxu0 %v5841
      %6504 = vmatpush.bf16.msra.mxu0 %v5825
      %6505 = vmatpush.bf16.msra.mxu0 %v5809
      %6506 = vmatmul.bf16.gmra.mxu0 %v4062
      %v6507 = vpop.f32.mrf.mxu0
      %v6508 = vadd.f32 %v6494, %v6507
      %v6509 = vpop.f32.mrf.mxu0
      %v6510 = vadd.f32 %v6496, %v6509
      %6511 = vdwg.mxu0
      %6512 = vmatpush.bf16.msra.mxu0 %v6049
      %6513 = vmatpush.bf16.msra.mxu0 %v6033
      %6514 = vmatpush.bf16.msra.mxu0 %v6017
      %6515 = vmatpush.bf16.msra.mxu0 %v6001
      %6516 = vmatpush.bf16.msra.mxu0 %v5985
      %6517 = vmatpush.bf16.msra.mxu0 %v5969
      %6518 = vmatpush.bf16.msra.mxu0 %v5953
      %6519 = vmatpush.bf16.msra.mxu0 %v5937
      %6520 = vmatmul.bf16.gmra.mxu0 %v4063
      %v6521 = vpop.f32.mrf.mxu0
      %v6522 = vadd.f32 %v6508, %v6521
      %v6523 = vpop.f32.mrf.mxu0
      %v6524 = vadd.f32 %v6510, %v6523
      %6525 = vdwg.mxu0
      %6526 = vmatpush.bf16.msra.mxu0 0
      %6527 = vmatpush.bf16.msra.mxu0 0
      %6528 = vmatpush.bf16.msra.mxu0 0
      %6529 = vmatpush.bf16.msra.mxu0 0
      %6530 = vmatpush.bf16.msra.mxu0 0
      %6531 = vmatpush.bf16.msra.mxu0 0
      %6532 = vmatpush.bf16.msra.mxu0 0
      %6533 = vmatpush.bf16.msra.mxu0 %v6065
      %6534 = vmatmul.bf16.gmra.mxu0 %v6482
      %v6535 = vpop.f32.mrf.mxu0
      %v6536 = vadd.f32 %v6522, %v6535
      %v6537 = vpop.f32.mrf.mxu0
      %v6538 = vadd.f32 %v6524, %v6537
      %6539 = vdwg.mxu0
      %6540 = vmatpush.bf16.msra.mxu0 %v5794
      %6541 = vmatpush.bf16.msra.mxu0 %v5778
      %6542 = vmatpush.bf16.msra.mxu0 %v5762
      %6543 = vmatpush.bf16.msra.mxu0 %v5746
      %6544 = vmatpush.bf16.msra.mxu0 %v5730
      %6545 = vmatpush.bf16.msra.mxu0 %v5714
      %6546 = vmatpush.bf16.msra.mxu0 %v5698
      %6547 = vmatpush.bf16.msra.mxu0 %v5682
      %6548 = vmatmul.bf16.gmra.mxu0 %v4061
      %v6549 = vpop.f32.mrf.mxu0
      %v6550 = vadd.f32 %v4466, %v6549
      %v6551 = vpop.f32.mrf.mxu0
      %v6552 = vadd.f32 %v4466, %v6551
      %6553 = vdwg.mxu0
      %6554 = vmatpush.bf16.msra.mxu0 %v5922
      %6555 = vmatpush.bf16.msra.mxu0 %v5906
      %6556 = vmatpush.bf16.msra.mxu0 %v5890
      %6557 = vmatpush.bf16.msra.mxu0 %v5874
      %6558 = vmatpush.bf16.msra.mxu0 %v5858
      %6559 = vmatpush.bf16.msra.mxu0 %v5842
      %6560 = vmatpush.bf16.msra.mxu0 %v5826
      %6561 = vmatpush.bf16.msra.mxu0 %v5810
      %6562 = vmatmul.bf16.gmra.mxu0 %v4062
      %v6563 = vpop.f32.mrf.mxu0
      %v6564 = vadd.f32 %v6550, %v6563
      %v6565 = vpop.f32.mrf.mxu0
      %v6566 = vadd.f32 %v6552, %v6565
      %6567 = vdwg.mxu0
      %6568 = vmatpush.bf16.msra.mxu0 %v6050
      %6569 = vmatpush.bf16.msra.mxu0 %v6034
      %6570 = vmatpush.bf16.msra.mxu0 %v6018
      %6571 = vmatpush.bf16.msra.mxu0 %v6002
      %6572 = vmatpush.bf16.msra.mxu0 %v5986
      %6573 = vmatpush.bf16.msra.mxu0 %v5970
      %6574 = vmatpush.bf16.msra.mxu0 %v5954
      %6575 = vmatpush.bf16.msra.mxu0 %v5938
      %6576 = vmatmul.bf16.gmra.mxu0 %v4063
      %v6577 = vpop.f32.mrf.mxu0
      %v6578 = vadd.f32 %v6564, %v6577
      %v6579 = vpop.f32.mrf.mxu0
      %v6580 = vadd.f32 %v6566, %v6579
      %6581 = vdwg.mxu0
      %6582 = vmatpush.bf16.msra.mxu0 0
      %6583 = vmatpush.bf16.msra.mxu0 0
      %6584 = vmatpush.bf16.msra.mxu0 0
      %6585 = vmatpush.bf16.msra.mxu0 0
      %6586 = vmatpush.bf16.msra.mxu0 0
      %6587 = vmatpush.bf16.msra.mxu0 0
      %6588 = vmatpush.bf16.msra.mxu0 0
      %6589 = vmatpush.bf16.msra.mxu0 %v6066
      %6590 = vmatmul.bf16.gmra.mxu0 %v6482
      %v6591 = vpop.f32.mrf.mxu0
      %v6592 = vadd.f32 %v6578, %v6591
      %v6593 = vpop.f32.mrf.mxu0
      %v6594 = vadd.f32 %v6580, %v6593
      %6595 = vdwg.mxu0
      %6596 = vmatpush.bf16.msra.mxu0 %v5795
      %6597 = vmatpush.bf16.msra.mxu0 %v5779
      %6598 = vmatpush.bf16.msra.mxu0 %v5763
      %6599 = vmatpush.bf16.msra.mxu0 %v5747
      %6600 = vmatpush.bf16.msra.mxu0 %v5731
      %6601 = vmatpush.bf16.msra.mxu0 %v5715
      %6602 = vmatpush.bf16.msra.mxu0 %v5699
      %6603 = vmatpush.bf16.msra.mxu0 %v5683
      %6604 = vmatmul.bf16.gmra.mxu0 %v4061
      %v6605 = vpop.f32.mrf.mxu0
      %v6606 = vadd.f32 %v4467, %v6605
      %v6607 = vpop.f32.mrf.mxu0
      %v6608 = vadd.f32 %v4467, %v6607
      %6609 = vdwg.mxu0
      %6610 = vmatpush.bf16.msra.mxu0 %v5923
      %6611 = vmatpush.bf16.msra.mxu0 %v5907
      %6612 = vmatpush.bf16.msra.mxu0 %v5891
      %6613 = vmatpush.bf16.msra.mxu0 %v5875
      %6614 = vmatpush.bf16.msra.mxu0 %v5859
      %6615 = vmatpush.bf16.msra.mxu0 %v5843
      %6616 = vmatpush.bf16.msra.mxu0 %v5827
      %6617 = vmatpush.bf16.msra.mxu0 %v5811
      %6618 = vmatmul.bf16.gmra.mxu0 %v4062
      %v6619 = vpop.f32.mrf.mxu0
      %v6620 = vadd.f32 %v6606, %v6619
      %v6621 = vpop.f32.mrf.mxu0
      %v6622 = vadd.f32 %v6608, %v6621
      %6623 = vdwg.mxu0
      %6624 = vmatpush.bf16.msra.mxu0 %v6051
      %6625 = vmatpush.bf16.msra.mxu0 %v6035
      %6626 = vmatpush.bf16.msra.mxu0 %v6019
      %6627 = vmatpush.bf16.msra.mxu0 %v6003
      %6628 = vmatpush.bf16.msra.mxu0 %v5987
      %6629 = vmatpush.bf16.msra.mxu0 %v5971
      %6630 = vmatpush.bf16.msra.mxu0 %v5955
      %6631 = vmatpush.bf16.msra.mxu0 %v5939
      %6632 = vmatmul.bf16.gmra.mxu0 %v4063
      %v6633 = vpop.f32.mrf.mxu0
      %v6634 = vadd.f32 %v6620, %v6633
      %v6635 = vpop.f32.mrf.mxu0
      %v6636 = vadd.f32 %v6622, %v6635
      %6637 = vdwg.mxu0
      %6638 = vmatpush.bf16.msra.mxu0 0
      %6639 = vmatpush.bf16.msra.mxu0 0
      %6640 = vmatpush.bf16.msra.mxu0 0
      %6641 = vmatpush.bf16.msra.mxu0 0
      %6642 = vmatpush.bf16.msra.mxu0 0
      %6643 = vmatpush.bf16.msra.mxu0 0
      %6644 = vmatpush.bf16.msra.mxu0 0
      %6645 = vmatpush.bf16.msra.mxu0 %v6067
      %6646 = vmatmul.bf16.gmra.mxu0 %v6482
      %v6647 = vpop.f32.mrf.mxu0
      %v6648 = vadd.f32 %v6634, %v6647
      %v6649 = vpop.f32.mrf.mxu0
      %v6650 = vadd.f32 %v6636, %v6649
      %6651 = vdwg.mxu0
      %6652 = vmatpush.bf16.msra.mxu0 %v5796
      %6653 = vmatpush.bf16.msra.mxu0 %v5780
      %6654 = vmatpush.bf16.msra.mxu0 %v5764
      %6655 = vmatpush.bf16.msra.mxu0 %v5748
      %6656 = vmatpush.bf16.msra.mxu0 %v5732
      %6657 = vmatpush.bf16.msra.mxu0 %v5716
      %6658 = vmatpush.bf16.msra.mxu0 %v5700
      %6659 = vmatpush.bf16.msra.mxu0 %v5684
      %6660 = vmatmul.bf16.gmra.mxu0 %v4061
      %v6661 = vpop.f32.mrf.mxu0
      %v6662 = vadd.f32 %v4468, %v6661
      %v6663 = vpop.f32.mrf.mxu0
      %v6664 = vadd.f32 %v4468, %v6663
      %6665 = vdwg.mxu0
      %6666 = vmatpush.bf16.msra.mxu0 %v5924
      %6667 = vmatpush.bf16.msra.mxu0 %v5908
      %6668 = vmatpush.bf16.msra.mxu0 %v5892
      %6669 = vmatpush.bf16.msra.mxu0 %v5876
      %6670 = vmatpush.bf16.msra.mxu0 %v5860
      %6671 = vmatpush.bf16.msra.mxu0 %v5844
      %6672 = vmatpush.bf16.msra.mxu0 %v5828
      %6673 = vmatpush.bf16.msra.mxu0 %v5812
      %6674 = vmatmul.bf16.gmra.mxu0 %v4062
      %v6675 = vpop.f32.mrf.mxu0
      %v6676 = vadd.f32 %v6662, %v6675
      %v6677 = vpop.f32.mrf.mxu0
      %v6678 = vadd.f32 %v6664, %v6677
      %6679 = vdwg.mxu0
      %6680 = vmatpush.bf16.msra.mxu0 %v6052
      %6681 = vmatpush.bf16.msra.mxu0 %v6036
      %6682 = vmatpush.bf16.msra.mxu0 %v6020
      %6683 = vmatpush.bf16.msra.mxu0 %v6004
      %6684 = vmatpush.bf16.msra.mxu0 %v5988
      %6685 = vmatpush.bf16.msra.mxu0 %v5972
      %6686 = vmatpush.bf16.msra.mxu0 %v5956
      %6687 = vmatpush.bf16.msra.mxu0 %v5940
      %6688 = vmatmul.bf16.gmra.mxu0 %v4063
      %v6689 = vpop.f32.mrf.mxu0
      %v6690 = vadd.f32 %v6676, %v6689
      %v6691 = vpop.f32.mrf.mxu0
      %v6692 = vadd.f32 %v6678, %v6691
      %6693 = vdwg.mxu0
      %6694 = vmatpush.bf16.msra.mxu0 0
      %6695 = vmatpush.bf16.msra.mxu0 0
      %6696 = vmatpush.bf16.msra.mxu0 0
      %6697 = vmatpush.bf16.msra.mxu0 0
      %6698 = vmatpush.bf16.msra.mxu0 0
      %6699 = vmatpush.bf16.msra.mxu0 0
      %6700 = vmatpush.bf16.msra.mxu0 0
      %6701 = vmatpush.bf16.msra.mxu0 %v6068
      %6702 = vmatmul.bf16.gmra.mxu0 %v6482
      %v6703 = vpop.f32.mrf.mxu0
      %v6704 = vadd.f32 %v6690, %v6703
      %v6705 = vpop.f32.mrf.mxu0
      %v6706 = vadd.f32 %v6692, %v6705
      %6707 = vdwg.mxu0
      %6708 = vmatpush.bf16.msra.mxu0 %v5797
      %6709 = vmatpush.bf16.msra.mxu0 %v5781
      %6710 = vmatpush.bf16.msra.mxu0 %v5765
      %6711 = vmatpush.bf16.msra.mxu0 %v5749
      %6712 = vmatpush.bf16.msra.mxu0 %v5733
      %6713 = vmatpush.bf16.msra.mxu0 %v5717
      %6714 = vmatpush.bf16.msra.mxu0 %v5701
      %6715 = vmatpush.bf16.msra.mxu0 %v5685
      %6716 = vmatmul.bf16.gmra.mxu0 %v4061
      %v6717 = vpop.f32.mrf.mxu0
      %v6718 = vadd.f32 %v4469, %v6717
      %v6719 = vpop.f32.mrf.mxu0
      %v6720 = vadd.f32 %v4469, %v6719
      %6721 = vdwg.mxu0
      %6722 = vmatpush.bf16.msra.mxu0 %v5925
      %6723 = vmatpush.bf16.msra.mxu0 %v5909
      %6724 = vmatpush.bf16.msra.mxu0 %v5893
      %6725 = vmatpush.bf16.msra.mxu0 %v5877
      %6726 = vmatpush.bf16.msra.mxu0 %v5861
      %6727 = vmatpush.bf16.msra.mxu0 %v5845
      %6728 = vmatpush.bf16.msra.mxu0 %v5829
      %6729 = vmatpush.bf16.msra.mxu0 %v5813
      %6730 = vmatmul.bf16.gmra.mxu0 %v4062
      %v6731 = vpop.f32.mrf.mxu0
      %v6732 = vadd.f32 %v6718, %v6731
      %v6733 = vpop.f32.mrf.mxu0
      %v6734 = vadd.f32 %v6720, %v6733
      %6735 = vdwg.mxu0
      %6736 = vmatpush.bf16.msra.mxu0 %v6053
      %6737 = vmatpush.bf16.msra.mxu0 %v6037
      %6738 = vmatpush.bf16.msra.mxu0 %v6021
      %6739 = vmatpush.bf16.msra.mxu0 %v6005
      %6740 = vmatpush.bf16.msra.mxu0 %v5989
      %6741 = vmatpush.bf16.msra.mxu0 %v5973
      %6742 = vmatpush.bf16.msra.mxu0 %v5957
      %6743 = vmatpush.bf16.msra.mxu0 %v5941
      %6744 = vmatmul.bf16.gmra.mxu0 %v4063
      %v6745 = vpop.f32.mrf.mxu0
      %v6746 = vadd.f32 %v6732, %v6745
      %v6747 = vpop.f32.mrf.mxu0
      %v6748 = vadd.f32 %v6734, %v6747
      %6749 = vdwg.mxu0
      %6750 = vmatpush.bf16.msra.mxu0 0
      %6751 = vmatpush.bf16.msra.mxu0 0
      %6752 = vmatpush.bf16.msra.mxu0 0
      %6753 = vmatpush.bf16.msra.mxu0 0
      %6754 = vmatpush.bf16.msra.mxu0 0
      %6755 = vmatpush.bf16.msra.mxu0 0
      %6756 = vmatpush.bf16.msra.mxu0 0
      %6757 = vmatpush.bf16.msra.mxu0 %v6069
      %6758 = vmatmul.bf16.gmra.mxu0 %v6482
      %v6759 = vpop.f32.mrf.mxu0
      %v6760 = vadd.f32 %v6746, %v6759
      %v6761 = vpop.f32.mrf.mxu0
      %v6762 = vadd.f32 %v6748, %v6761
      %6763 = vdwg.mxu0
      %6764 = vmatpush.bf16.msra.mxu0 %v5798
      %6765 = vmatpush.bf16.msra.mxu0 %v5782
      %6766 = vmatpush.bf16.msra.mxu0 %v5766
      %6767 = vmatpush.bf16.msra.mxu0 %v5750
      %6768 = vmatpush.bf16.msra.mxu0 %v5734
      %6769 = vmatpush.bf16.msra.mxu0 %v5718
      %6770 = vmatpush.bf16.msra.mxu0 %v5702
      %6771 = vmatpush.bf16.msra.mxu0 %v5686
      %6772 = vmatmul.bf16.gmra.mxu0 %v4061
      %v6773 = vpop.f32.mrf.mxu0
      %v6774 = vadd.f32 %v4470, %v6773
      %v6775 = vpop.f32.mrf.mxu0
      %v6776 = vadd.f32 %v4470, %v6775
      %6777 = vdwg.mxu0
      %6778 = vmatpush.bf16.msra.mxu0 %v5926
      %6779 = vmatpush.bf16.msra.mxu0 %v5910
      %6780 = vmatpush.bf16.msra.mxu0 %v5894
      %6781 = vmatpush.bf16.msra.mxu0 %v5878
      %6782 = vmatpush.bf16.msra.mxu0 %v5862
      %6783 = vmatpush.bf16.msra.mxu0 %v5846
      %6784 = vmatpush.bf16.msra.mxu0 %v5830
      %6785 = vmatpush.bf16.msra.mxu0 %v5814
      %6786 = vmatmul.bf16.gmra.mxu0 %v4062
      %v6787 = vpop.f32.mrf.mxu0
      %v6788 = vadd.f32 %v6774, %v6787
      %v6789 = vpop.f32.mrf.mxu0
      %v6790 = vadd.f32 %v6776, %v6789
      %6791 = vdwg.mxu0
      %6792 = vmatpush.bf16.msra.mxu0 %v6054
      %6793 = vmatpush.bf16.msra.mxu0 %v6038
      %6794 = vmatpush.bf16.msra.mxu0 %v6022
      %6795 = vmatpush.bf16.msra.mxu0 %v6006
      %6796 = vmatpush.bf16.msra.mxu0 %v5990
      %6797 = vmatpush.bf16.msra.mxu0 %v5974
      %6798 = vmatpush.bf16.msra.mxu0 %v5958
      %6799 = vmatpush.bf16.msra.mxu0 %v5942
      %6800 = vmatmul.bf16.gmra.mxu0 %v4063
      %v6801 = vpop.f32.mrf.mxu0
      %v6802 = vadd.f32 %v6788, %v6801
      %v6803 = vpop.f32.mrf.mxu0
      %v6804 = vadd.f32 %v6790, %v6803
      %6805 = vdwg.mxu0
      %6806 = vmatpush.bf16.msra.mxu0 0
      %6807 = vmatpush.bf16.msra.mxu0 0
      %6808 = vmatpush.bf16.msra.mxu0 0
      %6809 = vmatpush.bf16.msra.mxu0 0
      %6810 = vmatpush.bf16.msra.mxu0 0
      %6811 = vmatpush.bf16.msra.mxu0 0
      %6812 = vmatpush.bf16.msra.mxu0 0
      %6813 = vmatpush.bf16.msra.mxu0 %v6070
      %6814 = vmatmul.bf16.gmra.mxu0 %v6482
      %v6815 = vpop.f32.mrf.mxu0
      %v6816 = vadd.f32 %v6802, %v6815
      %v6817 = vpop.f32.mrf.mxu0
      %v6818 = vadd.f32 %v6804, %v6817
      %6819 = vdwg.mxu0
      %6820 = vmatpush.bf16.msra.mxu0 %v5799
      %6821 = vmatpush.bf16.msra.mxu0 %v5783
      %6822 = vmatpush.bf16.msra.mxu0 %v5767
      %6823 = vmatpush.bf16.msra.mxu0 %v5751
      %6824 = vmatpush.bf16.msra.mxu0 %v5735
      %6825 = vmatpush.bf16.msra.mxu0 %v5719
      %6826 = vmatpush.bf16.msra.mxu0 %v5703
      %6827 = vmatpush.bf16.msra.mxu0 %v5687
      %6828 = vmatmul.bf16.gmra.mxu0 %v4061
      %v6829 = vpop.f32.mrf.mxu0
      %v6830 = vadd.f32 %v4471, %v6829
      %v6831 = vpop.f32.mrf.mxu0
      %v6832 = vadd.f32 %v4471, %v6831
      %6833 = vdwg.mxu0
      %6834 = vmatpush.bf16.msra.mxu0 %v5927
      %6835 = vmatpush.bf16.msra.mxu0 %v5911
      %6836 = vmatpush.bf16.msra.mxu0 %v5895
      %6837 = vmatpush.bf16.msra.mxu0 %v5879
      %6838 = vmatpush.bf16.msra.mxu0 %v5863
      %6839 = vmatpush.bf16.msra.mxu0 %v5847
      %6840 = vmatpush.bf16.msra.mxu0 %v5831
      %6841 = vmatpush.bf16.msra.mxu0 %v5815
      %6842 = vmatmul.bf16.gmra.mxu0 %v4062
      %v6843 = vpop.f32.mrf.mxu0
      %v6844 = vadd.f32 %v6830, %v6843
      %v6845 = vpop.f32.mrf.mxu0
      %v6846 = vadd.f32 %v6832, %v6845
      %6847 = vdwg.mxu0
      %6848 = vmatpush.bf16.msra.mxu0 %v6055
      %6849 = vmatpush.bf16.msra.mxu0 %v6039
      %6850 = vmatpush.bf16.msra.mxu0 %v6023
      %6851 = vmatpush.bf16.msra.mxu0 %v6007
      %6852 = vmatpush.bf16.msra.mxu0 %v5991
      %6853 = vmatpush.bf16.msra.mxu0 %v5975
      %6854 = vmatpush.bf16.msra.mxu0 %v5959
      %6855 = vmatpush.bf16.msra.mxu0 %v5943
      %6856 = vmatmul.bf16.gmra.mxu0 %v4063
      %v6857 = vpop.f32.mrf.mxu0
      %v6858 = vadd.f32 %v6844, %v6857
      %v6859 = vpop.f32.mrf.mxu0
      %v6860 = vadd.f32 %v6846, %v6859
      %6861 = vdwg.mxu0
      %6862 = vmatpush.bf16.msra.mxu0 0
      %6863 = vmatpush.bf16.msra.mxu0 0
      %6864 = vmatpush.bf16.msra.mxu0 0
      %6865 = vmatpush.bf16.msra.mxu0 0
      %6866 = vmatpush.bf16.msra.mxu0 0
      %6867 = vmatpush.bf16.msra.mxu0 0
      %6868 = vmatpush.bf16.msra.mxu0 0
      %6869 = vmatpush.bf16.msra.mxu0 %v6071
      %6870 = vmatmul.bf16.gmra.mxu0 %v6482
      %v6871 = vpop.f32.mrf.mxu0
      %v6872 = vadd.f32 %v6858, %v6871
      %v6873 = vpop.f32.mrf.mxu0
      %v6874 = vadd.f32 %v6860, %v6873
      %6875 = vdwg.mxu0
      %6876 = vmatpush.bf16.msra.mxu0 %v5800
      %6877 = vmatpush.bf16.msra.mxu0 %v5784
      %6878 = vmatpush.bf16.msra.mxu0 %v5768
      %6879 = vmatpush.bf16.msra.mxu0 %v5752
      %6880 = vmatpush.bf16.msra.mxu0 %v5736
      %6881 = vmatpush.bf16.msra.mxu0 %v5720
      %6882 = vmatpush.bf16.msra.mxu0 %v5704
      %6883 = vmatpush.bf16.msra.mxu0 %v5688
      %6884 = vmatmul.bf16.gmra.mxu0 %v4061
      %v6885 = vpop.f32.mrf.mxu0
      %v6886 = vadd.f32 %v4472, %v6885
      %v6887 = vpop.f32.mrf.mxu0
      %v6888 = vadd.f32 %v4472, %v6887
      %6889 = vdwg.mxu0
      %6890 = vmatpush.bf16.msra.mxu0 %v5928
      %6891 = vmatpush.bf16.msra.mxu0 %v5912
      %6892 = vmatpush.bf16.msra.mxu0 %v5896
      %6893 = vmatpush.bf16.msra.mxu0 %v5880
      %6894 = vmatpush.bf16.msra.mxu0 %v5864
      %6895 = vmatpush.bf16.msra.mxu0 %v5848
      %6896 = vmatpush.bf16.msra.mxu0 %v5832
      %6897 = vmatpush.bf16.msra.mxu0 %v5816
      %6898 = vmatmul.bf16.gmra.mxu0 %v4062
      %v6899 = vpop.f32.mrf.mxu0
      %v6900 = vadd.f32 %v6886, %v6899
      %v6901 = vpop.f32.mrf.mxu0
      %v6902 = vadd.f32 %v6888, %v6901
      %6903 = vdwg.mxu0
      %6904 = vmatpush.bf16.msra.mxu0 %v6056
      %6905 = vmatpush.bf16.msra.mxu0 %v6040
      %6906 = vmatpush.bf16.msra.mxu0 %v6024
      %6907 = vmatpush.bf16.msra.mxu0 %v6008
      %6908 = vmatpush.bf16.msra.mxu0 %v5992
      %6909 = vmatpush.bf16.msra.mxu0 %v5976
      %6910 = vmatpush.bf16.msra.mxu0 %v5960
      %6911 = vmatpush.bf16.msra.mxu0 %v5944
      %6912 = vmatmul.bf16.gmra.mxu0 %v4063
      %v6913 = vpop.f32.mrf.mxu0
      %v6914 = vadd.f32 %v6900, %v6913
      %v6915 = vpop.f32.mrf.mxu0
      %v6916 = vadd.f32 %v6902, %v6915
      %6917 = vdwg.mxu0
      %6918 = vmatpush.bf16.msra.mxu0 0
      %6919 = vmatpush.bf16.msra.mxu0 0
      %6920 = vmatpush.bf16.msra.mxu0 0
      %6921 = vmatpush.bf16.msra.mxu0 0
      %6922 = vmatpush.bf16.msra.mxu0 0
      %6923 = vmatpush.bf16.msra.mxu0 0
      %6924 = vmatpush.bf16.msra.mxu0 0
      %6925 = vmatpush.bf16.msra.mxu0 %v6072
      %6926 = vmatmul.bf16.gmra.mxu0 %v6482
      %v6927 = vpop.f32.mrf.mxu0
      %v6928 = vadd.f32 %v6914, %v6927
      %v6929 = vpop.f32.mrf.mxu0
      %v6930 = vadd.f32 %v6916, %v6929
      %6931 = vdwg.mxu0
      %6932 = vmatpush.bf16.msra.mxu0 %v5801
      %6933 = vmatpush.bf16.msra.mxu0 %v5785
      %6934 = vmatpush.bf16.msra.mxu0 %v5769
      %6935 = vmatpush.bf16.msra.mxu0 %v5753
      %6936 = vmatpush.bf16.msra.mxu0 %v5737
      %6937 = vmatpush.bf16.msra.mxu0 %v5721
      %6938 = vmatpush.bf16.msra.mxu0 %v5705
      %6939 = vmatpush.bf16.msra.mxu0 %v5689
      %6940 = vmatmul.bf16.gmra.mxu0 %v4061
      %v6941 = vpop.f32.mrf.mxu0
      %v6942 = vadd.f32 %v4473, %v6941
      %v6943 = vpop.f32.mrf.mxu0
      %v6944 = vadd.f32 %v4473, %v6943
      %6945 = vdwg.mxu0
      %6946 = vmatpush.bf16.msra.mxu0 %v5929
      %6947 = vmatpush.bf16.msra.mxu0 %v5913
      %6948 = vmatpush.bf16.msra.mxu0 %v5897
      %6949 = vmatpush.bf16.msra.mxu0 %v5881
      %6950 = vmatpush.bf16.msra.mxu0 %v5865
      %6951 = vmatpush.bf16.msra.mxu0 %v5849
      %6952 = vmatpush.bf16.msra.mxu0 %v5833
      %6953 = vmatpush.bf16.msra.mxu0 %v5817
      %6954 = vmatmul.bf16.gmra.mxu0 %v4062
      %v6955 = vpop.f32.mrf.mxu0
      %v6956 = vadd.f32 %v6942, %v6955
      %v6957 = vpop.f32.mrf.mxu0
      %v6958 = vadd.f32 %v6944, %v6957
      %6959 = vdwg.mxu0
      %6960 = vmatpush.bf16.msra.mxu0 %v6057
      %6961 = vmatpush.bf16.msra.mxu0 %v6041
      %6962 = vmatpush.bf16.msra.mxu0 %v6025
      %6963 = vmatpush.bf16.msra.mxu0 %v6009
      %6964 = vmatpush.bf16.msra.mxu0 %v5993
      %6965 = vmatpush.bf16.msra.mxu0 %v5977
      %6966 = vmatpush.bf16.msra.mxu0 %v5961
      %6967 = vmatpush.bf16.msra.mxu0 %v5945
      %6968 = vmatmul.bf16.gmra.mxu0 %v4063
      %v6969 = vpop.f32.mrf.mxu0
      %v6970 = vadd.f32 %v6956, %v6969
      %v6971 = vpop.f32.mrf.mxu0
      %v6972 = vadd.f32 %v6958, %v6971
      %6973 = vdwg.mxu0
      %6974 = vmatpush.bf16.msra.mxu0 0
      %6975 = vmatpush.bf16.msra.mxu0 0
      %6976 = vmatpush.bf16.msra.mxu0 0
      %6977 = vmatpush.bf16.msra.mxu0 0
      %6978 = vmatpush.bf16.msra.mxu0 0
      %6979 = vmatpush.bf16.msra.mxu0 0
      %6980 = vmatpush.bf16.msra.mxu0 0
      %6981 = vmatpush.bf16.msra.mxu0 %v6073
      %6982 = vmatmul.bf16.gmra.mxu0 %v6482
      %v6983 = vpop.f32.mrf.mxu0
      %v6984 = vadd.f32 %v6970, %v6983
      %v6985 = vpop.f32.mrf.mxu0
      %v6986 = vadd.f32 %v6972, %v6985
      %6987 = vdwg.mxu0
      %6988 = vmatpush.bf16.msra.mxu0 %v5802
      %6989 = vmatpush.bf16.msra.mxu0 %v5786
      %6990 = vmatpush.bf16.msra.mxu0 %v5770
      %6991 = vmatpush.bf16.msra.mxu0 %v5754
      %6992 = vmatpush.bf16.msra.mxu0 %v5738
      %6993 = vmatpush.bf16.msra.mxu0 %v5722
      %6994 = vmatpush.bf16.msra.mxu0 %v5706
      %6995 = vmatpush.bf16.msra.mxu0 %v5690
      %6996 = vmatmul.bf16.gmra.mxu0 %v4061
      %v6997 = vpop.f32.mrf.mxu0
      %v6998 = vadd.f32 %v4474, %v6997
      %v6999 = vpop.f32.mrf.mxu0
      %v7000 = vadd.f32 %v4474, %v6999
      %7001 = vdwg.mxu0
      %7002 = vmatpush.bf16.msra.mxu0 %v5930
      %7003 = vmatpush.bf16.msra.mxu0 %v5914
      %7004 = vmatpush.bf16.msra.mxu0 %v5898
      %7005 = vmatpush.bf16.msra.mxu0 %v5882
      %7006 = vmatpush.bf16.msra.mxu0 %v5866
      %7007 = vmatpush.bf16.msra.mxu0 %v5850
      %7008 = vmatpush.bf16.msra.mxu0 %v5834
      %7009 = vmatpush.bf16.msra.mxu0 %v5818
      %7010 = vmatmul.bf16.gmra.mxu0 %v4062
      %v7011 = vpop.f32.mrf.mxu0
      %v7012 = vadd.f32 %v6998, %v7011
      %v7013 = vpop.f32.mrf.mxu0
      %v7014 = vadd.f32 %v7000, %v7013
      %7015 = vdwg.mxu0
      %7016 = vmatpush.bf16.msra.mxu0 %v6058
      %7017 = vmatpush.bf16.msra.mxu0 %v6042
      %7018 = vmatpush.bf16.msra.mxu0 %v6026
      %7019 = vmatpush.bf16.msra.mxu0 %v6010
      %7020 = vmatpush.bf16.msra.mxu0 %v5994
      %7021 = vmatpush.bf16.msra.mxu0 %v5978
      %7022 = vmatpush.bf16.msra.mxu0 %v5962
      %7023 = vmatpush.bf16.msra.mxu0 %v5946
      %7024 = vmatmul.bf16.gmra.mxu0 %v4063
      %v7025 = vpop.f32.mrf.mxu0
      %v7026 = vadd.f32 %v7012, %v7025
      %v7027 = vpop.f32.mrf.mxu0
      %v7028 = vadd.f32 %v7014, %v7027
      %7029 = vdwg.mxu0
      %7030 = vmatpush.bf16.msra.mxu0 0
      %7031 = vmatpush.bf16.msra.mxu0 0
      %7032 = vmatpush.bf16.msra.mxu0 0
      %7033 = vmatpush.bf16.msra.mxu0 0
      %7034 = vmatpush.bf16.msra.mxu0 0
      %7035 = vmatpush.bf16.msra.mxu0 0
      %7036 = vmatpush.bf16.msra.mxu0 0
      %7037 = vmatpush.bf16.msra.mxu0 %v6074
      %7038 = vmatmul.bf16.gmra.mxu0 %v6482
      %v7039 = vpop.f32.mrf.mxu0
      %v7040 = vadd.f32 %v7026, %v7039
      %v7041 = vpop.f32.mrf.mxu0
      %v7042 = vadd.f32 %v7028, %v7041
      %7043 = vdwg.mxu0
      %7044 = vmatpush.bf16.msra.mxu0 %v5803
      %7045 = vmatpush.bf16.msra.mxu0 %v5787
      %7046 = vmatpush.bf16.msra.mxu0 %v5771
      %7047 = vmatpush.bf16.msra.mxu0 %v5755
      %7048 = vmatpush.bf16.msra.mxu0 %v5739
      %7049 = vmatpush.bf16.msra.mxu0 %v5723
      %7050 = vmatpush.bf16.msra.mxu0 %v5707
      %7051 = vmatpush.bf16.msra.mxu0 %v5691
      %7052 = vmatmul.bf16.gmra.mxu0 %v4061
      %v7053 = vpop.f32.mrf.mxu0
      %v7054 = vadd.f32 %v4475, %v7053
      %v7055 = vpop.f32.mrf.mxu0
      %v7056 = vadd.f32 %v4475, %v7055
      %7057 = vdwg.mxu0
      %7058 = vmatpush.bf16.msra.mxu0 %v5931
      %7059 = vmatpush.bf16.msra.mxu0 %v5915
      %7060 = vmatpush.bf16.msra.mxu0 %v5899
      %7061 = vmatpush.bf16.msra.mxu0 %v5883
      %7062 = vmatpush.bf16.msra.mxu0 %v5867
      %7063 = vmatpush.bf16.msra.mxu0 %v5851
      %7064 = vmatpush.bf16.msra.mxu0 %v5835
      %7065 = vmatpush.bf16.msra.mxu0 %v5819
      %7066 = vmatmul.bf16.gmra.mxu0 %v4062
      %v7067 = vpop.f32.mrf.mxu0
      %v7068 = vadd.f32 %v7054, %v7067
      %v7069 = vpop.f32.mrf.mxu0
      %v7070 = vadd.f32 %v7056, %v7069
      %7071 = vdwg.mxu0
      %7072 = vmatpush.bf16.msra.mxu0 %v6059
      %7073 = vmatpush.bf16.msra.mxu0 %v6043
      %7074 = vmatpush.bf16.msra.mxu0 %v6027
      %7075 = vmatpush.bf16.msra.mxu0 %v6011
      %7076 = vmatpush.bf16.msra.mxu0 %v5995
      %7077 = vmatpush.bf16.msra.mxu0 %v5979
      %7078 = vmatpush.bf16.msra.mxu0 %v5963
      %7079 = vmatpush.bf16.msra.mxu0 %v5947
      %7080 = vmatmul.bf16.gmra.mxu0 %v4063
      %v7081 = vpop.f32.mrf.mxu0
      %v7082 = vadd.f32 %v7068, %v7081
      %v7083 = vpop.f32.mrf.mxu0
      %v7084 = vadd.f32 %v7070, %v7083
      %7085 = vdwg.mxu0
      %7086 = vmatpush.bf16.msra.mxu0 0
      %7087 = vmatpush.bf16.msra.mxu0 0
      %7088 = vmatpush.bf16.msra.mxu0 0
      %7089 = vmatpush.bf16.msra.mxu0 0
      %7090 = vmatpush.bf16.msra.mxu0 0
      %7091 = vmatpush.bf16.msra.mxu0 0
      %7092 = vmatpush.bf16.msra.mxu0 0
      %7093 = vmatpush.bf16.msra.mxu0 %v6075
      %7094 = vmatmul.bf16.gmra.mxu0 %v6482
      %v7095 = vpop.f32.mrf.mxu0
      %v7096 = vadd.f32 %v7082, %v7095
      %v7097 = vpop.f32.mrf.mxu0
      %v7098 = vadd.f32 %v7084, %v7097
      %7099 = vdwg.mxu0
      %7100 = vmatpush.bf16.msra.mxu0 %v5804
      %7101 = vmatpush.bf16.msra.mxu0 %v5788
      %7102 = vmatpush.bf16.msra.mxu0 %v5772
      %7103 = vmatpush.bf16.msra.mxu0 %v5756
      %7104 = vmatpush.bf16.msra.mxu0 %v5740
      %7105 = vmatpush.bf16.msra.mxu0 %v5724
      %7106 = vmatpush.bf16.msra.mxu0 %v5708
      %7107 = vmatpush.bf16.msra.mxu0 %v5692
      %7108 = vmatmul.bf16.gmra.mxu0 %v4061
      %v7109 = vpop.f32.mrf.mxu0
      %v7110 = vadd.f32 %v4476, %v7109
      %v7111 = vpop.f32.mrf.mxu0
      %v7112 = vadd.f32 %v4476, %v7111
      %7113 = vdwg.mxu0
      %7114 = vmatpush.bf16.msra.mxu0 %v5932
      %7115 = vmatpush.bf16.msra.mxu0 %v5916
      %7116 = vmatpush.bf16.msra.mxu0 %v5900
      %7117 = vmatpush.bf16.msra.mxu0 %v5884
      %7118 = vmatpush.bf16.msra.mxu0 %v5868
      %7119 = vmatpush.bf16.msra.mxu0 %v5852
      %7120 = vmatpush.bf16.msra.mxu0 %v5836
      %7121 = vmatpush.bf16.msra.mxu0 %v5820
      %7122 = vmatmul.bf16.gmra.mxu0 %v4062
      %v7123 = vpop.f32.mrf.mxu0
      %v7124 = vadd.f32 %v7110, %v7123
      %v7125 = vpop.f32.mrf.mxu0
      %v7126 = vadd.f32 %v7112, %v7125
      %7127 = vdwg.mxu0
      %7128 = vmatpush.bf16.msra.mxu0 %v6060
      %7129 = vmatpush.bf16.msra.mxu0 %v6044
      %7130 = vmatpush.bf16.msra.mxu0 %v6028
      %7131 = vmatpush.bf16.msra.mxu0 %v6012
      %7132 = vmatpush.bf16.msra.mxu0 %v5996
      %7133 = vmatpush.bf16.msra.mxu0 %v5980
      %7134 = vmatpush.bf16.msra.mxu0 %v5964
      %7135 = vmatpush.bf16.msra.mxu0 %v5948
      %7136 = vmatmul.bf16.gmra.mxu0 %v4063
      %v7137 = vpop.f32.mrf.mxu0
      %v7138 = vadd.f32 %v7124, %v7137
      %v7139 = vpop.f32.mrf.mxu0
      %v7140 = vadd.f32 %v7126, %v7139
      %7141 = vdwg.mxu0
      %7142 = vmatpush.bf16.msra.mxu0 0
      %7143 = vmatpush.bf16.msra.mxu0 0
      %7144 = vmatpush.bf16.msra.mxu0 0
      %7145 = vmatpush.bf16.msra.mxu0 0
      %7146 = vmatpush.bf16.msra.mxu0 0
      %7147 = vmatpush.bf16.msra.mxu0 0
      %7148 = vmatpush.bf16.msra.mxu0 0
      %7149 = vmatpush.bf16.msra.mxu0 %v6076
      %7150 = vmatmul.bf16.gmra.mxu0 %v6482
      %v7151 = vpop.f32.mrf.mxu0
      %v7152 = vadd.f32 %v7138, %v7151
      %v7153 = vpop.f32.mrf.mxu0
      %v7154 = vadd.f32 %v7140, %v7153
      %7155 = vdwg.mxu0
      %7156 = vmatpush.bf16.msra.mxu0 %v5805
      %7157 = vmatpush.bf16.msra.mxu0 %v5789
      %7158 = vmatpush.bf16.msra.mxu0 %v5773
      %7159 = vmatpush.bf16.msra.mxu0 %v5757
      %7160 = vmatpush.bf16.msra.mxu0 %v5741
      %7161 = vmatpush.bf16.msra.mxu0 %v5725
      %7162 = vmatpush.bf16.msra.mxu0 %v5709
      %7163 = vmatpush.bf16.msra.mxu0 %v5693
      %7164 = vmatmul.bf16.gmra.mxu0 %v4061
      %v7165 = vpop.f32.mrf.mxu0
      %v7166 = vadd.f32 %v4477, %v7165
      %v7167 = vpop.f32.mrf.mxu0
      %v7168 = vadd.f32 %v4477, %v7167
      %7169 = vdwg.mxu0
      %7170 = vmatpush.bf16.msra.mxu0 %v5933
      %7171 = vmatpush.bf16.msra.mxu0 %v5917
      %7172 = vmatpush.bf16.msra.mxu0 %v5901
      %7173 = vmatpush.bf16.msra.mxu0 %v5885
      %7174 = vmatpush.bf16.msra.mxu0 %v5869
      %7175 = vmatpush.bf16.msra.mxu0 %v5853
      %7176 = vmatpush.bf16.msra.mxu0 %v5837
      %7177 = vmatpush.bf16.msra.mxu0 %v5821
      %7178 = vmatmul.bf16.gmra.mxu0 %v4062
      %v7179 = vpop.f32.mrf.mxu0
      %v7180 = vadd.f32 %v7166, %v7179
      %v7181 = vpop.f32.mrf.mxu0
      %v7182 = vadd.f32 %v7168, %v7181
      %7183 = vdwg.mxu0
      %7184 = vmatpush.bf16.msra.mxu0 %v6061
      %7185 = vmatpush.bf16.msra.mxu0 %v6045
      %7186 = vmatpush.bf16.msra.mxu0 %v6029
      %7187 = vmatpush.bf16.msra.mxu0 %v6013
      %7188 = vmatpush.bf16.msra.mxu0 %v5997
      %7189 = vmatpush.bf16.msra.mxu0 %v5981
      %7190 = vmatpush.bf16.msra.mxu0 %v5965
      %7191 = vmatpush.bf16.msra.mxu0 %v5949
      %7192 = vmatmul.bf16.gmra.mxu0 %v4063
      %v7193 = vpop.f32.mrf.mxu0
      %v7194 = vadd.f32 %v7180, %v7193
      %v7195 = vpop.f32.mrf.mxu0
      %v7196 = vadd.f32 %v7182, %v7195
      %7197 = vdwg.mxu0
      %7198 = vmatpush.bf16.msra.mxu0 0
      %7199 = vmatpush.bf16.msra.mxu0 0
      %7200 = vmatpush.bf16.msra.mxu0 0
      %7201 = vmatpush.bf16.msra.mxu0 0
      %7202 = vmatpush.bf16.msra.mxu0 0
      %7203 = vmatpush.bf16.msra.mxu0 0
      %7204 = vmatpush.bf16.msra.mxu0 0
      %7205 = vmatpush.bf16.msra.mxu0 %v6077
      %7206 = vmatmul.bf16.gmra.mxu0 %v6482
      %v7207 = vpop.f32.mrf.mxu0
      %v7208 = vadd.f32 %v7194, %v7207
      %v7209 = vpop.f32.mrf.mxu0
      %v7210 = vadd.f32 %v7196, %v7209
      %7211 = vdwg.mxu0
      %7212 = vmatpush.bf16.msra.mxu0 %v5806
      %7213 = vmatpush.bf16.msra.mxu0 %v5790
      %7214 = vmatpush.bf16.msra.mxu0 %v5774
      %7215 = vmatpush.bf16.msra.mxu0 %v5758
      %7216 = vmatpush.bf16.msra.mxu0 %v5742
      %7217 = vmatpush.bf16.msra.mxu0 %v5726
      %7218 = vmatpush.bf16.msra.mxu0 %v5710
      %7219 = vmatpush.bf16.msra.mxu0 %v5694
      %7220 = vmatmul.bf16.gmra.mxu0 %v4061
      %v7221 = vpop.f32.mrf.mxu0
      %v7222 = vadd.f32 %v4478, %v7221
      %v7223 = vpop.f32.mrf.mxu0
      %v7224 = vadd.f32 %v4478, %v7223
      %7225 = vdwg.mxu0
      %7226 = vmatpush.bf16.msra.mxu0 %v5934
      %7227 = vmatpush.bf16.msra.mxu0 %v5918
      %7228 = vmatpush.bf16.msra.mxu0 %v5902
      %7229 = vmatpush.bf16.msra.mxu0 %v5886
      %7230 = vmatpush.bf16.msra.mxu0 %v5870
      %7231 = vmatpush.bf16.msra.mxu0 %v5854
      %7232 = vmatpush.bf16.msra.mxu0 %v5838
      %7233 = vmatpush.bf16.msra.mxu0 %v5822
      %7234 = vmatmul.bf16.gmra.mxu0 %v4062
      %v7235 = vpop.f32.mrf.mxu0
      %v7236 = vadd.f32 %v7222, %v7235
      %v7237 = vpop.f32.mrf.mxu0
      %v7238 = vadd.f32 %v7224, %v7237
      %7239 = vdwg.mxu0
      %7240 = vmatpush.bf16.msra.mxu0 %v6062
      %7241 = vmatpush.bf16.msra.mxu0 %v6046
      %7242 = vmatpush.bf16.msra.mxu0 %v6030
      %7243 = vmatpush.bf16.msra.mxu0 %v6014
      %7244 = vmatpush.bf16.msra.mxu0 %v5998
      %7245 = vmatpush.bf16.msra.mxu0 %v5982
      %7246 = vmatpush.bf16.msra.mxu0 %v5966
      %7247 = vmatpush.bf16.msra.mxu0 %v5950
      %7248 = vmatmul.bf16.gmra.mxu0 %v4063
      %v7249 = vpop.f32.mrf.mxu0
      %v7250 = vadd.f32 %v7236, %v7249
      %v7251 = vpop.f32.mrf.mxu0
      %v7252 = vadd.f32 %v7238, %v7251
      %7253 = vdwg.mxu0
      %7254 = vmatpush.bf16.msra.mxu0 0
      %7255 = vmatpush.bf16.msra.mxu0 0
      %7256 = vmatpush.bf16.msra.mxu0 0
      %7257 = vmatpush.bf16.msra.mxu0 0
      %7258 = vmatpush.bf16.msra.mxu0 0
      %7259 = vmatpush.bf16.msra.mxu0 0
      %7260 = vmatpush.bf16.msra.mxu0 0
      %7261 = vmatpush.bf16.msra.mxu0 %v6078
      %7262 = vmatmul.bf16.gmra.mxu0 %v6482
      %v7263 = vpop.f32.mrf.mxu0
      %v7264 = vadd.f32 %v7250, %v7263
      %v7265 = vpop.f32.mrf.mxu0
      %v7266 = vadd.f32 %v7252, %v7265
      %7267 = vdwg.mxu0
      %7268 = vmatpush.bf16.msra.mxu0 %v5807
      %7269 = vmatpush.bf16.msra.mxu0 %v5791
      %7270 = vmatpush.bf16.msra.mxu0 %v5775
      %7271 = vmatpush.bf16.msra.mxu0 %v5759
      %7272 = vmatpush.bf16.msra.mxu0 %v5743
      %7273 = vmatpush.bf16.msra.mxu0 %v5727
      %7274 = vmatpush.bf16.msra.mxu0 %v5711
      %7275 = vmatpush.bf16.msra.mxu0 %v5695
      %7276 = vmatmul.bf16.gmra.mxu0 %v4061
      %v7277 = vpop.f32.mrf.mxu0
      %v7278 = vadd.f32 %v4479, %v7277
      %v7279 = vpop.f32.mrf.mxu0
      %v7280 = vadd.f32 %v4479, %v7279
      %7281 = vdwg.mxu0
      %7282 = vmatpush.bf16.msra.mxu0 %v5935
      %7283 = vmatpush.bf16.msra.mxu0 %v5919
      %7284 = vmatpush.bf16.msra.mxu0 %v5903
      %7285 = vmatpush.bf16.msra.mxu0 %v5887
      %7286 = vmatpush.bf16.msra.mxu0 %v5871
      %7287 = vmatpush.bf16.msra.mxu0 %v5855
      %7288 = vmatpush.bf16.msra.mxu0 %v5839
      %7289 = vmatpush.bf16.msra.mxu0 %v5823
      %7290 = vmatmul.bf16.gmra.mxu0 %v4062
      %v7291 = vpop.f32.mrf.mxu0
      %v7292 = vadd.f32 %v7278, %v7291
      %v7293 = vpop.f32.mrf.mxu0
      %v7294 = vadd.f32 %v7280, %v7293
      %7295 = vdwg.mxu0
      %7296 = vmatpush.bf16.msra.mxu0 %v6063
      %7297 = vmatpush.bf16.msra.mxu0 %v6047
      %7298 = vmatpush.bf16.msra.mxu0 %v6031
      %7299 = vmatpush.bf16.msra.mxu0 %v6015
      %7300 = vmatpush.bf16.msra.mxu0 %v5999
      %7301 = vmatpush.bf16.msra.mxu0 %v5983
      %7302 = vmatpush.bf16.msra.mxu0 %v5967
      %7303 = vmatpush.bf16.msra.mxu0 %v5951
      %7304 = vmatmul.bf16.gmra.mxu0 %v4063
      %v7305 = vpop.f32.mrf.mxu0
      %v7306 = vadd.f32 %v7292, %v7305
      %v7307 = vpop.f32.mrf.mxu0
      %v7308 = vadd.f32 %v7294, %v7307
      %7309 = vdwg.mxu0
      %7310 = vmatpush.bf16.msra.mxu0 0
      %7311 = vmatpush.bf16.msra.mxu0 0
      %7312 = vmatpush.bf16.msra.mxu0 0
      %7313 = vmatpush.bf16.msra.mxu0 0
      %7314 = vmatpush.bf16.msra.mxu0 0
      %7315 = vmatpush.bf16.msra.mxu0 0
      %7316 = vmatpush.bf16.msra.mxu0 0
      %7317 = vmatpush.bf16.msra.mxu0 %v6079
      %7318 = vmatmul.bf16.gmra.mxu0 %v6482
      %v7319 = vpop.f32.mrf.mxu0
      %v7320 = vadd.f32 %v7306, %v7319
      %v7321 = vpop.f32.mrf.mxu0
      %v7322 = vadd.f32 %v7308, %v7321
      %7323 = vdwg.mxu0
      %7324 = vmatpush.bf16.msra.mxu0 %v5808
      %7325 = vmatpush.bf16.msra.mxu0 %v5792
      %7326 = vmatpush.bf16.msra.mxu0 %v5776
      %7327 = vmatpush.bf16.msra.mxu0 %v5760
      %7328 = vmatpush.bf16.msra.mxu0 %v5744
      %7329 = vmatpush.bf16.msra.mxu0 %v5728
      %7330 = vmatpush.bf16.msra.mxu0 %v5712
      %7331 = vmatpush.bf16.msra.mxu0 %v5696
      %7332 = vmatmul.bf16.gmra.mxu0 %v4061
      %v7333 = vpop.f32.mrf.mxu0
      %v7334 = vadd.f32 %v4480, %v7333
      %v7335 = vpop.f32.mrf.mxu0
      %v7336 = vadd.f32 %v4480, %v7335
      %7337 = vdwg.mxu0
      %7338 = vmatpush.bf16.msra.mxu0 %v5936
      %7339 = vmatpush.bf16.msra.mxu0 %v5920
      %7340 = vmatpush.bf16.msra.mxu0 %v5904
      %7341 = vmatpush.bf16.msra.mxu0 %v5888
      %7342 = vmatpush.bf16.msra.mxu0 %v5872
      %7343 = vmatpush.bf16.msra.mxu0 %v5856
      %7344 = vmatpush.bf16.msra.mxu0 %v5840
      %7345 = vmatpush.bf16.msra.mxu0 %v5824
      %7346 = vmatmul.bf16.gmra.mxu0 %v4062
      %v7347 = vpop.f32.mrf.mxu0
      %v7348 = vadd.f32 %v7334, %v7347
      %v7349 = vpop.f32.mrf.mxu0
      %v7350 = vadd.f32 %v7336, %v7349
      %7351 = vdwg.mxu0
      %7352 = vmatpush.bf16.msra.mxu0 %v6064
      %7353 = vmatpush.bf16.msra.mxu0 %v6048
      %7354 = vmatpush.bf16.msra.mxu0 %v6032
      %7355 = vmatpush.bf16.msra.mxu0 %v6016
      %7356 = vmatpush.bf16.msra.mxu0 %v6000
      %7357 = vmatpush.bf16.msra.mxu0 %v5984
      %7358 = vmatpush.bf16.msra.mxu0 %v5968
      %7359 = vmatpush.bf16.msra.mxu0 %v5952
      %7360 = vmatmul.bf16.gmra.mxu0 %v4063
      %v7361 = vpop.f32.mrf.mxu0
      %v7362 = vadd.f32 %v7348, %v7361
      %v7363 = vpop.f32.mrf.mxu0
      %v7364 = vadd.f32 %v7350, %v7363
      %7365 = vdwg.mxu0
      %7366 = vmatpush.bf16.msra.mxu0 0
      %7367 = vmatpush.bf16.msra.mxu0 0
      %7368 = vmatpush.bf16.msra.mxu0 0
      %7369 = vmatpush.bf16.msra.mxu0 0
      %7370 = vmatpush.bf16.msra.mxu0 0
      %7371 = vmatpush.bf16.msra.mxu0 0
      %7372 = vmatpush.bf16.msra.mxu0 0
      %7373 = vmatpush.bf16.msra.mxu0 %v6080
      %7374 = vmatmul.bf16.gmra.mxu0 %v6482
      %v7375 = vpop.f32.mrf.mxu0
      %v7376 = vadd.f32 %v7362, %v7375
      %v7377 = vpop.f32.mrf.mxu0
      %v7378 = vadd.f32 %v7364, %v7377
      %7379 = vdwg.mxu0
      %v7380 = vmax.f32 %v6536, 0.0
      %v7381 = vmax.f32 %v6592, 0.0
      %v7382 = vmax.f32 %v6648, 0.0
      %v7383 = vmax.f32 %v6704, 0.0
      %v7384 = vmax.f32 %v6760, 0.0
      %v7385 = vmax.f32 %v6816, 0.0
      %v7386 = vmax.f32 %v6872, 0.0
      %v7387 = vmax.f32 %v6928, 0.0
      %v7388 = vmax.f32 %v6984, 0.0
      %v7389 = vmax.f32 %v7040, 0.0
      %v7390 = vmax.f32 %v7096, 0.0
      %v7391 = vmax.f32 %v7152, 0.0
      %v7392 = vmax.f32 %v7208, 0.0
      %v7393 = vmax.f32 %v7264, 0.0
      %v7394 = vmax.f32 %v7320, 0.0
      %v7395 = vmax.f32 %v7376, 0.0
      %v7396 = vmax.f32 %v6538, 0.0
      %v7397 = vmax.f32 %v6594, 0.0
      %v7398 = vmax.f32 %v6650, 0.0
      %v7399 = vmax.f32 %v6706, 0.0
      %v7400 = vmax.f32 %v6762, 0.0
      %v7401 = vmax.f32 %v6818, 0.0
      %v7402 = vmax.f32 %v6874, 0.0
      %v7403 = vmax.f32 %v6930, 0.0
      %v7404 = vmax.f32 %v6986, 0.0
      %v7405 = vmax.f32 %v7042, 0.0
      %v7406 = vmax.f32 %v7098, 0.0
      %v7407 = vmax.f32 %v7154, 0.0
      %v7408 = vmax.f32 %v7210, 0.0
      %v7409 = vmax.f32 %v7266, 0.0
      %v7410 = vmax.f32 %v7322, 0.0
      %v7411 = vmax.f32 %v7378, 0.0
      %v7412 = vpack.c.bf16 %v7396, %v7380
      %v7413 = vpack.c.bf16 %v7397, %v7381
      %v7414 = vpack.c.bf16 %v7398, %v7382
      %v7415 = vpack.c.bf16 %v7399, %v7383
      %v7416 = vpack.c.bf16 %v7400, %v7384
      %v7417 = vpack.c.bf16 %v7401, %v7385
      %v7418 = vpack.c.bf16 %v7402, %v7386
      %v7419 = vpack.c.bf16 %v7403, %v7387
      %v7420 = vpack.c.bf16 %v7404, %v7388
      %v7421 = vpack.c.bf16 %v7405, %v7389
      %v7422 = vpack.c.bf16 %v7406, %v7390
      %v7423 = vpack.c.bf16 %v7407, %v7391
      %v7424 = vpack.c.bf16 %v7408, %v7392
      %v7425 = vpack.c.bf16 %v7409, %v7393
      %v7426 = vpack.c.bf16 %v7410, %v7394
      %v7427 = vpack.c.bf16 %v7411, %v7395
      %v7428 = vld [vmem:[%s5] sm:$0xff]
      %v7429 = vld [vmem:[%s5 + $0x8] sm:$0xff]
      %v7430 = vld [vmem:[%s5 + $0x10] sm:$0xff]
      %v7431 = vld [vmem:[%s5 + $0x18] sm:$0xff]
      %v7432 = vld [vmem:[%s5 + $0x20] sm:$0xff]
      %v7433 = vld [vmem:[%s5 + $0x28] sm:$0xff]
      %v7434 = vld [vmem:[%s5 + $0x30] sm:$0xff]
      %v7435 = vld [vmem:[%s5 + $0x38] sm:$0xff]
      %v7436 = vld [vmem:[%s5 + $0x40] sm:$0xff]
      %v7437 = vld [vmem:[%s5 + $0x48] sm:$0xff]
      %v7438 = vld [vmem:[%s5 + $0x50] sm:$0xff]
      %v7439 = vld [vmem:[%s5 + $0x58] sm:$0xff]
      %v7440 = vld [vmem:[%s5 + $0x60] sm:$0xff]
      %v7441 = vld [vmem:[%s5 + $0x68] sm:$0xff]
      %v7442 = vld [vmem:[%s5 + $0x70] sm:$0xff]
      %v7443 = vld [vmem:[%s5 + $0x78] sm:$0xff]
      %v7444 = vld [vmem:[%s5 + $0x80] sm:$0xff]
      %v7445 = vld [vmem:[%s5 + $0x88] sm:$0xff]
      %v7446 = vld [vmem:[%s5 + $0x90] sm:$0xff]
      %v7447 = vld [vmem:[%s5 + $0x98] sm:$0xff]
      %v7448 = vld [vmem:[%s5 + $0xa0] sm:$0xff]
      %v7449 = vld [vmem:[%s5 + $0xa8] sm:$0xff]
      %v7450 = vld [vmem:[%s5 + $0xb0] sm:$0xff]
      %v7451 = vld [vmem:[%s5 + $0xb8] sm:$0xff]
      %v7452 = vld [vmem:[%s5 + $0xc0] sm:$0xff]
      %v7453 = vld [vmem:[%s5 + $0xc8] sm:$0xff]
      %v7454 = vld [vmem:[%s5 + $0xd0] sm:$0xff]
      %v7455 = vld [vmem:[%s5 + $0xd8] sm:$0xff]
      %v7456 = vld [vmem:[%s5 + $0xe0] sm:$0xff]
      %v7457 = vld [vmem:[%s5 + $0xe8] sm:$0xff]
      %v7458 = vld [vmem:[%s5 + $0xf0] sm:$0xff]
      %v7459 = vld [vmem:[%s5 + $0xf8] sm:$0xff]
      %v7460 = vld [vmem:[%s5 + $0x100] sm:$0xff]
      %v7461 = vld [vmem:[%s5 + $0x108] sm:$0xff]
      %v7462 = vld [vmem:[%s5 + $0x110] sm:$0xff]
      %v7463 = vld [vmem:[%s5 + $0x118] sm:$0xff]
      %v7464 = vld [vmem:[%s5 + $0x120] sm:$0xff]
      %v7465 = vld [vmem:[%s5 + $0x128] sm:$0xff]
      %v7466 = vld [vmem:[%s5 + $0x130] sm:$0xff]
      %v7467 = vld [vmem:[%s5 + $0x138] sm:$0xff]
      %v7468 = vld [vmem:[%s5 + $0x140] sm:$0xff]
      %v7469 = vld [vmem:[%s5 + $0x148] sm:$0xff]
      %v7470 = vld [vmem:[%s5 + $0x150] sm:$0xff]
      %v7471 = vld [vmem:[%s5 + $0x158] sm:$0xff]
      %v7472 = vld [vmem:[%s5 + $0x160] sm:$0xff]
      %v7473 = vld [vmem:[%s5 + $0x168] sm:$0xff]
      %v7474 = vld [vmem:[%s5 + $0x170] sm:$0xff]
      %v7475 = vld [vmem:[%s5 + $0x178] sm:$0xff]
      %v7476 = vld [vmem:[%s5 + $0x180] sm:$0xff]
      %v7477 = vld [vmem:[%s5 + $0x188] sm:$0xff]
      %v7478 = vld [vmem:[%s5 + $0x190] sm:$0xff]
      %v7479 = vld [vmem:[%s5 + $0x198] sm:$0xff]
      %v7480 = vld [vmem:[%s5 + $0x1a0] sm:$0xff]
      %v7481 = vld [vmem:[%s5 + $0x1a8] sm:$0xff]
      %v7482 = vld [vmem:[%s5 + $0x1b0] sm:$0xff]
      %v7483 = vld [vmem:[%s5 + $0x1b8] sm:$0xff]
      %v7484 = vld [vmem:[%s5 + $0x1c0] sm:$0xff]
      %v7485 = vld [vmem:[%s5 + $0x1c8] sm:$0xff]
      %v7486 = vld [vmem:[%s5 + $0x1d0] sm:$0xff]
      %v7487 = vld [vmem:[%s5 + $0x1d8] sm:$0xff]
      %v7488 = vld [vmem:[%s5 + $0x1e0] sm:$0xff]
      %v7489 = vld [vmem:[%s5 + $0x1e8] sm:$0xff]
      %v7490 = vld [vmem:[%s5 + $0x1f0] sm:$0xff]
      %v7491 = vld [vmem:[%s5 + $0x1f8] sm:$0xff]
      %v7492 = vld [vmem:[%s5 + $0x200] sm:$0xff]
      %v7493 = vld [vmem:[%s5 + $0x208] sm:$0xff]
      %v7494 = vld [vmem:[%s5 + $0x210] sm:$0xff]
      %v7495 = vld [vmem:[%s5 + $0x218] sm:$0xff]
      %v7496 = vld [vmem:[%s5 + $0x220] sm:$0xff]
      %v7497 = vld [vmem:[%s5 + $0x228] sm:$0xff]
      %v7498 = vld [vmem:[%s5 + $0x230] sm:$0xff]
      %v7499 = vld [vmem:[%s5 + $0x238] sm:$0xff]
      %v7500 = vld [vmem:[%s5 + $0x240] sm:$0xff]
      %v7501 = vld [vmem:[%s5 + $0x248] sm:$0xff]
      %v7502 = vld [vmem:[%s5 + $0x250] sm:$0xff]
      %v7503 = vld [vmem:[%s5 + $0x258] sm:$0xff]
      %v7504 = vld [vmem:[%s5 + $0x260] sm:$0xff]
      %v7505 = vld [vmem:[%s5 + $0x268] sm:$0xff]
      %v7506 = vld [vmem:[%s5 + $0x270] sm:$0xff]
      %v7507 = vld [vmem:[%s5 + $0x278] sm:$0xff]
      %v7508 = vld [vmem:[%s5 + $0x280] sm:$0xff]
      %v7509 = vld [vmem:[%s5 + $0x288] sm:$0xff]
      %v7510 = vld [vmem:[%s5 + $0x290] sm:$0xff]
      %v7511 = vld [vmem:[%s5 + $0x298] sm:$0xff]
      %v7512 = vld [vmem:[%s5 + $0x2a0] sm:$0xff]
      %v7513 = vld [vmem:[%s5 + $0x2a8] sm:$0xff]
      %v7514 = vld [vmem:[%s5 + $0x2b0] sm:$0xff]
      %v7515 = vld [vmem:[%s5 + $0x2b8] sm:$0xff]
      %v7516 = vld [vmem:[%s5 + $0x2c0] sm:$0xff]
      %v7517 = vld [vmem:[%s5 + $0x2c8] sm:$0xff]
      %v7518 = vld [vmem:[%s5 + $0x2d0] sm:$0xff]
      %v7519 = vld [vmem:[%s5 + $0x2d8] sm:$0xff]
      %v7520 = vld [vmem:[%s5 + $0x2e0] sm:$0xff]
      %v7521 = vld [vmem:[%s5 + $0x2e8] sm:$0xff]
      %v7522 = vld [vmem:[%s5 + $0x2f0] sm:$0xff]
      %v7523 = vld [vmem:[%s5 + $0x2f8] sm:$0xff]
      %v7524 = vld [vmem:[%s5 + $0x300] sm:$0xff]
      %v7525 = vld [vmem:[%s5 + $0x308] sm:$0xff]
      %v7526 = vld [vmem:[%s5 + $0x310] sm:$0xff]
      %v7527 = vld [vmem:[%s5 + $0x318] sm:$0xff]
      %v7528 = vld [vmem:[%s5 + $0x320] sm:$0xff]
      %v7529 = vld [vmem:[%s5 + $0x328] sm:$0xff]
      %v7530 = vld [vmem:[%s5 + $0x330] sm:$0xff]
      %v7531 = vld [vmem:[%s5 + $0x338] sm:$0xff]
      %v7532 = vld [vmem:[%s5 + $0x340] sm:$0xff]
      %v7533 = vld [vmem:[%s5 + $0x348] sm:$0xff]
      %v7534 = vld [vmem:[%s5 + $0x350] sm:$0xff]
      %v7535 = vld [vmem:[%s5 + $0x358] sm:$0xff]
      %v7536 = vld [vmem:[%s5 + $0x360] sm:$0xff]
      %v7537 = vld [vmem:[%s5 + $0x368] sm:$0xff]
      %v7538 = vld [vmem:[%s5 + $0x370] sm:$0xff]
      %v7539 = vld [vmem:[%s5 + $0x378] sm:$0xff]
      %v7540 = vld [vmem:[%s5 + $0x380] sm:$0xff]
      %v7541 = vld [vmem:[%s5 + $0x388] sm:$0xff]
      %v7542 = vld [vmem:[%s5 + $0x390] sm:$0xff]
      %v7543 = vld [vmem:[%s5 + $0x398] sm:$0xff]
      %v7544 = vld [vmem:[%s5 + $0x3a0] sm:$0xff]
      %v7545 = vld [vmem:[%s5 + $0x3a8] sm:$0xff]
      %v7546 = vld [vmem:[%s5 + $0x3b0] sm:$0xff]
      %v7547 = vld [vmem:[%s5 + $0x3b8] sm:$0xff]
      %v7548 = vld [vmem:[%s5 + $0x3c0] sm:$0xff]
      %v7549 = vld [vmem:[%s5 + $0x3c8] sm:$0xff]
      %v7550 = vld [vmem:[%s5 + $0x3d0] sm:$0xff]
      %v7551 = vld [vmem:[%s5 + $0x3d8] sm:$0xff]
      %v7552 = vld [vmem:[%s5 + $0x3e0] sm:$0xff]
      %v7553 = vld [vmem:[%s5 + $0x3e8] sm:$0xff]
      %v7554 = vld [vmem:[%s5 + $0x3f0] sm:$0xff]
      %v7555 = vld [vmem:[%s5 + $0x3f8] sm:$0xff]
      %v7556 = vld [vmem:[%s5 + $0x400] sm:$0xff]
      %v7557 = vld [vmem:[%s5 + $0x408] sm:$0xff]
      %v7558 = vld [vmem:[%s5 + $0x410] sm:$0xff]
      %v7559 = vld [vmem:[%s5 + $0x418] sm:$0xff]
      %v7560 = vld [vmem:[%s5 + $0x420] sm:$0xff]
      %v7561 = vld [vmem:[%s5 + $0x428] sm:$0xff]
      %v7562 = vld [vmem:[%s5 + $0x430] sm:$0xff]
      %v7563 = vld [vmem:[%s5 + $0x438] sm:$0xff]
      %v7564 = vld [vmem:[%s5 + $0x440] sm:$0xff]
      %v7565 = vld [vmem:[%s5 + $0x448] sm:$0xff]
      %v7566 = vld [vmem:[%s5 + $0x450] sm:$0xff]
      %v7567 = vld [vmem:[%s5 + $0x458] sm:$0xff]
      %v7568 = vld [vmem:[%s5 + $0x460] sm:$0xff]
      %v7569 = vld [vmem:[%s5 + $0x468] sm:$0xff]
      %v7570 = vld [vmem:[%s5 + $0x470] sm:$0xff]
      %v7571 = vld [vmem:[%s5 + $0x478] sm:$0xff]
      %v7572 = vld [vmem:[%s5 + $0x480] sm:$0xff]
      %v7573 = vld [vmem:[%s5 + $0x488] sm:$0xff]
      %v7574 = vld [vmem:[%s5 + $0x490] sm:$0xff]
      %v7575 = vld [vmem:[%s5 + $0x498] sm:$0xff]
      %v7576 = vld [vmem:[%s5 + $0x4a0] sm:$0xff]
      %v7577 = vld [vmem:[%s5 + $0x4a8] sm:$0xff]
      %v7578 = vld [vmem:[%s5 + $0x4b0] sm:$0xff]
      %v7579 = vld [vmem:[%s5 + $0x4b8] sm:$0xff]
      %v7580 = vld [vmem:[%s5 + $0x4c0] sm:$0xff]
      %v7581 = vld [vmem:[%s5 + $0x4c8] sm:$0xff]
      %v7582 = vld [vmem:[%s5 + $0x4d0] sm:$0xff]
      %v7583 = vld [vmem:[%s5 + $0x4d8] sm:$0xff]
      %v7584 = vld [vmem:[%s5 + $0x4e0] sm:$0xff]
      %v7585 = vld [vmem:[%s5 + $0x4e8] sm:$0xff]
      %v7586 = vld [vmem:[%s5 + $0x4f0] sm:$0xff]
      %v7587 = vld [vmem:[%s5 + $0x4f8] sm:$0xff]
      %v7588 = vld [vmem:[%s5 + $0x500] sm:$0xff]
      %v7589 = vld [vmem:[%s5 + $0x508] sm:$0xff]
      %v7590 = vld [vmem:[%s5 + $0x510] sm:$0xff]
      %v7591 = vld [vmem:[%s5 + $0x518] sm:$0xff]
      %v7592 = vld [vmem:[%s5 + $0x520] sm:$0xff]
      %v7593 = vld [vmem:[%s5 + $0x528] sm:$0xff]
      %v7594 = vld [vmem:[%s5 + $0x530] sm:$0xff]
      %v7595 = vld [vmem:[%s5 + $0x538] sm:$0xff]
      %v7596 = vld [vmem:[%s5 + $0x540] sm:$0xff]
      %v7597 = vld [vmem:[%s5 + $0x548] sm:$0xff]
      %v7598 = vld [vmem:[%s5 + $0x550] sm:$0xff]
      %v7599 = vld [vmem:[%s5 + $0x558] sm:$0xff]
      %v7600 = vld [vmem:[%s5 + $0x560] sm:$0xff]
      %v7601 = vld [vmem:[%s5 + $0x568] sm:$0xff]
      %v7602 = vld [vmem:[%s5 + $0x570] sm:$0xff]
      %v7603 = vld [vmem:[%s5 + $0x578] sm:$0xff]
      %v7604 = vld [vmem:[%s5 + $0x580] sm:$0xff]
      %v7605 = vld [vmem:[%s5 + $0x588] sm:$0xff]
      %v7606 = vld [vmem:[%s5 + $0x590] sm:$0xff]
      %v7607 = vld [vmem:[%s5 + $0x598] sm:$0xff]
      %v7608 = vld [vmem:[%s5 + $0x5a0] sm:$0xff]
      %v7609 = vld [vmem:[%s5 + $0x5a8] sm:$0xff]
      %v7610 = vld [vmem:[%s5 + $0x5b0] sm:$0xff]
      %v7611 = vld [vmem:[%s5 + $0x5b8] sm:$0xff]
      %v7612 = vld [vmem:[%s5 + $0x5c0] sm:$0xff]
      %v7613 = vld [vmem:[%s5 + $0x5c8] sm:$0xff]
      %v7614 = vld [vmem:[%s5 + $0x5d0] sm:$0xff]
      %v7615 = vld [vmem:[%s5 + $0x5d8] sm:$0xff]
      %v7616 = vld [vmem:[%s5 + $0x5e0] sm:$0xff]
      %v7617 = vld [vmem:[%s5 + $0x5e8] sm:$0xff]
      %v7618 = vld [vmem:[%s5 + $0x5f0] sm:$0xff]
      %v7619 = vld [vmem:[%s5 + $0x5f8] sm:$0xff]
      %v7620 = vld [vmem:[%s5 + $0x600] sm:$0xff]
      %v7621 = vld [vmem:[%s5 + $0x608] sm:$0xff]
      %v7622 = vld [vmem:[%s5 + $0x610] sm:$0xff]
      %v7623 = vld [vmem:[%s5 + $0x618] sm:$0xff]
      %v7624 = vld [vmem:[%s5 + $0x620] sm:$0xff]
      %v7625 = vld [vmem:[%s5 + $0x628] sm:$0xff]
      %v7626 = vld [vmem:[%s5 + $0x630] sm:$0xff]
      %v7627 = vld [vmem:[%s5 + $0x638] sm:$0xff]
      %v7628 = vld [vmem:[%s5 + $0x640] sm:$0xff]
      %v7629 = vld [vmem:[%s5 + $0x648] sm:$0xff]
      %v7630 = vld [vmem:[%s5 + $0x650] sm:$0xff]
      %v7631 = vld [vmem:[%s5 + $0x658] sm:$0xff]
      %v7632 = vld [vmem:[%s5 + $0x660] sm:$0xff]
      %v7633 = vld [vmem:[%s5 + $0x668] sm:$0xff]
      %v7634 = vld [vmem:[%s5 + $0x670] sm:$0xff]
      %v7635 = vld [vmem:[%s5 + $0x678] sm:$0xff]
      %v7636 = vld [vmem:[%s5 + $0x680] sm:$0xff]
      %v7637 = vld [vmem:[%s5 + $0x688] sm:$0xff]
      %v7638 = vld [vmem:[%s5 + $0x690] sm:$0xff]
      %v7639 = vld [vmem:[%s5 + $0x698] sm:$0xff]
      %v7640 = vld [vmem:[%s5 + $0x6a0] sm:$0xff]
      %v7641 = vld [vmem:[%s5 + $0x6a8] sm:$0xff]
      %v7642 = vld [vmem:[%s5 + $0x6b0] sm:$0xff]
      %v7643 = vld [vmem:[%s5 + $0x6b8] sm:$0xff]
      %v7644 = vld [vmem:[%s5 + $0x6c0] sm:$0xff]
      %v7645 = vld [vmem:[%s5 + $0x6c8] sm:$0xff]
      %v7646 = vld [vmem:[%s5 + $0x6d0] sm:$0xff]
      %v7647 = vld [vmem:[%s5 + $0x6d8] sm:$0xff]
      %v7648 = vld [vmem:[%s5 + $0x6e0] sm:$0xff]
      %v7649 = vld [vmem:[%s5 + $0x6e8] sm:$0xff]
      %v7650 = vld [vmem:[%s5 + $0x6f0] sm:$0xff]
      %v7651 = vld [vmem:[%s5 + $0x6f8] sm:$0xff]
      %v7652 = vld [vmem:[%s5 + $0x700] sm:$0xff]
      %v7653 = vld [vmem:[%s5 + $0x708] sm:$0xff]
      %v7654 = vld [vmem:[%s5 + $0x710] sm:$0xff]
      %v7655 = vld [vmem:[%s5 + $0x718] sm:$0xff]
      %v7656 = vld [vmem:[%s5 + $0x720] sm:$0xff]
      %v7657 = vld [vmem:[%s5 + $0x728] sm:$0xff]
      %v7658 = vld [vmem:[%s5 + $0x730] sm:$0xff]
      %v7659 = vld [vmem:[%s5 + $0x738] sm:$0xff]
      %v7660 = vld [vmem:[%s5 + $0x740] sm:$0xff]
      %v7661 = vld [vmem:[%s5 + $0x748] sm:$0xff]
      %v7662 = vld [vmem:[%s5 + $0x750] sm:$0xff]
      %v7663 = vld [vmem:[%s5 + $0x758] sm:$0xff]
      %v7664 = vld [vmem:[%s5 + $0x760] sm:$0xff]
      %v7665 = vld [vmem:[%s5 + $0x768] sm:$0xff]
      %v7666 = vld [vmem:[%s5 + $0x770] sm:$0xff]
      %v7667 = vld [vmem:[%s5 + $0x778] sm:$0xff]
      %v7668 = vld [vmem:[%s5 + $0x780] sm:$0xff]
      %v7669 = vld [vmem:[%s5 + $0x788] sm:$0xff]
      %v7670 = vld [vmem:[%s5 + $0x790] sm:$0xff]
      %v7671 = vld [vmem:[%s5 + $0x798] sm:$0xff]
      %v7672 = vld [vmem:[%s5 + $0x7a0] sm:$0xff]
      %v7673 = vld [vmem:[%s5 + $0x7a8] sm:$0xff]
      %v7674 = vld [vmem:[%s5 + $0x7b0] sm:$0xff]
      %v7675 = vld [vmem:[%s5 + $0x7b8] sm:$0xff]
      %v7676 = vld [vmem:[%s5 + $0x7c0] sm:$0xff]
      %v7677 = vld [vmem:[%s5 + $0x7c8] sm:$0xff]
      %v7678 = vld [vmem:[%s5 + $0x7d0] sm:$0xff]
      %v7679 = vld [vmem:[%s5 + $0x7d8] sm:$0xff]
      %v7680 = vld [vmem:[%s5 + $0x7e0] sm:$0xff]
      %v7681 = vld [vmem:[%s5 + $0x7e8] sm:$0xff]
      %v7682 = vld [vmem:[%s5 + $0x7f0] sm:$0xff]
      %v7683 = vld [vmem:[%s5 + $0x7f8] sm:$0xff]
      %v7684 = vld [vmem:[%s5 + $0x800] sm:$0xff]
      %v7685 = vld [vmem:[%s5 + $0x808] sm:$0xff]
      %v7686 = vld [vmem:[%s5 + $0x810] sm:$0xff]
      %v7687 = vld [vmem:[%s5 + $0x818] sm:$0xff]
      %v7688 = vld [vmem:[%s5 + $0x820] sm:$0xff]
      %v7689 = vld [vmem:[%s5 + $0x828] sm:$0xff]
      %v7690 = vld [vmem:[%s5 + $0x830] sm:$0xff]
      %v7691 = vld [vmem:[%s5 + $0x838] sm:$0xff]
      %v7692 = vld [vmem:[%s5 + $0x840] sm:$0xff]
      %v7693 = vld [vmem:[%s5 + $0x848] sm:$0xff]
      %v7694 = vld [vmem:[%s5 + $0x850] sm:$0xff]
      %v7695 = vld [vmem:[%s5 + $0x858] sm:$0xff]
      %v7696 = vld [vmem:[%s5 + $0x860] sm:$0xff]
      %v7697 = vld [vmem:[%s5 + $0x868] sm:$0xff]
      %v7698 = vld [vmem:[%s5 + $0x870] sm:$0xff]
      %v7699 = vld [vmem:[%s5 + $0x878] sm:$0xff]
      %v7700 = vld [vmem:[%s5 + $0x880] sm:$0xff]
      %v7701 = vld [vmem:[%s5 + $0x888] sm:$0xff]
      %v7702 = vld [vmem:[%s5 + $0x890] sm:$0xff]
      %v7703 = vld [vmem:[%s5 + $0x898] sm:$0xff]
      %v7704 = vld [vmem:[%s5 + $0x8a0] sm:$0xff]
      %v7705 = vld [vmem:[%s5 + $0x8a8] sm:$0xff]
      %v7706 = vld [vmem:[%s5 + $0x8b0] sm:$0xff]
      %v7707 = vld [vmem:[%s5 + $0x8b8] sm:$0xff]
      %v7708 = vld [vmem:[%s5 + $0x8c0] sm:$0xff]
      %v7709 = vld [vmem:[%s5 + $0x8c8] sm:$0xff]
      %v7710 = vld [vmem:[%s5 + $0x8d0] sm:$0xff]
      %v7711 = vld [vmem:[%s5 + $0x8d8] sm:$0xff]
      %v7712 = vld [vmem:[%s5 + $0x8e0] sm:$0xff]
      %v7713 = vld [vmem:[%s5 + $0x8e8] sm:$0xff]
      %v7714 = vld [vmem:[%s5 + $0x8f0] sm:$0xff]
      %v7715 = vld [vmem:[%s5 + $0x8f8] sm:$0xff]
      %v7716 = vld [vmem:[%s5 + $0x900] sm:$0xff]
      %v7717 = vld [vmem:[%s5 + $0x908] sm:$0xff]
      %v7718 = vld [vmem:[%s5 + $0x910] sm:$0xff]
      %v7719 = vld [vmem:[%s5 + $0x918] sm:$0xff]
      %v7720 = vld [vmem:[%s5 + $0x920] sm:$0xff]
      %v7721 = vld [vmem:[%s5 + $0x928] sm:$0xff]
      %v7722 = vld [vmem:[%s5 + $0x930] sm:$0xff]
      %v7723 = vld [vmem:[%s5 + $0x938] sm:$0xff]
      %v7724 = vld [vmem:[%s5 + $0x940] sm:$0xff]
      %v7725 = vld [vmem:[%s5 + $0x948] sm:$0xff]
      %v7726 = vld [vmem:[%s5 + $0x950] sm:$0xff]
      %v7727 = vld [vmem:[%s5 + $0x958] sm:$0xff]
      %v7728 = vld [vmem:[%s5 + $0x960] sm:$0xff]
      %v7729 = vld [vmem:[%s5 + $0x968] sm:$0xff]
      %v7730 = vld [vmem:[%s5 + $0x970] sm:$0xff]
      %v7731 = vld [vmem:[%s5 + $0x978] sm:$0xff]
      %v7732 = vld [vmem:[%s5 + $0x980] sm:$0xff]
      %v7733 = vld [vmem:[%s5 + $0x988] sm:$0xff]
      %v7734 = vld [vmem:[%s5 + $0x990] sm:$0xff]
      %v7735 = vld [vmem:[%s5 + $0x998] sm:$0xff]
      %v7736 = vld [vmem:[%s5 + $0x9a0] sm:$0xff]
      %v7737 = vld [vmem:[%s5 + $0x9a8] sm:$0xff]
      %v7738 = vld [vmem:[%s5 + $0x9b0] sm:$0xff]
      %v7739 = vld [vmem:[%s5 + $0x9b8] sm:$0xff]
      %v7740 = vld [vmem:[%s5 + $0x9c0] sm:$0xff]
      %v7741 = vld [vmem:[%s5 + $0x9c8] sm:$0xff]
      %v7742 = vld [vmem:[%s5 + $0x9d0] sm:$0xff]
      %v7743 = vld [vmem:[%s5 + $0x9d8] sm:$0xff]
      %v7744 = vld [vmem:[%s5 + $0x9e0] sm:$0xff]
      %v7745 = vld [vmem:[%s5 + $0x9e8] sm:$0xff]
      %v7746 = vld [vmem:[%s5 + $0x9f0] sm:$0xff]
      %v7747 = vld [vmem:[%s5 + $0x9f8] sm:$0xff]
      %v7748 = vld [vmem:[%s5 + $0xa00] sm:$0xff]
      %v7749 = vld [vmem:[%s5 + $0xa08] sm:$0xff]
      %v7750 = vld [vmem:[%s5 + $0xa10] sm:$0xff]
      %v7751 = vld [vmem:[%s5 + $0xa18] sm:$0xff]
      %v7752 = vld [vmem:[%s5 + $0xa20] sm:$0xff]
      %v7753 = vld [vmem:[%s5 + $0xa28] sm:$0xff]
      %v7754 = vld [vmem:[%s5 + $0xa30] sm:$0xff]
      %v7755 = vld [vmem:[%s5 + $0xa38] sm:$0xff]
      %v7756 = vld [vmem:[%s5 + $0xa40] sm:$0xff]
      %v7757 = vld [vmem:[%s5 + $0xa48] sm:$0xff]
      %v7758 = vld [vmem:[%s5 + $0xa50] sm:$0xff]
      %v7759 = vld [vmem:[%s5 + $0xa58] sm:$0xff]
      %v7760 = vld [vmem:[%s5 + $0xa60] sm:$0xff]
      %v7761 = vld [vmem:[%s5 + $0xa68] sm:$0xff]
      %v7762 = vld [vmem:[%s5 + $0xa70] sm:$0xff]
      %v7763 = vld [vmem:[%s5 + $0xa78] sm:$0xff]
      %v7764 = vld [vmem:[%s5 + $0xa80] sm:$0xff]
      %v7765 = vld [vmem:[%s5 + $0xa88] sm:$0xff]
      %v7766 = vld [vmem:[%s5 + $0xa90] sm:$0xff]
      %v7767 = vld [vmem:[%s5 + $0xa98] sm:$0xff]
      %v7768 = vld [vmem:[%s5 + $0xaa0] sm:$0xff]
      %v7769 = vld [vmem:[%s5 + $0xaa8] sm:$0xff]
      %v7770 = vld [vmem:[%s5 + $0xab0] sm:$0xff]
      %v7771 = vld [vmem:[%s5 + $0xab8] sm:$0xff]
      %v7772 = vld [vmem:[%s5 + $0xac0] sm:$0xff]
      %v7773 = vld [vmem:[%s5 + $0xac8] sm:$0xff]
      %v7774 = vld [vmem:[%s5 + $0xad0] sm:$0xff]
      %v7775 = vld [vmem:[%s5 + $0xad8] sm:$0xff]
      %v7776 = vld [vmem:[%s5 + $0xae0] sm:$0xff]
      %v7777 = vld [vmem:[%s5 + $0xae8] sm:$0xff]
      %v7778 = vld [vmem:[%s5 + $0xaf0] sm:$0xff]
      %v7779 = vld [vmem:[%s5 + $0xaf8] sm:$0xff]
      %v7780 = vld [vmem:[%s5 + $0xb00] sm:$0xff]
      %v7781 = vld [vmem:[%s5 + $0xb08] sm:$0xff]
      %v7782 = vld [vmem:[%s5 + $0xb10] sm:$0xff]
      %v7783 = vld [vmem:[%s5 + $0xb18] sm:$0xff]
      %v7784 = vld [vmem:[%s5 + $0xb20] sm:$0xff]
      %v7785 = vld [vmem:[%s5 + $0xb28] sm:$0xff]
      %v7786 = vld [vmem:[%s5 + $0xb30] sm:$0xff]
      %v7787 = vld [vmem:[%s5 + $0xb38] sm:$0xff]
      %v7788 = vld [vmem:[%s5 + $0xb40] sm:$0xff]
      %v7789 = vld [vmem:[%s5 + $0xb48] sm:$0xff]
      %v7790 = vld [vmem:[%s5 + $0xb50] sm:$0xff]
      %v7791 = vld [vmem:[%s5 + $0xb58] sm:$0xff]
      %v7792 = vld [vmem:[%s5 + $0xb60] sm:$0xff]
      %v7793 = vld [vmem:[%s5 + $0xb68] sm:$0xff]
      %v7794 = vld [vmem:[%s5 + $0xb70] sm:$0xff]
      %v7795 = vld [vmem:[%s5 + $0xb78] sm:$0xff]
      %v7796 = vld [vmem:[%s5 + $0xb80] sm:$0xff]
      %v7797 = vld [vmem:[%s5 + $0xb88] sm:$0xff]
      %v7798 = vld [vmem:[%s5 + $0xb90] sm:$0xff]
      %v7799 = vld [vmem:[%s5 + $0xb98] sm:$0xff]
      %v7800 = vld [vmem:[%s5 + $0xba0] sm:$0xff]
      %v7801 = vld [vmem:[%s5 + $0xba8] sm:$0xff]
      %v7802 = vld [vmem:[%s5 + $0xbb0] sm:$0xff]
      %v7803 = vld [vmem:[%s5 + $0xbb8] sm:$0xff]
      %v7804 = vld [vmem:[%s5 + $0xbc0] sm:$0xff]
      %v7805 = vld [vmem:[%s5 + $0xbc8] sm:$0xff]
      %v7806 = vld [vmem:[%s5 + $0xbd0] sm:$0xff]
      %v7807 = vld [vmem:[%s5 + $0xbd8] sm:$0xff]
      %v7808 = vld [vmem:[%s5 + $0xbe0] sm:$0xff]
      %v7809 = vld [vmem:[%s5 + $0xbe8] sm:$0xff]
      %v7810 = vld [vmem:[%s5 + $0xbf0] sm:$0xff]
      %v7811 = vld [vmem:[%s5 + $0xbf8] sm:$0xff]
      %v7812 = vld [vmem:[%s5 + $0xc00] sm:$0xff]
      %v7813 = vld [vmem:[%s5 + $0xc08] sm:$0xff]
      %v7814 = vld [vmem:[%s5 + $0xc10] sm:$0xff]
      %v7815 = vld [vmem:[%s5 + $0xc18] sm:$0xff]
      %v7816 = vld [vmem:[%s5 + $0xc20] sm:$0xff]
      %v7817 = vld [vmem:[%s5 + $0xc28] sm:$0xff]
      %v7818 = vld [vmem:[%s5 + $0xc30] sm:$0xff]
      %v7819 = vld [vmem:[%s5 + $0xc38] sm:$0xff]
      %v7820 = vld [vmem:[%s5 + $0xc40] sm:$0xff]
      %v7821 = vld [vmem:[%s5 + $0xc48] sm:$0xff]
      %v7822 = vld [vmem:[%s5 + $0xc50] sm:$0xff]
      %v7823 = vld [vmem:[%s5 + $0xc58] sm:$0xff]
      %v7824 = vld [vmem:[%s5 + $0xc60] sm:$0xff]
      %v7825 = vld [vmem:[%s5 + $0xc68] sm:$0xff]
      %v7826 = vld [vmem:[%s5 + $0xc70] sm:$0xff]
      %v7827 = vld [vmem:[%s5 + $0xc78] sm:$0xff]
      %v7828 = vld [vmem:[%s5 + $0xc80] sm:$0xff]
      %v7829 = vld [vmem:[%s5 + $0xc88] sm:$0xff]
      %v7830 = vld [vmem:[%s5 + $0xc90] sm:$0xff]
      %v7831 = vld [vmem:[%s5 + $0xc98] sm:$0xff]
      %v7832 = vld [vmem:[%s5 + $0xca0] sm:$0xff]
      %v7833 = vld [vmem:[%s5 + $0xca8] sm:$0xff]
      %v7834 = vld [vmem:[%s5 + $0xcb0] sm:$0xff]
      %v7835 = vld [vmem:[%s5 + $0xcb8] sm:$0xff]
      %v7836 = vld [vmem:[%s5 + $0xcc0] sm:$0xff]
      %v7837 = vld [vmem:[%s5 + $0xcc8] sm:$0xff]
      %v7838 = vld [vmem:[%s5 + $0xcd0] sm:$0xff]
      %v7839 = vld [vmem:[%s5 + $0xcd8] sm:$0xff]
      %v7840 = vld [vmem:[%s5 + $0xce0] sm:$0xff]
      %v7841 = vld [vmem:[%s5 + $0xce8] sm:$0xff]
      %v7842 = vld [vmem:[%s5 + $0xcf0] sm:$0xff]
      %v7843 = vld [vmem:[%s5 + $0xcf8] sm:$0xff]
      %v7844 = vld [vmem:[%s5 + $0xd00] sm:$0xff]
      %v7845 = vld [vmem:[%s5 + $0xd08] sm:$0xff]
      %v7846 = vld [vmem:[%s5 + $0xd10] sm:$0xff]
      %v7847 = vld [vmem:[%s5 + $0xd18] sm:$0xff]
      %v7848 = vld [vmem:[%s5 + $0xd20] sm:$0xff]
      %v7849 = vld [vmem:[%s5 + $0xd28] sm:$0xff]
      %v7850 = vld [vmem:[%s5 + $0xd30] sm:$0xff]
      %v7851 = vld [vmem:[%s5 + $0xd38] sm:$0xff]
      %v7852 = vld [vmem:[%s5 + $0xd40] sm:$0xff]
      %v7853 = vld [vmem:[%s5 + $0xd48] sm:$0xff]
      %v7854 = vld [vmem:[%s5 + $0xd50] sm:$0xff]
      %v7855 = vld [vmem:[%s5 + $0xd58] sm:$0xff]
      %v7856 = vld [vmem:[%s5 + $0xd60] sm:$0xff]
      %v7857 = vld [vmem:[%s5 + $0xd68] sm:$0xff]
      %v7858 = vld [vmem:[%s5 + $0xd70] sm:$0xff]
      %v7859 = vld [vmem:[%s5 + $0xd78] sm:$0xff]
      %v7860 = vld [vmem:[%s5 + $0xd80] sm:$0xff]
      %v7861 = vld [vmem:[%s5 + $0xd88] sm:$0xff]
      %v7862 = vld [vmem:[%s5 + $0xd90] sm:$0xff]
      %v7863 = vld [vmem:[%s5 + $0xd98] sm:$0xff]
      %v7864 = vld [vmem:[%s5 + $0xda0] sm:$0xff]
      %v7865 = vld [vmem:[%s5 + $0xda8] sm:$0xff]
      %v7866 = vld [vmem:[%s5 + $0xdb0] sm:$0xff]
      %v7867 = vld [vmem:[%s5 + $0xdb8] sm:$0xff]
      %v7868 = vld [vmem:[%s5 + $0xdc0] sm:$0xff]
      %v7869 = vld [vmem:[%s5 + $0xdc8] sm:$0xff]
      %v7870 = vld [vmem:[%s5 + $0xdd0] sm:$0xff]
      %v7871 = vld [vmem:[%s5 + $0xdd8] sm:$0xff]
      %v7872 = vld [vmem:[%s5 + $0xde0] sm:$0xff]
      %v7873 = vld [vmem:[%s5 + $0xde8] sm:$0xff]
      %v7874 = vld [vmem:[%s5 + $0xdf0] sm:$0xff]
      %v7875 = vld [vmem:[%s5 + $0xdf8] sm:$0xff]
      %v7876 = vld [vmem:[%s5 + $0xe00] sm:$0xff]
      %v7877 = vld [vmem:[%s5 + $0xe08] sm:$0xff]
      %v7878 = vld [vmem:[%s5 + $0xe10] sm:$0xff]
      %v7879 = vld [vmem:[%s5 + $0xe18] sm:$0xff]
      %v7880 = vld [vmem:[%s5 + $0xe20] sm:$0xff]
      %v7881 = vld [vmem:[%s5 + $0xe28] sm:$0xff]
      %v7882 = vld [vmem:[%s5 + $0xe30] sm:$0xff]
      %v7883 = vld [vmem:[%s5 + $0xe38] sm:$0xff]
      %v7884 = vld [vmem:[%s5 + $0xe40] sm:$0xff]
      %v7885 = vld [vmem:[%s5 + $0xe48] sm:$0xff]
      %v7886 = vld [vmem:[%s5 + $0xe50] sm:$0xff]
      %v7887 = vld [vmem:[%s5 + $0xe58] sm:$0xff]
      %v7888 = vld [vmem:[%s5 + $0xe60] sm:$0xff]
      %v7889 = vld [vmem:[%s5 + $0xe68] sm:$0xff]
      %v7890 = vld [vmem:[%s5 + $0xe70] sm:$0xff]
      %v7891 = vld [vmem:[%s5 + $0xe78] sm:$0xff]
      %v7892 = vld [vmem:[%s5 + $0xe80] sm:$0xff]
      %v7893 = vld [vmem:[%s5 + $0xe88] sm:$0xff]
      %v7894 = vld [vmem:[%s5 + $0xe90] sm:$0xff]
      %v7895 = vld [vmem:[%s5 + $0xe98] sm:$0xff]
      %v7896 = vld [vmem:[%s5 + $0xea0] sm:$0xff]
      %v7897 = vld [vmem:[%s5 + $0xea8] sm:$0xff]
      %v7898 = vld [vmem:[%s5 + $0xeb0] sm:$0xff]
      %v7899 = vld [vmem:[%s5 + $0xeb8] sm:$0xff]
      %v7900 = vld [vmem:[%s5 + $0xec0] sm:$0xff]
      %v7901 = vld [vmem:[%s5 + $0xec8] sm:$0xff]
      %v7902 = vld [vmem:[%s5 + $0xed0] sm:$0xff]
      %v7903 = vld [vmem:[%s5 + $0xed8] sm:$0xff]
      %v7904 = vld [vmem:[%s5 + $0xee0] sm:$0xff]
      %v7905 = vld [vmem:[%s5 + $0xee8] sm:$0xff]
      %v7906 = vld [vmem:[%s5 + $0xef0] sm:$0xff]
      %v7907 = vld [vmem:[%s5 + $0xef8] sm:$0xff]
      %v7908 = vld [vmem:[%s5 + $0xf00] sm:$0xff]
      %v7909 = vld [vmem:[%s5 + $0xf08] sm:$0xff]
      %v7910 = vld [vmem:[%s5 + $0xf10] sm:$0xff]
      %v7911 = vld [vmem:[%s5 + $0xf18] sm:$0xff]
      %v7912 = vld [vmem:[%s5 + $0xf20] sm:$0xff]
      %v7913 = vld [vmem:[%s5 + $0xf28] sm:$0xff]
      %v7914 = vld [vmem:[%s5 + $0xf30] sm:$0xff]
      %v7915 = vld [vmem:[%s5 + $0xf38] sm:$0xff]
      %v7916 = vld [vmem:[%s5 + $0xf40] sm:$0xff]
      %v7917 = vld [vmem:[%s5 + $0xf48] sm:$0xff]
      %v7918 = vld [vmem:[%s5 + $0xf50] sm:$0xff]
      %v7919 = vld [vmem:[%s5 + $0xf58] sm:$0xff]
      %v7920 = vld [vmem:[%s5 + $0xf60] sm:$0xff]
      %v7921 = vld [vmem:[%s5 + $0xf68] sm:$0xff]
      %v7922 = vld [vmem:[%s5 + $0xf70] sm:$0xff]
      %v7923 = vld [vmem:[%s5 + $0xf78] sm:$0xff]
      %v7924 = vld [vmem:[%s5 + $0xf80] sm:$0xff]
      %v7925 = vld [vmem:[%s5 + $0xf88] sm:$0xff]
      %v7926 = vld [vmem:[%s5 + $0xf90] sm:$0xff]
      %v7927 = vld [vmem:[%s5 + $0xf98] sm:$0xff]
      %v7928 = vld [vmem:[%s5 + $0xfa0] sm:$0xff]
      %v7929 = vld [vmem:[%s5 + $0xfa8] sm:$0xff]
      %v7930 = vld [vmem:[%s5 + $0xfb0] sm:$0xff]
      %v7931 = vld [vmem:[%s5 + $0xfb8] sm:$0xff]
      %v7932 = vld [vmem:[%s5 + $0xfc0] sm:$0xff]
      %v7933 = vld [vmem:[%s5 + $0xfc8] sm:$0xff]
      %v7934 = vld [vmem:[%s5 + $0xfd0] sm:$0xff]
      %v7935 = vld [vmem:[%s5 + $0xfd8] sm:$0xff]
      %v7936 = vld [vmem:[%s5 + $0xfe0] sm:$0xff]
      %v7937 = vld [vmem:[%s5 + $0xfe8] sm:$0xff]
      %v7938 = vld [vmem:[%s5 + $0xff0] sm:$0xff]
      %v7939 = vld [vmem:[%s5 + $0xff8] sm:$0xff]
      %v7940 = vperm.slane %v327, 0
      %v7941 = vperm.slane %v328, 0
      %v7942 = vperm.slane %v329, 0
      %v7943 = vperm.slane %v330, 0
      %v8456 = vunpack.c.l.b16 %v7428
      %v8457 = vunpack.c.h.b16 %v7428
      %v8458 = vunpack.c.l.b16 %v7429
      %v8459 = vunpack.c.h.b16 %v7429
      %v8460 = vunpack.c.l.b16 %v7430
      %v8461 = vunpack.c.h.b16 %v7430
      %v8462 = vunpack.c.l.b16 %v7431
      %v8463 = vunpack.c.h.b16 %v7431
      %v8464 = vunpack.c.l.b16 %v7432
      %v8465 = vunpack.c.h.b16 %v7432
      %v8466 = vunpack.c.l.b16 %v7433
      %v8467 = vunpack.c.h.b16 %v7433
      %v8468 = vunpack.c.l.b16 %v7434
      %v8469 = vunpack.c.h.b16 %v7434
      %v8470 = vunpack.c.l.b16 %v7435
      %v8471 = vunpack.c.h.b16 %v7435
      %v8472 = vunpack.c.l.b16 %v7436
      %v8473 = vunpack.c.h.b16 %v7436
      %v8474 = vunpack.c.l.b16 %v7437
      %v8475 = vunpack.c.h.b16 %v7437
      %v8476 = vunpack.c.l.b16 %v7438
      %v8477 = vunpack.c.h.b16 %v7438
      %v8478 = vunpack.c.l.b16 %v7439
      %v8479 = vunpack.c.h.b16 %v7439
      %v8480 = vunpack.c.l.b16 %v7440
      %v8481 = vunpack.c.h.b16 %v7440
      %v8482 = vunpack.c.l.b16 %v7441
      %v8483 = vunpack.c.h.b16 %v7441
      %v8484 = vunpack.c.l.b16 %v7442
      %v8485 = vunpack.c.h.b16 %v7442
      %v8486 = vunpack.c.l.b16 %v7443
      %v8487 = vunpack.c.h.b16 %v7443
      %v8488 = vunpack.c.l.b16 %v7444
      %v8489 = vunpack.c.h.b16 %v7444
      %v8490 = vunpack.c.l.b16 %v7445
      %v8491 = vunpack.c.h.b16 %v7445
      %v8492 = vunpack.c.l.b16 %v7446
      %v8493 = vunpack.c.h.b16 %v7446
      %v8494 = vunpack.c.l.b16 %v7447
      %v8495 = vunpack.c.h.b16 %v7447
      %v8496 = vunpack.c.l.b16 %v7448
      %v8497 = vunpack.c.h.b16 %v7448
      %v8498 = vunpack.c.l.b16 %v7449
      %v8499 = vunpack.c.h.b16 %v7449
      %v8500 = vunpack.c.l.b16 %v7450
      %v8501 = vunpack.c.h.b16 %v7450
      %v8502 = vunpack.c.l.b16 %v7451
      %v8503 = vunpack.c.h.b16 %v7451
      %v8504 = vunpack.c.l.b16 %v7452
      %v8505 = vunpack.c.h.b16 %v7452
      %v8506 = vunpack.c.l.b16 %v7453
      %v8507 = vunpack.c.h.b16 %v7453
      %v8508 = vunpack.c.l.b16 %v7454
      %v8509 = vunpack.c.h.b16 %v7454
      %v8510 = vunpack.c.l.b16 %v7455
      %v8511 = vunpack.c.h.b16 %v7455
      %v8512 = vunpack.c.l.b16 %v7456
      %v8513 = vunpack.c.h.b16 %v7456
      %v8514 = vunpack.c.l.b16 %v7457
      %v8515 = vunpack.c.h.b16 %v7457
      %v8516 = vunpack.c.l.b16 %v7458
      %v8517 = vunpack.c.h.b16 %v7458
      %v8518 = vunpack.c.l.b16 %v7459
      %v8519 = vunpack.c.h.b16 %v7459
      %v8520 = vunpack.c.l.b16 %v7460
      %v8521 = vunpack.c.h.b16 %v7460
      %v8522 = vunpack.c.l.b16 %v7461
      %v8523 = vunpack.c.h.b16 %v7461
      %v8524 = vunpack.c.l.b16 %v7462
      %v8525 = vunpack.c.h.b16 %v7462
      %v8526 = vunpack.c.l.b16 %v7463
      %v8527 = vunpack.c.h.b16 %v7463
      %v8528 = vunpack.c.l.b16 %v7464
      %v8529 = vunpack.c.h.b16 %v7464
      %v8530 = vunpack.c.l.b16 %v7465
      %v8531 = vunpack.c.h.b16 %v7465
      %v8532 = vunpack.c.l.b16 %v7466
      %v8533 = vunpack.c.h.b16 %v7466
      %v8534 = vunpack.c.l.b16 %v7467
      %v8535 = vunpack.c.h.b16 %v7467
      %v8536 = vunpack.c.l.b16 %v7468
      %v8537 = vunpack.c.h.b16 %v7468
      %v8538 = vunpack.c.l.b16 %v7469
      %v8539 = vunpack.c.h.b16 %v7469
      %v8540 = vunpack.c.l.b16 %v7470
      %v8541 = vunpack.c.h.b16 %v7470
      %v8542 = vunpack.c.l.b16 %v7471
      %v8543 = vunpack.c.h.b16 %v7471
      %v8544 = vunpack.c.l.b16 %v7472
      %v8545 = vunpack.c.h.b16 %v7472
      %v8546 = vunpack.c.l.b16 %v7473
      %v8547 = vunpack.c.h.b16 %v7473
      %v8548 = vunpack.c.l.b16 %v7474
      %v8549 = vunpack.c.h.b16 %v7474
      %v8550 = vunpack.c.l.b16 %v7475
      %v8551 = vunpack.c.h.b16 %v7475
      %v8552 = vunpack.c.l.b16 %v7476
      %v8553 = vunpack.c.h.b16 %v7476
      %v8554 = vunpack.c.l.b16 %v7477
      %v8555 = vunpack.c.h.b16 %v7477
      %v8556 = vunpack.c.l.b16 %v7478
      %v8557 = vunpack.c.h.b16 %v7478
      %v8558 = vunpack.c.l.b16 %v7479
      %v8559 = vunpack.c.h.b16 %v7479
      %v8560 = vunpack.c.l.b16 %v7480
      %v8561 = vunpack.c.h.b16 %v7480
      %v8562 = vunpack.c.l.b16 %v7481
      %v8563 = vunpack.c.h.b16 %v7481
      %v8564 = vunpack.c.l.b16 %v7482
      %v8565 = vunpack.c.h.b16 %v7482
      %v8566 = vunpack.c.l.b16 %v7483
      %v8567 = vunpack.c.h.b16 %v7483
      %v8568 = vunpack.c.l.b16 %v7484
      %v8569 = vunpack.c.h.b16 %v7484
      %v8570 = vunpack.c.l.b16 %v7485
      %v8571 = vunpack.c.h.b16 %v7485
      %v8572 = vunpack.c.l.b16 %v7486
      %v8573 = vunpack.c.h.b16 %v7486
      %v8574 = vunpack.c.l.b16 %v7487
      %v8575 = vunpack.c.h.b16 %v7487
      %v8576 = vunpack.c.l.b16 %v7488
      %v8577 = vunpack.c.h.b16 %v7488
      %v8578 = vunpack.c.l.b16 %v7489
      %v8579 = vunpack.c.h.b16 %v7489
      %v8580 = vunpack.c.l.b16 %v7490
      %v8581 = vunpack.c.h.b16 %v7490
      %v8582 = vunpack.c.l.b16 %v7491
      %v8583 = vunpack.c.h.b16 %v7491
      %v8584 = vunpack.c.l.b16 %v7492
      %v8585 = vunpack.c.h.b16 %v7492
      %v8586 = vunpack.c.l.b16 %v7493
      %v8587 = vunpack.c.h.b16 %v7493
      %v8588 = vunpack.c.l.b16 %v7494
      %v8589 = vunpack.c.h.b16 %v7494
      %v8590 = vunpack.c.l.b16 %v7495
      %v8591 = vunpack.c.h.b16 %v7495
      %v8592 = vunpack.c.l.b16 %v7496
      %v8593 = vunpack.c.h.b16 %v7496
      %v8594 = vunpack.c.l.b16 %v7497
      %v8595 = vunpack.c.h.b16 %v7497
      %v8596 = vunpack.c.l.b16 %v7498
      %v8597 = vunpack.c.h.b16 %v7498
      %v8598 = vunpack.c.l.b16 %v7499
      %v8599 = vunpack.c.h.b16 %v7499
      %v8600 = vunpack.c.l.b16 %v7500
      %v8601 = vunpack.c.h.b16 %v7500
      %v8602 = vunpack.c.l.b16 %v7501
      %v8603 = vunpack.c.h.b16 %v7501
      %v8604 = vunpack.c.l.b16 %v7502
      %v8605 = vunpack.c.h.b16 %v7502
      %v8606 = vunpack.c.l.b16 %v7503
      %v8607 = vunpack.c.h.b16 %v7503
      %v8608 = vunpack.c.l.b16 %v7504
      %v8609 = vunpack.c.h.b16 %v7504
      %v8610 = vunpack.c.l.b16 %v7505
      %v8611 = vunpack.c.h.b16 %v7505
      %v8612 = vunpack.c.l.b16 %v7506
      %v8613 = vunpack.c.h.b16 %v7506
      %v8614 = vunpack.c.l.b16 %v7507
      %v8615 = vunpack.c.h.b16 %v7507
      %v8616 = vunpack.c.l.b16 %v7508
      %v8617 = vunpack.c.h.b16 %v7508
      %v8618 = vunpack.c.l.b16 %v7509
      %v8619 = vunpack.c.h.b16 %v7509
      %v8620 = vunpack.c.l.b16 %v7510
      %v8621 = vunpack.c.h.b16 %v7510
      %v8622 = vunpack.c.l.b16 %v7511
      %v8623 = vunpack.c.h.b16 %v7511
      %v8624 = vunpack.c.l.b16 %v7512
      %v8625 = vunpack.c.h.b16 %v7512
      %v8626 = vunpack.c.l.b16 %v7513
      %v8627 = vunpack.c.h.b16 %v7513
      %v8628 = vunpack.c.l.b16 %v7514
      %v8629 = vunpack.c.h.b16 %v7514
      %v8630 = vunpack.c.l.b16 %v7515
      %v8631 = vunpack.c.h.b16 %v7515
      %v8632 = vunpack.c.l.b16 %v7516
      %v8633 = vunpack.c.h.b16 %v7516
      %v8634 = vunpack.c.l.b16 %v7517
      %v8635 = vunpack.c.h.b16 %v7517
      %v8636 = vunpack.c.l.b16 %v7518
      %v8637 = vunpack.c.h.b16 %v7518
      %v8638 = vunpack.c.l.b16 %v7519
      %v8639 = vunpack.c.h.b16 %v7519
      %v8640 = vunpack.c.l.b16 %v7520
      %v8641 = vunpack.c.h.b16 %v7520
      %v8642 = vunpack.c.l.b16 %v7521
      %v8643 = vunpack.c.h.b16 %v7521
      %v8644 = vunpack.c.l.b16 %v7522
      %v8645 = vunpack.c.h.b16 %v7522
      %v8646 = vunpack.c.l.b16 %v7523
      %v8647 = vunpack.c.h.b16 %v7523
      %v8648 = vunpack.c.l.b16 %v7524
      %v8649 = vunpack.c.h.b16 %v7524
      %v8650 = vunpack.c.l.b16 %v7525
      %v8651 = vunpack.c.h.b16 %v7525
      %v8652 = vunpack.c.l.b16 %v7526
      %v8653 = vunpack.c.h.b16 %v7526
      %v8654 = vunpack.c.l.b16 %v7527
      %v8655 = vunpack.c.h.b16 %v7527
      %v8656 = vunpack.c.l.b16 %v7528
      %v8657 = vunpack.c.h.b16 %v7528
      %v8658 = vunpack.c.l.b16 %v7529
      %v8659 = vunpack.c.h.b16 %v7529
      %v8660 = vunpack.c.l.b16 %v7530
      %v8661 = vunpack.c.h.b16 %v7530
      %v8662 = vunpack.c.l.b16 %v7531
      %v8663 = vunpack.c.h.b16 %v7531
      %v8664 = vunpack.c.l.b16 %v7532
      %v8665 = vunpack.c.h.b16 %v7532
      %v8666 = vunpack.c.l.b16 %v7533
      %v8667 = vunpack.c.h.b16 %v7533
      %v8668 = vunpack.c.l.b16 %v7534
      %v8669 = vunpack.c.h.b16 %v7534
      %v8670 = vunpack.c.l.b16 %v7535
      %v8671 = vunpack.c.h.b16 %v7535
      %v8672 = vunpack.c.l.b16 %v7536
      %v8673 = vunpack.c.h.b16 %v7536
      %v8674 = vunpack.c.l.b16 %v7537
      %v8675 = vunpack.c.h.b16 %v7537
      %v8676 = vunpack.c.l.b16 %v7538
      %v8677 = vunpack.c.h.b16 %v7538
      %v8678 = vunpack.c.l.b16 %v7539
      %v8679 = vunpack.c.h.b16 %v7539
      %v8680 = vunpack.c.l.b16 %v7540
      %v8681 = vunpack.c.h.b16 %v7540
      %v8682 = vunpack.c.l.b16 %v7541
      %v8683 = vunpack.c.h.b16 %v7541
      %v8684 = vunpack.c.l.b16 %v7542
      %v8685 = vunpack.c.h.b16 %v7542
      %v8686 = vunpack.c.l.b16 %v7543
      %v8687 = vunpack.c.h.b16 %v7543
      %v8688 = vunpack.c.l.b16 %v7544
      %v8689 = vunpack.c.h.b16 %v7544
      %v8690 = vunpack.c.l.b16 %v7545
      %v8691 = vunpack.c.h.b16 %v7545
      %v8692 = vunpack.c.l.b16 %v7546
      %v8693 = vunpack.c.h.b16 %v7546
      %v8694 = vunpack.c.l.b16 %v7547
      %v8695 = vunpack.c.h.b16 %v7547
      %v8696 = vunpack.c.l.b16 %v7548
      %v8697 = vunpack.c.h.b16 %v7548
      %v8698 = vunpack.c.l.b16 %v7549
      %v8699 = vunpack.c.h.b16 %v7549
      %v8700 = vunpack.c.l.b16 %v7550
      %v8701 = vunpack.c.h.b16 %v7550
      %v8702 = vunpack.c.l.b16 %v7551
      %v8703 = vunpack.c.h.b16 %v7551
      %v8704 = vunpack.c.l.b16 %v7552
      %v8705 = vunpack.c.h.b16 %v7552
      %v8706 = vunpack.c.l.b16 %v7553
      %v8707 = vunpack.c.h.b16 %v7553
      %v8708 = vunpack.c.l.b16 %v7554
      %v8709 = vunpack.c.h.b16 %v7554
      %v8710 = vunpack.c.l.b16 %v7555
      %v8711 = vunpack.c.h.b16 %v7555
      %v8712 = vunpack.c.l.b16 %v7556
      %v8713 = vunpack.c.h.b16 %v7556
      %v8714 = vunpack.c.l.b16 %v7557
      %v8715 = vunpack.c.h.b16 %v7557
      %v8716 = vunpack.c.l.b16 %v7558
      %v8717 = vunpack.c.h.b16 %v7558
      %v8718 = vunpack.c.l.b16 %v7559
      %v8719 = vunpack.c.h.b16 %v7559
      %v8720 = vunpack.c.l.b16 %v7560
      %v8721 = vunpack.c.h.b16 %v7560
      %v8722 = vunpack.c.l.b16 %v7561
      %v8723 = vunpack.c.h.b16 %v7561
      %v8724 = vunpack.c.l.b16 %v7562
      %v8725 = vunpack.c.h.b16 %v7562
      %v8726 = vunpack.c.l.b16 %v7563
      %v8727 = vunpack.c.h.b16 %v7563
      %v8728 = vunpack.c.l.b16 %v7564
      %v8729 = vunpack.c.h.b16 %v7564
      %v8730 = vunpack.c.l.b16 %v7565
      %v8731 = vunpack.c.h.b16 %v7565
      %v8732 = vunpack.c.l.b16 %v7566
      %v8733 = vunpack.c.h.b16 %v7566
      %v8734 = vunpack.c.l.b16 %v7567
      %v8735 = vunpack.c.h.b16 %v7567
      %v8736 = vunpack.c.l.b16 %v7568
      %v8737 = vunpack.c.h.b16 %v7568
      %v8738 = vunpack.c.l.b16 %v7569
      %v8739 = vunpack.c.h.b16 %v7569
      %v8740 = vunpack.c.l.b16 %v7570
      %v8741 = vunpack.c.h.b16 %v7570
      %v8742 = vunpack.c.l.b16 %v7571
      %v8743 = vunpack.c.h.b16 %v7571
      %v8744 = vunpack.c.l.b16 %v7572
      %v8745 = vunpack.c.h.b16 %v7572
      %v8746 = vunpack.c.l.b16 %v7573
      %v8747 = vunpack.c.h.b16 %v7573
      %v8748 = vunpack.c.l.b16 %v7574
      %v8749 = vunpack.c.h.b16 %v7574
      %v8750 = vunpack.c.l.b16 %v7575
      %v8751 = vunpack.c.h.b16 %v7575
      %v8752 = vunpack.c.l.b16 %v7576
      %v8753 = vunpack.c.h.b16 %v7576
      %v8754 = vunpack.c.l.b16 %v7577
      %v8755 = vunpack.c.h.b16 %v7577
      %v8756 = vunpack.c.l.b16 %v7578
      %v8757 = vunpack.c.h.b16 %v7578
      %v8758 = vunpack.c.l.b16 %v7579
      %v8759 = vunpack.c.h.b16 %v7579
      %v8760 = vunpack.c.l.b16 %v7580
      %v8761 = vunpack.c.h.b16 %v7580
      %v8762 = vunpack.c.l.b16 %v7581
      %v8763 = vunpack.c.h.b16 %v7581
      %v8764 = vunpack.c.l.b16 %v7582
      %v8765 = vunpack.c.h.b16 %v7582
      %v8766 = vunpack.c.l.b16 %v7583
      %v8767 = vunpack.c.h.b16 %v7583
      %v8768 = vunpack.c.l.b16 %v7584
      %v8769 = vunpack.c.h.b16 %v7584
      %v8770 = vunpack.c.l.b16 %v7585
      %v8771 = vunpack.c.h.b16 %v7585
      %v8772 = vunpack.c.l.b16 %v7586
      %v8773 = vunpack.c.h.b16 %v7586
      %v8774 = vunpack.c.l.b16 %v7587
      %v8775 = vunpack.c.h.b16 %v7587
      %v8776 = vunpack.c.l.b16 %v7588
      %v8777 = vunpack.c.h.b16 %v7588
      %v8778 = vunpack.c.l.b16 %v7589
      %v8779 = vunpack.c.h.b16 %v7589
      %v8780 = vunpack.c.l.b16 %v7590
      %v8781 = vunpack.c.h.b16 %v7590
      %v8782 = vunpack.c.l.b16 %v7591
      %v8783 = vunpack.c.h.b16 %v7591
      %v8784 = vunpack.c.l.b16 %v7592
      %v8785 = vunpack.c.h.b16 %v7592
      %v8786 = vunpack.c.l.b16 %v7593
      %v8787 = vunpack.c.h.b16 %v7593
      %v8788 = vunpack.c.l.b16 %v7594
      %v8789 = vunpack.c.h.b16 %v7594
      %v8790 = vunpack.c.l.b16 %v7595
      %v8791 = vunpack.c.h.b16 %v7595
      %v8792 = vunpack.c.l.b16 %v7596
      %v8793 = vunpack.c.h.b16 %v7596
      %v8794 = vunpack.c.l.b16 %v7597
      %v8795 = vunpack.c.h.b16 %v7597
      %v8796 = vunpack.c.l.b16 %v7598
      %v8797 = vunpack.c.h.b16 %v7598
      %v8798 = vunpack.c.l.b16 %v7599
      %v8799 = vunpack.c.h.b16 %v7599
      %v8800 = vunpack.c.l.b16 %v7600
      %v8801 = vunpack.c.h.b16 %v7600
      %v8802 = vunpack.c.l.b16 %v7601
      %v8803 = vunpack.c.h.b16 %v7601
      %v8804 = vunpack.c.l.b16 %v7602
      %v8805 = vunpack.c.h.b16 %v7602
      %v8806 = vunpack.c.l.b16 %v7603
      %v8807 = vunpack.c.h.b16 %v7603
      %v8808 = vunpack.c.l.b16 %v7604
      %v8809 = vunpack.c.h.b16 %v7604
      %v8810 = vunpack.c.l.b16 %v7605
      %v8811 = vunpack.c.h.b16 %v7605
      %v8812 = vunpack.c.l.b16 %v7606
      %v8813 = vunpack.c.h.b16 %v7606
      %v8814 = vunpack.c.l.b16 %v7607
      %v8815 = vunpack.c.h.b16 %v7607
      %v8816 = vunpack.c.l.b16 %v7608
      %v8817 = vunpack.c.h.b16 %v7608
      %v8818 = vunpack.c.l.b16 %v7609
      %v8819 = vunpack.c.h.b16 %v7609
      %v8820 = vunpack.c.l.b16 %v7610
      %v8821 = vunpack.c.h.b16 %v7610
      %v8822 = vunpack.c.l.b16 %v7611
      %v8823 = vunpack.c.h.b16 %v7611
      %v8824 = vunpack.c.l.b16 %v7612
      %v8825 = vunpack.c.h.b16 %v7612
      %v8826 = vunpack.c.l.b16 %v7613
      %v8827 = vunpack.c.h.b16 %v7613
      %v8828 = vunpack.c.l.b16 %v7614
      %v8829 = vunpack.c.h.b16 %v7614
      %v8830 = vunpack.c.l.b16 %v7615
      %v8831 = vunpack.c.h.b16 %v7615
      %v8832 = vunpack.c.l.b16 %v7616
      %v8833 = vunpack.c.h.b16 %v7616
      %v8834 = vunpack.c.l.b16 %v7617
      %v8835 = vunpack.c.h.b16 %v7617
      %v8836 = vunpack.c.l.b16 %v7618
      %v8837 = vunpack.c.h.b16 %v7618
      %v8838 = vunpack.c.l.b16 %v7619
      %v8839 = vunpack.c.h.b16 %v7619
      %v8840 = vunpack.c.l.b16 %v7620
      %v8841 = vunpack.c.h.b16 %v7620
      %v8842 = vunpack.c.l.b16 %v7621
      %v8843 = vunpack.c.h.b16 %v7621
      %v8844 = vunpack.c.l.b16 %v7622
      %v8845 = vunpack.c.h.b16 %v7622
      %v8846 = vunpack.c.l.b16 %v7623
      %v8847 = vunpack.c.h.b16 %v7623
      %v8848 = vunpack.c.l.b16 %v7624
      %v8849 = vunpack.c.h.b16 %v7624
      %v8850 = vunpack.c.l.b16 %v7625
      %v8851 = vunpack.c.h.b16 %v7625
      %v8852 = vunpack.c.l.b16 %v7626
      %v8853 = vunpack.c.h.b16 %v7626
      %v8854 = vunpack.c.l.b16 %v7627
      %v8855 = vunpack.c.h.b16 %v7627
      %v8856 = vunpack.c.l.b16 %v7628
      %v8857 = vunpack.c.h.b16 %v7628
      %v8858 = vunpack.c.l.b16 %v7629
      %v8859 = vunpack.c.h.b16 %v7629
      %v8860 = vunpack.c.l.b16 %v7630
      %v8861 = vunpack.c.h.b16 %v7630
      %v8862 = vunpack.c.l.b16 %v7631
      %v8863 = vunpack.c.h.b16 %v7631
      %v8864 = vunpack.c.l.b16 %v7632
      %v8865 = vunpack.c.h.b16 %v7632
      %v8866 = vunpack.c.l.b16 %v7633
      %v8867 = vunpack.c.h.b16 %v7633
      %v8868 = vunpack.c.l.b16 %v7634
      %v8869 = vunpack.c.h.b16 %v7634
      %v8870 = vunpack.c.l.b16 %v7635
      %v8871 = vunpack.c.h.b16 %v7635
      %v8872 = vunpack.c.l.b16 %v7636
      %v8873 = vunpack.c.h.b16 %v7636
      %v8874 = vunpack.c.l.b16 %v7637
      %v8875 = vunpack.c.h.b16 %v7637
      %v8876 = vunpack.c.l.b16 %v7638
      %v8877 = vunpack.c.h.b16 %v7638
      %v8878 = vunpack.c.l.b16 %v7639
      %v8879 = vunpack.c.h.b16 %v7639
      %v8880 = vunpack.c.l.b16 %v7640
      %v8881 = vunpack.c.h.b16 %v7640
      %v8882 = vunpack.c.l.b16 %v7641
      %v8883 = vunpack.c.h.b16 %v7641
      %v8884 = vunpack.c.l.b16 %v7642
      %v8885 = vunpack.c.h.b16 %v7642
      %v8886 = vunpack.c.l.b16 %v7643
      %v8887 = vunpack.c.h.b16 %v7643
      %v8888 = vunpack.c.l.b16 %v7644
      %v8889 = vunpack.c.h.b16 %v7644
      %v8890 = vunpack.c.l.b16 %v7645
      %v8891 = vunpack.c.h.b16 %v7645
      %v8892 = vunpack.c.l.b16 %v7646
      %v8893 = vunpack.c.h.b16 %v7646
      %v8894 = vunpack.c.l.b16 %v7647
      %v8895 = vunpack.c.h.b16 %v7647
      %v8896 = vunpack.c.l.b16 %v7648
      %v8897 = vunpack.c.h.b16 %v7648
      %v8898 = vunpack.c.l.b16 %v7649
      %v8899 = vunpack.c.h.b16 %v7649
      %v8900 = vunpack.c.l.b16 %v7650
      %v8901 = vunpack.c.h.b16 %v7650
      %v8902 = vunpack.c.l.b16 %v7651
      %v8903 = vunpack.c.h.b16 %v7651
      %v8904 = vunpack.c.l.b16 %v7652
      %v8905 = vunpack.c.h.b16 %v7652
      %v8906 = vunpack.c.l.b16 %v7653
      %v8907 = vunpack.c.h.b16 %v7653
      %v8908 = vunpack.c.l.b16 %v7654
      %v8909 = vunpack.c.h.b16 %v7654
      %v8910 = vunpack.c.l.b16 %v7655
      %v8911 = vunpack.c.h.b16 %v7655
      %v8912 = vunpack.c.l.b16 %v7656
      %v8913 = vunpack.c.h.b16 %v7656
      %v8914 = vunpack.c.l.b16 %v7657
      %v8915 = vunpack.c.h.b16 %v7657
      %v8916 = vunpack.c.l.b16 %v7658
      %v8917 = vunpack.c.h.b16 %v7658
      %v8918 = vunpack.c.l.b16 %v7659
      %v8919 = vunpack.c.h.b16 %v7659
      %v8920 = vunpack.c.l.b16 %v7660
      %v8921 = vunpack.c.h.b16 %v7660
      %v8922 = vunpack.c.l.b16 %v7661
      %v8923 = vunpack.c.h.b16 %v7661
      %v8924 = vunpack.c.l.b16 %v7662
      %v8925 = vunpack.c.h.b16 %v7662
      %v8926 = vunpack.c.l.b16 %v7663
      %v8927 = vunpack.c.h.b16 %v7663
      %v8928 = vunpack.c.l.b16 %v7664
      %v8929 = vunpack.c.h.b16 %v7664
      %v8930 = vunpack.c.l.b16 %v7665
      %v8931 = vunpack.c.h.b16 %v7665
      %v8932 = vunpack.c.l.b16 %v7666
      %v8933 = vunpack.c.h.b16 %v7666
      %v8934 = vunpack.c.l.b16 %v7667
      %v8935 = vunpack.c.h.b16 %v7667
      %v8936 = vunpack.c.l.b16 %v7668
      %v8937 = vunpack.c.h.b16 %v7668
      %v8938 = vunpack.c.l.b16 %v7669
      %v8939 = vunpack.c.h.b16 %v7669
      %v8940 = vunpack.c.l.b16 %v7670
      %v8941 = vunpack.c.h.b16 %v7670
      %v8942 = vunpack.c.l.b16 %v7671
      %v8943 = vunpack.c.h.b16 %v7671
      %v8944 = vunpack.c.l.b16 %v7672
      %v8945 = vunpack.c.h.b16 %v7672
      %v8946 = vunpack.c.l.b16 %v7673
      %v8947 = vunpack.c.h.b16 %v7673
      %v8948 = vunpack.c.l.b16 %v7674
      %v8949 = vunpack.c.h.b16 %v7674
      %v8950 = vunpack.c.l.b16 %v7675
      %v8951 = vunpack.c.h.b16 %v7675
      %v8952 = vunpack.c.l.b16 %v7676
      %v8953 = vunpack.c.h.b16 %v7676
      %v8954 = vunpack.c.l.b16 %v7677
      %v8955 = vunpack.c.h.b16 %v7677
      %v8956 = vunpack.c.l.b16 %v7678
      %v8957 = vunpack.c.h.b16 %v7678
      %v8958 = vunpack.c.l.b16 %v7679
      %v8959 = vunpack.c.h.b16 %v7679
      %v8960 = vunpack.c.l.b16 %v7680
      %v8961 = vunpack.c.h.b16 %v7680
      %v8962 = vunpack.c.l.b16 %v7681
      %v8963 = vunpack.c.h.b16 %v7681
      %v8964 = vunpack.c.l.b16 %v7682
      %v8965 = vunpack.c.h.b16 %v7682
      %v8966 = vunpack.c.l.b16 %v7683
      %v8967 = vunpack.c.h.b16 %v7683
      %v8968 = vunpack.c.l.b16 %v7684
      %v8969 = vunpack.c.h.b16 %v7684
      %v8970 = vunpack.c.l.b16 %v7685
      %v8971 = vunpack.c.h.b16 %v7685
      %v8972 = vunpack.c.l.b16 %v7686
      %v8973 = vunpack.c.h.b16 %v7686
      %v8974 = vunpack.c.l.b16 %v7687
      %v8975 = vunpack.c.h.b16 %v7687
      %v8976 = vunpack.c.l.b16 %v7688
      %v8977 = vunpack.c.h.b16 %v7688
      %v8978 = vunpack.c.l.b16 %v7689
      %v8979 = vunpack.c.h.b16 %v7689
      %v8980 = vunpack.c.l.b16 %v7690
      %v8981 = vunpack.c.h.b16 %v7690
      %v8982 = vunpack.c.l.b16 %v7691
      %v8983 = vunpack.c.h.b16 %v7691
      %v8984 = vunpack.c.l.b16 %v7692
      %v8985 = vunpack.c.h.b16 %v7692
      %v8986 = vunpack.c.l.b16 %v7693
      %v8987 = vunpack.c.h.b16 %v7693
      %v8988 = vunpack.c.l.b16 %v7694
      %v8989 = vunpack.c.h.b16 %v7694
      %v8990 = vunpack.c.l.b16 %v7695
      %v8991 = vunpack.c.h.b16 %v7695
      %v8992 = vunpack.c.l.b16 %v7696
      %v8993 = vunpack.c.h.b16 %v7696
      %v8994 = vunpack.c.l.b16 %v7697
      %v8995 = vunpack.c.h.b16 %v7697
      %v8996 = vunpack.c.l.b16 %v7698
      %v8997 = vunpack.c.h.b16 %v7698
      %v8998 = vunpack.c.l.b16 %v7699
      %v8999 = vunpack.c.h.b16 %v7699
      %v9000 = vunpack.c.l.b16 %v7700
      %v9001 = vunpack.c.h.b16 %v7700
      %v9002 = vunpack.c.l.b16 %v7701
      %v9003 = vunpack.c.h.b16 %v7701
      %v9004 = vunpack.c.l.b16 %v7702
      %v9005 = vunpack.c.h.b16 %v7702
      %v9006 = vunpack.c.l.b16 %v7703
      %v9007 = vunpack.c.h.b16 %v7703
      %v9008 = vunpack.c.l.b16 %v7704
      %v9009 = vunpack.c.h.b16 %v7704
      %v9010 = vunpack.c.l.b16 %v7705
      %v9011 = vunpack.c.h.b16 %v7705
      %v9012 = vunpack.c.l.b16 %v7706
      %v9013 = vunpack.c.h.b16 %v7706
      %v9014 = vunpack.c.l.b16 %v7707
      %v9015 = vunpack.c.h.b16 %v7707
      %v9016 = vunpack.c.l.b16 %v7708
      %v9017 = vunpack.c.h.b16 %v7708
      %v9018 = vunpack.c.l.b16 %v7709
      %v9019 = vunpack.c.h.b16 %v7709
      %v9020 = vunpack.c.l.b16 %v7710
      %v9021 = vunpack.c.h.b16 %v7710
      %v9022 = vunpack.c.l.b16 %v7711
      %v9023 = vunpack.c.h.b16 %v7711
      %v9024 = vunpack.c.l.b16 %v7712
      %v9025 = vunpack.c.h.b16 %v7712
      %v9026 = vunpack.c.l.b16 %v7713
      %v9027 = vunpack.c.h.b16 %v7713
      %v9028 = vunpack.c.l.b16 %v7714
      %v9029 = vunpack.c.h.b16 %v7714
      %v9030 = vunpack.c.l.b16 %v7715
      %v9031 = vunpack.c.h.b16 %v7715
      %v9032 = vunpack.c.l.b16 %v7716
      %v9033 = vunpack.c.h.b16 %v7716
      %v9034 = vunpack.c.l.b16 %v7717
      %v9035 = vunpack.c.h.b16 %v7717
      %v9036 = vunpack.c.l.b16 %v7718
      %v9037 = vunpack.c.h.b16 %v7718
      %v9038 = vunpack.c.l.b16 %v7719
      %v9039 = vunpack.c.h.b16 %v7719
      %v9040 = vunpack.c.l.b16 %v7720
      %v9041 = vunpack.c.h.b16 %v7720
      %v9042 = vunpack.c.l.b16 %v7721
      %v9043 = vunpack.c.h.b16 %v7721
      %v9044 = vunpack.c.l.b16 %v7722
      %v9045 = vunpack.c.h.b16 %v7722
      %v9046 = vunpack.c.l.b16 %v7723
      %v9047 = vunpack.c.h.b16 %v7723
      %v9048 = vunpack.c.l.b16 %v7724
      %v9049 = vunpack.c.h.b16 %v7724
      %v9050 = vunpack.c.l.b16 %v7725
      %v9051 = vunpack.c.h.b16 %v7725
      %v9052 = vunpack.c.l.b16 %v7726
      %v9053 = vunpack.c.h.b16 %v7726
      %v9054 = vunpack.c.l.b16 %v7727
      %v9055 = vunpack.c.h.b16 %v7727
      %v9056 = vunpack.c.l.b16 %v7728
      %v9057 = vunpack.c.h.b16 %v7728
      %v9058 = vunpack.c.l.b16 %v7729
      %v9059 = vunpack.c.h.b16 %v7729
      %v9060 = vunpack.c.l.b16 %v7730
      %v9061 = vunpack.c.h.b16 %v7730
      %v9062 = vunpack.c.l.b16 %v7731
      %v9063 = vunpack.c.h.b16 %v7731
      %v9064 = vunpack.c.l.b16 %v7732
      %v9065 = vunpack.c.h.b16 %v7732
      %v9066 = vunpack.c.l.b16 %v7733
      %v9067 = vunpack.c.h.b16 %v7733
      %v9068 = vunpack.c.l.b16 %v7734
      %v9069 = vunpack.c.h.b16 %v7734
      %v9070 = vunpack.c.l.b16 %v7735
      %v9071 = vunpack.c.h.b16 %v7735
      %v9072 = vunpack.c.l.b16 %v7736
      %v9073 = vunpack.c.h.b16 %v7736
      %v9074 = vunpack.c.l.b16 %v7737
      %v9075 = vunpack.c.h.b16 %v7737
      %v9076 = vunpack.c.l.b16 %v7738
      %v9077 = vunpack.c.h.b16 %v7738
      %v9078 = vunpack.c.l.b16 %v7739
      %v9079 = vunpack.c.h.b16 %v7739
      %v9080 = vunpack.c.l.b16 %v7740
      %v9081 = vunpack.c.h.b16 %v7740
      %v9082 = vunpack.c.l.b16 %v7741
      %v9083 = vunpack.c.h.b16 %v7741
      %v9084 = vunpack.c.l.b16 %v7742
      %v9085 = vunpack.c.h.b16 %v7742
      %v9086 = vunpack.c.l.b16 %v7743
      %v9087 = vunpack.c.h.b16 %v7743
      %v9088 = vunpack.c.l.b16 %v7744
      %v9089 = vunpack.c.h.b16 %v7744
      %v9090 = vunpack.c.l.b16 %v7745
      %v9091 = vunpack.c.h.b16 %v7745
      %v9092 = vunpack.c.l.b16 %v7746
      %v9093 = vunpack.c.h.b16 %v7746
      %v9094 = vunpack.c.l.b16 %v7747
      %v9095 = vunpack.c.h.b16 %v7747
      %v9096 = vunpack.c.l.b16 %v7748
      %v9097 = vunpack.c.h.b16 %v7748
      %v9098 = vunpack.c.l.b16 %v7749
      %v9099 = vunpack.c.h.b16 %v7749
      %v9100 = vunpack.c.l.b16 %v7750
      %v9101 = vunpack.c.h.b16 %v7750
      %v9102 = vunpack.c.l.b16 %v7751
      %v9103 = vunpack.c.h.b16 %v7751
      %v9104 = vunpack.c.l.b16 %v7752
      %v9105 = vunpack.c.h.b16 %v7752
      %v9106 = vunpack.c.l.b16 %v7753
      %v9107 = vunpack.c.h.b16 %v7753
      %v9108 = vunpack.c.l.b16 %v7754
      %v9109 = vunpack.c.h.b16 %v7754
      %v9110 = vunpack.c.l.b16 %v7755
      %v9111 = vunpack.c.h.b16 %v7755
      %v9112 = vunpack.c.l.b16 %v7756
      %v9113 = vunpack.c.h.b16 %v7756
      %v9114 = vunpack.c.l.b16 %v7757
      %v9115 = vunpack.c.h.b16 %v7757
      %v9116 = vunpack.c.l.b16 %v7758
      %v9117 = vunpack.c.h.b16 %v7758
      %v9118 = vunpack.c.l.b16 %v7759
      %v9119 = vunpack.c.h.b16 %v7759
      %v9120 = vunpack.c.l.b16 %v7760
      %v9121 = vunpack.c.h.b16 %v7760
      %v9122 = vunpack.c.l.b16 %v7761
      %v9123 = vunpack.c.h.b16 %v7761
      %v9124 = vunpack.c.l.b16 %v7762
      %v9125 = vunpack.c.h.b16 %v7762
      %v9126 = vunpack.c.l.b16 %v7763
      %v9127 = vunpack.c.h.b16 %v7763
      %v9128 = vunpack.c.l.b16 %v7764
      %v9129 = vunpack.c.h.b16 %v7764
      %v9130 = vunpack.c.l.b16 %v7765
      %v9131 = vunpack.c.h.b16 %v7765
      %v9132 = vunpack.c.l.b16 %v7766
      %v9133 = vunpack.c.h.b16 %v7766
      %v9134 = vunpack.c.l.b16 %v7767
      %v9135 = vunpack.c.h.b16 %v7767
      %v9136 = vunpack.c.l.b16 %v7768
      %v9137 = vunpack.c.h.b16 %v7768
      %v9138 = vunpack.c.l.b16 %v7769
      %v9139 = vunpack.c.h.b16 %v7769
      %v9140 = vunpack.c.l.b16 %v7770
      %v9141 = vunpack.c.h.b16 %v7770
      %v9142 = vunpack.c.l.b16 %v7771
      %v9143 = vunpack.c.h.b16 %v7771
      %v9144 = vunpack.c.l.b16 %v7772
      %v9145 = vunpack.c.h.b16 %v7772
      %v9146 = vunpack.c.l.b16 %v7773
      %v9147 = vunpack.c.h.b16 %v7773
      %v9148 = vunpack.c.l.b16 %v7774
      %v9149 = vunpack.c.h.b16 %v7774
      %v9150 = vunpack.c.l.b16 %v7775
      %v9151 = vunpack.c.h.b16 %v7775
      %v9152 = vunpack.c.l.b16 %v7776
      %v9153 = vunpack.c.h.b16 %v7776
      %v9154 = vunpack.c.l.b16 %v7777
      %v9155 = vunpack.c.h.b16 %v7777
      %v9156 = vunpack.c.l.b16 %v7778
      %v9157 = vunpack.c.h.b16 %v7778
      %v9158 = vunpack.c.l.b16 %v7779
      %v9159 = vunpack.c.h.b16 %v7779
      %v9160 = vunpack.c.l.b16 %v7780
      %v9161 = vunpack.c.h.b16 %v7780
      %v9162 = vunpack.c.l.b16 %v7781
      %v9163 = vunpack.c.h.b16 %v7781
      %v9164 = vunpack.c.l.b16 %v7782
      %v9165 = vunpack.c.h.b16 %v7782
      %v9166 = vunpack.c.l.b16 %v7783
      %v9167 = vunpack.c.h.b16 %v7783
      %v9168 = vunpack.c.l.b16 %v7784
      %v9169 = vunpack.c.h.b16 %v7784
      %v9170 = vunpack.c.l.b16 %v7785
      %v9171 = vunpack.c.h.b16 %v7785
      %v9172 = vunpack.c.l.b16 %v7786
      %v9173 = vunpack.c.h.b16 %v7786
      %v9174 = vunpack.c.l.b16 %v7787
      %v9175 = vunpack.c.h.b16 %v7787
      %v9176 = vunpack.c.l.b16 %v7788
      %v9177 = vunpack.c.h.b16 %v7788
      %v9178 = vunpack.c.l.b16 %v7789
      %v9179 = vunpack.c.h.b16 %v7789
      %v9180 = vunpack.c.l.b16 %v7790
      %v9181 = vunpack.c.h.b16 %v7790
      %v9182 = vunpack.c.l.b16 %v7791
      %v9183 = vunpack.c.h.b16 %v7791
      %v9184 = vunpack.c.l.b16 %v7792
      %v9185 = vunpack.c.h.b16 %v7792
      %v9186 = vunpack.c.l.b16 %v7793
      %v9187 = vunpack.c.h.b16 %v7793
      %v9188 = vunpack.c.l.b16 %v7794
      %v9189 = vunpack.c.h.b16 %v7794
      %v9190 = vunpack.c.l.b16 %v7795
      %v9191 = vunpack.c.h.b16 %v7795
      %v9192 = vunpack.c.l.b16 %v7796
      %v9193 = vunpack.c.h.b16 %v7796
      %v9194 = vunpack.c.l.b16 %v7797
      %v9195 = vunpack.c.h.b16 %v7797
      %v9196 = vunpack.c.l.b16 %v7798
      %v9197 = vunpack.c.h.b16 %v7798
      %v9198 = vunpack.c.l.b16 %v7799
      %v9199 = vunpack.c.h.b16 %v7799
      %v9200 = vunpack.c.l.b16 %v7800
      %v9201 = vunpack.c.h.b16 %v7800
      %v9202 = vunpack.c.l.b16 %v7801
      %v9203 = vunpack.c.h.b16 %v7801
      %v9204 = vunpack.c.l.b16 %v7802
      %v9205 = vunpack.c.h.b16 %v7802
      %v9206 = vunpack.c.l.b16 %v7803
      %v9207 = vunpack.c.h.b16 %v7803
      %v9208 = vunpack.c.l.b16 %v7804
      %v9209 = vunpack.c.h.b16 %v7804
      %v9210 = vunpack.c.l.b16 %v7805
      %v9211 = vunpack.c.h.b16 %v7805
      %v9212 = vunpack.c.l.b16 %v7806
      %v9213 = vunpack.c.h.b16 %v7806
      %v9214 = vunpack.c.l.b16 %v7807
      %v9215 = vunpack.c.h.b16 %v7807
      %v9216 = vunpack.c.l.b16 %v7808
      %v9217 = vunpack.c.h.b16 %v7808
      %v9218 = vunpack.c.l.b16 %v7809
      %v9219 = vunpack.c.h.b16 %v7809
      %v9220 = vunpack.c.l.b16 %v7810
      %v9221 = vunpack.c.h.b16 %v7810
      %v9222 = vunpack.c.l.b16 %v7811
      %v9223 = vunpack.c.h.b16 %v7811
      %v9224 = vunpack.c.l.b16 %v7812
      %v9225 = vunpack.c.h.b16 %v7812
      %v9226 = vunpack.c.l.b16 %v7813
      %v9227 = vunpack.c.h.b16 %v7813
      %v9228 = vunpack.c.l.b16 %v7814
      %v9229 = vunpack.c.h.b16 %v7814
      %v9230 = vunpack.c.l.b16 %v7815
      %v9231 = vunpack.c.h.b16 %v7815
      %v9232 = vunpack.c.l.b16 %v7816
      %v9233 = vunpack.c.h.b16 %v7816
      %v9234 = vunpack.c.l.b16 %v7817
      %v9235 = vunpack.c.h.b16 %v7817
      %v9236 = vunpack.c.l.b16 %v7818
      %v9237 = vunpack.c.h.b16 %v7818
      %v9238 = vunpack.c.l.b16 %v7819
      %v9239 = vunpack.c.h.b16 %v7819
      %v9240 = vunpack.c.l.b16 %v7820
      %v9241 = vunpack.c.h.b16 %v7820
      %v9242 = vunpack.c.l.b16 %v7821
      %v9243 = vunpack.c.h.b16 %v7821
      %v9244 = vunpack.c.l.b16 %v7822
      %v9245 = vunpack.c.h.b16 %v7822
      %v9246 = vunpack.c.l.b16 %v7823
      %v9247 = vunpack.c.h.b16 %v7823
      %v9248 = vunpack.c.l.b16 %v7824
      %v9249 = vunpack.c.h.b16 %v7824
      %v9250 = vunpack.c.l.b16 %v7825
      %v9251 = vunpack.c.h.b16 %v7825
      %v9252 = vunpack.c.l.b16 %v7826
      %v9253 = vunpack.c.h.b16 %v7826
      %v9254 = vunpack.c.l.b16 %v7827
      %v9255 = vunpack.c.h.b16 %v7827
      %v9256 = vunpack.c.l.b16 %v7828
      %v9257 = vunpack.c.h.b16 %v7828
      %v9258 = vunpack.c.l.b16 %v7829
      %v9259 = vunpack.c.h.b16 %v7829
      %v9260 = vunpack.c.l.b16 %v7830
      %v9261 = vunpack.c.h.b16 %v7830
      %v9262 = vunpack.c.l.b16 %v7831
      %v9263 = vunpack.c.h.b16 %v7831
      %v9264 = vunpack.c.l.b16 %v7832
      %v9265 = vunpack.c.h.b16 %v7832
      %v9266 = vunpack.c.l.b16 %v7833
      %v9267 = vunpack.c.h.b16 %v7833
      %v9268 = vunpack.c.l.b16 %v7834
      %v9269 = vunpack.c.h.b16 %v7834
      %v9270 = vunpack.c.l.b16 %v7835
      %v9271 = vunpack.c.h.b16 %v7835
      %v9272 = vunpack.c.l.b16 %v7836
      %v9273 = vunpack.c.h.b16 %v7836
      %v9274 = vunpack.c.l.b16 %v7837
      %v9275 = vunpack.c.h.b16 %v7837
      %v9276 = vunpack.c.l.b16 %v7838
      %v9277 = vunpack.c.h.b16 %v7838
      %v9278 = vunpack.c.l.b16 %v7839
      %v9279 = vunpack.c.h.b16 %v7839
      %v9280 = vunpack.c.l.b16 %v7840
      %v9281 = vunpack.c.h.b16 %v7840
      %v9282 = vunpack.c.l.b16 %v7841
      %v9283 = vunpack.c.h.b16 %v7841
      %v9284 = vunpack.c.l.b16 %v7842
      %v9285 = vunpack.c.h.b16 %v7842
      %v9286 = vunpack.c.l.b16 %v7843
      %v9287 = vunpack.c.h.b16 %v7843
      %v9288 = vunpack.c.l.b16 %v7844
      %v9289 = vunpack.c.h.b16 %v7844
      %v9290 = vunpack.c.l.b16 %v7845
      %v9291 = vunpack.c.h.b16 %v7845
      %v9292 = vunpack.c.l.b16 %v7846
      %v9293 = vunpack.c.h.b16 %v7846
      %v9294 = vunpack.c.l.b16 %v7847
      %v9295 = vunpack.c.h.b16 %v7847
      %v9296 = vunpack.c.l.b16 %v7848
      %v9297 = vunpack.c.h.b16 %v7848
      %v9298 = vunpack.c.l.b16 %v7849
      %v9299 = vunpack.c.h.b16 %v7849
      %v9300 = vunpack.c.l.b16 %v7850
      %v9301 = vunpack.c.h.b16 %v7850
      %v9302 = vunpack.c.l.b16 %v7851
      %v9303 = vunpack.c.h.b16 %v7851
      %v9304 = vunpack.c.l.b16 %v7852
      %v9305 = vunpack.c.h.b16 %v7852
      %v9306 = vunpack.c.l.b16 %v7853
      %v9307 = vunpack.c.h.b16 %v7853
      %v9308 = vunpack.c.l.b16 %v7854
      %v9309 = vunpack.c.h.b16 %v7854
      %v9310 = vunpack.c.l.b16 %v7855
      %v9311 = vunpack.c.h.b16 %v7855
      %v9312 = vunpack.c.l.b16 %v7856
      %v9313 = vunpack.c.h.b16 %v7856
      %v9314 = vunpack.c.l.b16 %v7857
      %v9315 = vunpack.c.h.b16 %v7857
      %v9316 = vunpack.c.l.b16 %v7858
      %v9317 = vunpack.c.h.b16 %v7858
      %v9318 = vunpack.c.l.b16 %v7859
      %v9319 = vunpack.c.h.b16 %v7859
      %v9320 = vunpack.c.l.b16 %v7860
      %v9321 = vunpack.c.h.b16 %v7860
      %v9322 = vunpack.c.l.b16 %v7861
      %v9323 = vunpack.c.h.b16 %v7861
      %v9324 = vunpack.c.l.b16 %v7862
      %v9325 = vunpack.c.h.b16 %v7862
      %v9326 = vunpack.c.l.b16 %v7863
      %v9327 = vunpack.c.h.b16 %v7863
      %v9328 = vunpack.c.l.b16 %v7864
      %v9329 = vunpack.c.h.b16 %v7864
      %v9330 = vunpack.c.l.b16 %v7865
      %v9331 = vunpack.c.h.b16 %v7865
      %v9332 = vunpack.c.l.b16 %v7866
      %v9333 = vunpack.c.h.b16 %v7866
      %v9334 = vunpack.c.l.b16 %v7867
      %v9335 = vunpack.c.h.b16 %v7867
      %v9336 = vunpack.c.l.b16 %v7868
      %v9337 = vunpack.c.h.b16 %v7868
      %v9338 = vunpack.c.l.b16 %v7869
      %v9339 = vunpack.c.h.b16 %v7869
      %v9340 = vunpack.c.l.b16 %v7870
      %v9341 = vunpack.c.h.b16 %v7870
      %v9342 = vunpack.c.l.b16 %v7871
      %v9343 = vunpack.c.h.b16 %v7871
      %v9344 = vunpack.c.l.b16 %v7872
      %v9345 = vunpack.c.h.b16 %v7872
      %v9346 = vunpack.c.l.b16 %v7873
      %v9347 = vunpack.c.h.b16 %v7873
      %v9348 = vunpack.c.l.b16 %v7874
      %v9349 = vunpack.c.h.b16 %v7874
      %v9350 = vunpack.c.l.b16 %v7875
      %v9351 = vunpack.c.h.b16 %v7875
      %v9352 = vunpack.c.l.b16 %v7876
      %v9353 = vunpack.c.h.b16 %v7876
      %v9354 = vunpack.c.l.b16 %v7877
      %v9355 = vunpack.c.h.b16 %v7877
      %v9356 = vunpack.c.l.b16 %v7878
      %v9357 = vunpack.c.h.b16 %v7878
      %v9358 = vunpack.c.l.b16 %v7879
      %v9359 = vunpack.c.h.b16 %v7879
      %v9360 = vunpack.c.l.b16 %v7880
      %v9361 = vunpack.c.h.b16 %v7880
      %v9362 = vunpack.c.l.b16 %v7881
      %v9363 = vunpack.c.h.b16 %v7881
      %v9364 = vunpack.c.l.b16 %v7882
      %v9365 = vunpack.c.h.b16 %v7882
      %v9366 = vunpack.c.l.b16 %v7883
      %v9367 = vunpack.c.h.b16 %v7883
      %v9368 = vunpack.c.l.b16 %v7884
      %v9369 = vunpack.c.h.b16 %v7884
      %v9370 = vunpack.c.l.b16 %v7885
      %v9371 = vunpack.c.h.b16 %v7885
      %v9372 = vunpack.c.l.b16 %v7886
      %v9373 = vunpack.c.h.b16 %v7886
      %v9374 = vunpack.c.l.b16 %v7887
      %v9375 = vunpack.c.h.b16 %v7887
      %v9376 = vunpack.c.l.b16 %v7888
      %v9377 = vunpack.c.h.b16 %v7888
      %v9378 = vunpack.c.l.b16 %v7889
      %v9379 = vunpack.c.h.b16 %v7889
      %v9380 = vunpack.c.l.b16 %v7890
      %v9381 = vunpack.c.h.b16 %v7890
      %v9382 = vunpack.c.l.b16 %v7891
      %v9383 = vunpack.c.h.b16 %v7891
      %v9384 = vunpack.c.l.b16 %v7892
      %v9385 = vunpack.c.h.b16 %v7892
      %v9386 = vunpack.c.l.b16 %v7893
      %v9387 = vunpack.c.h.b16 %v7893
      %v9388 = vunpack.c.l.b16 %v7894
      %v9389 = vunpack.c.h.b16 %v7894
      %v9390 = vunpack.c.l.b16 %v7895
      %v9391 = vunpack.c.h.b16 %v7895
      %v9392 = vunpack.c.l.b16 %v7896
      %v9393 = vunpack.c.h.b16 %v7896
      %v9394 = vunpack.c.l.b16 %v7897
      %v9395 = vunpack.c.h.b16 %v7897
      %v9396 = vunpack.c.l.b16 %v7898
      %v9397 = vunpack.c.h.b16 %v7898
      %v9398 = vunpack.c.l.b16 %v7899
      %v9399 = vunpack.c.h.b16 %v7899
      %v9400 = vunpack.c.l.b16 %v7900
      %v9401 = vunpack.c.h.b16 %v7900
      %v9402 = vunpack.c.l.b16 %v7901
      %v9403 = vunpack.c.h.b16 %v7901
      %v9404 = vunpack.c.l.b16 %v7902
      %v9405 = vunpack.c.h.b16 %v7902
      %v9406 = vunpack.c.l.b16 %v7903
      %v9407 = vunpack.c.h.b16 %v7903
      %v9408 = vunpack.c.l.b16 %v7904
      %v9409 = vunpack.c.h.b16 %v7904
      %v9410 = vunpack.c.l.b16 %v7905
      %v9411 = vunpack.c.h.b16 %v7905
      %v9412 = vunpack.c.l.b16 %v7906
      %v9413 = vunpack.c.h.b16 %v7906
      %v9414 = vunpack.c.l.b16 %v7907
      %v9415 = vunpack.c.h.b16 %v7907
      %v9416 = vunpack.c.l.b16 %v7908
      %v9417 = vunpack.c.h.b16 %v7908
      %v9418 = vunpack.c.l.b16 %v7909
      %v9419 = vunpack.c.h.b16 %v7909
      %v9420 = vunpack.c.l.b16 %v7910
      %v9421 = vunpack.c.h.b16 %v7910
      %v9422 = vunpack.c.l.b16 %v7911
      %v9423 = vunpack.c.h.b16 %v7911
      %v9424 = vunpack.c.l.b16 %v7912
      %v9425 = vunpack.c.h.b16 %v7912
      %v9426 = vunpack.c.l.b16 %v7913
      %v9427 = vunpack.c.h.b16 %v7913
      %v9428 = vunpack.c.l.b16 %v7914
      %v9429 = vunpack.c.h.b16 %v7914
      %v9430 = vunpack.c.l.b16 %v7915
      %v9431 = vunpack.c.h.b16 %v7915
      %v9432 = vunpack.c.l.b16 %v7916
      %v9433 = vunpack.c.h.b16 %v7916
      %v9434 = vunpack.c.l.b16 %v7917
      %v9435 = vunpack.c.h.b16 %v7917
      %v9436 = vunpack.c.l.b16 %v7918
      %v9437 = vunpack.c.h.b16 %v7918
      %v9438 = vunpack.c.l.b16 %v7919
      %v9439 = vunpack.c.h.b16 %v7919
      %v9440 = vunpack.c.l.b16 %v7920
      %v9441 = vunpack.c.h.b16 %v7920
      %v9442 = vunpack.c.l.b16 %v7921
      %v9443 = vunpack.c.h.b16 %v7921
      %v9444 = vunpack.c.l.b16 %v7922
      %v9445 = vunpack.c.h.b16 %v7922
      %v9446 = vunpack.c.l.b16 %v7923
      %v9447 = vunpack.c.h.b16 %v7923
      %v9448 = vunpack.c.l.b16 %v7924
      %v9449 = vunpack.c.h.b16 %v7924
      %v9450 = vunpack.c.l.b16 %v7925
      %v9451 = vunpack.c.h.b16 %v7925
      %v9452 = vunpack.c.l.b16 %v7926
      %v9453 = vunpack.c.h.b16 %v7926
      %v9454 = vunpack.c.l.b16 %v7927
      %v9455 = vunpack.c.h.b16 %v7927
      %v9456 = vunpack.c.l.b16 %v7928
      %v9457 = vunpack.c.h.b16 %v7928
      %v9458 = vunpack.c.l.b16 %v7929
      %v9459 = vunpack.c.h.b16 %v7929
      %v9460 = vunpack.c.l.b16 %v7930
      %v9461 = vunpack.c.h.b16 %v7930
      %v9462 = vunpack.c.l.b16 %v7931
      %v9463 = vunpack.c.h.b16 %v7931
      %v9464 = vunpack.c.l.b16 %v7932
      %v9465 = vunpack.c.h.b16 %v7932
      %v9466 = vunpack.c.l.b16 %v7933
      %v9467 = vunpack.c.h.b16 %v7933
      %v9468 = vunpack.c.l.b16 %v7934
      %v9469 = vunpack.c.h.b16 %v7934
      %v9470 = vunpack.c.l.b16 %v7935
      %v9471 = vunpack.c.h.b16 %v7935
      %v9472 = vunpack.c.l.b16 %v7936
      %v9473 = vunpack.c.h.b16 %v7936
      %v9474 = vunpack.c.l.b16 %v7937
      %v9475 = vunpack.c.h.b16 %v7937
      %v9476 = vunpack.c.l.b16 %v7938
      %v9477 = vunpack.c.h.b16 %v7938
      %v9478 = vunpack.c.l.b16 %v7939
      %v9479 = vunpack.c.h.b16 %v7939
      %v9480 = vpack.c.b16 %v8460, %v8456
      %v9481 = vpack.c.b16 %v8461, %v8457
      %v9482 = vpack.c.b16 %v8462, %v8458
      %v9483 = vpack.c.b16 %v8463, %v8459
      %v9484 = vpack.c.b16 %v8468, %v8464
      %v9485 = vpack.c.b16 %v8469, %v8465
      %v9486 = vpack.c.b16 %v8470, %v8466
      %v9487 = vpack.c.b16 %v8471, %v8467
      %v9488 = vpack.c.b16 %v8476, %v8472
      %v9489 = vpack.c.b16 %v8477, %v8473
      %v9490 = vpack.c.b16 %v8478, %v8474
      %v9491 = vpack.c.b16 %v8479, %v8475
      %v9492 = vpack.c.b16 %v8484, %v8480
      %v9493 = vpack.c.b16 %v8485, %v8481
      %v9494 = vpack.c.b16 %v8486, %v8482
      %v9495 = vpack.c.b16 %v8487, %v8483
      %v9496 = vpack.c.b16 %v8492, %v8488
      %v9497 = vpack.c.b16 %v8493, %v8489
      %v9498 = vpack.c.b16 %v8494, %v8490
      %v9499 = vpack.c.b16 %v8495, %v8491
      %v9500 = vpack.c.b16 %v8500, %v8496
      %v9501 = vpack.c.b16 %v8501, %v8497
      %v9502 = vpack.c.b16 %v8502, %v8498
      %v9503 = vpack.c.b16 %v8503, %v8499
      %v9504 = vpack.c.b16 %v8508, %v8504
      %v9505 = vpack.c.b16 %v8509, %v8505
      %v9506 = vpack.c.b16 %v8510, %v8506
      %v9507 = vpack.c.b16 %v8511, %v8507
      %v9508 = vpack.c.b16 %v8516, %v8512
      %v9509 = vpack.c.b16 %v8517, %v8513
      %v9510 = vpack.c.b16 %v8518, %v8514
      %v9511 = vpack.c.b16 %v8519, %v8515
      %v9512 = vpack.c.b16 %v8524, %v8520
      %v9513 = vpack.c.b16 %v8525, %v8521
      %v9514 = vpack.c.b16 %v8526, %v8522
      %v9515 = vpack.c.b16 %v8527, %v8523
      %v9516 = vpack.c.b16 %v8532, %v8528
      %v9517 = vpack.c.b16 %v8533, %v8529
      %v9518 = vpack.c.b16 %v8534, %v8530
      %v9519 = vpack.c.b16 %v8535, %v8531
      %v9520 = vpack.c.b16 %v8540, %v8536
      %v9521 = vpack.c.b16 %v8541, %v8537
      %v9522 = vpack.c.b16 %v8542, %v8538
      %v9523 = vpack.c.b16 %v8543, %v8539
      %v9524 = vpack.c.b16 %v8548, %v8544
      %v9525 = vpack.c.b16 %v8549, %v8545
      %v9526 = vpack.c.b16 %v8550, %v8546
      %v9527 = vpack.c.b16 %v8551, %v8547
      %v9528 = vpack.c.b16 %v8556, %v8552
      %v9529 = vpack.c.b16 %v8557, %v8553
      %v9530 = vpack.c.b16 %v8558, %v8554
      %v9531 = vpack.c.b16 %v8559, %v8555
      %v9532 = vpack.c.b16 %v8564, %v8560
      %v9533 = vpack.c.b16 %v8565, %v8561
      %v9534 = vpack.c.b16 %v8566, %v8562
      %v9535 = vpack.c.b16 %v8567, %v8563
      %v9536 = vpack.c.b16 %v8572, %v8568
      %v9537 = vpack.c.b16 %v8573, %v8569
      %v9538 = vpack.c.b16 %v8574, %v8570
      %v9539 = vpack.c.b16 %v8575, %v8571
      %v9540 = vpack.c.b16 %v8580, %v8576
      %v9541 = vpack.c.b16 %v8581, %v8577
      %v9542 = vpack.c.b16 %v8582, %v8578
      %v9543 = vpack.c.b16 %v8583, %v8579
      %v9544 = vpack.c.b16 %v8588, %v8584
      %v9545 = vpack.c.b16 %v8589, %v8585
      %v9546 = vpack.c.b16 %v8590, %v8586
      %v9547 = vpack.c.b16 %v8591, %v8587
      %v9548 = vpack.c.b16 %v8596, %v8592
      %v9549 = vpack.c.b16 %v8597, %v8593
      %v9550 = vpack.c.b16 %v8598, %v8594
      %v9551 = vpack.c.b16 %v8599, %v8595
      %v9552 = vpack.c.b16 %v8604, %v8600
      %v9553 = vpack.c.b16 %v8605, %v8601
      %v9554 = vpack.c.b16 %v8606, %v8602
      %v9555 = vpack.c.b16 %v8607, %v8603
      %v9556 = vpack.c.b16 %v8612, %v8608
      %v9557 = vpack.c.b16 %v8613, %v8609
      %v9558 = vpack.c.b16 %v8614, %v8610
      %v9559 = vpack.c.b16 %v8615, %v8611
      %v9560 = vpack.c.b16 %v8620, %v8616
      %v9561 = vpack.c.b16 %v8621, %v8617
      %v9562 = vpack.c.b16 %v8622, %v8618
      %v9563 = vpack.c.b16 %v8623, %v8619
      %v9564 = vpack.c.b16 %v8628, %v8624
      %v9565 = vpack.c.b16 %v8629, %v8625
      %v9566 = vpack.c.b16 %v8630, %v8626
      %v9567 = vpack.c.b16 %v8631, %v8627
      %v9568 = vpack.c.b16 %v8636, %v8632
      %v9569 = vpack.c.b16 %v8637, %v8633
      %v9570 = vpack.c.b16 %v8638, %v8634
      %v9571 = vpack.c.b16 %v8639, %v8635
      %v9572 = vpack.c.b16 %v8644, %v8640
      %v9573 = vpack.c.b16 %v8645, %v8641
      %v9574 = vpack.c.b16 %v8646, %v8642
      %v9575 = vpack.c.b16 %v8647, %v8643
      %v9576 = vpack.c.b16 %v8652, %v8648
      %v9577 = vpack.c.b16 %v8653, %v8649
      %v9578 = vpack.c.b16 %v8654, %v8650
      %v9579 = vpack.c.b16 %v8655, %v8651
      %v9580 = vpack.c.b16 %v8660, %v8656
      %v9581 = vpack.c.b16 %v8661, %v8657
      %v9582 = vpack.c.b16 %v8662, %v8658
      %v9583 = vpack.c.b16 %v8663, %v8659
      %v9584 = vpack.c.b16 %v8668, %v8664
      %v9585 = vpack.c.b16 %v8669, %v8665
      %v9586 = vpack.c.b16 %v8670, %v8666
      %v9587 = vpack.c.b16 %v8671, %v8667
      %v9588 = vpack.c.b16 %v8676, %v8672
      %v9589 = vpack.c.b16 %v8677, %v8673
      %v9590 = vpack.c.b16 %v8678, %v8674
      %v9591 = vpack.c.b16 %v8679, %v8675
      %v9592 = vpack.c.b16 %v8684, %v8680
      %v9593 = vpack.c.b16 %v8685, %v8681
      %v9594 = vpack.c.b16 %v8686, %v8682
      %v9595 = vpack.c.b16 %v8687, %v8683
      %v9596 = vpack.c.b16 %v8692, %v8688
      %v9597 = vpack.c.b16 %v8693, %v8689
      %v9598 = vpack.c.b16 %v8694, %v8690
      %v9599 = vpack.c.b16 %v8695, %v8691
      %v9600 = vpack.c.b16 %v8700, %v8696
      %v9601 = vpack.c.b16 %v8701, %v8697
      %v9602 = vpack.c.b16 %v8702, %v8698
      %v9603 = vpack.c.b16 %v8703, %v8699
      %v9604 = vpack.c.b16 %v8708, %v8704
      %v9605 = vpack.c.b16 %v8709, %v8705
      %v9606 = vpack.c.b16 %v8710, %v8706
      %v9607 = vpack.c.b16 %v8711, %v8707
      %v9608 = vpack.c.b16 %v8716, %v8712
      %v9609 = vpack.c.b16 %v8717, %v8713
      %v9610 = vpack.c.b16 %v8718, %v8714
      %v9611 = vpack.c.b16 %v8719, %v8715
      %v9612 = vpack.c.b16 %v8724, %v8720
      %v9613 = vpack.c.b16 %v8725, %v8721
      %v9614 = vpack.c.b16 %v8726, %v8722
      %v9615 = vpack.c.b16 %v8727, %v8723
      %v9616 = vpack.c.b16 %v8732, %v8728
      %v9617 = vpack.c.b16 %v8733, %v8729
      %v9618 = vpack.c.b16 %v8734, %v8730
      %v9619 = vpack.c.b16 %v8735, %v8731
      %v9620 = vpack.c.b16 %v8740, %v8736
      %v9621 = vpack.c.b16 %v8741, %v8737
      %v9622 = vpack.c.b16 %v8742, %v8738
      %v9623 = vpack.c.b16 %v8743, %v8739
      %v9624 = vpack.c.b16 %v8748, %v8744
      %v9625 = vpack.c.b16 %v8749, %v8745
      %v9626 = vpack.c.b16 %v8750, %v8746
      %v9627 = vpack.c.b16 %v8751, %v8747
      %v9628 = vpack.c.b16 %v8756, %v8752
      %v9629 = vpack.c.b16 %v8757, %v8753
      %v9630 = vpack.c.b16 %v8758, %v8754
      %v9631 = vpack.c.b16 %v8759, %v8755
      %v9632 = vpack.c.b16 %v8764, %v8760
      %v9633 = vpack.c.b16 %v8765, %v8761
      %v9634 = vpack.c.b16 %v8766, %v8762
      %v9635 = vpack.c.b16 %v8767, %v8763
      %v9636 = vpack.c.b16 %v8772, %v8768
      %v9637 = vpack.c.b16 %v8773, %v8769
      %v9638 = vpack.c.b16 %v8774, %v8770
      %v9639 = vpack.c.b16 %v8775, %v8771
      %v9640 = vpack.c.b16 %v8780, %v8776
      %v9641 = vpack.c.b16 %v8781, %v8777
      %v9642 = vpack.c.b16 %v8782, %v8778
      %v9643 = vpack.c.b16 %v8783, %v8779
      %v9644 = vpack.c.b16 %v8788, %v8784
      %v9645 = vpack.c.b16 %v8789, %v8785
      %v9646 = vpack.c.b16 %v8790, %v8786
      %v9647 = vpack.c.b16 %v8791, %v8787
      %v9648 = vpack.c.b16 %v8796, %v8792
      %v9649 = vpack.c.b16 %v8797, %v8793
      %v9650 = vpack.c.b16 %v8798, %v8794
      %v9651 = vpack.c.b16 %v8799, %v8795
      %v9652 = vpack.c.b16 %v8804, %v8800
      %v9653 = vpack.c.b16 %v8805, %v8801
      %v9654 = vpack.c.b16 %v8806, %v8802
      %v9655 = vpack.c.b16 %v8807, %v8803
      %v9656 = vpack.c.b16 %v8812, %v8808
      %v9657 = vpack.c.b16 %v8813, %v8809
      %v9658 = vpack.c.b16 %v8814, %v8810
      %v9659 = vpack.c.b16 %v8815, %v8811
      %v9660 = vpack.c.b16 %v8820, %v8816
      %v9661 = vpack.c.b16 %v8821, %v8817
      %v9662 = vpack.c.b16 %v8822, %v8818
      %v9663 = vpack.c.b16 %v8823, %v8819
      %v9664 = vpack.c.b16 %v8828, %v8824
      %v9665 = vpack.c.b16 %v8829, %v8825
      %v9666 = vpack.c.b16 %v8830, %v8826
      %v9667 = vpack.c.b16 %v8831, %v8827
      %v9668 = vpack.c.b16 %v8836, %v8832
      %v9669 = vpack.c.b16 %v8837, %v8833
      %v9670 = vpack.c.b16 %v8838, %v8834
      %v9671 = vpack.c.b16 %v8839, %v8835
      %v9672 = vpack.c.b16 %v8844, %v8840
      %v9673 = vpack.c.b16 %v8845, %v8841
      %v9674 = vpack.c.b16 %v8846, %v8842
      %v9675 = vpack.c.b16 %v8847, %v8843
      %v9676 = vpack.c.b16 %v8852, %v8848
      %v9677 = vpack.c.b16 %v8853, %v8849
      %v9678 = vpack.c.b16 %v8854, %v8850
      %v9679 = vpack.c.b16 %v8855, %v8851
      %v9680 = vpack.c.b16 %v8860, %v8856
      %v9681 = vpack.c.b16 %v8861, %v8857
      %v9682 = vpack.c.b16 %v8862, %v8858
      %v9683 = vpack.c.b16 %v8863, %v8859
      %v9684 = vpack.c.b16 %v8868, %v8864
      %v9685 = vpack.c.b16 %v8869, %v8865
      %v9686 = vpack.c.b16 %v8870, %v8866
      %v9687 = vpack.c.b16 %v8871, %v8867
      %v9688 = vpack.c.b16 %v8876, %v8872
      %v9689 = vpack.c.b16 %v8877, %v8873
      %v9690 = vpack.c.b16 %v8878, %v8874
      %v9691 = vpack.c.b16 %v8879, %v8875
      %v9692 = vpack.c.b16 %v8884, %v8880
      %v9693 = vpack.c.b16 %v8885, %v8881
      %v9694 = vpack.c.b16 %v8886, %v8882
      %v9695 = vpack.c.b16 %v8887, %v8883
      %v9696 = vpack.c.b16 %v8892, %v8888
      %v9697 = vpack.c.b16 %v8893, %v8889
      %v9698 = vpack.c.b16 %v8894, %v8890
      %v9699 = vpack.c.b16 %v8895, %v8891
      %v9700 = vpack.c.b16 %v8900, %v8896
      %v9701 = vpack.c.b16 %v8901, %v8897
      %v9702 = vpack.c.b16 %v8902, %v8898
      %v9703 = vpack.c.b16 %v8903, %v8899
      %v9704 = vpack.c.b16 %v8908, %v8904
      %v9705 = vpack.c.b16 %v8909, %v8905
      %v9706 = vpack.c.b16 %v8910, %v8906
      %v9707 = vpack.c.b16 %v8911, %v8907
      %v9708 = vpack.c.b16 %v8916, %v8912
      %v9709 = vpack.c.b16 %v8917, %v8913
      %v9710 = vpack.c.b16 %v8918, %v8914
      %v9711 = vpack.c.b16 %v8919, %v8915
      %v9712 = vpack.c.b16 %v8924, %v8920
      %v9713 = vpack.c.b16 %v8925, %v8921
      %v9714 = vpack.c.b16 %v8926, %v8922
      %v9715 = vpack.c.b16 %v8927, %v8923
      %v9716 = vpack.c.b16 %v8932, %v8928
      %v9717 = vpack.c.b16 %v8933, %v8929
      %v9718 = vpack.c.b16 %v8934, %v8930
      %v9719 = vpack.c.b16 %v8935, %v8931
      %v9720 = vpack.c.b16 %v8940, %v8936
      %v9721 = vpack.c.b16 %v8941, %v8937
      %v9722 = vpack.c.b16 %v8942, %v8938
      %v9723 = vpack.c.b16 %v8943, %v8939
      %v9724 = vpack.c.b16 %v8948, %v8944
      %v9725 = vpack.c.b16 %v8949, %v8945
      %v9726 = vpack.c.b16 %v8950, %v8946
      %v9727 = vpack.c.b16 %v8951, %v8947
      %v9728 = vpack.c.b16 %v8956, %v8952
      %v9729 = vpack.c.b16 %v8957, %v8953
      %v9730 = vpack.c.b16 %v8958, %v8954
      %v9731 = vpack.c.b16 %v8959, %v8955
      %v9732 = vpack.c.b16 %v8964, %v8960
      %v9733 = vpack.c.b16 %v8965, %v8961
      %v9734 = vpack.c.b16 %v8966, %v8962
      %v9735 = vpack.c.b16 %v8967, %v8963
      %v9736 = vpack.c.b16 %v8972, %v8968
      %v9737 = vpack.c.b16 %v8973, %v8969
      %v9738 = vpack.c.b16 %v8974, %v8970
      %v9739 = vpack.c.b16 %v8975, %v8971
      %v9740 = vpack.c.b16 %v8980, %v8976
      %v9741 = vpack.c.b16 %v8981, %v8977
      %v9742 = vpack.c.b16 %v8982, %v8978
      %v9743 = vpack.c.b16 %v8983, %v8979
      %v9744 = vpack.c.b16 %v8988, %v8984
      %v9745 = vpack.c.b16 %v8989, %v8985
      %v9746 = vpack.c.b16 %v8990, %v8986
      %v9747 = vpack.c.b16 %v8991, %v8987
      %v9748 = vpack.c.b16 %v8996, %v8992
      %v9749 = vpack.c.b16 %v8997, %v8993
      %v9750 = vpack.c.b16 %v8998, %v8994
      %v9751 = vpack.c.b16 %v8999, %v8995
      %v9752 = vpack.c.b16 %v9004, %v9000
      %v9753 = vpack.c.b16 %v9005, %v9001
      %v9754 = vpack.c.b16 %v9006, %v9002
      %v9755 = vpack.c.b16 %v9007, %v9003
      %v9756 = vpack.c.b16 %v9012, %v9008
      %v9757 = vpack.c.b16 %v9013, %v9009
      %v9758 = vpack.c.b16 %v9014, %v9010
      %v9759 = vpack.c.b16 %v9015, %v9011
      %v9760 = vpack.c.b16 %v9020, %v9016
      %v9761 = vpack.c.b16 %v9021, %v9017
      %v9762 = vpack.c.b16 %v9022, %v9018
      %v9763 = vpack.c.b16 %v9023, %v9019
      %v9764 = vpack.c.b16 %v9028, %v9024
      %v9765 = vpack.c.b16 %v9029, %v9025
      %v9766 = vpack.c.b16 %v9030, %v9026
      %v9767 = vpack.c.b16 %v9031, %v9027
      %v9768 = vpack.c.b16 %v9036, %v9032
      %v9769 = vpack.c.b16 %v9037, %v9033
      %v9770 = vpack.c.b16 %v9038, %v9034
      %v9771 = vpack.c.b16 %v9039, %v9035
      %v9772 = vpack.c.b16 %v9044, %v9040
      %v9773 = vpack.c.b16 %v9045, %v9041
      %v9774 = vpack.c.b16 %v9046, %v9042
      %v9775 = vpack.c.b16 %v9047, %v9043
      %v9776 = vpack.c.b16 %v9052, %v9048
      %v9777 = vpack.c.b16 %v9053, %v9049
      %v9778 = vpack.c.b16 %v9054, %v9050
      %v9779 = vpack.c.b16 %v9055, %v9051
      %v9780 = vpack.c.b16 %v9060, %v9056
      %v9781 = vpack.c.b16 %v9061, %v9057
      %v9782 = vpack.c.b16 %v9062, %v9058
      %v9783 = vpack.c.b16 %v9063, %v9059
      %v9784 = vpack.c.b16 %v9068, %v9064
      %v9785 = vpack.c.b16 %v9069, %v9065
      %v9786 = vpack.c.b16 %v9070, %v9066
      %v9787 = vpack.c.b16 %v9071, %v9067
      %v9788 = vpack.c.b16 %v9076, %v9072
      %v9789 = vpack.c.b16 %v9077, %v9073
      %v9790 = vpack.c.b16 %v9078, %v9074
      %v9791 = vpack.c.b16 %v9079, %v9075
      %v9792 = vpack.c.b16 %v9084, %v9080
      %v9793 = vpack.c.b16 %v9085, %v9081
      %v9794 = vpack.c.b16 %v9086, %v9082
      %v9795 = vpack.c.b16 %v9087, %v9083
      %v9796 = vpack.c.b16 %v9092, %v9088
      %v9797 = vpack.c.b16 %v9093, %v9089
      %v9798 = vpack.c.b16 %v9094, %v9090
      %v9799 = vpack.c.b16 %v9095, %v9091
      %v9800 = vpack.c.b16 %v9100, %v9096
      %v9801 = vpack.c.b16 %v9101, %v9097
      %v9802 = vpack.c.b16 %v9102, %v9098
      %v9803 = vpack.c.b16 %v9103, %v9099
      %v9804 = vpack.c.b16 %v9108, %v9104
      %v9805 = vpack.c.b16 %v9109, %v9105
      %v9806 = vpack.c.b16 %v9110, %v9106
      %v9807 = vpack.c.b16 %v9111, %v9107
      %v9808 = vpack.c.b16 %v9116, %v9112
      %v9809 = vpack.c.b16 %v9117, %v9113
      %v9810 = vpack.c.b16 %v9118, %v9114
      %v9811 = vpack.c.b16 %v9119, %v9115
      %v9812 = vpack.c.b16 %v9124, %v9120
      %v9813 = vpack.c.b16 %v9125, %v9121
      %v9814 = vpack.c.b16 %v9126, %v9122
      %v9815 = vpack.c.b16 %v9127, %v9123
      %v9816 = vpack.c.b16 %v9132, %v9128
      %v9817 = vpack.c.b16 %v9133, %v9129
      %v9818 = vpack.c.b16 %v9134, %v9130
      %v9819 = vpack.c.b16 %v9135, %v9131
      %v9820 = vpack.c.b16 %v9140, %v9136
      %v9821 = vpack.c.b16 %v9141, %v9137
      %v9822 = vpack.c.b16 %v9142, %v9138
      %v9823 = vpack.c.b16 %v9143, %v9139
      %v9824 = vpack.c.b16 %v9148, %v9144
      %v9825 = vpack.c.b16 %v9149, %v9145
      %v9826 = vpack.c.b16 %v9150, %v9146
      %v9827 = vpack.c.b16 %v9151, %v9147
      %v9828 = vpack.c.b16 %v9156, %v9152
      %v9829 = vpack.c.b16 %v9157, %v9153
      %v9830 = vpack.c.b16 %v9158, %v9154
      %v9831 = vpack.c.b16 %v9159, %v9155
      %v9832 = vpack.c.b16 %v9164, %v9160
      %v9833 = vpack.c.b16 %v9165, %v9161
      %v9834 = vpack.c.b16 %v9166, %v9162
      %v9835 = vpack.c.b16 %v9167, %v9163
      %v9836 = vpack.c.b16 %v9172, %v9168
      %v9837 = vpack.c.b16 %v9173, %v9169
      %v9838 = vpack.c.b16 %v9174, %v9170
      %v9839 = vpack.c.b16 %v9175, %v9171
      %v9840 = vpack.c.b16 %v9180, %v9176
      %v9841 = vpack.c.b16 %v9181, %v9177
      %v9842 = vpack.c.b16 %v9182, %v9178
      %v9843 = vpack.c.b16 %v9183, %v9179
      %v9844 = vpack.c.b16 %v9188, %v9184
      %v9845 = vpack.c.b16 %v9189, %v9185
      %v9846 = vpack.c.b16 %v9190, %v9186
      %v9847 = vpack.c.b16 %v9191, %v9187
      %v9848 = vpack.c.b16 %v9196, %v9192
      %v9849 = vpack.c.b16 %v9197, %v9193
      %v9850 = vpack.c.b16 %v9198, %v9194
      %v9851 = vpack.c.b16 %v9199, %v9195
      %v9852 = vpack.c.b16 %v9204, %v9200
      %v9853 = vpack.c.b16 %v9205, %v9201
      %v9854 = vpack.c.b16 %v9206, %v9202
      %v9855 = vpack.c.b16 %v9207, %v9203
      %v9856 = vpack.c.b16 %v9212, %v9208
      %v9857 = vpack.c.b16 %v9213, %v9209
      %v9858 = vpack.c.b16 %v9214, %v9210
      %v9859 = vpack.c.b16 %v9215, %v9211
      %v9860 = vpack.c.b16 %v9220, %v9216
      %v9861 = vpack.c.b16 %v9221, %v9217
      %v9862 = vpack.c.b16 %v9222, %v9218
      %v9863 = vpack.c.b16 %v9223, %v9219
      %v9864 = vpack.c.b16 %v9228, %v9224
      %v9865 = vpack.c.b16 %v9229, %v9225
      %v9866 = vpack.c.b16 %v9230, %v9226
      %v9867 = vpack.c.b16 %v9231, %v9227
      %v9868 = vpack.c.b16 %v9236, %v9232
      %v9869 = vpack.c.b16 %v9237, %v9233
      %v9870 = vpack.c.b16 %v9238, %v9234
      %v9871 = vpack.c.b16 %v9239, %v9235
      %v9872 = vpack.c.b16 %v9244, %v9240
      %v9873 = vpack.c.b16 %v9245, %v9241
      %v9874 = vpack.c.b16 %v9246, %v9242
      %v9875 = vpack.c.b16 %v9247, %v9243
      %v9876 = vpack.c.b16 %v9252, %v9248
      %v9877 = vpack.c.b16 %v9253, %v9249
      %v9878 = vpack.c.b16 %v9254, %v9250
      %v9879 = vpack.c.b16 %v9255, %v9251
      %v9880 = vpack.c.b16 %v9260, %v9256
      %v9881 = vpack.c.b16 %v9261, %v9257
      %v9882 = vpack.c.b16 %v9262, %v9258
      %v9883 = vpack.c.b16 %v9263, %v9259
      %v9884 = vpack.c.b16 %v9268, %v9264
      %v9885 = vpack.c.b16 %v9269, %v9265
      %v9886 = vpack.c.b16 %v9270, %v9266
      %v9887 = vpack.c.b16 %v9271, %v9267
      %v9888 = vpack.c.b16 %v9276, %v9272
      %v9889 = vpack.c.b16 %v9277, %v9273
      %v9890 = vpack.c.b16 %v9278, %v9274
      %v9891 = vpack.c.b16 %v9279, %v9275
      %v9892 = vpack.c.b16 %v9284, %v9280
      %v9893 = vpack.c.b16 %v9285, %v9281
      %v9894 = vpack.c.b16 %v9286, %v9282
      %v9895 = vpack.c.b16 %v9287, %v9283
      %v9896 = vpack.c.b16 %v9292, %v9288
      %v9897 = vpack.c.b16 %v9293, %v9289
      %v9898 = vpack.c.b16 %v9294, %v9290
      %v9899 = vpack.c.b16 %v9295, %v9291
      %v9900 = vpack.c.b16 %v9300, %v9296
      %v9901 = vpack.c.b16 %v9301, %v9297
      %v9902 = vpack.c.b16 %v9302, %v9298
      %v9903 = vpack.c.b16 %v9303, %v9299
      %v9904 = vpack.c.b16 %v9308, %v9304
      %v9905 = vpack.c.b16 %v9309, %v9305
      %v9906 = vpack.c.b16 %v9310, %v9306
      %v9907 = vpack.c.b16 %v9311, %v9307
      %v9908 = vpack.c.b16 %v9316, %v9312
      %v9909 = vpack.c.b16 %v9317, %v9313
      %v9910 = vpack.c.b16 %v9318, %v9314
      %v9911 = vpack.c.b16 %v9319, %v9315
      %v9912 = vpack.c.b16 %v9324, %v9320
      %v9913 = vpack.c.b16 %v9325, %v9321
      %v9914 = vpack.c.b16 %v9326, %v9322
      %v9915 = vpack.c.b16 %v9327, %v9323
      %v9916 = vpack.c.b16 %v9332, %v9328
      %v9917 = vpack.c.b16 %v9333, %v9329
      %v9918 = vpack.c.b16 %v9334, %v9330
      %v9919 = vpack.c.b16 %v9335, %v9331
      %v9920 = vpack.c.b16 %v9340, %v9336
      %v9921 = vpack.c.b16 %v9341, %v9337
      %v9922 = vpack.c.b16 %v9342, %v9338
      %v9923 = vpack.c.b16 %v9343, %v9339
      %v9924 = vpack.c.b16 %v9348, %v9344
      %v9925 = vpack.c.b16 %v9349, %v9345
      %v9926 = vpack.c.b16 %v9350, %v9346
      %v9927 = vpack.c.b16 %v9351, %v9347
      %v9928 = vpack.c.b16 %v9356, %v9352
      %v9929 = vpack.c.b16 %v9357, %v9353
      %v9930 = vpack.c.b16 %v9358, %v9354
      %v9931 = vpack.c.b16 %v9359, %v9355
      %v9932 = vpack.c.b16 %v9364, %v9360
      %v9933 = vpack.c.b16 %v9365, %v9361
      %v9934 = vpack.c.b16 %v9366, %v9362
      %v9935 = vpack.c.b16 %v9367, %v9363
      %v9936 = vpack.c.b16 %v9372, %v9368
      %v9937 = vpack.c.b16 %v9373, %v9369
      %v9938 = vpack.c.b16 %v9374, %v9370
      %v9939 = vpack.c.b16 %v9375, %v9371
      %v9940 = vpack.c.b16 %v9380, %v9376
      %v9941 = vpack.c.b16 %v9381, %v9377
      %v9942 = vpack.c.b16 %v9382, %v9378
      %v9943 = vpack.c.b16 %v9383, %v9379
      %v9944 = vpack.c.b16 %v9388, %v9384
      %v9945 = vpack.c.b16 %v9389, %v9385
      %v9946 = vpack.c.b16 %v9390, %v9386
      %v9947 = vpack.c.b16 %v9391, %v9387
      %v9948 = vpack.c.b16 %v9396, %v9392
      %v9949 = vpack.c.b16 %v9397, %v9393
      %v9950 = vpack.c.b16 %v9398, %v9394
      %v9951 = vpack.c.b16 %v9399, %v9395
      %v9952 = vpack.c.b16 %v9404, %v9400
      %v9953 = vpack.c.b16 %v9405, %v9401
      %v9954 = vpack.c.b16 %v9406, %v9402
      %v9955 = vpack.c.b16 %v9407, %v9403
      %v9956 = vpack.c.b16 %v9412, %v9408
      %v9957 = vpack.c.b16 %v9413, %v9409
      %v9958 = vpack.c.b16 %v9414, %v9410
      %v9959 = vpack.c.b16 %v9415, %v9411
      %v9960 = vpack.c.b16 %v9420, %v9416
      %v9961 = vpack.c.b16 %v9421, %v9417
      %v9962 = vpack.c.b16 %v9422, %v9418
      %v9963 = vpack.c.b16 %v9423, %v9419
      %v9964 = vpack.c.b16 %v9428, %v9424
      %v9965 = vpack.c.b16 %v9429, %v9425
      %v9966 = vpack.c.b16 %v9430, %v9426
      %v9967 = vpack.c.b16 %v9431, %v9427
      %v9968 = vpack.c.b16 %v9436, %v9432
      %v9969 = vpack.c.b16 %v9437, %v9433
      %v9970 = vpack.c.b16 %v9438, %v9434
      %v9971 = vpack.c.b16 %v9439, %v9435
      %v9972 = vpack.c.b16 %v9444, %v9440
      %v9973 = vpack.c.b16 %v9445, %v9441
      %v9974 = vpack.c.b16 %v9446, %v9442
      %v9975 = vpack.c.b16 %v9447, %v9443
      %v9976 = vpack.c.b16 %v9452, %v9448
      %v9977 = vpack.c.b16 %v9453, %v9449
      %v9978 = vpack.c.b16 %v9454, %v9450
      %v9979 = vpack.c.b16 %v9455, %v9451
      %v9980 = vpack.c.b16 %v9460, %v9456
      %v9981 = vpack.c.b16 %v9461, %v9457
      %v9982 = vpack.c.b16 %v9462, %v9458
      %v9983 = vpack.c.b16 %v9463, %v9459
      %v9984 = vpack.c.b16 %v9468, %v9464
      %v9985 = vpack.c.b16 %v9469, %v9465
      %v9986 = vpack.c.b16 %v9470, %v9466
      %v9987 = vpack.c.b16 %v9471, %v9467
      %v9988 = vpack.c.b16 %v9476, %v9472
      %v9989 = vpack.c.b16 %v9477, %v9473
      %v9990 = vpack.c.b16 %v9478, %v9474
      %v9991 = vpack.c.b16 %v9479, %v9475
      %10504 = vmatpush.bf16.msra.mxu0 %v9508
      %10505 = vmatpush.bf16.msra.mxu0 %v9504
      %10506 = vmatpush.bf16.msra.mxu0 %v9500
      %10507 = vmatpush.bf16.msra.mxu0 %v9496
      %10508 = vmatpush.bf16.msra.mxu0 %v9492
      %10509 = vmatpush.bf16.msra.mxu0 %v9488
      %10510 = vmatpush.bf16.msra.mxu0 %v9484
      %10511 = vmatpush.bf16.msra.mxu0 %v9480
      %10512 = vmatmul.bf16.gmra.mxu0 %v7412
      %v10513 = vpop.f32.mrf.mxu0
      %v10514 = vadd.f32 %v7940, %v10513
      %v10515 = vpop.f32.mrf.mxu0
      %v10516 = vadd.f32 %v7940, %v10515
      %10517 = vdwg.mxu0
      %10518 = vmatpush.bf16.msra.mxu0 %v9540
      %10519 = vmatpush.bf16.msra.mxu0 %v9536
      %10520 = vmatpush.bf16.msra.mxu0 %v9532
      %10521 = vmatpush.bf16.msra.mxu0 %v9528
      %10522 = vmatpush.bf16.msra.mxu0 %v9524
      %10523 = vmatpush.bf16.msra.mxu0 %v9520
      %10524 = vmatpush.bf16.msra.mxu0 %v9516
      %10525 = vmatpush.bf16.msra.mxu0 %v9512
      %10526 = vmatmul.bf16.gmra.mxu0 %v7413
      %v10527 = vpop.f32.mrf.mxu0
      %v10528 = vadd.f32 %v10514, %v10527
      %v10529 = vpop.f32.mrf.mxu0
      %v10530 = vadd.f32 %v10516, %v10529
      %10531 = vdwg.mxu0
      %10532 = vmatpush.bf16.msra.mxu0 %v9572
      %10533 = vmatpush.bf16.msra.mxu0 %v9568
      %10534 = vmatpush.bf16.msra.mxu0 %v9564
      %10535 = vmatpush.bf16.msra.mxu0 %v9560
      %10536 = vmatpush.bf16.msra.mxu0 %v9556
      %10537 = vmatpush.bf16.msra.mxu0 %v9552
      %10538 = vmatpush.bf16.msra.mxu0 %v9548
      %10539 = vmatpush.bf16.msra.mxu0 %v9544
      %10540 = vmatmul.bf16.gmra.mxu0 %v7414
      %v10541 = vpop.f32.mrf.mxu0
      %v10542 = vadd.f32 %v10528, %v10541
      %v10543 = vpop.f32.mrf.mxu0
      %v10544 = vadd.f32 %v10530, %v10543
      %10545 = vdwg.mxu0
      %10546 = vmatpush.bf16.msra.mxu0 %v9604
      %10547 = vmatpush.bf16.msra.mxu0 %v9600
      %10548 = vmatpush.bf16.msra.mxu0 %v9596
      %10549 = vmatpush.bf16.msra.mxu0 %v9592
      %10550 = vmatpush.bf16.msra.mxu0 %v9588
      %10551 = vmatpush.bf16.msra.mxu0 %v9584
      %10552 = vmatpush.bf16.msra.mxu0 %v9580
      %10553 = vmatpush.bf16.msra.mxu0 %v9576
      %10554 = vmatmul.bf16.gmra.mxu0 %v7415
      %v10555 = vpop.f32.mrf.mxu0
      %v10556 = vadd.f32 %v10542, %v10555
      %v10557 = vpop.f32.mrf.mxu0
      %v10558 = vadd.f32 %v10544, %v10557
      %10559 = vdwg.mxu0
      %10560 = vmatpush.bf16.msra.mxu0 %v9636
      %10561 = vmatpush.bf16.msra.mxu0 %v9632
      %10562 = vmatpush.bf16.msra.mxu0 %v9628
      %10563 = vmatpush.bf16.msra.mxu0 %v9624
      %10564 = vmatpush.bf16.msra.mxu0 %v9620
      %10565 = vmatpush.bf16.msra.mxu0 %v9616
      %10566 = vmatpush.bf16.msra.mxu0 %v9612
      %10567 = vmatpush.bf16.msra.mxu0 %v9608
      %10568 = vmatmul.bf16.gmra.mxu0 %v7416
      %v10569 = vpop.f32.mrf.mxu0
      %v10570 = vadd.f32 %v10556, %v10569
      %v10571 = vpop.f32.mrf.mxu0
      %v10572 = vadd.f32 %v10558, %v10571
      %10573 = vdwg.mxu0
      %10574 = vmatpush.bf16.msra.mxu0 %v9668
      %10575 = vmatpush.bf16.msra.mxu0 %v9664
      %10576 = vmatpush.bf16.msra.mxu0 %v9660
      %10577 = vmatpush.bf16.msra.mxu0 %v9656
      %10578 = vmatpush.bf16.msra.mxu0 %v9652
      %10579 = vmatpush.bf16.msra.mxu0 %v9648
      %10580 = vmatpush.bf16.msra.mxu0 %v9644
      %10581 = vmatpush.bf16.msra.mxu0 %v9640
      %10582 = vmatmul.bf16.gmra.mxu0 %v7417
      %v10583 = vpop.f32.mrf.mxu0
      %v10584 = vadd.f32 %v10570, %v10583
      %v10585 = vpop.f32.mrf.mxu0
      %v10586 = vadd.f32 %v10572, %v10585
      %10587 = vdwg.mxu0
      %10588 = vmatpush.bf16.msra.mxu0 %v9700
      %10589 = vmatpush.bf16.msra.mxu0 %v9696
      %10590 = vmatpush.bf16.msra.mxu0 %v9692
      %10591 = vmatpush.bf16.msra.mxu0 %v9688
      %10592 = vmatpush.bf16.msra.mxu0 %v9684
      %10593 = vmatpush.bf16.msra.mxu0 %v9680
      %10594 = vmatpush.bf16.msra.mxu0 %v9676
      %10595 = vmatpush.bf16.msra.mxu0 %v9672
      %10596 = vmatmul.bf16.gmra.mxu0 %v7418
      %v10597 = vpop.f32.mrf.mxu0
      %v10598 = vadd.f32 %v10584, %v10597
      %v10599 = vpop.f32.mrf.mxu0
      %v10600 = vadd.f32 %v10586, %v10599
      %10601 = vdwg.mxu0
      %10602 = vmatpush.bf16.msra.mxu0 %v9732
      %10603 = vmatpush.bf16.msra.mxu0 %v9728
      %10604 = vmatpush.bf16.msra.mxu0 %v9724
      %10605 = vmatpush.bf16.msra.mxu0 %v9720
      %10606 = vmatpush.bf16.msra.mxu0 %v9716
      %10607 = vmatpush.bf16.msra.mxu0 %v9712
      %10608 = vmatpush.bf16.msra.mxu0 %v9708
      %10609 = vmatpush.bf16.msra.mxu0 %v9704
      %10610 = vmatmul.bf16.gmra.mxu0 %v7419
      %v10611 = vpop.f32.mrf.mxu0
      %v10612 = vadd.f32 %v10598, %v10611
      %v10613 = vpop.f32.mrf.mxu0
      %v10614 = vadd.f32 %v10600, %v10613
      %10615 = vdwg.mxu0
      %10616 = vmatpush.bf16.msra.mxu0 %v9764
      %10617 = vmatpush.bf16.msra.mxu0 %v9760
      %10618 = vmatpush.bf16.msra.mxu0 %v9756
      %10619 = vmatpush.bf16.msra.mxu0 %v9752
      %10620 = vmatpush.bf16.msra.mxu0 %v9748
      %10621 = vmatpush.bf16.msra.mxu0 %v9744
      %10622 = vmatpush.bf16.msra.mxu0 %v9740
      %10623 = vmatpush.bf16.msra.mxu0 %v9736
      %10624 = vmatmul.bf16.gmra.mxu0 %v7420
      %v10625 = vpop.f32.mrf.mxu0
      %v10626 = vadd.f32 %v10612, %v10625
      %v10627 = vpop.f32.mrf.mxu0
      %v10628 = vadd.f32 %v10614, %v10627
      %10629 = vdwg.mxu0
      %10630 = vmatpush.bf16.msra.mxu0 %v9796
      %10631 = vmatpush.bf16.msra.mxu0 %v9792
      %10632 = vmatpush.bf16.msra.mxu0 %v9788
      %10633 = vmatpush.bf16.msra.mxu0 %v9784
      %10634 = vmatpush.bf16.msra.mxu0 %v9780
      %10635 = vmatpush.bf16.msra.mxu0 %v9776
      %10636 = vmatpush.bf16.msra.mxu0 %v9772
      %10637 = vmatpush.bf16.msra.mxu0 %v9768
      %10638 = vmatmul.bf16.gmra.mxu0 %v7421
      %v10639 = vpop.f32.mrf.mxu0
      %v10640 = vadd.f32 %v10626, %v10639
      %v10641 = vpop.f32.mrf.mxu0
      %v10642 = vadd.f32 %v10628, %v10641
      %10643 = vdwg.mxu0
      %10644 = vmatpush.bf16.msra.mxu0 %v9828
      %10645 = vmatpush.bf16.msra.mxu0 %v9824
      %10646 = vmatpush.bf16.msra.mxu0 %v9820
      %10647 = vmatpush.bf16.msra.mxu0 %v9816
      %10648 = vmatpush.bf16.msra.mxu0 %v9812
      %10649 = vmatpush.bf16.msra.mxu0 %v9808
      %10650 = vmatpush.bf16.msra.mxu0 %v9804
      %10651 = vmatpush.bf16.msra.mxu0 %v9800
      %10652 = vmatmul.bf16.gmra.mxu0 %v7422
      %v10653 = vpop.f32.mrf.mxu0
      %v10654 = vadd.f32 %v10640, %v10653
      %v10655 = vpop.f32.mrf.mxu0
      %v10656 = vadd.f32 %v10642, %v10655
      %10657 = vdwg.mxu0
      %10658 = vmatpush.bf16.msra.mxu0 %v9860
      %10659 = vmatpush.bf16.msra.mxu0 %v9856
      %10660 = vmatpush.bf16.msra.mxu0 %v9852
      %10661 = vmatpush.bf16.msra.mxu0 %v9848
      %10662 = vmatpush.bf16.msra.mxu0 %v9844
      %10663 = vmatpush.bf16.msra.mxu0 %v9840
      %10664 = vmatpush.bf16.msra.mxu0 %v9836
      %10665 = vmatpush.bf16.msra.mxu0 %v9832
      %10666 = vmatmul.bf16.gmra.mxu0 %v7423
      %v10667 = vpop.f32.mrf.mxu0
      %v10668 = vadd.f32 %v10654, %v10667
      %v10669 = vpop.f32.mrf.mxu0
      %v10670 = vadd.f32 %v10656, %v10669
      %10671 = vdwg.mxu0
      %10672 = vmatpush.bf16.msra.mxu0 %v9892
      %10673 = vmatpush.bf16.msra.mxu0 %v9888
      %10674 = vmatpush.bf16.msra.mxu0 %v9884
      %10675 = vmatpush.bf16.msra.mxu0 %v9880
      %10676 = vmatpush.bf16.msra.mxu0 %v9876
      %10677 = vmatpush.bf16.msra.mxu0 %v9872
      %10678 = vmatpush.bf16.msra.mxu0 %v9868
      %10679 = vmatpush.bf16.msra.mxu0 %v9864
      %10680 = vmatmul.bf16.gmra.mxu0 %v7424
      %v10681 = vpop.f32.mrf.mxu0
      %v10682 = vadd.f32 %v10668, %v10681
      %v10683 = vpop.f32.mrf.mxu0
      %v10684 = vadd.f32 %v10670, %v10683
      %10685 = vdwg.mxu0
      %10686 = vmatpush.bf16.msra.mxu0 %v9924
      %10687 = vmatpush.bf16.msra.mxu0 %v9920
      %10688 = vmatpush.bf16.msra.mxu0 %v9916
      %10689 = vmatpush.bf16.msra.mxu0 %v9912
      %10690 = vmatpush.bf16.msra.mxu0 %v9908
      %10691 = vmatpush.bf16.msra.mxu0 %v9904
      %10692 = vmatpush.bf16.msra.mxu0 %v9900
      %10693 = vmatpush.bf16.msra.mxu0 %v9896
      %10694 = vmatmul.bf16.gmra.mxu0 %v7425
      %v10695 = vpop.f32.mrf.mxu0
      %v10696 = vadd.f32 %v10682, %v10695
      %v10697 = vpop.f32.mrf.mxu0
      %v10698 = vadd.f32 %v10684, %v10697
      %10699 = vdwg.mxu0
      %10700 = vmatpush.bf16.msra.mxu0 %v9956
      %10701 = vmatpush.bf16.msra.mxu0 %v9952
      %10702 = vmatpush.bf16.msra.mxu0 %v9948
      %10703 = vmatpush.bf16.msra.mxu0 %v9944
      %10704 = vmatpush.bf16.msra.mxu0 %v9940
      %10705 = vmatpush.bf16.msra.mxu0 %v9936
      %10706 = vmatpush.bf16.msra.mxu0 %v9932
      %10707 = vmatpush.bf16.msra.mxu0 %v9928
      %10708 = vmatmul.bf16.gmra.mxu0 %v7426
      %v10709 = vpop.f32.mrf.mxu0
      %v10710 = vadd.f32 %v10696, %v10709
      %v10711 = vpop.f32.mrf.mxu0
      %v10712 = vadd.f32 %v10698, %v10711
      %10713 = vdwg.mxu0
      %10714 = vmatpush.bf16.msra.mxu0 %v9988
      %10715 = vmatpush.bf16.msra.mxu0 %v9984
      %10716 = vmatpush.bf16.msra.mxu0 %v9980
      %10717 = vmatpush.bf16.msra.mxu0 %v9976
      %10718 = vmatpush.bf16.msra.mxu0 %v9972
      %10719 = vmatpush.bf16.msra.mxu0 %v9968
      %10720 = vmatpush.bf16.msra.mxu0 %v9964
      %10721 = vmatpush.bf16.msra.mxu0 %v9960
      %10722 = vmatmul.bf16.gmra.mxu0 %v7427
      %v10723 = vpop.f32.mrf.mxu0
      %v10724 = vadd.f32 %v10710, %v10723
      %v10725 = vpop.f32.mrf.mxu0
      %v10726 = vadd.f32 %v10712, %v10725
      %10727 = vdwg.mxu0
      %10728 = vmatpush.bf16.msra.mxu0 %v9509
      %10729 = vmatpush.bf16.msra.mxu0 %v9505
      %10730 = vmatpush.bf16.msra.mxu0 %v9501
      %10731 = vmatpush.bf16.msra.mxu0 %v9497
      %10732 = vmatpush.bf16.msra.mxu0 %v9493
      %10733 = vmatpush.bf16.msra.mxu0 %v9489
      %10734 = vmatpush.bf16.msra.mxu0 %v9485
      %10735 = vmatpush.bf16.msra.mxu0 %v9481
      %10736 = vmatmul.bf16.gmra.mxu0 %v7412
      %v10737 = vpop.f32.mrf.mxu0
      %v10738 = vadd.f32 %v7941, %v10737
      %v10739 = vpop.f32.mrf.mxu0
      %v10740 = vadd.f32 %v7941, %v10739
      %10741 = vdwg.mxu0
      %10742 = vmatpush.bf16.msra.mxu0 %v9541
      %10743 = vmatpush.bf16.msra.mxu0 %v9537
      %10744 = vmatpush.bf16.msra.mxu0 %v9533
      %10745 = vmatpush.bf16.msra.mxu0 %v9529
      %10746 = vmatpush.bf16.msra.mxu0 %v9525
      %10747 = vmatpush.bf16.msra.mxu0 %v9521
      %10748 = vmatpush.bf16.msra.mxu0 %v9517
      %10749 = vmatpush.bf16.msra.mxu0 %v9513
      %10750 = vmatmul.bf16.gmra.mxu0 %v7413
      %v10751 = vpop.f32.mrf.mxu0
      %v10752 = vadd.f32 %v10738, %v10751
      %v10753 = vpop.f32.mrf.mxu0
      %v10754 = vadd.f32 %v10740, %v10753
      %10755 = vdwg.mxu0
      %10756 = vmatpush.bf16.msra.mxu0 %v9573
      %10757 = vmatpush.bf16.msra.mxu0 %v9569
      %10758 = vmatpush.bf16.msra.mxu0 %v9565
      %10759 = vmatpush.bf16.msra.mxu0 %v9561
      %10760 = vmatpush.bf16.msra.mxu0 %v9557
      %10761 = vmatpush.bf16.msra.mxu0 %v9553
      %10762 = vmatpush.bf16.msra.mxu0 %v9549
      %10763 = vmatpush.bf16.msra.mxu0 %v9545
      %10764 = vmatmul.bf16.gmra.mxu0 %v7414
      %v10765 = vpop.f32.mrf.mxu0
      %v10766 = vadd.f32 %v10752, %v10765
      %v10767 = vpop.f32.mrf.mxu0
      %v10768 = vadd.f32 %v10754, %v10767
      %10769 = vdwg.mxu0
      %10770 = vmatpush.bf16.msra.mxu0 %v9605
      %10771 = vmatpush.bf16.msra.mxu0 %v9601
      %10772 = vmatpush.bf16.msra.mxu0 %v9597
      %10773 = vmatpush.bf16.msra.mxu0 %v9593
      %10774 = vmatpush.bf16.msra.mxu0 %v9589
      %10775 = vmatpush.bf16.msra.mxu0 %v9585
      %10776 = vmatpush.bf16.msra.mxu0 %v9581
      %10777 = vmatpush.bf16.msra.mxu0 %v9577
      %10778 = vmatmul.bf16.gmra.mxu0 %v7415
      %v10779 = vpop.f32.mrf.mxu0
      %v10780 = vadd.f32 %v10766, %v10779
      %v10781 = vpop.f32.mrf.mxu0
      %v10782 = vadd.f32 %v10768, %v10781
      %10783 = vdwg.mxu0
      %10784 = vmatpush.bf16.msra.mxu0 %v9637
      %10785 = vmatpush.bf16.msra.mxu0 %v9633
      %10786 = vmatpush.bf16.msra.mxu0 %v9629
      %10787 = vmatpush.bf16.msra.mxu0 %v9625
      %10788 = vmatpush.bf16.msra.mxu0 %v9621
      %10789 = vmatpush.bf16.msra.mxu0 %v9617
      %10790 = vmatpush.bf16.msra.mxu0 %v9613
      %10791 = vmatpush.bf16.msra.mxu0 %v9609
      %10792 = vmatmul.bf16.gmra.mxu0 %v7416
      %v10793 = vpop.f32.mrf.mxu0
      %v10794 = vadd.f32 %v10780, %v10793
      %v10795 = vpop.f32.mrf.mxu0
      %v10796 = vadd.f32 %v10782, %v10795
      %10797 = vdwg.mxu0
      %10798 = vmatpush.bf16.msra.mxu0 %v9669
      %10799 = vmatpush.bf16.msra.mxu0 %v9665
      %10800 = vmatpush.bf16.msra.mxu0 %v9661
      %10801 = vmatpush.bf16.msra.mxu0 %v9657
      %10802 = vmatpush.bf16.msra.mxu0 %v9653
      %10803 = vmatpush.bf16.msra.mxu0 %v9649
      %10804 = vmatpush.bf16.msra.mxu0 %v9645
      %10805 = vmatpush.bf16.msra.mxu0 %v9641
      %10806 = vmatmul.bf16.gmra.mxu0 %v7417
      %v10807 = vpop.f32.mrf.mxu0
      %v10808 = vadd.f32 %v10794, %v10807
      %v10809 = vpop.f32.mrf.mxu0
      %v10810 = vadd.f32 %v10796, %v10809
      %10811 = vdwg.mxu0
      %10812 = vmatpush.bf16.msra.mxu0 %v9701
      %10813 = vmatpush.bf16.msra.mxu0 %v9697
      %10814 = vmatpush.bf16.msra.mxu0 %v9693
      %10815 = vmatpush.bf16.msra.mxu0 %v9689
      %10816 = vmatpush.bf16.msra.mxu0 %v9685
      %10817 = vmatpush.bf16.msra.mxu0 %v9681
      %10818 = vmatpush.bf16.msra.mxu0 %v9677
      %10819 = vmatpush.bf16.msra.mxu0 %v9673
      %10820 = vmatmul.bf16.gmra.mxu0 %v7418
      %v10821 = vpop.f32.mrf.mxu0
      %v10822 = vadd.f32 %v10808, %v10821
      %v10823 = vpop.f32.mrf.mxu0
      %v10824 = vadd.f32 %v10810, %v10823
      %10825 = vdwg.mxu0
      %10826 = vmatpush.bf16.msra.mxu0 %v9733
      %10827 = vmatpush.bf16.msra.mxu0 %v9729
      %10828 = vmatpush.bf16.msra.mxu0 %v9725
      %10829 = vmatpush.bf16.msra.mxu0 %v9721
      %10830 = vmatpush.bf16.msra.mxu0 %v9717
      %10831 = vmatpush.bf16.msra.mxu0 %v9713
      %10832 = vmatpush.bf16.msra.mxu0 %v9709
      %10833 = vmatpush.bf16.msra.mxu0 %v9705
      %10834 = vmatmul.bf16.gmra.mxu0 %v7419
      %v10835 = vpop.f32.mrf.mxu0
      %v10836 = vadd.f32 %v10822, %v10835
      %v10837 = vpop.f32.mrf.mxu0
      %v10838 = vadd.f32 %v10824, %v10837
      %10839 = vdwg.mxu0
      %10840 = vmatpush.bf16.msra.mxu0 %v9765
      %10841 = vmatpush.bf16.msra.mxu0 %v9761
      %10842 = vmatpush.bf16.msra.mxu0 %v9757
      %10843 = vmatpush.bf16.msra.mxu0 %v9753
      %10844 = vmatpush.bf16.msra.mxu0 %v9749
      %10845 = vmatpush.bf16.msra.mxu0 %v9745
      %10846 = vmatpush.bf16.msra.mxu0 %v9741
      %10847 = vmatpush.bf16.msra.mxu0 %v9737
      %10848 = vmatmul.bf16.gmra.mxu0 %v7420
      %v10849 = vpop.f32.mrf.mxu0
      %v10850 = vadd.f32 %v10836, %v10849
      %v10851 = vpop.f32.mrf.mxu0
      %v10852 = vadd.f32 %v10838, %v10851
      %10853 = vdwg.mxu0
      %10854 = vmatpush.bf16.msra.mxu0 %v9797
      %10855 = vmatpush.bf16.msra.mxu0 %v9793
      %10856 = vmatpush.bf16.msra.mxu0 %v9789
      %10857 = vmatpush.bf16.msra.mxu0 %v9785
      %10858 = vmatpush.bf16.msra.mxu0 %v9781
      %10859 = vmatpush.bf16.msra.mxu0 %v9777
      %10860 = vmatpush.bf16.msra.mxu0 %v9773
      %10861 = vmatpush.bf16.msra.mxu0 %v9769
      %10862 = vmatmul.bf16.gmra.mxu0 %v7421
      %v10863 = vpop.f32.mrf.mxu0
      %v10864 = vadd.f32 %v10850, %v10863
      %v10865 = vpop.f32.mrf.mxu0
      %v10866 = vadd.f32 %v10852, %v10865
      %10867 = vdwg.mxu0
      %10868 = vmatpush.bf16.msra.mxu0 %v9829
      %10869 = vmatpush.bf16.msra.mxu0 %v9825
      %10870 = vmatpush.bf16.msra.mxu0 %v9821
      %10871 = vmatpush.bf16.msra.mxu0 %v9817
      %10872 = vmatpush.bf16.msra.mxu0 %v9813
      %10873 = vmatpush.bf16.msra.mxu0 %v9809
      %10874 = vmatpush.bf16.msra.mxu0 %v9805
      %10875 = vmatpush.bf16.msra.mxu0 %v9801
      %10876 = vmatmul.bf16.gmra.mxu0 %v7422
      %v10877 = vpop.f32.mrf.mxu0
      %v10878 = vadd.f32 %v10864, %v10877
      %v10879 = vpop.f32.mrf.mxu0
      %v10880 = vadd.f32 %v10866, %v10879
      %10881 = vdwg.mxu0
      %10882 = vmatpush.bf16.msra.mxu0 %v9861
      %10883 = vmatpush.bf16.msra.mxu0 %v9857
      %10884 = vmatpush.bf16.msra.mxu0 %v9853
      %10885 = vmatpush.bf16.msra.mxu0 %v9849
      %10886 = vmatpush.bf16.msra.mxu0 %v9845
      %10887 = vmatpush.bf16.msra.mxu0 %v9841
      %10888 = vmatpush.bf16.msra.mxu0 %v9837
      %10889 = vmatpush.bf16.msra.mxu0 %v9833
      %10890 = vmatmul.bf16.gmra.mxu0 %v7423
      %v10891 = vpop.f32.mrf.mxu0
      %v10892 = vadd.f32 %v10878, %v10891
      %v10893 = vpop.f32.mrf.mxu0
      %v10894 = vadd.f32 %v10880, %v10893
      %10895 = vdwg.mxu0
      %10896 = vmatpush.bf16.msra.mxu0 %v9893
      %10897 = vmatpush.bf16.msra.mxu0 %v9889
      %10898 = vmatpush.bf16.msra.mxu0 %v9885
      %10899 = vmatpush.bf16.msra.mxu0 %v9881
      %10900 = vmatpush.bf16.msra.mxu0 %v9877
      %10901 = vmatpush.bf16.msra.mxu0 %v9873
      %10902 = vmatpush.bf16.msra.mxu0 %v9869
      %10903 = vmatpush.bf16.msra.mxu0 %v9865
      %10904 = vmatmul.bf16.gmra.mxu0 %v7424
      %v10905 = vpop.f32.mrf.mxu0
      %v10906 = vadd.f32 %v10892, %v10905
      %v10907 = vpop.f32.mrf.mxu0
      %v10908 = vadd.f32 %v10894, %v10907
      %10909 = vdwg.mxu0
      %10910 = vmatpush.bf16.msra.mxu0 %v9925
      %10911 = vmatpush.bf16.msra.mxu0 %v9921
      %10912 = vmatpush.bf16.msra.mxu0 %v9917
      %10913 = vmatpush.bf16.msra.mxu0 %v9913
      %10914 = vmatpush.bf16.msra.mxu0 %v9909
      %10915 = vmatpush.bf16.msra.mxu0 %v9905
      %10916 = vmatpush.bf16.msra.mxu0 %v9901
      %10917 = vmatpush.bf16.msra.mxu0 %v9897
      %10918 = vmatmul.bf16.gmra.mxu0 %v7425
      %v10919 = vpop.f32.mrf.mxu0
      %v10920 = vadd.f32 %v10906, %v10919
      %v10921 = vpop.f32.mrf.mxu0
      %v10922 = vadd.f32 %v10908, %v10921
      %10923 = vdwg.mxu0
      %10924 = vmatpush.bf16.msra.mxu0 %v9957
      %10925 = vmatpush.bf16.msra.mxu0 %v9953
      %10926 = vmatpush.bf16.msra.mxu0 %v9949
      %10927 = vmatpush.bf16.msra.mxu0 %v9945
      %10928 = vmatpush.bf16.msra.mxu0 %v9941
      %10929 = vmatpush.bf16.msra.mxu0 %v9937
      %10930 = vmatpush.bf16.msra.mxu0 %v9933
      %10931 = vmatpush.bf16.msra.mxu0 %v9929
      %10932 = vmatmul.bf16.gmra.mxu0 %v7426
      %v10933 = vpop.f32.mrf.mxu0
      %v10934 = vadd.f32 %v10920, %v10933
      %v10935 = vpop.f32.mrf.mxu0
      %v10936 = vadd.f32 %v10922, %v10935
      %10937 = vdwg.mxu0
      %10938 = vmatpush.bf16.msra.mxu0 %v9989
      %10939 = vmatpush.bf16.msra.mxu0 %v9985
      %10940 = vmatpush.bf16.msra.mxu0 %v9981
      %10941 = vmatpush.bf16.msra.mxu0 %v9977
      %10942 = vmatpush.bf16.msra.mxu0 %v9973
      %10943 = vmatpush.bf16.msra.mxu0 %v9969
      %10944 = vmatpush.bf16.msra.mxu0 %v9965
      %10945 = vmatpush.bf16.msra.mxu0 %v9961
      %10946 = vmatmul.bf16.gmra.mxu0 %v7427
      %v10947 = vpop.f32.mrf.mxu0
      %v10948 = vadd.f32 %v10934, %v10947
      %v10949 = vpop.f32.mrf.mxu0
      %v10950 = vadd.f32 %v10936, %v10949
      %10951 = vdwg.mxu0
      %10952 = vmatpush.bf16.msra.mxu0 %v9510
      %10953 = vmatpush.bf16.msra.mxu0 %v9506
      %10954 = vmatpush.bf16.msra.mxu0 %v9502
      %10955 = vmatpush.bf16.msra.mxu0 %v9498
      %10956 = vmatpush.bf16.msra.mxu0 %v9494
      %10957 = vmatpush.bf16.msra.mxu0 %v9490
      %10958 = vmatpush.bf16.msra.mxu0 %v9486
      %10959 = vmatpush.bf16.msra.mxu0 %v9482
      %10960 = vmatmul.bf16.gmra.mxu0 %v7412
      %v10961 = vpop.f32.mrf.mxu0
      %v10962 = vadd.f32 %v7942, %v10961
      %v10963 = vpop.f32.mrf.mxu0
      %v10964 = vadd.f32 %v7942, %v10963
      %10965 = vdwg.mxu0
      %10966 = vmatpush.bf16.msra.mxu0 %v9542
      %10967 = vmatpush.bf16.msra.mxu0 %v9538
      %10968 = vmatpush.bf16.msra.mxu0 %v9534
      %10969 = vmatpush.bf16.msra.mxu0 %v9530
      %10970 = vmatpush.bf16.msra.mxu0 %v9526
      %10971 = vmatpush.bf16.msra.mxu0 %v9522
      %10972 = vmatpush.bf16.msra.mxu0 %v9518
      %10973 = vmatpush.bf16.msra.mxu0 %v9514
      %10974 = vmatmul.bf16.gmra.mxu0 %v7413
      %v10975 = vpop.f32.mrf.mxu0
      %v10976 = vadd.f32 %v10962, %v10975
      %v10977 = vpop.f32.mrf.mxu0
      %v10978 = vadd.f32 %v10964, %v10977
      %10979 = vdwg.mxu0
      %10980 = vmatpush.bf16.msra.mxu0 %v9574
      %10981 = vmatpush.bf16.msra.mxu0 %v9570
      %10982 = vmatpush.bf16.msra.mxu0 %v9566
      %10983 = vmatpush.bf16.msra.mxu0 %v9562
      %10984 = vmatpush.bf16.msra.mxu0 %v9558
      %10985 = vmatpush.bf16.msra.mxu0 %v9554
      %10986 = vmatpush.bf16.msra.mxu0 %v9550
      %10987 = vmatpush.bf16.msra.mxu0 %v9546
      %10988 = vmatmul.bf16.gmra.mxu0 %v7414
      %v10989 = vpop.f32.mrf.mxu0
      %v10990 = vadd.f32 %v10976, %v10989
      %v10991 = vpop.f32.mrf.mxu0
      %v10992 = vadd.f32 %v10978, %v10991
      %10993 = vdwg.mxu0
      %10994 = vmatpush.bf16.msra.mxu0 %v9606
      %10995 = vmatpush.bf16.msra.mxu0 %v9602
      %10996 = vmatpush.bf16.msra.mxu0 %v9598
      %10997 = vmatpush.bf16.msra.mxu0 %v9594
      %10998 = vmatpush.bf16.msra.mxu0 %v9590
      %10999 = vmatpush.bf16.msra.mxu0 %v9586
      %11000 = vmatpush.bf16.msra.mxu0 %v9582
      %11001 = vmatpush.bf16.msra.mxu0 %v9578
      %11002 = vmatmul.bf16.gmra.mxu0 %v7415
      %v11003 = vpop.f32.mrf.mxu0
      %v11004 = vadd.f32 %v10990, %v11003
      %v11005 = vpop.f32.mrf.mxu0
      %v11006 = vadd.f32 %v10992, %v11005
      %11007 = vdwg.mxu0
      %11008 = vmatpush.bf16.msra.mxu0 %v9638
      %11009 = vmatpush.bf16.msra.mxu0 %v9634
      %11010 = vmatpush.bf16.msra.mxu0 %v9630
      %11011 = vmatpush.bf16.msra.mxu0 %v9626
      %11012 = vmatpush.bf16.msra.mxu0 %v9622
      %11013 = vmatpush.bf16.msra.mxu0 %v9618
      %11014 = vmatpush.bf16.msra.mxu0 %v9614
      %11015 = vmatpush.bf16.msra.mxu0 %v9610
      %11016 = vmatmul.bf16.gmra.mxu0 %v7416
      %v11017 = vpop.f32.mrf.mxu0
      %v11018 = vadd.f32 %v11004, %v11017
      %v11019 = vpop.f32.mrf.mxu0
      %v11020 = vadd.f32 %v11006, %v11019
      %11021 = vdwg.mxu0
      %11022 = vmatpush.bf16.msra.mxu0 %v9670
      %11023 = vmatpush.bf16.msra.mxu0 %v9666
      %11024 = vmatpush.bf16.msra.mxu0 %v9662
      %11025 = vmatpush.bf16.msra.mxu0 %v9658
      %11026 = vmatpush.bf16.msra.mxu0 %v9654
      %11027 = vmatpush.bf16.msra.mxu0 %v9650
      %11028 = vmatpush.bf16.msra.mxu0 %v9646
      %11029 = vmatpush.bf16.msra.mxu0 %v9642
      %11030 = vmatmul.bf16.gmra.mxu0 %v7417
      %v11031 = vpop.f32.mrf.mxu0
      %v11032 = vadd.f32 %v11018, %v11031
      %v11033 = vpop.f32.mrf.mxu0
      %v11034 = vadd.f32 %v11020, %v11033
      %11035 = vdwg.mxu0
      %11036 = vmatpush.bf16.msra.mxu0 %v9702
      %11037 = vmatpush.bf16.msra.mxu0 %v9698
      %11038 = vmatpush.bf16.msra.mxu0 %v9694
      %11039 = vmatpush.bf16.msra.mxu0 %v9690
      %11040 = vmatpush.bf16.msra.mxu0 %v9686
      %11041 = vmatpush.bf16.msra.mxu0 %v9682
      %11042 = vmatpush.bf16.msra.mxu0 %v9678
      %11043 = vmatpush.bf16.msra.mxu0 %v9674
      %11044 = vmatmul.bf16.gmra.mxu0 %v7418
      %v11045 = vpop.f32.mrf.mxu0
      %v11046 = vadd.f32 %v11032, %v11045
      %v11047 = vpop.f32.mrf.mxu0
      %v11048 = vadd.f32 %v11034, %v11047
      %11049 = vdwg.mxu0
      %11050 = vmatpush.bf16.msra.mxu0 %v9734
      %11051 = vmatpush.bf16.msra.mxu0 %v9730
      %11052 = vmatpush.bf16.msra.mxu0 %v9726
      %11053 = vmatpush.bf16.msra.mxu0 %v9722
      %11054 = vmatpush.bf16.msra.mxu0 %v9718
      %11055 = vmatpush.bf16.msra.mxu0 %v9714
      %11056 = vmatpush.bf16.msra.mxu0 %v9710
      %11057 = vmatpush.bf16.msra.mxu0 %v9706
      %11058 = vmatmul.bf16.gmra.mxu0 %v7419
      %v11059 = vpop.f32.mrf.mxu0
      %v11060 = vadd.f32 %v11046, %v11059
      %v11061 = vpop.f32.mrf.mxu0
      %v11062 = vadd.f32 %v11048, %v11061
      %11063 = vdwg.mxu0
      %11064 = vmatpush.bf16.msra.mxu0 %v9766
      %11065 = vmatpush.bf16.msra.mxu0 %v9762
      %11066 = vmatpush.bf16.msra.mxu0 %v9758
      %11067 = vmatpush.bf16.msra.mxu0 %v9754
      %11068 = vmatpush.bf16.msra.mxu0 %v9750
      %11069 = vmatpush.bf16.msra.mxu0 %v9746
      %11070 = vmatpush.bf16.msra.mxu0 %v9742
      %11071 = vmatpush.bf16.msra.mxu0 %v9738
      %11072 = vmatmul.bf16.gmra.mxu0 %v7420
      %v11073 = vpop.f32.mrf.mxu0
      %v11074 = vadd.f32 %v11060, %v11073
      %v11075 = vpop.f32.mrf.mxu0
      %v11076 = vadd.f32 %v11062, %v11075
      %11077 = vdwg.mxu0
      %11078 = vmatpush.bf16.msra.mxu0 %v9798
      %11079 = vmatpush.bf16.msra.mxu0 %v9794
      %11080 = vmatpush.bf16.msra.mxu0 %v9790
      %11081 = vmatpush.bf16.msra.mxu0 %v9786
      %11082 = vmatpush.bf16.msra.mxu0 %v9782
      %11083 = vmatpush.bf16.msra.mxu0 %v9778
      %11084 = vmatpush.bf16.msra.mxu0 %v9774
      %11085 = vmatpush.bf16.msra.mxu0 %v9770
      %11086 = vmatmul.bf16.gmra.mxu0 %v7421
      %v11087 = vpop.f32.mrf.mxu0
      %v11088 = vadd.f32 %v11074, %v11087
      %v11089 = vpop.f32.mrf.mxu0
      %v11090 = vadd.f32 %v11076, %v11089
      %11091 = vdwg.mxu0
      %11092 = vmatpush.bf16.msra.mxu0 %v9830
      %11093 = vmatpush.bf16.msra.mxu0 %v9826
      %11094 = vmatpush.bf16.msra.mxu0 %v9822
      %11095 = vmatpush.bf16.msra.mxu0 %v9818
      %11096 = vmatpush.bf16.msra.mxu0 %v9814
      %11097 = vmatpush.bf16.msra.mxu0 %v9810
      %11098 = vmatpush.bf16.msra.mxu0 %v9806
      %11099 = vmatpush.bf16.msra.mxu0 %v9802
      %11100 = vmatmul.bf16.gmra.mxu0 %v7422
      %v11101 = vpop.f32.mrf.mxu0
      %v11102 = vadd.f32 %v11088, %v11101
      %v11103 = vpop.f32.mrf.mxu0
      %v11104 = vadd.f32 %v11090, %v11103
      %11105 = vdwg.mxu0
      %11106 = vmatpush.bf16.msra.mxu0 %v9862
      %11107 = vmatpush.bf16.msra.mxu0 %v9858
      %11108 = vmatpush.bf16.msra.mxu0 %v9854
      %11109 = vmatpush.bf16.msra.mxu0 %v9850
      %11110 = vmatpush.bf16.msra.mxu0 %v9846
      %11111 = vmatpush.bf16.msra.mxu0 %v9842
      %11112 = vmatpush.bf16.msra.mxu0 %v9838
      %11113 = vmatpush.bf16.msra.mxu0 %v9834
      %11114 = vmatmul.bf16.gmra.mxu0 %v7423
      %v11115 = vpop.f32.mrf.mxu0
      %v11116 = vadd.f32 %v11102, %v11115
      %v11117 = vpop.f32.mrf.mxu0
      %v11118 = vadd.f32 %v11104, %v11117
      %11119 = vdwg.mxu0
      %11120 = vmatpush.bf16.msra.mxu0 %v9894
      %11121 = vmatpush.bf16.msra.mxu0 %v9890
      %11122 = vmatpush.bf16.msra.mxu0 %v9886
      %11123 = vmatpush.bf16.msra.mxu0 %v9882
      %11124 = vmatpush.bf16.msra.mxu0 %v9878
      %11125 = vmatpush.bf16.msra.mxu0 %v9874
      %11126 = vmatpush.bf16.msra.mxu0 %v9870
      %11127 = vmatpush.bf16.msra.mxu0 %v9866
      %11128 = vmatmul.bf16.gmra.mxu0 %v7424
      %v11129 = vpop.f32.mrf.mxu0
      %v11130 = vadd.f32 %v11116, %v11129
      %v11131 = vpop.f32.mrf.mxu0
      %v11132 = vadd.f32 %v11118, %v11131
      %11133 = vdwg.mxu0
      %11134 = vmatpush.bf16.msra.mxu0 %v9926
      %11135 = vmatpush.bf16.msra.mxu0 %v9922
      %11136 = vmatpush.bf16.msra.mxu0 %v9918
      %11137 = vmatpush.bf16.msra.mxu0 %v9914
      %11138 = vmatpush.bf16.msra.mxu0 %v9910
      %11139 = vmatpush.bf16.msra.mxu0 %v9906
      %11140 = vmatpush.bf16.msra.mxu0 %v9902
      %11141 = vmatpush.bf16.msra.mxu0 %v9898
      %11142 = vmatmul.bf16.gmra.mxu0 %v7425
      %v11143 = vpop.f32.mrf.mxu0
      %v11144 = vadd.f32 %v11130, %v11143
      %v11145 = vpop.f32.mrf.mxu0
      %v11146 = vadd.f32 %v11132, %v11145
      %11147 = vdwg.mxu0
      %11148 = vmatpush.bf16.msra.mxu0 %v9958
      %11149 = vmatpush.bf16.msra.mxu0 %v9954
      %11150 = vmatpush.bf16.msra.mxu0 %v9950
      %11151 = vmatpush.bf16.msra.mxu0 %v9946
      %11152 = vmatpush.bf16.msra.mxu0 %v9942
      %11153 = vmatpush.bf16.msra.mxu0 %v9938
      %11154 = vmatpush.bf16.msra.mxu0 %v9934
      %11155 = vmatpush.bf16.msra.mxu0 %v9930
      %11156 = vmatmul.bf16.gmra.mxu0 %v7426
      %v11157 = vpop.f32.mrf.mxu0
      %v11158 = vadd.f32 %v11144, %v11157
      %v11159 = vpop.f32.mrf.mxu0
      %v11160 = vadd.f32 %v11146, %v11159
      %11161 = vdwg.mxu0
      %11162 = vmatpush.bf16.msra.mxu0 %v9990
      %11163 = vmatpush.bf16.msra.mxu0 %v9986
      %11164 = vmatpush.bf16.msra.mxu0 %v9982
      %11165 = vmatpush.bf16.msra.mxu0 %v9978
      %11166 = vmatpush.bf16.msra.mxu0 %v9974
      %11167 = vmatpush.bf16.msra.mxu0 %v9970
      %11168 = vmatpush.bf16.msra.mxu0 %v9966
      %11169 = vmatpush.bf16.msra.mxu0 %v9962
      %11170 = vmatmul.bf16.gmra.mxu0 %v7427
      %v11171 = vpop.f32.mrf.mxu0
      %v11172 = vadd.f32 %v11158, %v11171
      %v11173 = vpop.f32.mrf.mxu0
      %v11174 = vadd.f32 %v11160, %v11173
      %11175 = vdwg.mxu0
      %11176 = vmatpush.bf16.msra.mxu0 %v9511
      %11177 = vmatpush.bf16.msra.mxu0 %v9507
      %11178 = vmatpush.bf16.msra.mxu0 %v9503
      %11179 = vmatpush.bf16.msra.mxu0 %v9499
      %11180 = vmatpush.bf16.msra.mxu0 %v9495
      %11181 = vmatpush.bf16.msra.mxu0 %v9491
      %11182 = vmatpush.bf16.msra.mxu0 %v9487
      %11183 = vmatpush.bf16.msra.mxu0 %v9483
      %11184 = vmatmul.bf16.gmra.mxu0 %v7412
      %v11185 = vpop.f32.mrf.mxu0
      %v11186 = vadd.f32 %v7943, %v11185
      %v11187 = vpop.f32.mrf.mxu0
      %v11188 = vadd.f32 %v7943, %v11187
      %11189 = vdwg.mxu0
      %11190 = vmatpush.bf16.msra.mxu0 %v9543
      %11191 = vmatpush.bf16.msra.mxu0 %v9539
      %11192 = vmatpush.bf16.msra.mxu0 %v9535
      %11193 = vmatpush.bf16.msra.mxu0 %v9531
      %11194 = vmatpush.bf16.msra.mxu0 %v9527
      %11195 = vmatpush.bf16.msra.mxu0 %v9523
      %11196 = vmatpush.bf16.msra.mxu0 %v9519
      %11197 = vmatpush.bf16.msra.mxu0 %v9515
      %11198 = vmatmul.bf16.gmra.mxu0 %v7413
      %v11199 = vpop.f32.mrf.mxu0
      %v11200 = vadd.f32 %v11186, %v11199
      %v11201 = vpop.f32.mrf.mxu0
      %v11202 = vadd.f32 %v11188, %v11201
      %11203 = vdwg.mxu0
      %11204 = vmatpush.bf16.msra.mxu0 %v9575
      %11205 = vmatpush.bf16.msra.mxu0 %v9571
      %11206 = vmatpush.bf16.msra.mxu0 %v9567
      %11207 = vmatpush.bf16.msra.mxu0 %v9563
      %11208 = vmatpush.bf16.msra.mxu0 %v9559
      %11209 = vmatpush.bf16.msra.mxu0 %v9555
      %11210 = vmatpush.bf16.msra.mxu0 %v9551
      %11211 = vmatpush.bf16.msra.mxu0 %v9547
      %11212 = vmatmul.bf16.gmra.mxu0 %v7414
      %v11213 = vpop.f32.mrf.mxu0
      %v11214 = vadd.f32 %v11200, %v11213
      %v11215 = vpop.f32.mrf.mxu0
      %v11216 = vadd.f32 %v11202, %v11215
      %11217 = vdwg.mxu0
      %11218 = vmatpush.bf16.msra.mxu0 %v9607
      %11219 = vmatpush.bf16.msra.mxu0 %v9603
      %11220 = vmatpush.bf16.msra.mxu0 %v9599
      %11221 = vmatpush.bf16.msra.mxu0 %v9595
      %11222 = vmatpush.bf16.msra.mxu0 %v9591
      %11223 = vmatpush.bf16.msra.mxu0 %v9587
      %11224 = vmatpush.bf16.msra.mxu0 %v9583
      %11225 = vmatpush.bf16.msra.mxu0 %v9579
      %11226 = vmatmul.bf16.gmra.mxu0 %v7415
      %v11227 = vpop.f32.mrf.mxu0
      %v11228 = vadd.f32 %v11214, %v11227
      %v11229 = vpop.f32.mrf.mxu0
      %v11230 = vadd.f32 %v11216, %v11229
      %11231 = vdwg.mxu0
      %11232 = vmatpush.bf16.msra.mxu0 %v9639
      %11233 = vmatpush.bf16.msra.mxu0 %v9635
      %11234 = vmatpush.bf16.msra.mxu0 %v9631
      %11235 = vmatpush.bf16.msra.mxu0 %v9627
      %11236 = vmatpush.bf16.msra.mxu0 %v9623
      %11237 = vmatpush.bf16.msra.mxu0 %v9619
      %11238 = vmatpush.bf16.msra.mxu0 %v9615
      %11239 = vmatpush.bf16.msra.mxu0 %v9611
      %11240 = vmatmul.bf16.gmra.mxu0 %v7416
      %v11241 = vpop.f32.mrf.mxu0
      %v11242 = vadd.f32 %v11228, %v11241
      %v11243 = vpop.f32.mrf.mxu0
      %v11244 = vadd.f32 %v11230, %v11243
      %11245 = vdwg.mxu0
      %11246 = vmatpush.bf16.msra.mxu0 %v9671
      %11247 = vmatpush.bf16.msra.mxu0 %v9667
      %11248 = vmatpush.bf16.msra.mxu0 %v9663
      %11249 = vmatpush.bf16.msra.mxu0 %v9659
      %11250 = vmatpush.bf16.msra.mxu0 %v9655
      %11251 = vmatpush.bf16.msra.mxu0 %v9651
      %11252 = vmatpush.bf16.msra.mxu0 %v9647
      %11253 = vmatpush.bf16.msra.mxu0 %v9643
      %11254 = vmatmul.bf16.gmra.mxu0 %v7417
      %v11255 = vpop.f32.mrf.mxu0
      %v11256 = vadd.f32 %v11242, %v11255
      %v11257 = vpop.f32.mrf.mxu0
      %v11258 = vadd.f32 %v11244, %v11257
      %11259 = vdwg.mxu0
      %11260 = vmatpush.bf16.msra.mxu0 %v9703
      %11261 = vmatpush.bf16.msra.mxu0 %v9699
      %11262 = vmatpush.bf16.msra.mxu0 %v9695
      %11263 = vmatpush.bf16.msra.mxu0 %v9691
      %11264 = vmatpush.bf16.msra.mxu0 %v9687
      %11265 = vmatpush.bf16.msra.mxu0 %v9683
      %11266 = vmatpush.bf16.msra.mxu0 %v9679
      %11267 = vmatpush.bf16.msra.mxu0 %v9675
      %11268 = vmatmul.bf16.gmra.mxu0 %v7418
      %v11269 = vpop.f32.mrf.mxu0
      %v11270 = vadd.f32 %v11256, %v11269
      %v11271 = vpop.f32.mrf.mxu0
      %v11272 = vadd.f32 %v11258, %v11271
      %11273 = vdwg.mxu0
      %11274 = vmatpush.bf16.msra.mxu0 %v9735
      %11275 = vmatpush.bf16.msra.mxu0 %v9731
      %11276 = vmatpush.bf16.msra.mxu0 %v9727
      %11277 = vmatpush.bf16.msra.mxu0 %v9723
      %11278 = vmatpush.bf16.msra.mxu0 %v9719
      %11279 = vmatpush.bf16.msra.mxu0 %v9715
      %11280 = vmatpush.bf16.msra.mxu0 %v9711
      %11281 = vmatpush.bf16.msra.mxu0 %v9707
      %11282 = vmatmul.bf16.gmra.mxu0 %v7419
      %v11283 = vpop.f32.mrf.mxu0
      %v11284 = vadd.f32 %v11270, %v11283
      %v11285 = vpop.f32.mrf.mxu0
      %v11286 = vadd.f32 %v11272, %v11285
      %11287 = vdwg.mxu0
      %11288 = vmatpush.bf16.msra.mxu0 %v9767
      %11289 = vmatpush.bf16.msra.mxu0 %v9763
      %11290 = vmatpush.bf16.msra.mxu0 %v9759
      %11291 = vmatpush.bf16.msra.mxu0 %v9755
      %11292 = vmatpush.bf16.msra.mxu0 %v9751
      %11293 = vmatpush.bf16.msra.mxu0 %v9747
      %11294 = vmatpush.bf16.msra.mxu0 %v9743
      %11295 = vmatpush.bf16.msra.mxu0 %v9739
      %11296 = vmatmul.bf16.gmra.mxu0 %v7420
      %v11297 = vpop.f32.mrf.mxu0
      %v11298 = vadd.f32 %v11284, %v11297
      %v11299 = vpop.f32.mrf.mxu0
      %v11300 = vadd.f32 %v11286, %v11299
      %11301 = vdwg.mxu0
      %11302 = vmatpush.bf16.msra.mxu0 %v9799
      %11303 = vmatpush.bf16.msra.mxu0 %v9795
      %11304 = vmatpush.bf16.msra.mxu0 %v9791
      %11305 = vmatpush.bf16.msra.mxu0 %v9787
      %11306 = vmatpush.bf16.msra.mxu0 %v9783
      %11307 = vmatpush.bf16.msra.mxu0 %v9779
      %11308 = vmatpush.bf16.msra.mxu0 %v9775
      %11309 = vmatpush.bf16.msra.mxu0 %v9771
      %11310 = vmatmul.bf16.gmra.mxu0 %v7421
      %v11311 = vpop.f32.mrf.mxu0
      %v11312 = vadd.f32 %v11298, %v11311
      %v11313 = vpop.f32.mrf.mxu0
      %v11314 = vadd.f32 %v11300, %v11313
      %11315 = vdwg.mxu0
      %11316 = vmatpush.bf16.msra.mxu0 %v9831
      %11317 = vmatpush.bf16.msra.mxu0 %v9827
      %11318 = vmatpush.bf16.msra.mxu0 %v9823
      %11319 = vmatpush.bf16.msra.mxu0 %v9819
      %11320 = vmatpush.bf16.msra.mxu0 %v9815
      %11321 = vmatpush.bf16.msra.mxu0 %v9811
      %11322 = vmatpush.bf16.msra.mxu0 %v9807
      %11323 = vmatpush.bf16.msra.mxu0 %v9803
      %11324 = vmatmul.bf16.gmra.mxu0 %v7422
      %v11325 = vpop.f32.mrf.mxu0
      %v11326 = vadd.f32 %v11312, %v11325
      %v11327 = vpop.f32.mrf.mxu0
      %v11328 = vadd.f32 %v11314, %v11327
      %11329 = vdwg.mxu0
      %11330 = vmatpush.bf16.msra.mxu0 %v9863
      %11331 = vmatpush.bf16.msra.mxu0 %v9859
      %11332 = vmatpush.bf16.msra.mxu0 %v9855
      %11333 = vmatpush.bf16.msra.mxu0 %v9851
      %11334 = vmatpush.bf16.msra.mxu0 %v9847
      %11335 = vmatpush.bf16.msra.mxu0 %v9843
      %11336 = vmatpush.bf16.msra.mxu0 %v9839
      %11337 = vmatpush.bf16.msra.mxu0 %v9835
      %11338 = vmatmul.bf16.gmra.mxu0 %v7423
      %v11339 = vpop.f32.mrf.mxu0
      %v11340 = vadd.f32 %v11326, %v11339
      %v11341 = vpop.f32.mrf.mxu0
      %v11342 = vadd.f32 %v11328, %v11341
      %11343 = vdwg.mxu0
      %11344 = vmatpush.bf16.msra.mxu0 %v9895
      %11345 = vmatpush.bf16.msra.mxu0 %v9891
      %11346 = vmatpush.bf16.msra.mxu0 %v9887
      %11347 = vmatpush.bf16.msra.mxu0 %v9883
      %11348 = vmatpush.bf16.msra.mxu0 %v9879
      %11349 = vmatpush.bf16.msra.mxu0 %v9875
      %11350 = vmatpush.bf16.msra.mxu0 %v9871
      %11351 = vmatpush.bf16.msra.mxu0 %v9867
      %11352 = vmatmul.bf16.gmra.mxu0 %v7424
      %v11353 = vpop.f32.mrf.mxu0
      %v11354 = vadd.f32 %v11340, %v11353
      %v11355 = vpop.f32.mrf.mxu0
      %v11356 = vadd.f32 %v11342, %v11355
      %11357 = vdwg.mxu0
      %11358 = vmatpush.bf16.msra.mxu0 %v9927
      %11359 = vmatpush.bf16.msra.mxu0 %v9923
      %11360 = vmatpush.bf16.msra.mxu0 %v9919
      %11361 = vmatpush.bf16.msra.mxu0 %v9915
      %11362 = vmatpush.bf16.msra.mxu0 %v9911
      %11363 = vmatpush.bf16.msra.mxu0 %v9907
      %11364 = vmatpush.bf16.msra.mxu0 %v9903
      %11365 = vmatpush.bf16.msra.mxu0 %v9899
      %11366 = vmatmul.bf16.gmra.mxu0 %v7425
      %v11367 = vpop.f32.mrf.mxu0
      %v11368 = vadd.f32 %v11354, %v11367
      %v11369 = vpop.f32.mrf.mxu0
      %v11370 = vadd.f32 %v11356, %v11369
      %11371 = vdwg.mxu0
      %11372 = vmatpush.bf16.msra.mxu0 %v9959
      %11373 = vmatpush.bf16.msra.mxu0 %v9955
      %11374 = vmatpush.bf16.msra.mxu0 %v9951
      %11375 = vmatpush.bf16.msra.mxu0 %v9947
      %11376 = vmatpush.bf16.msra.mxu0 %v9943
      %11377 = vmatpush.bf16.msra.mxu0 %v9939
      %11378 = vmatpush.bf16.msra.mxu0 %v9935
      %11379 = vmatpush.bf16.msra.mxu0 %v9931
      %11380 = vmatmul.bf16.gmra.mxu0 %v7426
      %v11381 = vpop.f32.mrf.mxu0
      %v11382 = vadd.f32 %v11368, %v11381
      %v11383 = vpop.f32.mrf.mxu0
      %v11384 = vadd.f32 %v11370, %v11383
      %11385 = vdwg.mxu0
      %11386 = vmatpush.bf16.msra.mxu0 %v9991
      %11387 = vmatpush.bf16.msra.mxu0 %v9987
      %11388 = vmatpush.bf16.msra.mxu0 %v9983
      %11389 = vmatpush.bf16.msra.mxu0 %v9979
      %11390 = vmatpush.bf16.msra.mxu0 %v9975
      %11391 = vmatpush.bf16.msra.mxu0 %v9971
      %11392 = vmatpush.bf16.msra.mxu0 %v9967
      %11393 = vmatpush.bf16.msra.mxu0 %v9963
      %11394 = vmatmul.bf16.gmra.mxu0 %v7427
      %v11395 = vpop.f32.mrf.mxu0
      %v11396 = vadd.f32 %v11382, %v11395
      %v11397 = vpop.f32.mrf.mxu0
      %v11398 = vadd.f32 %v11384, %v11397
      %11399 = vdwg.mxu0
      %v11400 = vadd.f32 %v4053, %v10724
      %v11401 = vadd.f32 %v4054, %v10948
      %v11402 = vadd.f32 %v4055, %v11172
      %v11403 = vadd.f32 %v4056, %v11396
      %v11404 = vadd.f32 %v4057, %v10726
      %v11405 = vadd.f32 %v4058, %v10950
      %v11406 = vadd.f32 %v4059, %v11174
      %v11407 = vadd.f32 %v4060, %v11398
      %v11408 = vadd.f32 %v11400, %v11401
      %v11409 = vadd.f32 %v11408, %v11402
      %v11410 = vsel %vm2147, %v11403, 0.0
      %v11411 = vadd.f32 %v11409, %v11410
      %11412 = vadd.xlane.f32.xlu0 %v11411
      %v11413 = vpop.xlane.xlu0 %11412
      %v11414 = vadd.f32 %v11404, %v11405
      %v11415 = vadd.f32 %v11414, %v11406
      %v11416 = vsel %vm2147, %v11407, 0.0
      %v11417 = vadd.f32 %v11415, %v11416
      %11418 = vadd.xlane.f32.xlu0 %v11417
      %v11419 = vpop.xlane.xlu0 %11418
      %v11420 = vmul.f32 %v11413, %v3974
      %v11421 = vmul.f32 %v11419, %v3974
      %v11422 = vsub.f32 %v11400, %v11420
      %v11423 = vsub.f32 %v11401, %v11420
      %v11424 = vsub.f32 %v11402, %v11420
      %v11425 = vsub.f32 %v11403, %v11420
      %v11426 = vsub.f32 %v11404, %v11421
      %v11427 = vsub.f32 %v11405, %v11421
      %v11428 = vsub.f32 %v11406, %v11421
      %v11429 = vsub.f32 %v11407, %v11421
      %v11430 = vmul.f32 %v11422, %v11422
      %v11431 = vmul.f32 %v11423, %v11423
      %v11432 = vmul.f32 %v11424, %v11424
      %v11433 = vmul.f32 %v11425, %v11425
      %v11434 = vmul.f32 %v11426, %v11426
      %v11435 = vmul.f32 %v11427, %v11427
      %v11436 = vmul.f32 %v11428, %v11428
      %v11437 = vmul.f32 %v11429, %v11429
      %v11438 = vadd.f32 %v11430, %v11431
      %v11439 = vadd.f32 %v11438, %v11432
      %v11440 = vsel %vm2147, %v11433, 0.0
      %v11441 = vadd.f32 %v11439, %v11440
      %11442 = vadd.xlane.f32.xlu0 %v11441
      %v11443 = vpop.xlane.xlu0 %11442
      %v11444 = vadd.f32 %v11434, %v11435
      %v11445 = vadd.f32 %v11444, %v11436
      %v11446 = vsel %vm2147, %v11437, 0.0
      %v11447 = vadd.f32 %v11445, %v11446
      %11448 = vadd.xlane.f32.xlu0 %v11447
      %v11449 = vpop.xlane.xlu0 %11448
      %v11450 = vmul.f32 %v11443, %v3974
      %v11451 = vmul.f32 %v11449, %v3974
      %v11452 = vadd.f32 %v11450, 1e-05
      %v11453 = vadd.f32 %v11451, 1e-05
      %v11454 = vrsqrt.pop %v11452
      %v11455 = vmul.f32 %v11454, %v11452
      %v11456 = vmul.f32 %v11455, %v11454
      %v11457 = vmul.f32 0.5, %v11456
      %v11458 = vsub.f32 1.5, %v11457
      %v11459 = vmul.f32 %v11454, %v11458
      %vm11460 = vweird.f32 %v11452
      %vm11461 = vweird.f32 %v11454
      %vm11462 = vmor %vm11460, %vm11461
      %v11463 = vsel %vm11462, %v11454, %v11459
      %v11464 = vrsqrt.pop %v11453
      %v11465 = vmul.f32 %v11464, %v11453
      %v11466 = vmul.f32 %v11465, %v11464
      %v11467 = vmul.f32 0.5, %v11466
      %v11468 = vsub.f32 1.5, %v11467
      %v11469 = vmul.f32 %v11464, %v11468
      %vm11470 = vweird.f32 %v11453
      %vm11471 = vweird.f32 %v11464
      %vm11472 = vmor %vm11470, %vm11471
      %v11473 = vsel %vm11472, %v11464, %v11469
      %v11474 = vmul.f32 %v11422, %v11463
      %v11475 = vmul.f32 %v11423, %v11463
      %v11476 = vmul.f32 %v11424, %v11463
      %v11477 = vmul.f32 %v11425, %v11463
      %v11478 = vmul.f32 %v11426, %v11473
      %v11479 = vmul.f32 %v11427, %v11473
      %v11480 = vmul.f32 %v11428, %v11473
      %v11481 = vmul.f32 %v11429, %v11473
      %v11482 = vperm.slane %v323, 6
      %v11483 = vperm.slane %v324, 6
      %v11484 = vperm.slane %v325, 6
      %v11485 = vperm.slane %v326, 6
      %v11486 = vmul.f32 %v11474, %v11482
      %v11487 = vmul.f32 %v11475, %v11483
      %v11488 = vmul.f32 %v11476, %v11484
      %v11489 = vmul.f32 %v11477, %v11485
      %v11490 = vmul.f32 %v11478, %v11482
      %v11491 = vmul.f32 %v11479, %v11483
      %v11492 = vmul.f32 %v11480, %v11484
      %v11493 = vmul.f32 %v11481, %v11485
      %v11494 = vperm.slane %v323, 7
      %v11495 = vperm.slane %v324, 7
      %v11496 = vperm.slane %v325, 7
      %v11497 = vperm.slane %v326, 7
      %v11498 = vadd.f32 %v11486, %v11494
      %v11499 = vadd.f32 %v11487, %v11495
      %v11500 = vadd.f32 %v11488, %v11496
      %v11501 = vadd.f32 %v11489, %v11497
      %v11502 = vadd.f32 %v11490, %v11494
      %v11503 = vadd.f32 %v11491, %v11495
      %v11504 = vadd.f32 %v11492, %v11496
      %v11505 = vadd.f32 %v11493, %v11497
      %v11506 = vpack.c.bf16 %v11502, %v11498
      %v11507 = vpack.c.bf16 %v11503, %v11499
      %v11508 = vpack.c.bf16 %v11504, %v11500
      %v11509 = vpack.c.bf16 %v11505, %v11501
      %v11510 = vld [vmem:[%s6] sm:$0xff]
      %v11511 = vld [vmem:[%s6 + $0x8] sm:$0xff]
      %v11512 = vld [vmem:[%s6 + $0x10] sm:$0xff]
      %v11513 = vld [vmem:[%s6 + $0x18] sm:$0xff]
      %v11514 = vld [vmem:[%s6 + $0x20] sm:$0xff]
      %v11515 = vld [vmem:[%s6 + $0x28] sm:$0xff]
      %v11516 = vld [vmem:[%s6 + $0x30] sm:$0xff]
      %v11517 = vld [vmem:[%s6 + $0x38] sm:$0xff]
      %v11518 = vld [vmem:[%s6 + $0x40] sm:$0xff]
      %v11519 = vld [vmem:[%s6 + $0x48] sm:$0xff]
      %v11520 = vld [vmem:[%s6 + $0x50] sm:$0xff]
      %v11521 = vld [vmem:[%s6 + $0x58] sm:$0xff]
      %v11522 = vld [vmem:[%s6 + $0x60] sm:$0xff]
      %v11523 = vld [vmem:[%s6 + $0x68] sm:$0xff]
      %v11524 = vld [vmem:[%s6 + $0x70] sm:$0xff]
      %v11525 = vld [vmem:[%s6 + $0x78] sm:$0xff]
      %v11526 = vld [vmem:[%s6 + $0x80] sm:$0xff]
      %v11527 = vld [vmem:[%s6 + $0x88] sm:$0xff]
      %v11528 = vld [vmem:[%s6 + $0x90] sm:$0xff]
      %v11529 = vld [vmem:[%s6 + $0x98] sm:$0xff]
      %v11530 = vld [vmem:[%s6 + $0xa0] sm:$0xff]
      %v11531 = vld [vmem:[%s6 + $0xa8] sm:$0xff]
      %v11532 = vld [vmem:[%s6 + $0xb0] sm:$0xff]
      %v11533 = vld [vmem:[%s6 + $0xb8] sm:$0xff]
      %v11534 = vld [vmem:[%s6 + $0xc0] sm:$0xff]
      %v11535 = vld [vmem:[%s6 + $0xc8] sm:$0xff]
      %v11536 = vld [vmem:[%s6 + $0xd0] sm:$0xff]
      %v11537 = vld [vmem:[%s6 + $0xd8] sm:$0xff]
      %v11538 = vld [vmem:[%s6 + $0xe0] sm:$0xff]
      %v11539 = vld [vmem:[%s6 + $0xe8] sm:$0xff]
      %v11540 = vld [vmem:[%s6 + $0xf0] sm:$0xff]
      %v11541 = vld [vmem:[%s6 + $0xf8] sm:$0xff]
      %v11542 = vld [vmem:[%s6 + $0x100] sm:$0xff]
      %v11543 = vld [vmem:[%s6 + $0x108] sm:$0xff]
      %v11544 = vld [vmem:[%s6 + $0x110] sm:$0xff]
      %v11545 = vld [vmem:[%s6 + $0x118] sm:$0xff]
      %v11546 = vld [vmem:[%s6 + $0x120] sm:$0xff]
      %v11547 = vld [vmem:[%s6 + $0x128] sm:$0xff]
      %v11548 = vld [vmem:[%s6 + $0x130] sm:$0xff]
      %v11549 = vld [vmem:[%s6 + $0x138] sm:$0xff]
      %v11550 = vld [vmem:[%s6 + $0x140] sm:$0xff]
      %v11551 = vld [vmem:[%s6 + $0x148] sm:$0xff]
      %v11552 = vld [vmem:[%s6 + $0x150] sm:$0xff]
      %v11553 = vld [vmem:[%s6 + $0x158] sm:$0xff]
      %v11554 = vld [vmem:[%s6 + $0x160] sm:$0xff]
      %v11555 = vld [vmem:[%s6 + $0x168] sm:$0xff]
      %v11556 = vld [vmem:[%s6 + $0x170] sm:$0xff]
      %v11557 = vld [vmem:[%s6 + $0x178] sm:$0xff]
      %v11558 = vld [vmem:[%s6 + $0x180] sm:$0xff]
      %v11559 = vld [vmem:[%s6 + $0x188] sm:$0xff]
      %v11560 = vld [vmem:[%s6 + $0x190] sm:$0xff]
      %v11561 = vld [vmem:[%s6 + $0x198] sm:$0xff]
      %v11562 = vld [vmem:[%s6 + $0x1a0] sm:$0xff]
      %v11563 = vld [vmem:[%s6 + $0x1a8] sm:$0xff]
      %v11564 = vld [vmem:[%s6 + $0x1b0] sm:$0xff]
      %v11565 = vld [vmem:[%s6 + $0x1b8] sm:$0xff]
      %v11566 = vld [vmem:[%s6 + $0x1c0] sm:$0xff]
      %v11567 = vld [vmem:[%s6 + $0x1c8] sm:$0xff]
      %v11568 = vld [vmem:[%s6 + $0x1d0] sm:$0xff]
      %v11569 = vld [vmem:[%s6 + $0x1d8] sm:$0xff]
      %v11570 = vld [vmem:[%s6 + $0x1e0] sm:$0xff]
      %v11571 = vld [vmem:[%s6 + $0x1e8] sm:$0xff]
      %v11572 = vld [vmem:[%s6 + $0x1f0] sm:$0xff]
      %v11573 = vld [vmem:[%s6 + $0x1f8] sm:$0xff]
      %v11574 = vld [vmem:[%s6 + $0x200] sm:$0xff]
      %v11575 = vld [vmem:[%s6 + $0x208] sm:$0xff]
      %v11576 = vld [vmem:[%s6 + $0x210] sm:$0xff]
      %v11577 = vld [vmem:[%s6 + $0x218] sm:$0xff]
      %v11578 = vld [vmem:[%s6 + $0x220] sm:$0xff]
      %v11579 = vld [vmem:[%s6 + $0x228] sm:$0xff]
      %v11580 = vld [vmem:[%s6 + $0x230] sm:$0xff]
      %v11581 = vld [vmem:[%s6 + $0x238] sm:$0xff]
      %v11582 = vld [vmem:[%s6 + $0x240] sm:$0xff]
      %v11583 = vld [vmem:[%s6 + $0x248] sm:$0xff]
      %v11584 = vld [vmem:[%s6 + $0x250] sm:$0xff]
      %v11585 = vld [vmem:[%s6 + $0x258] sm:$0xff]
      %v11586 = vld [vmem:[%s6 + $0x260] sm:$0xff]
      %v11587 = vld [vmem:[%s6 + $0x268] sm:$0xff]
      %v11588 = vld [vmem:[%s6 + $0x270] sm:$0xff]
      %v11589 = vld [vmem:[%s6 + $0x278] sm:$0xff]
      %v11590 = vld [vmem:[%s6 + $0x280] sm:$0xff]
      %v11591 = vld [vmem:[%s6 + $0x288] sm:$0xff]
      %v11592 = vld [vmem:[%s6 + $0x290] sm:$0xff]
      %v11593 = vld [vmem:[%s6 + $0x298] sm:$0xff]
      %v11594 = vld [vmem:[%s6 + $0x2a0] sm:$0xff]
      %v11595 = vld [vmem:[%s6 + $0x2a8] sm:$0xff]
      %v11596 = vld [vmem:[%s6 + $0x2b0] sm:$0xff]
      %v11597 = vld [vmem:[%s6 + $0x2b8] sm:$0xff]
      %v11598 = vld [vmem:[%s6 + $0x2c0] sm:$0xff]
      %v11599 = vld [vmem:[%s6 + $0x2c8] sm:$0xff]
      %v11600 = vld [vmem:[%s6 + $0x2d0] sm:$0xff]
      %v11601 = vld [vmem:[%s6 + $0x2d8] sm:$0xff]
      %v11602 = vld [vmem:[%s6 + $0x2e0] sm:$0xff]
      %v11603 = vld [vmem:[%s6 + $0x2e8] sm:$0xff]
      %v11604 = vld [vmem:[%s6 + $0x2f0] sm:$0xff]
      %v11605 = vld [vmem:[%s6 + $0x2f8] sm:$0xff]
      %v11606 = vld [vmem:[%s6 + $0x300] sm:$0xff]
      %v11607 = vld [vmem:[%s6 + $0x308] sm:$0xff]
      %v11608 = vld [vmem:[%s6 + $0x310] sm:$0xff]
      %v11609 = vld [vmem:[%s6 + $0x318] sm:$0xff]
      %v11610 = vperm.slane %v327, 1
      %v11611 = vperm.slane %v328, 1
      %v11612 = vperm.slane %v329, 1
      %v11613 = vperm.slane %v330, 1
      %v11714 = vunpack.c.l.b16 %v11510
      %v11715 = vunpack.c.h.b16 %v11510
      %v11716 = vunpack.c.l.b16 %v11511
      %v11717 = vunpack.c.h.b16 %v11511
      %v11718 = vunpack.c.l.b16 %v11512
      %v11719 = vunpack.c.h.b16 %v11512
      %v11720 = vunpack.c.l.b16 %v11513
      %v11721 = vunpack.c.h.b16 %v11513
      %v11722 = vunpack.c.l.b16 %v11514
      %v11723 = vunpack.c.h.b16 %v11514
      %v11724 = vunpack.c.l.b16 %v11515
      %v11725 = vunpack.c.h.b16 %v11515
      %v11726 = vunpack.c.l.b16 %v11516
      %v11727 = vunpack.c.h.b16 %v11516
      %v11728 = vunpack.c.l.b16 %v11517
      %v11729 = vunpack.c.h.b16 %v11517
      %v11730 = vunpack.c.l.b16 %v11518
      %v11731 = vunpack.c.h.b16 %v11518
      %v11732 = vunpack.c.l.b16 %v11519
      %v11733 = vunpack.c.h.b16 %v11519
      %v11734 = vunpack.c.l.b16 %v11520
      %v11735 = vunpack.c.h.b16 %v11520
      %v11736 = vunpack.c.l.b16 %v11521
      %v11737 = vunpack.c.h.b16 %v11521
      %v11738 = vunpack.c.l.b16 %v11522
      %v11739 = vunpack.c.h.b16 %v11522
      %v11740 = vunpack.c.l.b16 %v11523
      %v11741 = vunpack.c.h.b16 %v11523
      %v11742 = vunpack.c.l.b16 %v11524
      %v11743 = vunpack.c.h.b16 %v11524
      %v11744 = vunpack.c.l.b16 %v11525
      %v11745 = vunpack.c.h.b16 %v11525
      %v11746 = vunpack.c.l.b16 %v11526
      %v11747 = vunpack.c.h.b16 %v11526
      %v11748 = vunpack.c.l.b16 %v11527
      %v11749 = vunpack.c.h.b16 %v11527
      %v11750 = vunpack.c.l.b16 %v11528
      %v11751 = vunpack.c.h.b16 %v11528
      %v11752 = vunpack.c.l.b16 %v11529
      %v11753 = vunpack.c.h.b16 %v11529
      %v11754 = vunpack.c.l.b16 %v11530
      %v11755 = vunpack.c.h.b16 %v11530
      %v11756 = vunpack.c.l.b16 %v11531
      %v11757 = vunpack.c.h.b16 %v11531
      %v11758 = vunpack.c.l.b16 %v11532
      %v11759 = vunpack.c.h.b16 %v11532
      %v11760 = vunpack.c.l.b16 %v11533
      %v11761 = vunpack.c.h.b16 %v11533
      %v11762 = vunpack.c.l.b16 %v11534
      %v11763 = vunpack.c.h.b16 %v11534
      %v11764 = vunpack.c.l.b16 %v11535
      %v11765 = vunpack.c.h.b16 %v11535
      %v11766 = vunpack.c.l.b16 %v11536
      %v11767 = vunpack.c.h.b16 %v11536
      %v11768 = vunpack.c.l.b16 %v11537
      %v11769 = vunpack.c.h.b16 %v11537
      %v11770 = vunpack.c.l.b16 %v11538
      %v11771 = vunpack.c.h.b16 %v11538
      %v11772 = vunpack.c.l.b16 %v11539
      %v11773 = vunpack.c.h.b16 %v11539
      %v11774 = vunpack.c.l.b16 %v11540
      %v11775 = vunpack.c.h.b16 %v11540
      %v11776 = vunpack.c.l.b16 %v11541
      %v11777 = vunpack.c.h.b16 %v11541
      %v11778 = vunpack.c.l.b16 %v11542
      %v11779 = vunpack.c.h.b16 %v11542
      %v11780 = vunpack.c.l.b16 %v11543
      %v11781 = vunpack.c.h.b16 %v11543
      %v11782 = vunpack.c.l.b16 %v11544
      %v11783 = vunpack.c.h.b16 %v11544
      %v11784 = vunpack.c.l.b16 %v11545
      %v11785 = vunpack.c.h.b16 %v11545
      %v11786 = vunpack.c.l.b16 %v11546
      %v11787 = vunpack.c.h.b16 %v11546
      %v11788 = vunpack.c.l.b16 %v11547
      %v11789 = vunpack.c.h.b16 %v11547
      %v11790 = vunpack.c.l.b16 %v11548
      %v11791 = vunpack.c.h.b16 %v11548
      %v11792 = vunpack.c.l.b16 %v11549
      %v11793 = vunpack.c.h.b16 %v11549
      %v11794 = vunpack.c.l.b16 %v11550
      %v11795 = vunpack.c.h.b16 %v11550
      %v11796 = vunpack.c.l.b16 %v11551
      %v11797 = vunpack.c.h.b16 %v11551
      %v11798 = vunpack.c.l.b16 %v11552
      %v11799 = vunpack.c.h.b16 %v11552
      %v11800 = vunpack.c.l.b16 %v11553
      %v11801 = vunpack.c.h.b16 %v11553
      %v11802 = vunpack.c.l.b16 %v11554
      %v11803 = vunpack.c.h.b16 %v11554
      %v11804 = vunpack.c.l.b16 %v11555
      %v11805 = vunpack.c.h.b16 %v11555
      %v11806 = vunpack.c.l.b16 %v11556
      %v11807 = vunpack.c.h.b16 %v11556
      %v11808 = vunpack.c.l.b16 %v11557
      %v11809 = vunpack.c.h.b16 %v11557
      %v11810 = vunpack.c.l.b16 %v11558
      %v11811 = vunpack.c.h.b16 %v11558
      %v11812 = vunpack.c.l.b16 %v11559
      %v11813 = vunpack.c.h.b16 %v11559
      %v11814 = vunpack.c.l.b16 %v11560
      %v11815 = vunpack.c.h.b16 %v11560
      %v11816 = vunpack.c.l.b16 %v11561
      %v11817 = vunpack.c.h.b16 %v11561
      %v11818 = vunpack.c.l.b16 %v11562
      %v11819 = vunpack.c.h.b16 %v11562
      %v11820 = vunpack.c.l.b16 %v11563
      %v11821 = vunpack.c.h.b16 %v11563
      %v11822 = vunpack.c.l.b16 %v11564
      %v11823 = vunpack.c.h.b16 %v11564
      %v11824 = vunpack.c.l.b16 %v11565
      %v11825 = vunpack.c.h.b16 %v11565
      %v11826 = vunpack.c.l.b16 %v11566
      %v11827 = vunpack.c.h.b16 %v11566
      %v11828 = vunpack.c.l.b16 %v11567
      %v11829 = vunpack.c.h.b16 %v11567
      %v11830 = vunpack.c.l.b16 %v11568
      %v11831 = vunpack.c.h.b16 %v11568
      %v11832 = vunpack.c.l.b16 %v11569
      %v11833 = vunpack.c.h.b16 %v11569
      %v11834 = vunpack.c.l.b16 %v11570
      %v11835 = vunpack.c.h.b16 %v11570
      %v11836 = vunpack.c.l.b16 %v11571
      %v11837 = vunpack.c.h.b16 %v11571
      %v11838 = vunpack.c.l.b16 %v11572
      %v11839 = vunpack.c.h.b16 %v11572
      %v11840 = vunpack.c.l.b16 %v11573
      %v11841 = vunpack.c.h.b16 %v11573
      %v11842 = vunpack.c.l.b16 %v11574
      %v11843 = vunpack.c.h.b16 %v11574
      %v11844 = vunpack.c.l.b16 %v11575
      %v11845 = vunpack.c.h.b16 %v11575
      %v11846 = vunpack.c.l.b16 %v11576
      %v11847 = vunpack.c.h.b16 %v11576
      %v11848 = vunpack.c.l.b16 %v11577
      %v11849 = vunpack.c.h.b16 %v11577
      %v11850 = vunpack.c.l.b16 %v11578
      %v11851 = vunpack.c.h.b16 %v11578
      %v11852 = vunpack.c.l.b16 %v11579
      %v11853 = vunpack.c.h.b16 %v11579
      %v11854 = vunpack.c.l.b16 %v11580
      %v11855 = vunpack.c.h.b16 %v11580
      %v11856 = vunpack.c.l.b16 %v11581
      %v11857 = vunpack.c.h.b16 %v11581
      %v11858 = vunpack.c.l.b16 %v11582
      %v11859 = vunpack.c.h.b16 %v11582
      %v11860 = vunpack.c.l.b16 %v11583
      %v11861 = vunpack.c.h.b16 %v11583
      %v11862 = vunpack.c.l.b16 %v11584
      %v11863 = vunpack.c.h.b16 %v11584
      %v11864 = vunpack.c.l.b16 %v11585
      %v11865 = vunpack.c.h.b16 %v11585
      %v11866 = vunpack.c.l.b16 %v11586
      %v11867 = vunpack.c.h.b16 %v11586
      %v11868 = vunpack.c.l.b16 %v11587
      %v11869 = vunpack.c.h.b16 %v11587
      %v11870 = vunpack.c.l.b16 %v11588
      %v11871 = vunpack.c.h.b16 %v11588
      %v11872 = vunpack.c.l.b16 %v11589
      %v11873 = vunpack.c.h.b16 %v11589
      %v11874 = vunpack.c.l.b16 %v11590
      %v11875 = vunpack.c.h.b16 %v11590
      %v11876 = vunpack.c.l.b16 %v11591
      %v11877 = vunpack.c.h.b16 %v11591
      %v11878 = vunpack.c.l.b16 %v11592
      %v11879 = vunpack.c.h.b16 %v11592
      %v11880 = vunpack.c.l.b16 %v11593
      %v11881 = vunpack.c.h.b16 %v11593
      %v11882 = vunpack.c.l.b16 %v11594
      %v11883 = vunpack.c.h.b16 %v11594
      %v11884 = vunpack.c.l.b16 %v11595
      %v11885 = vunpack.c.h.b16 %v11595
      %v11886 = vunpack.c.l.b16 %v11596
      %v11887 = vunpack.c.h.b16 %v11596
      %v11888 = vunpack.c.l.b16 %v11597
      %v11889 = vunpack.c.h.b16 %v11597
      %v11890 = vunpack.c.l.b16 %v11598
      %v11891 = vunpack.c.h.b16 %v11598
      %v11892 = vunpack.c.l.b16 %v11599
      %v11893 = vunpack.c.h.b16 %v11599
      %v11894 = vunpack.c.l.b16 %v11600
      %v11895 = vunpack.c.h.b16 %v11600
      %v11896 = vunpack.c.l.b16 %v11601
      %v11897 = vunpack.c.h.b16 %v11601
      %v11898 = vunpack.c.l.b16 %v11602
      %v11899 = vunpack.c.h.b16 %v11602
      %v11900 = vunpack.c.l.b16 %v11603
      %v11901 = vunpack.c.h.b16 %v11603
      %v11902 = vunpack.c.l.b16 %v11604
      %v11903 = vunpack.c.h.b16 %v11604
      %v11904 = vunpack.c.l.b16 %v11605
      %v11905 = vunpack.c.h.b16 %v11605
      %v11906 = vunpack.c.l.b16 %v11606
      %v11907 = vunpack.c.h.b16 %v11606
      %v11908 = vunpack.c.l.b16 %v11607
      %v11909 = vunpack.c.h.b16 %v11607
      %v11910 = vunpack.c.l.b16 %v11608
      %v11911 = vunpack.c.h.b16 %v11608
      %v11912 = vunpack.c.l.b16 %v11609
      %v11913 = vunpack.c.h.b16 %v11609
      %v11914 = vpack.c.b16 %v11718, %v11714
      %v11915 = vpack.c.b16 %v11719, %v11715
      %v11916 = vpack.c.b16 %v11720, %v11716
      %v11917 = vpack.c.b16 %v11721, %v11717
      %v11918 = vpack.c.b16 %v11726, %v11722
      %v11919 = vpack.c.b16 %v11727, %v11723
      %v11920 = vpack.c.b16 %v11728, %v11724
      %v11921 = vpack.c.b16 %v11729, %v11725
      %v11922 = vpack.c.b16 %v11734, %v11730
      %v11923 = vpack.c.b16 %v11735, %v11731
      %v11924 = vpack.c.b16 %v11736, %v11732
      %v11925 = vpack.c.b16 %v11737, %v11733
      %v11926 = vpack.c.b16 %v11742, %v11738
      %v11927 = vpack.c.b16 %v11743, %v11739
      %v11928 = vpack.c.b16 %v11744, %v11740
      %v11929 = vpack.c.b16 %v11745, %v11741
      %v11930 = vpack.c.b16 %v11750, %v11746
      %v11931 = vpack.c.b16 %v11751, %v11747
      %v11932 = vpack.c.b16 %v11752, %v11748
      %v11933 = vpack.c.b16 %v11753, %v11749
      %v11934 = vpack.c.b16 %v11758, %v11754
      %v11935 = vpack.c.b16 %v11759, %v11755
      %v11936 = vpack.c.b16 %v11760, %v11756
      %v11937 = vpack.c.b16 %v11761, %v11757
      %v11938 = vpack.c.b16 %v11766, %v11762
      %v11939 = vpack.c.b16 %v11767, %v11763
      %v11940 = vpack.c.b16 %v11768, %v11764
      %v11941 = vpack.c.b16 %v11769, %v11765
      %v11942 = vpack.c.b16 %v11774, %v11770
      %v11943 = vpack.c.b16 %v11775, %v11771
      %v11944 = vpack.c.b16 %v11776, %v11772
      %v11945 = vpack.c.b16 %v11777, %v11773
      %v11946 = vpack.c.b16 %v11782, %v11778
      %v11947 = vpack.c.b16 %v11783, %v11779
      %v11948 = vpack.c.b16 %v11784, %v11780
      %v11949 = vpack.c.b16 %v11785, %v11781
      %v11950 = vpack.c.b16 %v11790, %v11786
      %v11951 = vpack.c.b16 %v11791, %v11787
      %v11952 = vpack.c.b16 %v11792, %v11788
      %v11953 = vpack.c.b16 %v11793, %v11789
      %v11954 = vpack.c.b16 %v11798, %v11794
      %v11955 = vpack.c.b16 %v11799, %v11795
      %v11956 = vpack.c.b16 %v11800, %v11796
      %v11957 = vpack.c.b16 %v11801, %v11797
      %v11958 = vpack.c.b16 %v11806, %v11802
      %v11959 = vpack.c.b16 %v11807, %v11803
      %v11960 = vpack.c.b16 %v11808, %v11804
      %v11961 = vpack.c.b16 %v11809, %v11805
      %v11962 = vpack.c.b16 %v11814, %v11810
      %v11963 = vpack.c.b16 %v11815, %v11811
      %v11964 = vpack.c.b16 %v11816, %v11812
      %v11965 = vpack.c.b16 %v11817, %v11813
      %v11966 = vpack.c.b16 %v11822, %v11818
      %v11967 = vpack.c.b16 %v11823, %v11819
      %v11968 = vpack.c.b16 %v11824, %v11820
      %v11969 = vpack.c.b16 %v11825, %v11821
      %v11970 = vpack.c.b16 %v11830, %v11826
      %v11971 = vpack.c.b16 %v11831, %v11827
      %v11972 = vpack.c.b16 %v11832, %v11828
      %v11973 = vpack.c.b16 %v11833, %v11829
      %v11974 = vpack.c.b16 %v11838, %v11834
      %v11975 = vpack.c.b16 %v11839, %v11835
      %v11976 = vpack.c.b16 %v11840, %v11836
      %v11977 = vpack.c.b16 %v11841, %v11837
      %v11978 = vpack.c.b16 %v11846, %v11842
      %v11979 = vpack.c.b16 %v11847, %v11843
      %v11980 = vpack.c.b16 %v11848, %v11844
      %v11981 = vpack.c.b16 %v11849, %v11845
      %v11982 = vpack.c.b16 %v11854, %v11850
      %v11983 = vpack.c.b16 %v11855, %v11851
      %v11984 = vpack.c.b16 %v11856, %v11852
      %v11985 = vpack.c.b16 %v11857, %v11853
      %v11986 = vpack.c.b16 %v11862, %v11858
      %v11987 = vpack.c.b16 %v11863, %v11859
      %v11988 = vpack.c.b16 %v11864, %v11860
      %v11989 = vpack.c.b16 %v11865, %v11861
      %v11990 = vpack.c.b16 %v11870, %v11866
      %v11991 = vpack.c.b16 %v11871, %v11867
      %v11992 = vpack.c.b16 %v11872, %v11868
      %v11993 = vpack.c.b16 %v11873, %v11869
      %v11994 = vpack.c.b16 %v11878, %v11874
      %v11995 = vpack.c.b16 %v11879, %v11875
      %v11996 = vpack.c.b16 %v11880, %v11876
      %v11997 = vpack.c.b16 %v11881, %v11877
      %v11998 = vpack.c.b16 %v11886, %v11882
      %v11999 = vpack.c.b16 %v11887, %v11883
      %v12000 = vpack.c.b16 %v11888, %v11884
      %v12001 = vpack.c.b16 %v11889, %v11885
      %v12002 = vpack.c.b16 %v11894, %v11890
      %v12003 = vpack.c.b16 %v11895, %v11891
      %v12004 = vpack.c.b16 %v11896, %v11892
      %v12005 = vpack.c.b16 %v11897, %v11893
      %v12006 = vpack.c.b16 %v11902, %v11898
      %v12007 = vpack.c.b16 %v11903, %v11899
      %v12008 = vpack.c.b16 %v11904, %v11900
      %v12009 = vpack.c.b16 %v11905, %v11901
      %v12010 = vpack.c.b16 %v11910, %v11906
      %v12011 = vpack.c.b16 %v11911, %v11907
      %v12012 = vpack.c.b16 %v11912, %v11908
      %v12013 = vpack.c.b16 %v11913, %v11909
      %v12115 = vsel %vm2147, %v11509, 0
      %12117 = vmatpush.bf16.msra.mxu0 %v11942
      %12118 = vmatpush.bf16.msra.mxu0 %v11938
      %12119 = vmatpush.bf16.msra.mxu0 %v11934
      %12120 = vmatpush.bf16.msra.mxu0 %v11930
      %12121 = vmatpush.bf16.msra.mxu0 %v11926
      %12122 = vmatpush.bf16.msra.mxu0 %v11922
      %12123 = vmatpush.bf16.msra.mxu0 %v11918
      %12124 = vmatpush.bf16.msra.mxu0 %v11914
      %12125 = vmatmul.bf16.gmra.mxu0 %v11506
      %v12126 = vpop.f32.mrf.mxu0
      %v12127 = vadd.f32 %v11610, %v12126
      %v12128 = vpop.f32.mrf.mxu0
      %v12129 = vadd.f32 %v11610, %v12128
      %12130 = vdwg.mxu0
      %12131 = vmatpush.bf16.msra.mxu0 %v11974
      %12132 = vmatpush.bf16.msra.mxu0 %v11970
      %12133 = vmatpush.bf16.msra.mxu0 %v11966
      %12134 = vmatpush.bf16.msra.mxu0 %v11962
      %12135 = vmatpush.bf16.msra.mxu0 %v11958
      %12136 = vmatpush.bf16.msra.mxu0 %v11954
      %12137 = vmatpush.bf16.msra.mxu0 %v11950
      %12138 = vmatpush.bf16.msra.mxu0 %v11946
      %12139 = vmatmul.bf16.gmra.mxu0 %v11507
      %v12140 = vpop.f32.mrf.mxu0
      %v12141 = vadd.f32 %v12127, %v12140
      %v12142 = vpop.f32.mrf.mxu0
      %v12143 = vadd.f32 %v12129, %v12142
      %12144 = vdwg.mxu0
      %12145 = vmatpush.bf16.msra.mxu0 %v12006
      %12146 = vmatpush.bf16.msra.mxu0 %v12002
      %12147 = vmatpush.bf16.msra.mxu0 %v11998
      %12148 = vmatpush.bf16.msra.mxu0 %v11994
      %12149 = vmatpush.bf16.msra.mxu0 %v11990
      %12150 = vmatpush.bf16.msra.mxu0 %v11986
      %12151 = vmatpush.bf16.msra.mxu0 %v11982
      %12152 = vmatpush.bf16.msra.mxu0 %v11978
      %12153 = vmatmul.bf16.gmra.mxu0 %v11508
      %v12154 = vpop.f32.mrf.mxu0
      %v12155 = vadd.f32 %v12141, %v12154
      %v12156 = vpop.f32.mrf.mxu0
      %v12157 = vadd.f32 %v12143, %v12156
      %12158 = vdwg.mxu0
      %12159 = vmatpush.bf16.msra.mxu0 0
      %12160 = vmatpush.bf16.msra.mxu0 0
      %12161 = vmatpush.bf16.msra.mxu0 0
      %12162 = vmatpush.bf16.msra.mxu0 0
      %12163 = vmatpush.bf16.msra.mxu0 0
      %12164 = vmatpush.bf16.msra.mxu0 0
      %12165 = vmatpush.bf16.msra.mxu0 0
      %12166 = vmatpush.bf16.msra.mxu0 %v12010
      %12167 = vmatmul.bf16.gmra.mxu0 %v12115
      %v12168 = vpop.f32.mrf.mxu0
      %v12169 = vadd.f32 %v12155, %v12168
      %v12170 = vpop.f32.mrf.mxu0
      %v12171 = vadd.f32 %v12157, %v12170
      %12172 = vdwg.mxu0
      %12173 = vmatpush.bf16.msra.mxu0 %v11943
      %12174 = vmatpush.bf16.msra.mxu0 %v11939
      %12175 = vmatpush.bf16.msra.mxu0 %v11935
      %12176 = vmatpush.bf16.msra.mxu0 %v11931
      %12177 = vmatpush.bf16.msra.mxu0 %v11927
      %12178 = vmatpush.bf16.msra.mxu0 %v11923
      %12179 = vmatpush.bf16.msra.mxu0 %v11919
      %12180 = vmatpush.bf16.msra.mxu0 %v11915
      %12181 = vmatmul.bf16.gmra.mxu0 %v11506
      %v12182 = vpop.f32.mrf.mxu0
      %v12183 = vadd.f32 %v11611, %v12182
      %v12184 = vpop.f32.mrf.mxu0
      %v12185 = vadd.f32 %v11611, %v12184
      %12186 = vdwg.mxu0
      %12187 = vmatpush.bf16.msra.mxu0 %v11975
      %12188 = vmatpush.bf16.msra.mxu0 %v11971
      %12189 = vmatpush.bf16.msra.mxu0 %v11967
      %12190 = vmatpush.bf16.msra.mxu0 %v11963
      %12191 = vmatpush.bf16.msra.mxu0 %v11959
      %12192 = vmatpush.bf16.msra.mxu0 %v11955
      %12193 = vmatpush.bf16.msra.mxu0 %v11951
      %12194 = vmatpush.bf16.msra.mxu0 %v11947
      %12195 = vmatmul.bf16.gmra.mxu0 %v11507
      %v12196 = vpop.f32.mrf.mxu0
      %v12197 = vadd.f32 %v12183, %v12196
      %v12198 = vpop.f32.mrf.mxu0
      %v12199 = vadd.f32 %v12185, %v12198
      %12200 = vdwg.mxu0
      %12201 = vmatpush.bf16.msra.mxu0 %v12007
      %12202 = vmatpush.bf16.msra.mxu0 %v12003
      %12203 = vmatpush.bf16.msra.mxu0 %v11999
      %12204 = vmatpush.bf16.msra.mxu0 %v11995
      %12205 = vmatpush.bf16.msra.mxu0 %v11991
      %12206 = vmatpush.bf16.msra.mxu0 %v11987
      %12207 = vmatpush.bf16.msra.mxu0 %v11983
      %12208 = vmatpush.bf16.msra.mxu0 %v11979
      %12209 = vmatmul.bf16.gmra.mxu0 %v11508
      %v12210 = vpop.f32.mrf.mxu0
      %v12211 = vadd.f32 %v12197, %v12210
      %v12212 = vpop.f32.mrf.mxu0
      %v12213 = vadd.f32 %v12199, %v12212
      %12214 = vdwg.mxu0
      %12215 = vmatpush.bf16.msra.mxu0 0
      %12216 = vmatpush.bf16.msra.mxu0 0
      %12217 = vmatpush.bf16.msra.mxu0 0
      %12218 = vmatpush.bf16.msra.mxu0 0
      %12219 = vmatpush.bf16.msra.mxu0 0
      %12220 = vmatpush.bf16.msra.mxu0 0
      %12221 = vmatpush.bf16.msra.mxu0 0
      %12222 = vmatpush.bf16.msra.mxu0 %v12011
      %12223 = vmatmul.bf16.gmra.mxu0 %v12115
      %v12224 = vpop.f32.mrf.mxu0
      %v12225 = vadd.f32 %v12211, %v12224
      %v12226 = vpop.f32.mrf.mxu0
      %v12227 = vadd.f32 %v12213, %v12226
      %12228 = vdwg.mxu0
      %12229 = vmatpush.bf16.msra.mxu0 %v11944
      %12230 = vmatpush.bf16.msra.mxu0 %v11940
      %12231 = vmatpush.bf16.msra.mxu0 %v11936
      %12232 = vmatpush.bf16.msra.mxu0 %v11932
      %12233 = vmatpush.bf16.msra.mxu0 %v11928
      %12234 = vmatpush.bf16.msra.mxu0 %v11924
      %12235 = vmatpush.bf16.msra.mxu0 %v11920
      %12236 = vmatpush.bf16.msra.mxu0 %v11916
      %12237 = vmatmul.bf16.gmra.mxu0 %v11506
      %v12238 = vpop.f32.mrf.mxu0
      %v12239 = vadd.f32 %v11612, %v12238
      %v12240 = vpop.f32.mrf.mxu0
      %v12241 = vadd.f32 %v11612, %v12240
      %12242 = vdwg.mxu0
      %12243 = vmatpush.bf16.msra.mxu0 %v11976
      %12244 = vmatpush.bf16.msra.mxu0 %v11972
      %12245 = vmatpush.bf16.msra.mxu0 %v11968
      %12246 = vmatpush.bf16.msra.mxu0 %v11964
      %12247 = vmatpush.bf16.msra.mxu0 %v11960
      %12248 = vmatpush.bf16.msra.mxu0 %v11956
      %12249 = vmatpush.bf16.msra.mxu0 %v11952
      %12250 = vmatpush.bf16.msra.mxu0 %v11948
      %12251 = vmatmul.bf16.gmra.mxu0 %v11507
      %v12252 = vpop.f32.mrf.mxu0
      %v12253 = vadd.f32 %v12239, %v12252
      %v12254 = vpop.f32.mrf.mxu0
      %v12255 = vadd.f32 %v12241, %v12254
      %12256 = vdwg.mxu0
      %12257 = vmatpush.bf16.msra.mxu0 %v12008
      %12258 = vmatpush.bf16.msra.mxu0 %v12004
      %12259 = vmatpush.bf16.msra.mxu0 %v12000
      %12260 = vmatpush.bf16.msra.mxu0 %v11996
      %12261 = vmatpush.bf16.msra.mxu0 %v11992
      %12262 = vmatpush.bf16.msra.mxu0 %v11988
      %12263 = vmatpush.bf16.msra.mxu0 %v11984
      %12264 = vmatpush.bf16.msra.mxu0 %v11980
      %12265 = vmatmul.bf16.gmra.mxu0 %v11508
      %v12266 = vpop.f32.mrf.mxu0
      %v12267 = vadd.f32 %v12253, %v12266
      %v12268 = vpop.f32.mrf.mxu0
      %v12269 = vadd.f32 %v12255, %v12268
      %12270 = vdwg.mxu0
      %12271 = vmatpush.bf16.msra.mxu0 0
      %12272 = vmatpush.bf16.msra.mxu0 0
      %12273 = vmatpush.bf16.msra.mxu0 0
      %12274 = vmatpush.bf16.msra.mxu0 0
      %12275 = vmatpush.bf16.msra.mxu0 0
      %12276 = vmatpush.bf16.msra.mxu0 0
      %12277 = vmatpush.bf16.msra.mxu0 0
      %12278 = vmatpush.bf16.msra.mxu0 %v12012
      %12279 = vmatmul.bf16.gmra.mxu0 %v12115
      %v12280 = vpop.f32.mrf.mxu0
      %v12281 = vadd.f32 %v12267, %v12280
      %v12282 = vpop.f32.mrf.mxu0
      %v12283 = vadd.f32 %v12269, %v12282
      %12284 = vdwg.mxu0
      %12285 = vmatpush.bf16.msra.mxu0 %v11945
      %12286 = vmatpush.bf16.msra.mxu0 %v11941
      %12287 = vmatpush.bf16.msra.mxu0 %v11937
      %12288 = vmatpush.bf16.msra.mxu0 %v11933
      %12289 = vmatpush.bf16.msra.mxu0 %v11929
      %12290 = vmatpush.bf16.msra.mxu0 %v11925
      %12291 = vmatpush.bf16.msra.mxu0 %v11921
      %12292 = vmatpush.bf16.msra.mxu0 %v11917
      %12293 = vmatmul.bf16.gmra.mxu0 %v11506
      %v12294 = vpop.f32.mrf.mxu0
      %v12295 = vadd.f32 %v11613, %v12294
      %v12296 = vpop.f32.mrf.mxu0
      %v12297 = vadd.f32 %v11613, %v12296
      %12298 = vdwg.mxu0
      %12299 = vmatpush.bf16.msra.mxu0 %v11977
      %12300 = vmatpush.bf16.msra.mxu0 %v11973
      %12301 = vmatpush.bf16.msra.mxu0 %v11969
      %12302 = vmatpush.bf16.msra.mxu0 %v11965
      %12303 = vmatpush.bf16.msra.mxu0 %v11961
      %12304 = vmatpush.bf16.msra.mxu0 %v11957
      %12305 = vmatpush.bf16.msra.mxu0 %v11953
      %12306 = vmatpush.bf16.msra.mxu0 %v11949
      %12307 = vmatmul.bf16.gmra.mxu0 %v11507
      %v12308 = vpop.f32.mrf.mxu0
      %v12309 = vadd.f32 %v12295, %v12308
      %v12310 = vpop.f32.mrf.mxu0
      %v12311 = vadd.f32 %v12297, %v12310
      %12312 = vdwg.mxu0
      %12313 = vmatpush.bf16.msra.mxu0 %v12009
      %12314 = vmatpush.bf16.msra.mxu0 %v12005
      %12315 = vmatpush.bf16.msra.mxu0 %v12001
      %12316 = vmatpush.bf16.msra.mxu0 %v11997
      %12317 = vmatpush.bf16.msra.mxu0 %v11993
      %12318 = vmatpush.bf16.msra.mxu0 %v11989
      %12319 = vmatpush.bf16.msra.mxu0 %v11985
      %12320 = vmatpush.bf16.msra.mxu0 %v11981
      %12321 = vmatmul.bf16.gmra.mxu0 %v11508
      %v12322 = vpop.f32.mrf.mxu0
      %v12323 = vadd.f32 %v12309, %v12322
      %v12324 = vpop.f32.mrf.mxu0
      %v12325 = vadd.f32 %v12311, %v12324
      %12326 = vdwg.mxu0
      %12327 = vmatpush.bf16.msra.mxu0 0
      %12328 = vmatpush.bf16.msra.mxu0 0
      %12329 = vmatpush.bf16.msra.mxu0 0
      %12330 = vmatpush.bf16.msra.mxu0 0
      %12331 = vmatpush.bf16.msra.mxu0 0
      %12332 = vmatpush.bf16.msra.mxu0 0
      %12333 = vmatpush.bf16.msra.mxu0 0
      %12334 = vmatpush.bf16.msra.mxu0 %v12013
      %12335 = vmatmul.bf16.gmra.mxu0 %v12115
      %v12336 = vpop.f32.mrf.mxu0
      %v12337 = vadd.f32 %v12323, %v12336
      %v12338 = vpop.f32.mrf.mxu0
      %v12339 = vadd.f32 %v12325, %v12338
      %12340 = vdwg.mxu0
      %v12341 = vmax.f32 %v12169, 0.0
      %v12342 = vmax.f32 %v12225, 0.0
      %v12343 = vmax.f32 %v12281, 0.0
      %v12344 = vmax.f32 %v12337, 0.0
      %v12345 = vmax.f32 %v12171, 0.0
      %v12346 = vmax.f32 %v12227, 0.0
      %v12347 = vmax.f32 %v12283, 0.0
      %v12348 = vmax.f32 %v12339, 0.0
      %v12349 = vperm.slane %v327, 2
      %v12350 = vperm.slane %v328, 2
      %v12351 = vperm.slane %v329, 2
      %v12352 = vperm.slane %v330, 2
      %v12353 = vmul.f32 %v12341, %v12349
      %v12354 = vmul.f32 %v12342, %v12350
      %v12355 = vmul.f32 %v12343, %v12351
      %v12356 = vmul.f32 %v12344, %v12352
      %v12357 = vmul.f32 %v12345, %v12349
      %v12358 = vmul.f32 %v12346, %v12350
      %v12359 = vmul.f32 %v12347, %v12351
      %v12360 = vmul.f32 %v12348, %v12352
      %v12361 = vadd.f32 %v12353, %v12354
      %v12362 = vadd.f32 %v12361, %v12355
      %v12363 = vsel %vm2147, %v12356, 0.0
      %v12364 = vadd.f32 %v12362, %v12363
      %12365 = vadd.xlane.f32.xlu0 %v12364
      %v12366 = vpop.xlane.xlu0 %12365
      %v12367 = vadd.f32 %v12357, %v12358
      %v12368 = vadd.f32 %v12367, %v12359
      %v12369 = vsel %vm2147, %v12360, 0.0
      %v12370 = vadd.f32 %v12368, %v12369
      %12371 = vadd.xlane.f32.xlu0 %v12370
      %v12372 = vpop.xlane.xlu0 %12371
      %v12373 = vperm.slane %v327, 3
      %v12374 = vadd.f32 %v12366, %v12373
      %v12375 = vadd.f32 %v12372, %v12373
      %v12376 = vmul.f32 %v12374, 0.5
      %v12377 = vmul.f32 %v12375, 0.5
      %v12378 = vtanh.pop %v12376
      %v12379 = vtanh.pop %v12377
      %v12380 = vadd.f32 %v12378, 1.0
      %v12381 = vadd.f32 %v12379, 1.0
      %v12382 = vmul.f32 %v12380, 0.5
      %v12383 = vmul.f32 %v12381, 0.5
      %vm12384 = vcmask 7168
      %12385 = vst.msk [vmem:[%s310] sm:$0xff] %vm12384, %v12382
      %12386 = vst.msk [vmem:[%s310 + $0x8] sm:$0xff] %vm12384, %v12383
      %s12387 = smul.u32 2, %s19
      %p12388 = scmp.lt.s32.totalorder %s12387, 7
      %s12389 = scalar_select %p12388, %s12387, 7
      %s12390 = smul.addr %s12389, 8
      %s12391 = scalar_lea.vmem %s8, %s12390
      // Predicated region
      $region53: #{ad_classifier_forward_grouped.1} parent=51 // pred_check
        %p12392 = pneg %p210
      $region54: #{ad_classifier_forward_grouped.1} parent=51 // pred_check_branch
        %12394 = sbr.rel (%p12392) target = $region56
      $region55: #{ad_classifier_forward_grouped.1} parent=51 // pred_region
        %s12395 = smul.u32 2, %s19
      $region56: #{ad_classifier_forward_grouped.1} parent=51 // pred_fallthru
        _
    $region52: #{ad_classifier_forward_grouped.1} parent=5 // pred_fallthru
      _
    %p12396 = scmp.le.s32.totalorder 2, %s14
    // Predicated region
    $region57: #{ad_classifier_forward_grouped.1} parent=5 // pred_check
      %p12397 = pneg %p12396
    $region58: #{ad_classifier_forward_grouped.1} parent=5 // pred_check_branch
      %12399 = sbr.rel (%p12397) target = $region60
    $region59: #{ad_classifier_forward_grouped.1} parent=5 // pred_region
      %s12400 = ssub.s32 %s14, 2
      // Predicated region
      $region61: #{ad_classifier_forward_grouped.1} parent=59 // pred_check
        %p12401 = pneg %p216
      $region62: #{ad_classifier_forward_grouped.1} parent=59 // pred_check_branch
        %12403 = sbr.rel (%p12401) target = $region64
      $region63: #{ad_classifier_forward_grouped.1} parent=59 // pred_region
        %s12404 = smul.u32 2, %s20
        %p12405 = scmp.lt.s32.totalorder %s12404, 7
        %s12406 = scalar_select %p12405, %s12404, 7
        %s12407 = smul.addr %s12406, 8
        %s12408 = scalar_lea.vmem %s8, %s12407
      $region64: #{ad_classifier_forward_grouped.1} parent=59 // pred_fallthru
        _
    $region60: #{ad_classifier_forward_grouped.1} parent=5 // pred_fallthru
      _
  $region6: #{ad_classifier_forward_grouped.1} parent=0 // loop_footer
    %s18 = sadd.s32 1, %s14
  $region7: #{ad_classifier_forward_grouped.1} parent=0 // loop_footer_branch
    %13 = sbr.rel target = $region3
  $region8: #{ad_classifier_forward_grouped.1} parent=0 // loop_exit
    _

</llo_original>
